<compile_context>
chip_gen: v7x
topology: tpu7x:2x2x1
jax: 0.10.0
libtpu: 0.0.40
codegen_flags: <defaults>
</compile_context>

<pallas_src>
import functools

import jax
import jax.numpy as jnp
from jax import lax
from jax.experimental import pallas as pl
from jax.experimental.pallas import tpu as pltpu


def _gelu(x):
    # TODO(synk): torch.nn.functional.gelu defaults to the exact erf form;
    # Mosaic has no guaranteed erf lowering, so we use the tanh approximation.
    c = jnp.float32(0.7978845608028654)  # sqrt(2/pi)
    return 0.5 * x * (1.0 + jnp.tanh(c * (x + 0.044715 * x * x * x)))


def _pick_tile(dim, tile_max):
    # Full-extent block if it fits (satisfies the lane/sublane rule for any
    # dim), otherwise a 128-multiple tile with a cdiv grid (partial last tile
    # is masked by Pallas; no contraction runs over these axes so padding
    # never contaminates valid outputs).
    return dim if dim <= tile_max else tile_max


# ----------------------------- Pallas kernels -----------------------------

def _mlp2_kernel(x_ref, w1_ref, b1_ref, w2_ref, b2_ref, o_ref, h_ref, *,
                 vpu_first):
    """Fused 2-layer 1x1-conv MLP: o = W2 @ gelu(W1 @ x + b1) + b2.

    Channels-first: x (Cin, tile_m) bf16, weights (Cout, Cin) bf16,
    out (Cout, tile_m).  The hidden activation lives in a bf16 VMEM scratch
    (no HBM round-trip).  f32 accumulation; gelu in f32, cast at the store.
    """
    if vpu_first:
        # K (= in_channels) is tiny: do the first layer as K broadcast-FMAs
        # on the VPU instead of a degenerate MXU contraction.
        cin = x_ref.shape[0]
        chid, tm = h_ref.shape
        h = jnp.zeros((chid, tm), jnp.float32)
        for i in range(cin):
            wcol = jnp.broadcast_to(
                w1_ref[:, i:i + 1].astype(jnp.float32), (chid, tm))
            xrow = jnp.broadcast_to(
                x_ref[i:i + 1, :].astype(jnp.float32), (chid, tm))
            h = h + wcol * xrow
    else:
        h = jnp.dot(w1_ref[...], x_ref[...],
                    preferred_element_type=jnp.float32)
    # Hidden scratch is bf16: halves scratch VMEM + store/load bytes and is
    # directly MXU-ready for the second matmul.
    h_ref[...] = _gelu(h + b1_ref[...]).astype(h_ref.dtype)
    o = jnp.dot(w2_ref[...], h_ref[...],
                preferred_element_type=jnp.float32) + b2_ref[...]
    o_ref[...] = o.astype(o_ref.dtype)


def mlp2(x_cf, w1, b1, w2, b2, *, out_dtype, tile_m_max=8192):
    """Fused lifting/projection MLP on (C, M) channels-first activations."""
    cin, m = x_cf.shape
    chid = w1.shape[0]
    cout = w2.shape[0]
    tile_m = _pick_tile(m, tile_m_max)
    kernel = functools.partial(_mlp2_kernel, vpu_first=(cin <= 4))
    return pl.pallas_call(
        kernel,
        out_shape=jax.ShapeDtypeStruct((cout, m), out_dtype),
        grid_spec=pltpu.PrefetchScalarGridSpec(
            num_scalar_prefetch=0,
            grid=(pl.cdiv(m, tile_m),),
            in_specs=[
                pl.BlockSpec((cin, tile_m), lambda i: (0, i)),
                pl.BlockSpec((chid, cin), lambda i: (0, 0)),
                pl.BlockSpec((chid, 1), lambda i: (0, 0)),
                pl.BlockSpec((cout, chid), lambda i: (0, 0)),
                pl.BlockSpec((cout, 1), lambda i: (0, 0)),
            ],
            out_specs=pl.BlockSpec((cout, tile_m), lambda i: (0, i)),
            scratch_shapes=[pltpu.VMEM((chid, tile_m), jnp.bfloat16)],
        ),
        compiler_params=pltpu.CompilerParams(
            dimension_semantics=("parallel",)),
    )(x_cf, w1, b1.reshape(chid, 1), w2, b2.reshape(cout, 1))


def _fno_block_kernel(x_ref, xfno_ref, wskip_ref, b_ref, o_ref, *, apply_gelu):
    """Fused FNO-block epilogue: spectral-out + bias + bias-free 1x1 skip (+gelu)."""
    skip = jnp.dot(wskip_ref[...], x_ref[...],
                   preferred_element_type=jnp.float32)
    acc = xfno_ref[...] + b_ref[...] + skip
    if apply_gelu:
        acc = _gelu(acc)
    o_ref[...] = acc.astype(o_ref.dtype)


def fno_block(x_cf, x_fno_cf, w_skip, b_spec, *, apply_gelu, out_dtype,
              tile_m_max=8192):
    c, m = x_cf.shape
    tile_m = _pick_tile(m, tile_m_max)
    kernel = functools.partial(_fno_block_kernel, apply_gelu=apply_gelu)
    return pl.pallas_call(
        kernel,
        out_shape=jax.ShapeDtypeStruct((c, m), out_dtype),
        grid_spec=pltpu.PrefetchScalarGridSpec(
            num_scalar_prefetch=0,
            grid=(pl.cdiv(m, tile_m),),
            in_specs=[
                pl.BlockSpec((c, tile_m), lambda i: (0, i)),
                pl.BlockSpec((c, tile_m), lambda i: (0, i)),
                pl.BlockSpec((c, c), lambda i: (0, 0)),
                pl.BlockSpec((c, 1), lambda i: (0, 0)),
            ],
            out_specs=pl.BlockSpec((c, tile_m), lambda i: (0, i)),
        ),
        compiler_params=pltpu.CompilerParams(
            dimension_semantics=("parallel",)),
    )(x_cf, x_fno_cf, w_skip, b_spec.reshape(c, 1))


def _spectral_mul_kernel(xr_ref, xi_ref, wr_ref, wi_ref, or_ref, oi_ref):
    """Per-mode complex channel contraction (modes k on the lane axis).

      out[b, o, k] = sum_i x[i, b, k] * w[i, o, k]   (complex)

    Naive 4-multiply complex FMA accumulated directly into the two f32
    accumulators (lower VALU-op count and vreg pressure than Gauss).
    Weights stream in bf16 and are upcast after load.  Pure VPU kernel.
    """
    ci = xr_ref.shape[0]
    b, co_t, tk = or_ref.shape

    def body(i, carry):
        acc_r, acc_i = carry
        a = xr_ref[i][:, None, :]                       # (B, 1, tk)  real(x)
        bb = xi_ref[i][:, None, :]                      # (B, 1, tk)  imag(x)
        c = wr_ref[i].astype(jnp.float32)[None, :, :]   # (1, Cot, tk) real(w)
        d = wi_ref[i].astype(jnp.float32)[None, :, :]   # (1, Cot, tk) imag(w)
        acc_r = acc_r + a * c - bb * d
        acc_i = acc_i + a * d + bb * c
        return acc_r, acc_i

    zeros = jnp.zeros((b, co_t, tk), jnp.float32)
    acc_r, acc_i = lax.fori_loop(0, ci, body, (zeros, zeros), unroll=True)
    or_ref[...] = acc_r
    oi_ref[...] = acc_i


def spectral_mul(xr, xi, wr, wi, *, tile_k_max=128, tile_co_max=16):
    """x: (Ci, B, K) f32, w: (Ci, Co, K) bf16 -> out: (B, Co, K) f32.

    2-D parallel grid over (Co, K): even when K fits a single lane tile the
    Co axis supplies >= 2 parallel steps (v7x megacore), and the per-step
    accumulator (B, tile_co, tile_k) stays small (~8 vregs) to avoid spills
    inside the unrolled Ci loop.
    """
    ci, b, k = xr.shape
    co = wr.shape[1]
    tile_k = _pick_tile(k, tile_k_max)
    tile_co = _pick_tile(co, tile_co_max)
    out_shape = (
        jax.ShapeDtypeStruct((b, co, k), jnp.float32),
        jax.ShapeDtypeStruct((b, co, k), jnp.float32),
    )
    return pl.pallas_call(
        _spectral_mul_kernel,
        out_shape=out_shape,
        grid_spec=pltpu.PrefetchScalarGridSpec(
            num_scalar_prefetch=0,
            grid=(pl.cdiv(co, tile_co), pl.cdiv(k, tile_k)),
            in_specs=[
                pl.BlockSpec((ci, b, tile_k), lambda o, kk: (0, 0, kk)),
                pl.BlockSpec((ci, b, tile_k), lambda o, kk: (0, 0, kk)),
                pl.BlockSpec((ci, tile_co, tile_k), lambda o, kk: (0, o, kk)),
                pl.BlockSpec((ci, tile_co, tile_k), lambda o, kk: (0, o, kk)),
            ],
            out_specs=[
                pl.BlockSpec((b, tile_co, tile_k), lambda o, kk: (0, o, kk)),
                pl.BlockSpec((b, tile_co, tile_k), lambda o, kk: (0, o, kk)),
            ],
        ),
        compiler_params=pltpu.CompilerParams(
            dimension_semantics=("parallel", "parallel")),
    )(xr, xi, wr, wi)


# ------------------------------ FNO pieces ------------------------------

def spectral_conv2d(x_cf, wr_bf, wi_bf, b_, h_, w_, modes1, modes2,
                    fft_norm="forward"):
    """Classic FNO spectral conv in channels-first flattened layout.

    x_cf: (Cin, B*H*W)  ->  (Cout, B*H*W) f32.  FFTs run over axes=(2,3) of
    the free reshape (C, B, H, W); only the tiny truncated-mode tensor is
    transposed, and the output spectrum is built by pad+concat.
    """
    cin = x_cf.shape[0]
    co = wr_bf.shape[1]
    wf = w_ // 2 + 1
    k = 2 * modes1 * modes2
    assert h_ >= 2 * modes1 and wf >= modes2, (
        "spectral_conv2d requires H >= 2*modes1 and W//2+1 >= modes2")

    # TODO(synk): FFT/iFFT have no Pallas equivalent; done in plain JAX/XLA.
    x4 = x_cf.reshape(cin, b_, h_, w_).astype(jnp.float32)
    x_ft = jnp.fft.rfft2(x4, axes=(2, 3), norm=fft_norm)     # (Cin,B,H,Wf)
    top = x_ft[:, :, :modes1, :modes2]
    bot = x_ft[:, :, h_ - modes1:, :modes2]
    xk = jnp.concatenate([top, bot], axis=2).reshape(cin, b_, k)

    out_r, out_i = spectral_mul(jnp.real(xk), jnp.imag(xk), wr_bf, wi_bf)

    # Small (B, Co, K) complex tensor: the transpose/pad below is negligible.
    out_k = (out_r + 1j * out_i).astype(jnp.complex64)
    out_k = out_k.transpose(1, 0, 2).reshape(co, b_, 2 * modes1, modes2)
    pad_w = wf - modes2
    top_blk = jnp.pad(out_k[:, :, :modes1],
                      ((0, 0), (0, 0), (0, 0), (0, pad_w)))
    bot_blk = jnp.pad(out_k[:, :, modes1:],
                      ((0, 0), (0, 0), (0, 0), (0, pad_w)))
    mid = jnp.zeros((co, b_, h_ - 2 * modes1, wf), jnp.complex64)
    out_ft = jnp.concatenate([top_blk, mid, bot_blk], axis=2)  # (Co,B,H,Wf)

    y = jnp.fft.irfft2(out_ft, s=(h_, w_), axes=(2, 3), norm=fft_norm)
    return y.reshape(co, b_ * h_ * w_)


def init_params(key, *, in_channels, out_channels, hidden, lifting, projection,
                n_layers, modes1, modes2):
    # TODO(synk): neuralop's rank=0.5 Tucker factorization of spectral weights
    # is a parametrization detail; dense per-layer complex weights used here.
    k = 2 * modes1 * modes2
    ks = jax.random.split(key, 7)

    def dense(kk, shape, fan_in):
        return jax.random.normal(kk, shape, jnp.float32) * (1.0 / fan_in)

    # All 1x1-conv weights stored channels-first: (Cout, Cin).
    return {
        "lift_w1": dense(ks[0], (lifting, in_channels), in_channels),
        "lift_b1": jnp.zeros((lifting,), jnp.float32),
        "lift_w2": dense(ks[1], (hidden, lifting), lifting),
        "lift_b2": jnp.zeros((hidden,), jnp.float32),
        "proj_w1": dense(ks[2], (projection, hidden), hidden),
        "proj_b1": jnp.zeros((projection,), jnp.float32),
        "proj_w2": dense(ks[3], (out_channels, projection), projection),
        "proj_b2": jnp.zeros((out_channels,), jnp.float32),
        "skip_w": dense(ks[4], (n_layers, hidden, hidden), hidden),
        "spec_wr": dense(ks[5], (n_layers, hidden, hidden, k), hidden * hidden),
        "spec_wi": dense(ks[6], (n_layers, hidden, hidden, k), hidden * hidden),
        "spec_b": jnp.zeros((n_layers, hidden), jnp.float32),
    }


def fno_forward(x_nchw, params, *, n_layers, modes1, modes2, tile_m_max=8192):
    b_, cin, h_, w_ = x_nchw.shape
    m = b_ * h_ * w_
    act_dtype = jnp.bfloat16

    # Pre-cast all weights to bf16 once (no per-grid-step casts in kernels;
    # bf16 spectral weights halve the weight-streaming HBM traffic).
    lift_w1 = params["lift_w1"].astype(act_dtype)
    lift_w2 = params["lift_w2"].astype(act_dtype)
    proj_w1 = params["proj_w1"].astype(act_dtype)
    proj_w2 = params["proj_w2"].astype(act_dtype)
    skip_w = params["skip_w"].astype(act_dtype)
    spec_wr = params["spec_wr"].astype(act_dtype)
    spec_wi = params["spec_wi"].astype(act_dtype)

    # NCHW -> channels-first flattened (C, B*H*W), bf16: single transpose at
    # entry; activations are carried in bf16 between kernels.
    x_cf = x_nchw.transpose(1, 0, 2, 3).reshape(cin, m).astype(act_dtype)

    # Lifting MLP: fused 1x1 conv -> gelu -> 1x1 conv (one kernel).
    xf = mlp2(x_cf, lift_w1, params["lift_b1"], lift_w2, params["lift_b2"],
              out_dtype=act_dtype, tile_m_max=tile_m_max)

    # n_layers FNO blocks: spectral conv + 1x1 skip, gelu except after last.
    for layer_idx in range(n_layers):
        x_fno = spectral_conv2d(
            xf, spec_wr[layer_idx], spec_wi[layer_idx],
            b_, h_, w_, modes1, modes2, fft_norm="forward",
        )
        xf = fno_block(
            xf, x_fno, skip_w[layer_idx], params["spec_b"][layer_idx],
            apply_gelu=(layer_idx < n_layers - 1),
            out_dtype=act_dtype, tile_m_max=tile_m_max,
        )

    # Projection MLP (fused); f32 output.  Output row (out_channels=1) is
    # lane-dense because M sits on the lane axis.
    yf = mlp2(xf, proj_w1, params["proj_b1"], proj_w2, params["proj_b2"],
              out_dtype=jnp.float32, tile_m_max=tile_m_max)

    cout = params["proj_w2"].shape[0]
    # Single transpose at exit back to NCHW.
    return yf.reshape(cout, b_, h_, w_).transpose(1, 0, 2, 3)


if __name__ == "__main__":
    # Small shapes consistent with FNO(n_modes=(8,8), hidden_channels=32,
    # in_channels=3, out_channels=1, lifting_channels=64,
    # projection_channels=64, n_layers=4) applied to a (2,3,16,16) NCHW input.
    B, Cin, H, W = 2, 3, 16, 16
    hidden, lifting, projection = 32, 64, 64
    out_channels = 1
    n_layers = 4
    modes1, modes2 = 8, 8

    key = jax.random.PRNGKey(0)
    kx, kp = jax.random.split(key)
    x = jax.random.normal(kx, (B, Cin, H, W), jnp.float32)
    params = init_params(
        kp, in_channels=Cin, out_channels=out_channels, hidden=hidden,
        lifting=lifting, projection=projection, n_layers=n_layers,
        modes1=modes1, modes2=modes2,
    )

    fwd = jax.jit(functools.partial(
        fno_forward, n_layers=n_layers, modes1=modes1, modes2=modes2))
    y = fwd(x, params)
    jax.block_until_ready(y)
    assert y.shape == (B, out_channels, H, W), y.shape
    assert y.dtype == jnp.float32
    assert bool(jnp.all(jnp.isfinite(y)))
    print("KERNEL_OK")
</pallas_src>

<mosaic_0001>
module attributes {stable_mosaic.version = 11 : i64} {
  func.func @_mlp2_kernel(%arg0: i32, %arg1: memref<3x512xbf16, #tpu.memory_space<vmem>>, %arg2: memref<64x3xbf16, #tpu.memory_space<vmem>>, %arg3: memref<64x1xf32, #tpu.memory_space<vmem>>, %arg4: memref<32x64xbf16, #tpu.memory_space<vmem>>, %arg5: memref<32x1xf32, #tpu.memory_space<vmem>>, %arg6: memref<32x512xbf16, #tpu.memory_space<vmem>>, %arg7: memref<64x512xbf16, #tpu.memory_space<vmem>>) attributes {dimension_semantics = [#tpu.dimension_semantics<parallel>], iteration_bounds = array<i64: 1>, scalar_prefetch = 0 : i64, scratch_operands = 1 : i64, tpu.core_type = #tpu.core_type<tc>, window_params = [{transform_indices = @transform_0, window_bounds = array<i64: 3, 512>}, {pipeline_mode = #tpu.pipeline_mode<synchronous>, transform_indices = @transform_1, window_bounds = array<i64: 64, 3>}, {pipeline_mode = #tpu.pipeline_mode<synchronous>, transform_indices = @transform_2, window_bounds = array<i64: 64, 1>}, {pipeline_mode = #tpu.pipeline_mode<synchronous>, transform_indices = @transform_3, window_bounds = array<i64: 32, 64>}, {pipeline_mode = #tpu.pipeline_mode<synchronous>, transform_indices = @transform_4, window_bounds = array<i64: 32, 1>}, {transform_indices = @transform_5, window_bounds = array<i64: 32, 512>}]} {
    %cst = arith.constant 0.000000e+00 : f32
    %0 = vector.broadcast %cst : f32 to vector<64x512xf32>
    %c0 = arith.constant 0 : index
    %c0_0 = arith.constant 0 : index
    %1 = vector.load %arg2[%c0, %c0_0] : memref<64x3xbf16, #tpu.memory_space<vmem>>, vector<64x1xbf16>
    %2 = arith.extf %1 : vector<64x1xbf16> to vector<64x1xf32>
    %3 = vector.shape_cast %2 : vector<64x1xf32> to vector<64x1xf32>
    %4 = vector.broadcast %3 : vector<64x1xf32> to vector<64x512xf32>
    %c0_1 = arith.constant 0 : index
    %c0_2 = arith.constant 0 : index
    %5 = vector.load %arg1[%c0_1, %c0_2] : memref<3x512xbf16, #tpu.memory_space<vmem>>, vector<1x512xbf16>
    %6 = arith.extf %5 : vector<1x512xbf16> to vector<1x512xf32>
    %7 = vector.shape_cast %6 : vector<1x512xf32> to vector<1x512xf32>
    %8 = vector.broadcast %7 : vector<1x512xf32> to vector<64x512xf32>
    %9 = arith.mulf %4, %8 : vector<64x512xf32>
    %10 = arith.addf %0, %9 : vector<64x512xf32>
    %c0_3 = arith.constant 0 : index
    %c1 = arith.constant 1 : index
    %11 = vector.load %arg2[%c0_3, %c1] : memref<64x3xbf16, #tpu.memory_space<vmem>>, vector<64x1xbf16>
    %12 = arith.extf %11 : vector<64x1xbf16> to vector<64x1xf32>
    %13 = vector.shape_cast %12 : vector<64x1xf32> to vector<64x1xf32>
    %14 = vector.broadcast %13 : vector<64x1xf32> to vector<64x512xf32>
    %c1_4 = arith.constant 1 : index
    %c0_5 = arith.constant 0 : index
    %15 = vector.load %arg1[%c1_4, %c0_5] : memref<3x512xbf16, #tpu.memory_space<vmem>>, vector<1x512xbf16>
    %16 = arith.extf %15 : vector<1x512xbf16> to vector<1x512xf32>
    %17 = vector.shape_cast %16 : vector<1x512xf32> to vector<1x512xf32>
    %18 = vector.broadcast %17 : vector<1x512xf32> to vector<64x512xf32>
    %19 = arith.mulf %14, %18 : vector<64x512xf32>
    %20 = arith.addf %10, %19 : vector<64x512xf32>
    %c0_6 = arith.constant 0 : index
    %c2 = arith.constant 2 : index
    %21 = vector.load %arg2[%c0_6, %c2] : memref<64x3xbf16, #tpu.memory_space<vmem>>, vector<64x1xbf16>
    %22 = arith.extf %21 : vector<64x1xbf16> to vector<64x1xf32>
    %23 = vector.shape_cast %22 : vector<64x1xf32> to vector<64x1xf32>
    %24 = vector.broadcast %23 : vector<64x1xf32> to vector<64x512xf32>
    %c2_7 = arith.constant 2 : index
    %c0_8 = arith.constant 0 : index
    %25 = vector.load %arg1[%c2_7, %c0_8] : memref<3x512xbf16, #tpu.memory_space<vmem>>, vector<1x512xbf16>
    %26 = arith.extf %25 : vector<1x512xbf16> to vector<1x512xf32>
    %27 = vector.shape_cast %26 : vector<1x512xf32> to vector<1x512xf32>
    %28 = vector.broadcast %27 : vector<1x512xf32> to vector<64x512xf32>
    %29 = arith.mulf %24, %28 : vector<64x512xf32>
    %30 = arith.addf %20, %29 : vector<64x512xf32>
    %c0_9 = arith.constant 0 : index
    %c0_10 = arith.constant 0 : index
    %31 = vector.load %arg3[%c0_9, %c0_10] : memref<64x1xf32, #tpu.memory_space<vmem>>, vector<64x1xf32>
    %32 = vector.broadcast %31 : vector<64x1xf32> to vector<64x512xf32>
    %33 = arith.addf %30, %32 : vector<64x512xf32>
    %cst_11 = arith.constant 5.000000e-01 : f32
    %34 = vector.broadcast %cst_11 : f32 to vector<64x512xf32>
    %35 = arith.mulf %34, %33 : vector<64x512xf32>
    %cst_12 = arith.constant 4.471500e-02 : f32
    %36 = vector.broadcast %cst_12 : f32 to vector<64x512xf32>
    %37 = arith.mulf %36, %33 : vector<64x512xf32>
    %38 = arith.mulf %37, %33 : vector<64x512xf32>
    %39 = arith.mulf %38, %33 : vector<64x512xf32>
    %40 = arith.addf %33, %39 : vector<64x512xf32>
    %cst_13 = arith.constant 0.797884583 : f32
    %41 = vector.broadcast %cst_13 : f32 to vector<64x512xf32>
    %42 = arith.mulf %41, %40 : vector<64x512xf32>
    %43 = math.tanh %42 : vector<64x512xf32>
    %cst_14 = arith.constant 1.000000e+00 : f32
    %44 = vector.broadcast %cst_14 : f32 to vector<64x512xf32>
    %45 = arith.addf %44, %43 : vector<64x512xf32>
    %46 = arith.mulf %35, %45 : vector<64x512xf32>
    %47 = arith.truncf %46 : vector<64x512xf32> to vector<64x512xbf16>
    %c0_15 = arith.constant 0 : index
    %c0_16 = arith.constant 0 : index
    %48 = vector.load %arg7[%c0_15, %c0_16] : memref<64x512xbf16, #tpu.memory_space<vmem>>, vector<64x512xbf16>
    tpu.vector_store %arg7[%c0_15, %c0_16], %47 {strides = array<i32>} : memref<64x512xbf16, #tpu.memory_space<vmem>>, vector<64x512xbf16>,
    %c0_17 = arith.constant 0 : index
    %c0_18 = arith.constant 0 : index
    %49 = vector.load %arg4[%c0_17, %c0_18] : memref<32x64xbf16, #tpu.memory_space<vmem>>, vector<32x64xbf16>
    %c0_19 = arith.constant 0 : index
    %c0_20 = arith.constant 0 : index
    %50 = vector.load %arg7[%c0_19, %c0_20] : memref<64x512xbf16, #tpu.memory_space<vmem>>, vector<64x512xbf16>
    %cst_21 = arith.constant dense<0.000000e+00> : vector<32x512xf32>
    %51 = tpu.matmul %49, %50, %cst_21 {dimension_numbers = #tpu.dot_dimension_numbers<[1], [0], [0], [1], [0, 0, 1, 1], [], []>} : vector<32x64xbf16>, vector<64x512xbf16>, vector<32x512xf32> -> vector<32x512xf32>
    %c0_22 = arith.constant 0 : index
    %c0_23 = arith.constant 0 : index
    %52 = vector.load %arg5[%c0_22, %c0_23] : memref<32x1xf32, #tpu.memory_space<vmem>>, vector<32x1xf32>
    %53 = vector.broadcast %52 : vector<32x1xf32> to vector<32x512xf32>
    %54 = arith.addf %51, %53 : vector<32x512xf32>
    %55 = arith.truncf %54 : vector<32x512xf32> to vector<32x512xbf16>
    %c0_24 = arith.constant 0 : index
    %c0_25 = arith.constant 0 : index
    %56 = vector.load %arg6[%c0_24, %c0_25] : memref<32x512xbf16, #tpu.memory_space<vmem>>, vector<32x512xbf16>
    tpu.vector_store %arg6[%c0_24, %c0_25], %55 {strides = array<i32>} : memref<32x512xbf16, #tpu.memory_space<vmem>>, vector<32x512xbf16>,
    return
  }
  func.func @transform_0(%arg0: i32) -> (i32, i32) {
    %c0_i32 = arith.constant 0 : i32
    %c0_i32_0 = arith.constant 0 : i32
    return %c0_i32, %arg0 : i32, i32
  }
  func.func @transform_1(%arg0: i32) -> (i32, i32) {
    %c0_i32 = arith.constant 0 : i32
    %c0_i32_0 = arith.constant 0 : i32
    %c0_i32_1 = arith.constant 0 : i32
    return %c0_i32, %c0_i32_0 : i32, i32
  }
  func.func @transform_2(%arg0: i32) -> (i32, i32) {
    %c0_i32 = arith.constant 0 : i32
    %c0_i32_0 = arith.constant 0 : i32
    %c0_i32_1 = arith.constant 0 : i32
    return %c0_i32, %c0_i32_0 : i32, i32
  }
  func.func @transform_3(%arg0: i32) -> (i32, i32) {
    %c0_i32 = arith.constant 0 : i32
    %c0_i32_0 = arith.constant 0 : i32
    %c0_i32_1 = arith.constant 0 : i32
    return %c0_i32, %c0_i32_0 : i32, i32
  }
  func.func @transform_4(%arg0: i32) -> (i32, i32) {
    %c0_i32 = arith.constant 0 : i32
    %c0_i32_0 = arith.constant 0 : i32
    %c0_i32_1 = arith.constant 0 : i32
    return %c0_i32, %c0_i32_0 : i32, i32
  }
  func.func @transform_5(%arg0: i32) -> (i32, i32) {
    %c0_i32 = arith.constant 0 : i32
    %c0_i32_0 = arith.constant 0 : i32
    return %c0_i32, %arg0 : i32, i32
  }
}

module attributes {stable_mosaic.version = 11 : i64} {
  func.func @_spectral_mul_kernel(%arg0: i32, %arg1: i32, %arg2: memref<32x2x128xf32, #tpu.memory_space<vmem>>, %arg3: memref<32x2x128xf32, #tpu.memory_space<vmem>>, %arg4: memref<32x16x128xbf16, #tpu.memory_space<vmem>>, %arg5: memref<32x16x128xbf16, #tpu.memory_space<vmem>>, %arg6: memref<2x16x128xf32, #tpu.memory_space<vmem>>, %arg7: memref<2x16x128xf32, #tpu.memory_space<vmem>>) attributes {dimension_semantics = [#tpu.dimension_semantics<parallel>, #tpu.dimension_semantics<parallel>], iteration_bounds = array<i64: 2, 1>, scalar_prefetch = 0 : i64, scratch_operands = 0 : i64, tpu.core_type = #tpu.core_type<tc>, window_params = [{transform_indices = @transform_0, window_bounds = array<i64: 32, 2, 128>}, {transform_indices = @transform_1, window_bounds = array<i64: 32, 2, 128>}, {transform_indices = @transform_2, window_bounds = array<i64: 32, 16, 128>}, {transform_indices = @transform_3, window_bounds = array<i64: 32, 16, 128>}, {transform_indices = @transform_4, window_bounds = array<i64: 2, 16, 128>}, {transform_indices = @transform_5, window_bounds = array<i64: 2, 16, 128>}]} {
    %cst = arith.constant 0.000000e+00 : f32
    %0 = vector.broadcast %cst : f32 to vector<2x16x128xf32>
    %c0_i32 = arith.constant 0 : i32
    %1 = arith.index_cast %c0_i32 : i32 to index
    %c0 = arith.constant 0 : index
    %c0_0 = arith.constant 0 : index
    %2 = vector.load %arg2[%1, %c0, %c0_0] : memref<32x2x128xf32, #tpu.memory_space<vmem>>, vector<1x2x128xf32>
    %3 = vector.shape_cast %2 : vector<1x2x128xf32> to vector<2x128xf32>
    %4 = vector.shape_cast %3 : vector<2x128xf32> to vector<2x1x128xf32>
    %5 = arith.index_cast %c0_i32 : i32 to index
    %c0_1 = arith.constant 0 : index
    %c0_2 = arith.constant 0 : index
    %6 = vector.load %arg3[%5, %c0_1, %c0_2] : memref<32x2x128xf32, #tpu.memory_space<vmem>>, vector<1x2x128xf32>
    %7 = vector.shape_cast %6 : vector<1x2x128xf32> to vector<2x128xf32>
    %8 = vector.shape_cast %7 : vector<2x128xf32> to vector<2x1x128xf32>
    %9 = arith.index_cast %c0_i32 : i32 to index
    %c0_3 = arith.constant 0 : index
    %c0_4 = arith.constant 0 : index
    %10 = vector.load %arg4[%9, %c0_3, %c0_4] : memref<32x16x128xbf16, #tpu.memory_space<vmem>>, vector<1x16x128xbf16>
    %11 = vector.shape_cast %10 : vector<1x16x128xbf16> to vector<16x128xbf16>
    %12 = arith.extf %11 : vector<16x128xbf16> to vector<16x128xf32>
    %13 = vector.shape_cast %12 : vector<16x128xf32> to vector<1x16x128xf32>
    %14 = arith.index_cast %c0_i32 : i32 to index
    %c0_5 = arith.constant 0 : index
    %c0_6 = arith.constant 0 : index
    %15 = vector.load %arg5[%14, %c0_5, %c0_6] : memref<32x16x128xbf16, #tpu.memory_space<vmem>>, vector<1x16x128xbf16>
    %16 = vector.shape_cast %15 : vector<1x16x128xbf16> to vector<16x128xbf16>
    %17 = arith.extf %16 : vector<16x128xbf16> to vector<16x128xf32>
    %18 = vector.shape_cast %17 : vector<16x128xf32> to vector<1x16x128xf32>
    %19 = vector.broadcast %4 : vector<2x1x128xf32> to vector<2x16x128xf32>
    %20 = vector.broadcast %13 : vector<1x16x128xf32> to vector<2x16x128xf32>
    %21 = arith.mulf %19, %20 : vector<2x16x128xf32>
    %22 = arith.addf %0, %21 : vector<2x16x128xf32>
    %23 = vector.broadcast %8 : vector<2x1x128xf32> to vector<2x16x128xf32>
    %24 = vector.broadcast %18 : vector<1x16x128xf32> to vector<2x16x128xf32>
    %25 = arith.mulf %23, %24 : vector<2x16x128xf32>
    %26 = arith.subf %22, %25 : vector<2x16x128xf32>
    %27 = vector.broadcast %4 : vector<2x1x128xf32> to vector<2x16x128xf32>
    %28 = vector.broadcast %18 : vector<1x16x128xf32> to vector<2x16x128xf32>
    %29 = arith.mulf %27, %28 : vector<2x16x128xf32>
    %30 = arith.addf %0, %29 : vector<2x16x128xf32>
    %31 = vector.broadcast %8 : vector<2x1x128xf32> to vector<2x16x128xf32>
    %32 = vector.broadcast %13 : vector<1x16x128xf32> to vector<2x16x128xf32>
    %33 = arith.mulf %31, %32 : vector<2x16x128xf32>
    %34 = arith.addf %30, %33 : vector<2x16x128xf32>
    %c1_i32 = arith.constant 1 : i32
    %35 = arith.index_cast %c1_i32 : i32 to index
    %c0_7 = arith.constant 0 : index
    %c0_8 = arith.constant 0 : index
    %36 = vector.load %arg2[%35, %c0_7, %c0_8] : memref<32x2x128xf32, #tpu.memory_space<vmem>>, vector<1x2x128xf32>
    %37 = vector.shape_cast %36 : vector<1x2x128xf32> to vector<2x128xf32>
    %38 = vector.shape_cast %37 : vector<2x128xf32> to vector<2x1x128xf32>
    %39 = arith.index_cast %c1_i32 : i32 to index
    %c0_9 = arith.constant 0 : index
    %c0_10 = arith.constant 0 : index
    %40 = vector.load %arg3[%39, %c0_9, %c0_10] : memref<32x2x128xf32, #tpu.memory_space<vmem>>, vector<1x2x128xf32>
    %41 = vector.shape_cast %40 : vector<1x2x128xf32> to vector<2x128xf32>
    %42 = vector.shape_cast %41 : vector<2x128xf32> to vector<2x1x128xf32>
    %43 = arith.index_cast %c1_i32 : i32 to index
    %c0_11 = arith.constant 0 : index
    %c0_12 = arith.constant 0 : index
    %44 = vector.load %arg4[%43, %c0_11, %c0_12] : memref<32x16x128xbf16, #tpu.memory_space<vmem>>, vector<1x16x128xbf16>
    %45 = vector.shape_cast %44 : vector<1x16x128xbf16> to vector<16x128xbf16>
    %46 = arith.extf %45 : vector<16x128xbf16> to vector<16x128xf32>
    %47 = vector.shape_cast %46 : vector<16x128xf32> to vector<1x16x128xf32>
    %48 = arith.index_cast %c1_i32 : i32 to index
    %c0_13 = arith.constant 0 : index
    %c0_14 = arith.constant 0 : index
    %49 = vector.load %arg5[%48, %c0_13, %c0_14] : memref<32x16x128xbf16, #tpu.memory_space<vmem>>, vector<1x16x128xbf16>
    %50 = vector.shape_cast %49 : vector<1x16x128xbf16> to vector<16x128xbf16>
    %51 = arith.extf %50 : vector<16x128xbf16> to vector<16x128xf32>
    %52 = vector.shape_cast %51 : vector<16x128xf32> to vector<1x16x128xf32>
    %53 = vector.broadcast %38 : vector<2x1x128xf32> to vector<2x16x128xf32>
    %54 = vector.broadcast %47 : vector<1x16x128xf32> to vector<2x16x128xf32>
    %55 = arith.mulf %53, %54 : vector<2x16x128xf32>
    %56 = arith.addf %26, %55 : vector<2x16x128xf32>
    %57 = vector.broadcast %42 : vector<2x1x128xf32> to vector<2x16x128xf32>
    %58 = vector.broadcast %52 : vector<1x16x128xf32> to vector<2x16x128xf32>
    %59 = arith.mulf %57, %58 : vector<2x16x128xf32>
    %60 = arith.subf %56, %59 : vector<2x16x128xf32>
    %61 = vector.broadcast %38 : vector<2x1x128xf32> to vector<2x16x128xf32>
    %62 = vector.broadcast %52 : vector<1x16x128xf32> to vector<2x16x128xf32>
    %63 = arith.mulf %61, %62 : vector<2x16x128xf32>
    %64 = arith.addf %34, %63 : vector<2x16x128xf32>
    %65 = vector.broadcast %42 : vector<2x1x128xf32> to vector<2x16x128xf32>
    %66 = vector.broadcast %47 : vector<1x16x128xf32> to vector<2x16x128xf32>
    %67 = arith.mulf %65, %66 : vector<2x16x128xf32>
    %68 = arith.addf %64, %67 : vector<2x16x128xf32>
    %c2_i32 = arith.constant 2 : i32
    %69 = arith.index_cast %c2_i32 : i32 to index
    %c0_15 = arith.constant 0 : index
    %c0_16 = arith.constant 0 : index
    %70 = vector.load %arg2[%69, %c0_15, %c0_16] : memref<32x2x128xf32, #tpu.memory_space<vmem>>, vector<1x2x128xf32>
    %71 = vector.shape_cast %70 : vector<1x2x128xf32> to vector<2x128xf32>
    %72 = vector.shape_cast %71 : vector<2x128xf32> to vector<2x1x128xf32>
    %73 = arith.index_cast %c2_i32 : i32 to index
    %c0_17 = arith.constant 0 : index
    %c0_18 = arith.constant 0 : index
    %74 = vector.load %arg3[%73, %c0_17, %c0_18] : memref<32x2x128xf32, #tpu.memory_space<vmem>>, vector<1x2x128xf32>
    %75 = vector.shape_cast %74 : vector<1x2x128xf32> to vector<2x128xf32>
    %76 = vector.shape_cast %75 : vector<2x128xf32> to vector<2x1x128xf32>
    %77 = arith.index_cast %c2_i32 : i32 to index
    %c0_19 = arith.constant 0 : index
    %c0_20 = arith.constant 0 : index
    %78 = vector.load %arg4[%77, %c0_19, %c0_20] : memref<32x16x128xbf16, #tpu.memory_space<vmem>>, vector<1x16x128xbf16>
    %79 = vector.shape_cast %78 : vector<1x16x128xbf16> to vector<16x128xbf16>
    %80 = arith.extf %79 : vector<16x128xbf16> to vector<16x128xf32>
    %81 = vector.shape_cast %80 : vector<16x128xf32> to vector<1x16x128xf32>
    %82 = arith.index_cast %c2_i32 : i32 to index
    %c0_21 = arith.constant 0 : index
    %c0_22 = arith.constant 0 : index
    %83 = vector.load %arg5[%82, %c0_21, %c0_22] : memref<32x16x128xbf16, #tpu.memory_space<vmem>>, vector<1x16x128xbf16>
    %84 = vector.shape_cast %83 : vector<1x16x128xbf16> to vector<16x128xbf16>
    %85 = arith.extf %84 : vector<16x128xbf16> to vector<16x128xf32>
    %86 = vector.shape_cast %85 : vector<16x128xf32> to vector<1x16x128xf32>
    %87 = vector.broadcast %72 : vector<2x1x128xf32> to vector<2x16x128xf32>
    %88 = vector.broadcast %81 : vector<1x16x128xf32> to vector<2x16x128xf32>
    %89 = arith.mulf %87, %88 : vector<2x16x128xf32>
    %90 = arith.addf %60, %89 : vector<2x16x128xf32>
    %91 = vector.broadcast %76 : vector<2x1x128xf32> to vector<2x16x128xf32>
    %92 = vector.broadcast %86 : vector<1x16x128xf32> to vector<2x16x128xf32>
    %93 = arith.mulf %91, %92 : vector<2x16x128xf32>
    %94 = arith.subf %90, %93 : vector<2x16x128xf32>
    %95 = vector.broadcast %72 : vector<2x1x128xf32> to vector<2x16x128xf32>
    %96 = vector.broadcast %86 : vector<1x16x128xf32> to vector<2x16x128xf32>
    %97 = arith.mulf %95, %96 : vector<2x16x128xf32>
    %98 = arith.addf %68, %97 : vector<2x16x128xf32>
    %99 = vector.broadcast %76 : vector<2x1x128xf32> to vector<2x16x128xf32>
    %100 = vector.broadcast %81 : vector<1x16x128xf32> to vector<2x16x128xf32>
    %101 = arith.mulf %99, %100 : vector<2x16x128xf32>
    %102 = arith.addf %98, %101 : vector<2x16x128xf32>
    %c3_i32 = arith.constant 3 : i32
    %103 = arith.index_cast %c3_i32 : i32 to index
    %c0_23 = arith.constant 0 : index
    %c0_24 = arith.constant 0 : index
    %104 = vector.load %arg2[%103, %c0_23, %c0_24] : memref<32x2x128xf32, #tpu.memory_space<vmem>>, vector<1x2x128xf32>
    %105 = vector.shape_cast %104 : vector<1x2x128xf32> to vector<2x128xf32>
    %106 = vector.shape_cast %105 : vector<2x128xf32> to vector<2x1x128xf32>
    %107 = arith.index_cast %c3_i32 : i32 to index
    %c0_25 = arith.constant 0 : index
    %c0_26 = arith.constant 0 : index
    %108 = vector.load %arg3[%107, %c0_25, %c0_26] : memref<32x2x128xf32, #tpu.memory_space<vmem>>, vector<1x2x128xf32>
    %109 = vector.shape_cast %108 : vector<1x2x128xf32> to vector<2x128xf32>
    %110 = vector.shape_cast %109 : vector<2x128xf32> to vector<2x1x128xf32>
    %111 = arith.index_cast %c3_i32 : i32 to index
    %c0_27 = arith.constant 0 : index
    %c0_28 = arith.constant 0 : index
    %112 = vector.load %arg4[%111, %c0_27, %c0_28] : memref<32x16x128xbf16, #tpu.memory_space<vmem>>, vector<1x16x128xbf16>
    %113 = vector.shape_cast %112 : vector<1x16x128xbf16> to vector<16x128xbf16>
    %114 = arith.extf %113 : vector<16x128xbf16> to vector<16x128xf32>
    %115 = vector.shape_cast %114 : vector<16x128xf32> to vector<1x16x128xf32>
    %116 = arith.index_cast %c3_i32 : i32 to index
    %c0_29 = arith.constant 0 : index
    %c0_30 = arith.constant 0 : index
    %117 = vector.load %arg5[%116, %c0_29, %c0_30] : memref<32x16x128xbf16, #tpu.memory_space<vmem>>, vector<1x16x128xbf16>
    %118 = vector.shape_cast %117 : vector<1x16x128xbf16> to vector<16x128xbf16>
    %119 = arith.extf %118 : vector<16x128xbf16> to vector<16x128xf32>
    %120 = vector.shape_cast %119 : vector<16x128xf32> to vector<1x16x128xf32>
    %121 = vector.broadcast %106 : vector<2x1x128xf32> to vector<2x16x128xf32>
    %122 = vector.broadcast %115 : vector<1x16x128xf32> to vector<2x16x128xf32>
    %123 = arith.mulf %121, %122 : vector<2x16x128xf32>
    %124 = arith.addf %94, %123 : vector<2x16x128xf32>
    %125 = vector.broadcast %110 : vector<2x1x128xf32> to vector<2x16x128xf32>
    %126 = vector.broadcast %120 : vector<1x16x128xf32> to vector<2x16x128xf32>
    %127 = arith.mulf %125, %126 : vector<2x16x128xf32>
    %128 = arith.subf %124, %127 : vector<2x16x128xf32>
    %129 = vector.broadcast %106 : vector<2x1x128xf32> to vector<2x16x128xf32>
    %130 = vector.broadcast %120 : vector<1x16x128xf32> to vector<2x16x128xf32>
    %131 = arith.mulf %129, %130 : vector<2x16x128xf32>
    %132 = arith.addf %102, %131 : vector<2x16x128xf32>
    %133 = vector.broadcast %110 : vector<2x1x128xf32> to vector<2x16x128xf32>
    %134 = vector.broadcast %115 : vector<1x16x128xf32> to vector<2x16x128xf32>
    %135 = arith.mulf %133, %134 : vector<2x16x128xf32>
    %136 = arith.addf %132, %135 : vector<2x16x128xf32>
    %c4_i32 = arith.constant 4 : i32
    %137 = arith.index_cast %c4_i32 : i32 to index
    %c0_31 = arith.constant 0 : index
    %c0_32 = arith.constant 0 : index
    %138 = vector.load %arg2[%137, %c0_31, %c0_32] : memref<32x2x128xf32, #tpu.memory_space<vmem>>, vector<1x2x128xf32>
    %139 = vector.shape_cast %138 : vector<1x2x128xf32> to vector<2x128xf32>
    %140 = vector.shape_cast %139 : vector<2x128xf32> to vector<2x1x128xf32>
    %141 = arith.index_cast %c4_i32 : i32 to index
    %c0_33 = arith.constant 0 : index
    %c0_34 = arith.constant 0 : index
    %142 = vector.load %arg3[%141, %c0_33, %c0_34] : memref<32x2x128xf32, #tpu.memory_space<vmem>>, vector<1x2x128xf32>
    %143 = vector.shape_cast %142 : vector<1x2x128xf32> to vector<2x128xf32>
    %144 = vector.shape_cast %143 : vector<2x128xf32> to vector<2x1x128xf32>
    %145 = arith.index_cast %c4_i32 : i32 to index
    %c0_35 = arith.constant 0 : index
    %c0_36 = arith.constant 0 : index
    %146 = vector.load %arg4[%145, %c0_35, %c0_36] : memref<32x16x128xbf16, #tpu.memory_space<vmem>>, vector<1x16x128xbf16>
    %147 = vector.shape_cast %146 : vector<1x16x128xbf16> to vector<16x128xbf16>
    %148 = arith.extf %147 : vector<16x128xbf16> to vector<16x128xf32>
    %149 = vector.shape_cast %148 : vector<16x128xf32> to vector<1x16x128xf32>
    %150 = arith.index_cast %c4_i32 : i32 to index
    %c0_37 = arith.constant 0 : index
    %c0_38 = arith.constant 0 : index
    %151 = vector.load %arg5[%150, %c0_37, %c0_38] : memref<32x16x128xbf16, #tpu.memory_space<vmem>>, vector<1x16x128xbf16>
    %152 = vector.shape_cast %151 : vector<1x16x128xbf16> to vector<16x128xbf16>
    %153 = arith.extf %152 : vector<16x128xbf16> to vector<16x128xf32>
    %154 = vector.shape_cast %153 : vector<16x128xf32> to vector<1x16x128xf32>
    %155 = vector.broadcast %140 : vector<2x1x128xf32> to vector<2x16x128xf32>
    %156 = vector.broadcast %149 : vector<1x16x128xf32> to vector<2x16x128xf32>
    %157 = arith.mulf %155, %156 : vector<2x16x128xf32>
    %158 = arith.addf %128, %157 : vector<2x16x128xf32>
    %159 = vector.broadcast %144 : vector<2x1x128xf32> to vector<2x16x128xf32>
    %160 = vector.broadcast %154 : vector<1x16x128xf32> to vector<2x16x128xf32>
    %161 = arith.mulf %159, %160 : vector<2x16x128xf32>
    %162 = arith.subf %158, %161 : vector<2x16x128xf32>
    %163 = vector.broadcast %140 : vector<2x1x128xf32> to vector<2x16x128xf32>
    %164 = vector.broadcast %154 : vector<1x16x128xf32> to vector<2x16x128xf32>
    %165 = arith.mulf %163, %164 : vector<2x16x128xf32>
    %166 = arith.addf %136, %165 : vector<2x16x128xf32>
    %167 = vector.broadcast %144 : vector<2x1x128xf32> to vector<2x16x128xf32>
    %168 = vector.broadcast %149 : vector<1x16x128xf32> to vector<2x16x128xf32>
    %169 = arith.mulf %167, %168 : vector<2x16x128xf32>
    %170 = arith.addf %166, %169 : vector<2x16x128xf32>
    %c5_i32 = arith.constant 5 : i32
    %171 = arith.index_cast %c5_i32 : i32 to index
    %c0_39 = arith.constant 0 : index
    %c0_40 = arith.constant 0 : index
    %172 = vector.load %arg2[%171, %c0_39, %c0_40] : memref<32x2x128xf32, #tpu.memory_space<vmem>>, vector<1x2x128xf32>
    %173 = vector.shape_cast %172 : vector<1x2x128xf32> to vector<2x128xf32>
    %174 = vector.shape_cast %173 : vector<2x128xf32> to vector<2x1x128xf32>
    %175 = arith.index_cast %c5_i32 : i32 to index
    %c0_41 = arith.constant 0 : index
    %c0_42 = arith.constant 0 : index
    %176 = vector.load %arg3[%175, %c0_41, %c0_42] : memref<32x2x128xf32, #tpu.memory_space<vmem>>, vector<1x2x128xf32>
    %177 = vector.shape_cast %176 : vector<1x2x128xf32> to vector<2x128xf32>
    %178 = vector.shape_cast %177 : vector<2x128xf32> to vector<2x1x128xf32>
    %179 = arith.index_cast %c5_i32 : i32 to index
    %c0_43 = arith.constant 0 : index
    %c0_44 = arith.constant 0 : index
    %180 = vector.load %arg4[%179, %c0_43, %c0_44] : memref<32x16x128xbf16, #tpu.memory_space<vmem>>, vector<1x16x128xbf16>
    %181 = vector.shape_cast %180 : vector<1x16x128xbf16> to vector<16x128xbf16>
    %182 = arith.extf %181 : vector<16x128xbf16> to vector<16x128xf32>
    %183 = vector.shape_cast %182 : vector<16x128xf32> to vector<1x16x128xf32>
    %184 = arith.index_cast %c5_i32 : i32 to index
    %c0_45 = arith.constant 0 : index
    %c0_46 = arith.constant 0 : index
    %185 = vector.load %arg5[%184, %c0_45, %c0_46] : memref<32x16x128xbf16, #tpu.memory_space<vmem>>, vector<1x16x128xbf16>
    %186 = vector.shape_cast %185 : vector<1x16x128xbf16> to vector<16x128xbf16>
    %187 = arith.extf %186 : vector<16x128xbf16> to vector<16x128xf32>
    %188 = vector.shape_cast %187 : vector<16x128xf32> to vector<1x16x128xf32>
    %189 = vector.broadcast %174 : vector<2x1x128xf32> to vector<2x16x128xf32>
    %190 = vector.broadcast %183 : vector<1x16x128xf32> to vector<2x16x128xf32>
    %191 = arith.mulf %189, %190 : vector<2x16x128xf32>
    %192 = arith.addf %162, %191 : vector<2x16x128xf32>
    %193 = vector.broadcast %178 : vector<2x1x128xf32> to vector<2x16x128xf32>
    %194 = vector.broadcast %188 : vector<1x16x128xf32> to vector<2x16x128xf32>
    %195 = arith.mulf %193, %194 : vector<2x16x128xf32>
    %196 = arith.subf %192, %195 : vector<2x16x128xf32>
    %197 = vector.broadcast %174 : vector<2x1x128xf32> to vector<2x16x128xf32>
    %198 = vector.broadcast %188 : vector<1x16x128xf32> to vector<2x16x128xf32>
    %199 = arith.mulf %197, %198 : vector<2x16x128xf32>
    %200 = arith.addf %170, %199 : vector<2x16x128xf32>
    %201 = vector.broadcast %178 : vector<2x1x128xf32> to vector<2x16x128xf32>
    %202 = vector.broadcast %183 : vector<1x16x128xf32> to vector<2x16x128xf32>
    %203 = arith.mulf %201, %202 : vector<2x16x128xf32>
    %204 = arith.addf %200, %203 : vector<2x16x128xf32>
    %c6_i32 = arith.constant 6 : i32
    %205 = arith.index_cast %c6_i32 : i32 to index
    %c0_47 = arith.constant 0 : index
    %c0_48 = arith.constant 0 : index
    %206 = vector.load %arg2[%205, %c0_47, %c0_48] : memref<32x2x128xf32, #tpu.memory_space<vmem>>, vector<1x2x128xf32>
    %207 = vector.shape_cast %206 : vector<1x2x128xf32> to vector<2x128xf32>
    %208 = vector.shape_cast %207 : vector<2x128xf32> to vector<2x1x128xf32>
    %209 = arith.index_cast %c6_i32 : i32 to index
    %c0_49 = arith.constant 0 : index
    %c0_50 = arith.constant 0 : index
    %210 = vector.load %arg3[%209, %c0_49, %c0_50] : memref<32x2x128xf32, #tpu.memory_space<vmem>>, vector<1x2x128xf32>
    %211 = vector.shape_cast %210 : vector<1x2x128xf32> to vector<2x128xf32>
    %212 = vector.shape_cast %211 : vector<2x128xf32> to vector<2x1x128xf32>
    %213 = arith.index_cast %c6_i32 : i32 to index
    %c0_51 = arith.constant 0 : index
    %c0_52 = arith.constant 0 : index
    %214 = vector.load %arg4[%213, %c0_51, %c0_52] : memref<32x16x128xbf16, #tpu.memory_space<vmem>>, vector<1x16x128xbf16>
    %215 = vector.shape_cast %214 : vector<1x16x128xbf16> to vector<16x128xbf16>
    %216 = arith.extf %215 : vector<16x128xbf16> to vector<16x128xf32>
    %217 = vector.shape_cast %216 : vector<16x128xf32> to vector<1x16x128xf32>
    %218 = arith.index_cast %c6_i32 : i32 to index
    %c0_53 = arith.constant 0 : index
    %c0_54 = arith.constant 0 : index
    %219 = vector.load %arg5[%218, %c0_53, %c0_54] : memref<32x16x128xbf16, #tpu.memory_space<vmem>>, vector<1x16x128xbf16>
    %220 = vector.shape_cast %219 : vector<1x16x128xbf16> to vector<16x128xbf16>
    %221 = arith.extf %220 : vector<16x128xbf16> to vector<16x128xf32>
    %222 = vector.shape_cast %221 : vector<16x128xf32> to vector<1x16x128xf32>
    %223 = vector.broadcast %208 : vector<2x1x128xf32> to vector<2x16x128xf32>
    %224 = vector.broadcast %217 : vector<1x16x128xf32> to vector<2x16x128xf32>
    %225 = arith.mulf %223, %224 : vector<2x16x128xf32>
    %226 = arith.addf %196, %225 : vector<2x16x128xf32>
    %227 = vector.broadcast %212 : vector<2x1x128xf32> to vector<2x16x128xf32>
    %228 = vector.broadcast %222 : vector<1x16x128xf32> to vector<2x16x128xf32>
    %229 = arith.mulf %227, %228 : vector<2x16x128xf32>
    %230 = arith.subf %226, %229 : vector<2x16x128xf32>
    %231 = vector.broadcast %208 : vector<2x1x128xf32> to vector<2x16x128xf32>
    %232 = vector.broadcast %222 : vector<1x16x128xf32> to vector<2x16x128xf32>
    %233 = arith.mulf %231, %232 : vector<2x16x128xf32>
    %234 = arith.addf %204, %233 : vector<2x16x128xf32>
    %235 = vector.broadcast %212 : vector<2x1x128xf32> to vector<2x16x128xf32>
    %236 = vector.broadcast %217 : vector<1x16x128xf32> to vector<2x16x128xf32>
    %237 = arith.mulf %235, %236 : vector<2x16x128xf32>
    %238 = arith.addf %234, %237 : vector<2x16x128xf32>
    %c7_i32 = arith.constant 7 : i32
    %239 = arith.index_cast %c7_i32 : i32 to index
    %c0_55 = arith.constant 0 : index
    %c0_56 = arith.constant 0 : index
    %240 = vector.load %arg2[%239, %c0_55, %c0_56] : memref<32x2x128xf32, #tpu.memory_space<vmem>>, vector<1x2x128xf32>
    %241 = vector.shape_cast %240 : vector<1x2x128xf32> to vector<2x128xf32>
    %242 = vector.shape_cast %241 : vector<2x128xf32> to vector<2x1x128xf32>
    %243 = arith.index_cast %c7_i32 : i32 to index
    %c0_57 = arith.constant 0 : index
    %c0_58 = arith.constant 0 : index
    %244 = vector.load %arg3[%243, %c0_57, %c0_58] : memref<32x2x128xf32, #tpu.memory_space<vmem>>, vector<1x2x128xf32>
    %245 = vector.shape_cast %244 : vector<1x2x128xf32> to vector<2x128xf32>
    %246 = vector.shape_cast %245 : vector<2x128xf32> to vector<2x1x128xf32>
    %247 = arith.index_cast %c7_i32 : i32 to index
    %c0_59 = arith.constant 0 : index
    %c0_60 = arith.constant 0 : index
    %248 = vector.load %arg4[%247, %c0_59, %c0_60] : memref<32x16x128xbf16, #tpu.memory_space<vmem>>, vector<1x16x128xbf16>
    %249 = vector.shape_cast %248 : vector<1x16x128xbf16> to vector<16x128xbf16>
    %250 = arith.extf %249 : vector<16x128xbf16> to vector<16x128xf32>
    %251 = vector.shape_cast %250 : vector<16x128xf32> to vector<1x16x128xf32>
    %252 = arith.index_cast %c7_i32 : i32 to index
    %c0_61 = arith.constant 0 : index
    %c0_62 = arith.constant 0 : index
    %253 = vector.load %arg5[%252, %c0_61, %c0_62] : memref<32x16x128xbf16, #tpu.memory_space<vmem>>, vector<1x16x128xbf16>
    %254 = vector.shape_cast %253 : vector<1x16x128xbf16> to vector<16x128xbf16>
    %255 = arith.extf %254 : vector<16x128xbf16> to vector<16x128xf32>
    %256 = vector.shape_cast %255 : vector<16x128xf32> to vector<1x16x128xf32>
    %257 = vector.broadcast %242 : vector<2x1x128xf32> to vector<2x16x128xf32>
    %258 = vector.broadcast %251 : vector<1x16x128xf32> to vector<2x16x128xf32>
    %259 = arith.mulf %257, %258 : vector<2x16x128xf32>
    %260 = arith.addf %230, %259 : vector<2x16x128xf32>
    %261 = vector.broadcast %246 : vector<2x1x128xf32> to vector<2x16x128xf32>
    %262 = vector.broadcast %256 : vector<1x16x128xf32> to vector<2x16x128xf32>
    %263 = arith.mulf %261, %262 : vector<2x16x128xf32>
    %264 = arith.subf %260, %263 : vector<2x16x128xf32>
    %265 = vector.broadcast %242 : vector<2x1x128xf32> to vector<2x16x128xf32>
    %266 = vector.broadcast %256 : vector<1x16x128xf32> to vector<2x16x128xf32>
    %267 = arith.mulf %265, %266 : vector<2x16x128xf32>
    %268 = arith.addf %238, %267 : vector<2x16x128xf32>
    %269 = vector.broadcast %246 : vector<2x1x128xf32> to vector<2x16x128xf32>
    %270 = vector.broadcast %251 : vector<1x16x128xf32> to vector<2x16x128xf32>
    %271 = arith.mulf %269, %270 : vector<2x16x128xf32>
    %272 = arith.addf %268, %271 : vector<2x16x128xf32>
    %c8_i32 = arith.constant 8 : i32
    %273 = arith.index_cast %c8_i32 : i32 to index
    %c0_63 = arith.constant 0 : index
    %c0_64 = arith.constant 0 : index
    %274 = vector.load %arg2[%273, %c0_63, %c0_64] : memref<32x2x128xf32, #tpu.memory_space<vmem>>, vector<1x2x128xf32>
    %275 = vector.shape_cast %274 : vector<1x2x128xf32> to vector<2x128xf32>
    %276 = vector.shape_cast %275 : vector<2x128xf32> to vector<2x1x128xf32>
    %277 = arith.index_cast %c8_i32 : i32 to index
    %c0_65 = arith.constant 0 : index
    %c0_66 = arith.constant 0 : index
    %278 = vector.load %arg3[%277, %c0_65, %c0_66] : memref<32x2x128xf32, #tpu.memory_space<vmem>>, vector<1x2x128xf32>
    %279 = vector.shape_cast %278 : vector<1x2x128xf32> to vector<2x128xf32>
    %280 = vector.shape_cast %279 : vector<2x128xf32> to vector<2x1x128xf32>
    %281 = arith.index_cast %c8_i32 : i32 to index
    %c0_67 = arith.constant 0 : index
    %c0_68 = arith.constant 0 : index
    %282 = vector.load %arg4[%281, %c0_67, %c0_68] : memref<32x16x128xbf16, #tpu.memory_space<vmem>>, vector<1x16x128xbf16>
    %283 = vector.shape_cast %282 : vector<1x16x128xbf16> to vector<16x128xbf16>
    %284 = arith.extf %283 : vector<16x128xbf16> to vector<16x128xf32>
    %285 = vector.shape_cast %284 : vector<16x128xf32> to vector<1x16x128xf32>
    %286 = arith.index_cast %c8_i32 : i32 to index
    %c0_69 = arith.constant 0 : index
    %c0_70 = arith.constant 0 : index
    %287 = vector.load %arg5[%286, %c0_69, %c0_70] : memref<32x16x128xbf16, #tpu.memory_space<vmem>>, vector<1x16x128xbf16>
    %288 = vector.shape_cast %287 : vector<1x16x128xbf16> to vector<16x128xbf16>
    %289 = arith.extf %288 : vector<16x128xbf16> to vector<16x128xf32>
    %290 = vector.shape_cast %289 : vector<16x128xf32> to vector<1x16x128xf32>
    %291 = vector.broadcast %276 : vector<2x1x128xf32> to vector<2x16x128xf32>
    %292 = vector.broadcast %285 : vector<1x16x128xf32> to vector<2x16x128xf32>
    %293 = arith.mulf %291, %292 : vector<2x16x128xf32>
    %294 = arith.addf %264, %293 : vector<2x16x128xf32>
    %295 = vector.broadcast %280 : vector<2x1x128xf32> to vector<2x16x128xf32>
    %296 = vector.broadcast %290 : vector<1x16x128xf32> to vector<2x16x128xf32>
    %297 = arith.mulf %295, %296 : vector<2x16x128xf32>
    %298 = arith.subf %294, %297 : vector<2x16x128xf32>
    %299 = vector.broadcast %276 : vector<2x1x128xf32> to vector<2x16x128xf32>
    %300 = vector.broadcast %290 : vector<1x16x128xf32> to vector<2x16x128xf32>
    %301 = arith.mulf %299, %300 : vector<2x16x128xf32>
    %302 = arith.addf %272, %301 : vector<2x16x128xf32>
    %303 = vector.broadcast %280 : vector<2x1x128xf32> to vector<2x16x128xf32>
    %304 = vector.broadcast %285 : vector<1x16x128xf32> to vector<2x16x128xf32>
    %305 = arith.mulf %303, %304 : vector<2x16x128xf32>
    %306 = arith.addf %302, %305 : vector<2x16x128xf32>
    %c9_i32 = arith.constant 9 : i32
    %307 = arith.index_cast %c9_i32 : i32 to index
    %c0_71 = arith.constant 0 : index
    %c0_72 = arith.constant 0 : index
    %308 = vector.load %arg2[%307, %c0_71, %c0_72] : memref<32x2x128xf32, #tpu.memory_space<vmem>>, vector<1x2x128xf32>
    %309 = vector.shape_cast %308 : vector<1x2x128xf32> to vector<2x128xf32>
    %310 = vector.shape_cast %309 : vector<2x128xf32> to vector<2x1x128xf32>
    %311 = arith.index_cast %c9_i32 : i32 to index
    %c0_73 = arith.constant 0 : index
    %c0_74 = arith.constant 0 : index
    %312 = vector.load %arg3[%311, %c0_73, %c0_74] : memref<32x2x128xf32, #tpu.memory_space<vmem>>, vector<1x2x128xf32>
    %313 = vector.shape_cast %312 : vector<1x2x128xf32> to vector<2x128xf32>
    %314 = vector.shape_cast %313 : vector<2x128xf32> to vector<2x1x128xf32>
    %315 = arith.index_cast %c9_i32 : i32 to index
    %c0_75 = arith.constant 0 : index
    %c0_76 = arith.constant 0 : index
    %316 = vector.load %arg4[%315, %c0_75, %c0_76] : memref<32x16x128xbf16, #tpu.memory_space<vmem>>, vector<1x16x128xbf16>
    %317 = vector.shape_cast %316 : vector<1x16x128xbf16> to vector<16x128xbf16>
    %318 = arith.extf %317 : vector<16x128xbf16> to vector<16x128xf32>
    %319 = vector.shape_cast %318 : vector<16x128xf32> to vector<1x16x128xf32>
    %320 = arith.index_cast %c9_i32 : i32 to index
    %c0_77 = arith.constant 0 : index
    %c0_78 = arith.constant 0 : index
    %321 = vector.load %arg5[%320, %c0_77, %c0_78] : memref<32x16x128xbf16, #tpu.memory_space<vmem>>, vector<1x16x128xbf16>
    %322 = vector.shape_cast %321 : vector<1x16x128xbf16> to vector<16x128xbf16>
    %323 = arith.extf %322 : vector<16x128xbf16> to vector<16x128xf32>
    %324 = vector.shape_cast %323 : vector<16x128xf32> to vector<1x16x128xf32>
    %325 = vector.broadcast %310 : vector<2x1x128xf32> to vector<2x16x128xf32>
    %326 = vector.broadcast %319 : vector<1x16x128xf32> to vector<2x16x128xf32>
    %327 = arith.mulf %325, %326 : vector<2x16x128xf32>
    %328 = arith.addf %298, %327 : vector<2x16x128xf32>
    %329 = vector.broadcast %314 : vector<2x1x128xf32> to vector<2x16x128xf32>
    %330 = vector.broadcast %324 : vector<1x16x128xf32> to vector<2x16x128xf32>
    %331 = arith.mulf %329, %330 : vector<2x16x128xf32>
    %332 = arith.subf %328, %331 : vector<2x16x128xf32>
    %333 = vector.broadcast %310 : vector<2x1x128xf32> to vector<2x16x128xf32>
    %334 = vector.broadcast %324 : vector<1x16x128xf32> to vector<2x16x128xf32>
    %335 = arith.mulf %333, %334 : vector<2x16x128xf32>
    %336 = arith.addf %306, %335 : vector<2x16x128xf32>
    %337 = vector.broadcast %314 : vector<2x1x128xf32> to vector<2x16x128xf32>
    %338 = vector.broadcast %319 : vector<1x16x128xf32> to vector<2x16x128xf32>
    %339 = arith.mulf %337, %338 : vector<2x16x128xf32>
    %340 = arith.addf %336, %339 : vector<2x16x128xf32>
    %c10_i32 = arith.constant 10 : i32
    %341 = arith.index_cast %c10_i32 : i32 to index
    %c0_79 = arith.constant 0 : index
    %c0_80 = arith.constant 0 : index
    %342 = vector.load %arg2[%341, %c0_79, %c0_80] : memref<32x2x128xf32, #tpu.memory_space<vmem>>, vector<1x2x128xf32>
    %343 = vector.shape_cast %342 : vector<1x2x128xf32> to vector<2x128xf32>
    %344 = vector.shape_cast %343 : vector<2x128xf32> to vector<2x1x128xf32>
    %345 = arith.index_cast %c10_i32 : i32 to index
    %c0_81 = arith.constant 0 : index
    %c0_82 = arith.constant 0 : index
    %346 = vector.load %arg3[%345, %c0_81, %c0_82] : memref<32x2x128xf32, #tpu.memory_space<vmem>>, vector<1x2x128xf32>
    %347 = vector.shape_cast %346 : vector<1x2x128xf32> to vector<2x128xf32>
    %348 = vector.shape_cast %347 : vector<2x128xf32> to vector<2x1x128xf32>
    %349 = arith.index_cast %c10_i32 : i32 to index
    %c0_83 = arith.constant 0 : index
    %c0_84 = arith.constant 0 : index
    %350 = vector.load %arg4[%349, %c0_83, %c0_84] : memref<32x16x128xbf16, #tpu.memory_space<vmem>>, vector<1x16x128xbf16>
    %351 = vector.shape_cast %350 : vector<1x16x128xbf16> to vector<16x128xbf16>
    %352 = arith.extf %351 : vector<16x128xbf16> to vector<16x128xf32>
    %353 = vector.shape_cast %352 : vector<16x128xf32> to vector<1x16x128xf32>
    %354 = arith.index_cast %c10_i32 : i32 to index
    %c0_85 = arith.constant 0 : index
    %c0_86 = arith.constant 0 : index
    %355 = vector.load %arg5[%354, %c0_85, %c0_86] : memref<32x16x128xbf16, #tpu.memory_space<vmem>>, vector<1x16x128xbf16>
    %356 = vector.shape_cast %355 : vector<1x16x128xbf16> to vector<16x128xbf16>
    %357 = arith.extf %356 : vector<16x128xbf16> to vector<16x128xf32>
    %358 = vector.shape_cast %357 : vector<16x128xf32> to vector<1x16x128xf32>
    %359 = vector.broadcast %344 : vector<2x1x128xf32> to vector<2x16x128xf32>
    %360 = vector.broadcast %353 : vector<1x16x128xf32> to vector<2x16x128xf32>
    %361 = arith.mulf %359, %360 : vector<2x16x128xf32>
    %362 = arith.addf %332, %361 : vector<2x16x128xf32>
    %363 = vector.broadcast %348 : vector<2x1x128xf32> to vector<2x16x128xf32>
    %364 = vector.broadcast %358 : vector<1x16x128xf32> to vector<2x16x128xf32>
    %365 = arith.mulf %363, %364 : vector<2x16x128xf32>
    %366 = arith.subf %362, %365 : vector<2x16x128xf32>
    %367 = vector.broadcast %344 : vector<2x1x128xf32> to vector<2x16x128xf32>
    %368 = vector.broadcast %358 : vector<1x16x128xf32> to vector<2x16x128xf32>
    %369 = arith.mulf %367, %368 : vector<2x16x128xf32>
    %370 = arith.addf %340, %369 : vector<2x16x128xf32>
    %371 = vector.broadcast %348 : vector<2x1x128xf32> to vector<2x16x128xf32>
    %372 = vector.broadcast %353 : vector<1x16x128xf32> to vector<2x16x128xf32>
    %373 = arith.mulf %371, %372 : vector<2x16x128xf32>
    %374 = arith.addf %370, %373 : vector<2x16x128xf32>
    %c11_i32 = arith.constant 11 : i32
    %375 = arith.index_cast %c11_i32 : i32 to index
    %c0_87 = arith.constant 0 : index
    %c0_88 = arith.constant 0 : index
    %376 = vector.load %arg2[%375, %c0_87, %c0_88] : memref<32x2x128xf32, #tpu.memory_space<vmem>>, vector<1x2x128xf32>
    %377 = vector.shape_cast %376 : vector<1x2x128xf32> to vector<2x128xf32>
    %378 = vector.shape_cast %377 : vector<2x128xf32> to vector<2x1x128xf32>
    %379 = arith.index_cast %c11_i32 : i32 to index
    %c0_89 = arith.constant 0 : index
    %c0_90 = arith.constant 0 : index
    %380 = vector.load %arg3[%379, %c0_89, %c0_90] : memref<32x2x128xf32, #tpu.memory_space<vmem>>, vector<1x2x128xf32>
    %381 = vector.shape_cast %380 : vector<1x2x128xf32> to vector<2x128xf32>
    %382 = vector.shape_cast %381 : vector<2x128xf32> to vector<2x1x128xf32>
    %383 = arith.index_cast %c11_i32 : i32 to index
    %c0_91 = arith.constant 0 : index
    %c0_92 = arith.constant 0 : index
    %384 = vector.load %arg4[%383, %c0_91, %c0_92] : memref<32x16x128xbf16, #tpu.memory_space<vmem>>, vector<1x16x128xbf16>
    %385 = vector.shape_cast %384 : vector<1x16x128xbf16> to vector<16x128xbf16>
    %386 = arith.extf %385 : vector<16x128xbf16> to vector<16x128xf32>
    %387 = vector.shape_cast %386 : vector<16x128xf32> to vector<1x16x128xf32>
    %388 = arith.index_cast %c11_i32 : i32 to index
    %c0_93 = arith.constant 0 : index
    %c0_94 = arith.constant 0 : index
    %389 = vector.load %arg5[%388, %c0_93, %c0_94] : memref<32x16x128xbf16, #tpu.memory_space<vmem>>, vector<1x16x128xbf16>
    %390 = vector.shape_cast %389 : vector<1x16x128xbf16> to vector<16x128xbf16>
    %391 = arith.extf %390 : vector<16x128xbf16> to vector<16x128xf32>
    %392 = vector.shape_cast %391 : vector<16x128xf32> to vector<1x16x128xf32>
    %393 = vector.broadcast %378 : vector<2x1x128xf32> to vector<2x16x128xf32>
    %394 = vector.broadcast %387 : vector<1x16x128xf32> to vector<2x16x128xf32>
    %395 = arith.mulf %393, %394 : vector<2x16x128xf32>
    %396 = arith.addf %366, %395 : vector<2x16x128xf32>
    %397 = vector.broadcast %382 : vector<2x1x128xf32> to vector<2x16x128xf32>
    %398 = vector.broadcast %392 : vector<1x16x128xf32> to vector<2x16x128xf32>
    %399 = arith.mulf %397, %398 : vector<2x16x128xf32>
    %400 = arith.subf %396, %399 : vector<2x16x128xf32>
    %401 = vector.broadcast %378 : vector<2x1x128xf32> to vector<2x16x128xf32>
    %402 = vector.broadcast %392 : vector<1x16x128xf32> to vector<2x16x128xf32>
    %403 = arith.mulf %401, %402 : vector<2x16x128xf32>
    %404 = arith.addf %374, %403 : vector<2x16x128xf32>
    %405 = vector.broadcast %382 : vector<2x1x128xf32> to vector<2x16x128xf32>
    %406 = vector.broadcast %387 : vector<1x16x128xf32> to vector<2x16x128xf32>
    %407 = arith.mulf %405, %406 : vector<2x16x128xf32>
    %408 = arith.addf %404, %407 : vector<2x16x128xf32>
    %c12_i32 = arith.constant 12 : i32
    %409 = arith.index_cast %c12_i32 : i32 to index
    %c0_95 = arith.constant 0 : index
    %c0_96 = arith.constant 0 : index
    %410 = vector.load %arg2[%409, %c0_95, %c0_96] : memref<32x2x128xf32, #tpu.memory_space<vmem>>, vector<1x2x128xf32>
    %411 = vector.shape_cast %410 : vector<1x2x128xf32> to vector<2x128xf32>
    %412 = vector.shape_cast %411 : vector<2x128xf32> to vector<2x1x128xf32>
    %413 = arith.index_cast %c12_i32 : i32 to index
    %c0_97 = arith.constant 0 : index
    %c0_98 = arith.constant 0 : index
    %414 = vector.load %arg3[%413, %c0_97, %c0_98] : memref<32x2x128xf32, #tpu.memory_space<vmem>>, vector<1x2x128xf32>
    %415 = vector.shape_cast %414 : vector<1x2x128xf32> to vector<2x128xf32>
    %416 = vector.shape_cast %415 : vector<2x128xf32> to vector<2x1x128xf32>
    %417 = arith.index_cast %c12_i32 : i32 to index
    %c0_99 = arith.constant 0 : index
    %c0_100 = arith.constant 0 : index
    %418 = vector.load %arg4[%417, %c0_99, %c0_100] : memref<32x16x128xbf16, #tpu.memory_space<vmem>>, vector<1x16x128xbf16>
    %419 = vector.shape_cast %418 : vector<1x16x128xbf16> to vector<16x128xbf16>
    %420 = arith.extf %419 : vector<16x128xbf16> to vector<16x128xf32>
    %421 = vector.shape_cast %420 : vector<16x128xf32> to vector<1x16x128xf32>
    %422 = arith.index_cast %c12_i32 : i32 to index
    %c0_101 = arith.constant 0 : index
    %c0_102 = arith.constant 0 : index
    %423 = vector.load %arg5[%422, %c0_101, %c0_102] : memref<32x16x128xbf16, #tpu.memory_space<vmem>>, vector<1x16x128xbf16>
    %424 = vector.shape_cast %423 : vector<1x16x128xbf16> to vector<16x128xbf16>
    %425 = arith.extf %424 : vector<16x128xbf16> to vector<16x128xf32>
    %426 = vector.shape_cast %425 : vector<16x128xf32> to vector<1x16x128xf32>
    %427 = vector.broadcast %412 : vector<2x1x128xf32> to vector<2x16x128xf32>
    %428 = vector.broadcast %421 : vector<1x16x128xf32> to vector<2x16x128xf32>
    %429 = arith.mulf %427, %428 : vector<2x16x128xf32>
    %430 = arith.addf %400, %429 : vector<2x16x128xf32>
    %431 = vector.broadcast %416 : vector<2x1x128xf32> to vector<2x16x128xf32>
    %432 = vector.broadcast %426 : vector<1x16x128xf32> to vector<2x16x128xf32>
    %433 = arith.mulf %431, %432 : vector<2x16x128xf32>
    %434 = arith.subf %430, %433 : vector<2x16x128xf32>
    %435 = vector.broadcast %412 : vector<2x1x128xf32> to vector<2x16x128xf32>
    %436 = vector.broadcast %426 : vector<1x16x128xf32> to vector<2x16x128xf32>
    %437 = arith.mulf %435, %436 : vector<2x16x128xf32>
    %438 = arith.addf %408, %437 : vector<2x16x128xf32>
    %439 = vector.broadcast %416 : vector<2x1x128xf32> to vector<2x16x128xf32>
    %440 = vector.broadcast %421 : vector<1x16x128xf32> to vector<2x16x128xf32>
    %441 = arith.mulf %439, %440 : vector<2x16x128xf32>
    %442 = arith.addf %438, %441 : vector<2x16x128xf32>
    %c13_i32 = arith.constant 13 : i32
    %443 = arith.index_cast %c13_i32 : i32 to index
    %c0_103 = arith.constant 0 : index
    %c0_104 = arith.constant 0 : index
    %444 = vector.load %arg2[%443, %c0_103, %c0_104] : memref<32x2x128xf32, #tpu.memory_space<vmem>>, vector<1x2x128xf32>
    %445 = vector.shape_cast %444 : vector<1x2x128xf32> to vector<2x128xf32>
    %446 = vector.shape_cast %445 : vector<2x128xf32> to vector<2x1x128xf32>
    %447 = arith.index_cast %c13_i32 : i32 to index
    %c0_105 = arith.constant 0 : index
    %c0_106 = arith.constant 0 : index
    %448 = vector.load %arg3[%447, %c0_105, %c0_106] : memref<32x2x128xf32, #tpu.memory_space<vmem>>, vector<1x2x128xf32>
    %449 = vector.shape_cast %448 : vector<1x2x128xf32> to vector<2x128xf32>
    %450 = vector.shape_cast %449 : vector<2x128xf32> to vector<2x1x128xf32>
    %451 = arith.index_cast %c13_i32 : i32 to index
    %c0_107 = arith.constant 0 : index
    %c0_108 = arith.constant 0 : index
    %452 = vector.load %arg4[%451, %c0_107, %c0_108] : memref<32x16x128xbf16, #tpu.memory_space<vmem>>, vector<1x16x128xbf16>
    %453 = vector.shape_cast %452 : vector<1x16x128xbf16> to vector<16x128xbf16>
    %454 = arith.extf %453 : vector<16x128xbf16> to vector<16x128xf32>
    %455 = vector.shape_cast %454 : vector<16x128xf32> to vector<1x16x128xf32>
    %456 = arith.index_cast %c13_i32 : i32 to index
    %c0_109 = arith.constant 0 : index
    %c0_110 = arith.constant 0 : index
    %457 = vector.load %arg5[%456, %c0_109, %c0_110] : memref<32x16x128xbf16, #tpu.memory_space<vmem>>, vector<1x16x128xbf16>
    %458 = vector.shape_cast %457 : vector<1x16x128xbf16> to vector<16x128xbf16>
    %459 = arith.extf %458 : vector<16x128xbf16> to vector<16x128xf32>
    %460 = vector.shape_cast %459 : vector<16x128xf32> to vector<1x16x128xf32>
    %461 = vector.broadcast %446 : vector<2x1x128xf32> to vector<2x16x128xf32>
    %462 = vector.broadcast %455 : vector<1x16x128xf32> to vector<2x16x128xf32>
    %463 = arith.mulf %461, %462 : vector<2x16x128xf32>
    %464 = arith.addf %434, %463 : vector<2x16x128xf32>
    %465 = vector.broadcast %450 : vector<2x1x128xf32> to vector<2x16x128xf32>
    %466 = vector.broadcast %460 : vector<1x16x128xf32> to vector<2x16x128xf32>
    %467 = arith.mulf %465, %466 : vector<2x16x128xf32>
    %468 = arith.subf %464, %467 : vector<2x16x128xf32>
    %469 = vector.broadcast %446 : vector<2x1x128xf32> to vector<2x16x128xf32>
    %470 = vector.broadcast %460 : vector<1x16x128xf32> to vector<2x16x128xf32>
    %471 = arith.mulf %469, %470 : vector<2x16x128xf32>
    %472 = arith.addf %442, %471 : vector<2x16x128xf32>
    %473 = vector.broadcast %450 : vector<2x1x128xf32> to vector<2x16x128xf32>
    %474 = vector.broadcast %455 : vector<1x16x128xf32> to vector<2x16x128xf32>
    %475 = arith.mulf %473, %474 : vector<2x16x128xf32>
    %476 = arith.addf %472, %475 : vector<2x16x128xf32>
    %c14_i32 = arith.constant 14 : i32
    %477 = arith.index_cast %c14_i32 : i32 to index
    %c0_111 = arith.constant 0 : index
    %c0_112 = arith.constant 0 : index
    %478 = vector.load %arg2[%477, %c0_111, %c0_112] : memref<32x2x128xf32, #tpu.memory_space<vmem>>, vector<1x2x128xf32>
    %479 = vector.shape_cast %478 : vector<1x2x128xf32> to vector<2x128xf32>
    %480 = vector.shape_cast %479 : vector<2x128xf32> to vector<2x1x128xf32>
    %481 = arith.index_cast %c14_i32 : i32 to index
    %c0_113 = arith.constant 0 : index
    %c0_114 = arith.constant 0 : index
    %482 = vector.load %arg3[%481, %c0_113, %c0_114] : memref<32x2x128xf32, #tpu.memory_space<vmem>>, vector<1x2x128xf32>
    %483 = vector.shape_cast %482 : vector<1x2x128xf32> to vector<2x128xf32>
    %484 = vector.shape_cast %483 : vector<2x128xf32> to vector<2x1x128xf32>
    %485 = arith.index_cast %c14_i32 : i32 to index
    %c0_115 = arith.constant 0 : index
    %c0_116 = arith.constant 0 : index
    %486 = vector.load %arg4[%485, %c0_115, %c0_116] : memref<32x16x128xbf16, #tpu.memory_space<vmem>>, vector<1x16x128xbf16>
    %487 = vector.shape_cast %486 : vector<1x16x128xbf16> to vector<16x128xbf16>
    %488 = arith.extf %487 : vector<16x128xbf16> to vector<16x128xf32>
    %489 = vector.shape_cast %488 : vector<16x128xf32> to vector<1x16x128xf32>
    %490 = arith.index_cast %c14_i32 : i32 to index
    %c0_117 = arith.constant 0 : index
    %c0_118 = arith.constant 0 : index
    %491 = vector.load %arg5[%490, %c0_117, %c0_118] : memref<32x16x128xbf16, #tpu.memory_space<vmem>>, vector<1x16x128xbf16>
    %492 = vector.shape_cast %491 : vector<1x16x128xbf16> to vector<16x128xbf16>
    %493 = arith.extf %492 : vector<16x128xbf16> to vector<16x128xf32>
    %494 = vector.shape_cast %493 : vector<16x128xf32> to vector<1x16x128xf32>
    %495 = vector.broadcast %480 : vector<2x1x128xf32> to vector<2x16x128xf32>
    %496 = vector.broadcast %489 : vector<1x16x128xf32> to vector<2x16x128xf32>
    %497 = arith.mulf %495, %496 : vector<2x16x128xf32>
    %498 = arith.addf %468, %497 : vector<2x16x128xf32>
    %499 = vector.broadcast %484 : vector<2x1x128xf32> to vector<2x16x128xf32>
    %500 = vector.broadcast %494 : vector<1x16x128xf32> to vector<2x16x128xf32>
    %501 = arith.mulf %499, %500 : vector<2x16x128xf32>
    %502 = arith.subf %498, %501 : vector<2x16x128xf32>
    %503 = vector.broadcast %480 : vector<2x1x128xf32> to vector<2x16x128xf32>
    %504 = vector.broadcast %494 : vector<1x16x128xf32> to vector<2x16x128xf32>
    %505 = arith.mulf %503, %504 : vector<2x16x128xf32>
    %506 = arith.addf %476, %505 : vector<2x16x128xf32>
    %507 = vector.broadcast %484 : vector<2x1x128xf32> to vector<2x16x128xf32>
    %508 = vector.broadcast %489 : vector<1x16x128xf32> to vector<2x16x128xf32>
    %509 = arith.mulf %507, %508 : vector<2x16x128xf32>
    %510 = arith.addf %506, %509 : vector<2x16x128xf32>
    %c15_i32 = arith.constant 15 : i32
    %511 = arith.index_cast %c15_i32 : i32 to index
    %c0_119 = arith.constant 0 : index
    %c0_120 = arith.constant 0 : index
    %512 = vector.load %arg2[%511, %c0_119, %c0_120] : memref<32x2x128xf32, #tpu.memory_space<vmem>>, vector<1x2x128xf32>
    %513 = vector.shape_cast %512 : vector<1x2x128xf32> to vector<2x128xf32>
    %514 = vector.shape_cast %513 : vector<2x128xf32> to vector<2x1x128xf32>
    %515 = arith.index_cast %c15_i32 : i32 to index
    %c0_121 = arith.constant 0 : index
    %c0_122 = arith.constant 0 : index
    %516 = vector.load %arg3[%515, %c0_121, %c0_122] : memref<32x2x128xf32, #tpu.memory_space<vmem>>, vector<1x2x128xf32>
    %517 = vector.shape_cast %516 : vector<1x2x128xf32> to vector<2x128xf32>
    %518 = vector.shape_cast %517 : vector<2x128xf32> to vector<2x1x128xf32>
    %519 = arith.index_cast %c15_i32 : i32 to index
    %c0_123 = arith.constant 0 : index
    %c0_124 = arith.constant 0 : index
    %520 = vector.load %arg4[%519, %c0_123, %c0_124] : memref<32x16x128xbf16, #tpu.memory_space<vmem>>, vector<1x16x128xbf16>
    %521 = vector.shape_cast %520 : vector<1x16x128xbf16> to vector<16x128xbf16>
    %522 = arith.extf %521 : vector<16x128xbf16> to vector<16x128xf32>
    %523 = vector.shape_cast %522 : vector<16x128xf32> to vector<1x16x128xf32>
    %524 = arith.index_cast %c15_i32 : i32 to index
    %c0_125 = arith.constant 0 : index
    %c0_126 = arith.constant 0 : index
    %525 = vector.load %arg5[%524, %c0_125, %c0_126] : memref<32x16x128xbf16, #tpu.memory_space<vmem>>, vector<1x16x128xbf16>
    %526 = vector.shape_cast %525 : vector<1x16x128xbf16> to vector<16x128xbf16>
    %527 = arith.extf %526 : vector<16x128xbf16> to vector<16x128xf32>
    %528 = vector.shape_cast %527 : vector<16x128xf32> to vector<1x16x128xf32>
    %529 = vector.broadcast %514 : vector<2x1x128xf32> to vector<2x16x128xf32>
    %530 = vector.broadcast %523 : vector<1x16x128xf32> to vector<2x16x128xf32>
    %531 = arith.mulf %529, %530 : vector<2x16x128xf32>
    %532 = arith.addf %502, %531 : vector<2x16x128xf32>
    %533 = vector.broadcast %518 : vector<2x1x128xf32> to vector<2x16x128xf32>
    %534 = vector.broadcast %528 : vector<1x16x128xf32> to vector<2x16x128xf32>
    %535 = arith.mulf %533, %534 : vector<2x16x128xf32>
    %536 = arith.subf %532, %535 : vector<2x16x128xf32>
    %537 = vector.broadcast %514 : vector<2x1x128xf32> to vector<2x16x128xf32>
    %538 = vector.broadcast %528 : vector<1x16x128xf32> to vector<2x16x128xf32>
    %539 = arith.mulf %537, %538 : vector<2x16x128xf32>
    %540 = arith.addf %510, %539 : vector<2x16x128xf32>
    %541 = vector.broadcast %518 : vector<2x1x128xf32> to vector<2x16x128xf32>
    %542 = vector.broadcast %523 : vector<1x16x128xf32> to vector<2x16x128xf32>
    %543 = arith.mulf %541, %542 : vector<2x16x128xf32>
    %544 = arith.addf %540, %543 : vector<2x16x128xf32>
    %c16_i32 = arith.constant 16 : i32
    %545 = arith.index_cast %c16_i32 : i32 to index
    %c0_127 = arith.constant 0 : index
    %c0_128 = arith.constant 0 : index
    %546 = vector.load %arg2[%545, %c0_127, %c0_128] : memref<32x2x128xf32, #tpu.memory_space<vmem>>, vector<1x2x128xf32>
    %547 = vector.shape_cast %546 : vector<1x2x128xf32> to vector<2x128xf32>
    %548 = vector.shape_cast %547 : vector<2x128xf32> to vector<2x1x128xf32>
    %549 = arith.index_cast %c16_i32 : i32 to index
    %c0_129 = arith.constant 0 : index
    %c0_130 = arith.constant 0 : index
    %550 = vector.load %arg3[%549, %c0_129, %c0_130] : memref<32x2x128xf32, #tpu.memory_space<vmem>>, vector<1x2x128xf32>
    %551 = vector.shape_cast %550 : vector<1x2x128xf32> to vector<2x128xf32>
    %552 = vector.shape_cast %551 : vector<2x128xf32> to vector<2x1x128xf32>
    %553 = arith.index_cast %c16_i32 : i32 to index
    %c0_131 = arith.constant 0 : index
    %c0_132 = arith.constant 0 : index
    %554 = vector.load %arg4[%553, %c0_131, %c0_132] : memref<32x16x128xbf16, #tpu.memory_space<vmem>>, vector<1x16x128xbf16>
    %555 = vector.shape_cast %554 : vector<1x16x128xbf16> to vector<16x128xbf16>
    %556 = arith.extf %555 : vector<16x128xbf16> to vector<16x128xf32>
    %557 = vector.shape_cast %556 : vector<16x128xf32> to vector<1x16x128xf32>
    %558 = arith.index_cast %c16_i32 : i32 to index
    %c0_133 = arith.constant 0 : index
    %c0_134 = arith.constant 0 : index
    %559 = vector.load %arg5[%558, %c0_133, %c0_134] : memref<32x16x128xbf16, #tpu.memory_space<vmem>>, vector<1x16x128xbf16>
    %560 = vector.shape_cast %559 : vector<1x16x128xbf16> to vector<16x128xbf16>
    %561 = arith.extf %560 : vector<16x128xbf16> to vector<16x128xf32>
    %562 = vector.shape_cast %561 : vector<16x128xf32> to vector<1x16x128xf32>
    %563 = vector.broadcast %548 : vector<2x1x128xf32> to vector<2x16x128xf32>
    %564 = vector.broadcast %557 : vector<1x16x128xf32> to vector<2x16x128xf32>
    %565 = arith.mulf %563, %564 : vector<2x16x128xf32>
    %566 = arith.addf %536, %565 : vector<2x16x128xf32>
    %567 = vector.broadcast %552 : vector<2x1x128xf32> to vector<2x16x128xf32>
    %568 = vector.broadcast %562 : vector<1x16x128xf32> to vector<2x16x128xf32>
    %569 = arith.mulf %567, %568 : vector<2x16x128xf32>
    %570 = arith.subf %566, %569 : vector<2x16x128xf32>
    %571 = vector.broadcast %548 : vector<2x1x128xf32> to vector<2x16x128xf32>
    %572 = vector.broadcast %562 : vector<1x16x128xf32> to vector<2x16x128xf32>
    %573 = arith.mulf %571, %572 : vector<2x16x128xf32>
    %574 = arith.addf %544, %573 : vector<2x16x128xf32>
    %575 = vector.broadcast %552 : vector<2x1x128xf32> to vector<2x16x128xf32>
    %576 = vector.broadcast %557 : vector<1x16x128xf32> to vector<2x16x128xf32>
    %577 = arith.mulf %575, %576 : vector<2x16x128xf32>
    %578 = arith.addf %574, %577 : vector<2x16x128xf32>
    %c17_i32 = arith.constant 17 : i32
    %579 = arith.index_cast %c17_i32 : i32 to index
    %c0_135 = arith.constant 0 : index
    %c0_136 = arith.constant 0 : index
    %580 = vector.load %arg2[%579, %c0_135, %c0_136] : memref<32x2x128xf32, #tpu.memory_space<vmem>>, vector<1x2x128xf32>
    %581 = vector.shape_cast %580 : vector<1x2x128xf32> to vector<2x128xf32>
    %582 = vector.shape_cast %581 : vector<2x128xf32> to vector<2x1x128xf32>
    %583 = arith.index_cast %c17_i32 : i32 to index
    %c0_137 = arith.constant 0 : index
    %c0_138 = arith.constant 0 : index
    %584 = vector.load %arg3[%583, %c0_137, %c0_138] : memref<32x2x128xf32, #tpu.memory_space<vmem>>, vector<1x2x128xf32>
    %585 = vector.shape_cast %584 : vector<1x2x128xf32> to vector<2x128xf32>
    %586 = vector.shape_cast %585 : vector<2x128xf32> to vector<2x1x128xf32>
    %587 = arith.index_cast %c17_i32 : i32 to index
    %c0_139 = arith.constant 0 : index
    %c0_140 = arith.constant 0 : index
    %588 = vector.load %arg4[%587, %c0_139, %c0_140] : memref<32x16x128xbf16, #tpu.memory_space<vmem>>, vector<1x16x128xbf16>
    %589 = vector.shape_cast %588 : vector<1x16x128xbf16> to vector<16x128xbf16>
    %590 = arith.extf %589 : vector<16x128xbf16> to vector<16x128xf32>
    %591 = vector.shape_cast %590 : vector<16x128xf32> to vector<1x16x128xf32>
    %592 = arith.index_cast %c17_i32 : i32 to index
    %c0_141 = arith.constant 0 : index
    %c0_142 = arith.constant 0 : index
    %593 = vector.load %arg5[%592, %c0_141, %c0_142] : memref<32x16x128xbf16, #tpu.memory_space<vmem>>, vector<1x16x128xbf16>
    %594 = vector.shape_cast %593 : vector<1x16x128xbf16> to vector<16x128xbf16>
    %595 = arith.extf %594 : vector<16x128xbf16> to vector<16x128xf32>
    %596 = vector.shape_cast %595 : vector<16x128xf32> to vector<1x16x128xf32>
    %597 = vector.broadcast %582 : vector<2x1x128xf32> to vector<2x16x128xf32>
    %598 = vector.broadcast %591 : vector<1x16x128xf32> to vector<2x16x128xf32>
    %599 = arith.mulf %597, %598 : vector<2x16x128xf32>
    %600 = arith.addf %570, %599 : vector<2x16x128xf32>
    %601 = vector.broadcast %586 : vector<2x1x128xf32> to vector<2x16x128xf32>
    %602 = vector.broadcast %596 : vector<1x16x128xf32> to vector<2x16x128xf32>
    %603 = arith.mulf %601, %602 : vector<2x16x128xf32>
    %604 = arith.subf %600, %603 : vector<2x16x128xf32>
    %605 = vector.broadcast %582 : vector<2x1x128xf32> to vector<2x16x128xf32>
    %606 = vector.broadcast %596 : vector<1x16x128xf32> to vector<2x16x128xf32>
    %607 = arith.mulf %605, %606 : vector<2x16x128xf32>
    %608 = arith.addf %578, %607 : vector<2x16x128xf32>
    %609 = vector.broadcast %586 : vector<2x1x128xf32> to vector<2x16x128xf32>
    %610 = vector.broadcast %591 : vector<1x16x128xf32> to vector<2x16x128xf32>
    %611 = arith.mulf %609, %610 : vector<2x16x128xf32>
    %612 = arith.addf %608, %611 : vector<2x16x128xf32>
    %c18_i32 = arith.constant 18 : i32
    %613 = arith.index_cast %c18_i32 : i32 to index
    %c0_143 = arith.constant 0 : index
    %c0_144 = arith.constant 0 : index
    %614 = vector.load %arg2[%613, %c0_143, %c0_144] : memref<32x2x128xf32, #tpu.memory_space<vmem>>, vector<1x2x128xf32>
    %615 = vector.shape_cast %614 : vector<1x2x128xf32> to vector<2x128xf32>
    %616 = vector.shape_cast %615 : vector<2x128xf32> to vector<2x1x128xf32>
    %617 = arith.index_cast %c18_i32 : i32 to index
    %c0_145 = arith.constant 0 : index
    %c0_146 = arith.constant 0 : index
    %618 = vector.load %arg3[%617, %c0_145, %c0_146] : memref<32x2x128xf32, #tpu.memory_space<vmem>>, vector<1x2x128xf32>
    %619 = vector.shape_cast %618 : vector<1x2x128xf32> to vector<2x128xf32>
    %620 = vector.shape_cast %619 : vector<2x128xf32> to vector<2x1x128xf32>
    %621 = arith.index_cast %c18_i32 : i32 to index
    %c0_147 = arith.constant 0 : index
    %c0_148 = arith.constant 0 : index
    %622 = vector.load %arg4[%621, %c0_147, %c0_148] : memref<32x16x128xbf16, #tpu.memory_space<vmem>>, vector<1x16x128xbf16>
    %623 = vector.shape_cast %622 : vector<1x16x128xbf16> to vector<16x128xbf16>
    %624 = arith.extf %623 : vector<16x128xbf16> to vector<16x128xf32>
    %625 = vector.shape_cast %624 : vector<16x128xf32> to vector<1x16x128xf32>
    %626 = arith.index_cast %c18_i32 : i32 to index
    %c0_149 = arith.constant 0 : index
    %c0_150 = arith.constant 0 : index
    %627 = vector.load %arg5[%626, %c0_149, %c0_150] : memref<32x16x128xbf16, #tpu.memory_space<vmem>>, vector<1x16x128xbf16>
    %628 = vector.shape_cast %627 : vector<1x16x128xbf16> to vector<16x128xbf16>
    %629 = arith.extf %628 : vector<16x128xbf16> to vector<16x128xf32>
    %630 = vector.shape_cast %629 : vector<16x128xf32> to vector<1x16x128xf32>
    %631 = vector.broadcast %616 : vector<2x1x128xf32> to vector<2x16x128xf32>
    %632 = vector.broadcast %625 : vector<1x16x128xf32> to vector<2x16x128xf32>
    %633 = arith.mulf %631, %632 : vector<2x16x128xf32>
    %634 = arith.addf %604, %633 : vector<2x16x128xf32>
    %635 = vector.broadcast %620 : vector<2x1x128xf32> to vector<2x16x128xf32>
    %636 = vector.broadcast %630 : vector<1x16x128xf32> to vector<2x16x128xf32>
    %637 = arith.mulf %635, %636 : vector<2x16x128xf32>
    %638 = arith.subf %634, %637 : vector<2x16x128xf32>
    %639 = vector.broadcast %616 : vector<2x1x128xf32> to vector<2x16x128xf32>
    %640 = vector.broadcast %630 : vector<1x16x128xf32> to vector<2x16x128xf32>
    %641 = arith.mulf %639, %640 : vector<2x16x128xf32>
    %642 = arith.addf %612, %641 : vector<2x16x128xf32>
    %643 = vector.broadcast %620 : vector<2x1x128xf32> to vector<2x16x128xf32>
    %644 = vector.broadcast %625 : vector<1x16x128xf32> to vector<2x16x128xf32>
    %645 = arith.mulf %643, %644 : vector<2x16x128xf32>
    %646 = arith.addf %642, %645 : vector<2x16x128xf32>
    %c19_i32 = arith.constant 19 : i32
    %647 = arith.index_cast %c19_i32 : i32 to index
    %c0_151 = arith.constant 0 : index
    %c0_152 = arith.constant 0 : index
    %648 = vector.load %arg2[%647, %c0_151, %c0_152] : memref<32x2x128xf32, #tpu.memory_space<vmem>>, vector<1x2x128xf32>
    %649 = vector.shape_cast %648 : vector<1x2x128xf32> to vector<2x128xf32>
    %650 = vector.shape_cast %649 : vector<2x128xf32> to vector<2x1x128xf32>
    %651 = arith.index_cast %c19_i32 : i32 to index
    %c0_153 = arith.constant 0 : index
    %c0_154 = arith.constant 0 : index
    %652 = vector.load %arg3[%651, %c0_153, %c0_154] : memref<32x2x128xf32, #tpu.memory_space<vmem>>, vector<1x2x128xf32>
    %653 = vector.shape_cast %652 : vector<1x2x128xf32> to vector<2x128xf32>
    %654 = vector.shape_cast %653 : vector<2x128xf32> to vector<2x1x128xf32>
    %655 = arith.index_cast %c19_i32 : i32 to index
    %c0_155 = arith.constant 0 : index
    %c0_156 = arith.constant 0 : index
    %656 = vector.load %arg4[%655, %c0_155, %c0_156] : memref<32x16x128xbf16, #tpu.memory_space<vmem>>, vector<1x16x128xbf16>
    %657 = vector.shape_cast %656 : vector<1x16x128xbf16> to vector<16x128xbf16>
    %658 = arith.extf %657 : vector<16x128xbf16> to vector<16x128xf32>
    %659 = vector.shape_cast %658 : vector<16x128xf32> to vector<1x16x128xf32>
    %660 = arith.index_cast %c19_i32 : i32 to index
    %c0_157 = arith.constant 0 : index
    %c0_158 = arith.constant 0 : index
    %661 = vector.load %arg5[%660, %c0_157, %c0_158] : memref<32x16x128xbf16, #tpu.memory_space<vmem>>, vector<1x16x128xbf16>
    %662 = vector.shape_cast %661 : vector<1x16x128xbf16> to vector<16x128xbf16>
    %663 = arith.extf %662 : vector<16x128xbf16> to vector<16x128xf32>
    %664 = vector.shape_cast %663 : vector<16x128xf32> to vector<1x16x128xf32>
    %665 = vector.broadcast %650 : vector<2x1x128xf32> to vector<2x16x128xf32>
    %666 = vector.broadcast %659 : vector<1x16x128xf32> to vector<2x16x128xf32>
    %667 = arith.mulf %665, %666 : vector<2x16x128xf32>
    %668 = arith.addf %638, %667 : vector<2x16x128xf32>
    %669 = vector.broadcast %654 : vector<2x1x128xf32> to vector<2x16x128xf32>
    %670 = vector.broadcast %664 : vector<1x16x128xf32> to vector<2x16x128xf32>
    %671 = arith.mulf %669, %670 : vector<2x16x128xf32>
    %672 = arith.subf %668, %671 : vector<2x16x128xf32>
    %673 = vector.broadcast %650 : vector<2x1x128xf32> to vector<2x16x128xf32>
    %674 = vector.broadcast %664 : vector<1x16x128xf32> to vector<2x16x128xf32>
    %675 = arith.mulf %673, %674 : vector<2x16x128xf32>
    %676 = arith.addf %646, %675 : vector<2x16x128xf32>
    %677 = vector.broadcast %654 : vector<2x1x128xf32> to vector<2x16x128xf32>
    %678 = vector.broadcast %659 : vector<1x16x128xf32> to vector<2x16x128xf32>
    %679 = arith.mulf %677, %678 : vector<2x16x128xf32>
    %680 = arith.addf %676, %679 : vector<2x16x128xf32>
    %c20_i32 = arith.constant 20 : i32
    %681 = arith.index_cast %c20_i32 : i32 to index
    %c0_159 = arith.constant 0 : index
    %c0_160 = arith.constant 0 : index
    %682 = vector.load %arg2[%681, %c0_159, %c0_160] : memref<32x2x128xf32, #tpu.memory_space<vmem>>, vector<1x2x128xf32>
    %683 = vector.shape_cast %682 : vector<1x2x128xf32> to vector<2x128xf32>
    %684 = vector.shape_cast %683 : vector<2x128xf32> to vector<2x1x128xf32>
    %685 = arith.index_cast %c20_i32 : i32 to index
    %c0_161 = arith.constant 0 : index
    %c0_162 = arith.constant 0 : index
    %686 = vector.load %arg3[%685, %c0_161, %c0_162] : memref<32x2x128xf32, #tpu.memory_space<vmem>>, vector<1x2x128xf32>
    %687 = vector.shape_cast %686 : vector<1x2x128xf32> to vector<2x128xf32>
    %688 = vector.shape_cast %687 : vector<2x128xf32> to vector<2x1x128xf32>
    %689 = arith.index_cast %c20_i32 : i32 to index
    %c0_163 = arith.constant 0 : index
    %c0_164 = arith.constant 0 : index
    %690 = vector.load %arg4[%689, %c0_163, %c0_164] : memref<32x16x128xbf16, #tpu.memory_space<vmem>>, vector<1x16x128xbf16>
    %691 = vector.shape_cast %690 : vector<1x16x128xbf16> to vector<16x128xbf16>
    %692 = arith.extf %691 : vector<16x128xbf16> to vector<16x128xf32>
    %693 = vector.shape_cast %692 : vector<16x128xf32> to vector<1x16x128xf32>
    %694 = arith.index_cast %c20_i32 : i32 to index
    %c0_165 = arith.constant 0 : index
    %c0_166 = arith.constant 0 : index
    %695 = vector.load %arg5[%694, %c0_165, %c0_166] : memref<32x16x128xbf16, #tpu.memory_space<vmem>>, vector<1x16x128xbf16>
    %696 = vector.shape_cast %695 : vector<1x16x128xbf16> to vector<16x128xbf16>
    %697 = arith.extf %696 : vector<16x128xbf16> to vector<16x128xf32>
    %698 = vector.shape_cast %697 : vector<16x128xf32> to vector<1x16x128xf32>
    %699 = vector.broadcast %684 : vector<2x1x128xf32> to vector<2x16x128xf32>
    %700 = vector.broadcast %693 : vector<1x16x128xf32> to vector<2x16x128xf32>
    %701 = arith.mulf %699, %700 : vector<2x16x128xf32>
    %702 = arith.addf %672, %701 : vector<2x16x128xf32>
    %703 = vector.broadcast %688 : vector<2x1x128xf32> to vector<2x16x128xf32>
    %704 = vector.broadcast %698 : vector<1x16x128xf32> to vector<2x16x128xf32>
    %705 = arith.mulf %703, %704 : vector<2x16x128xf32>
    %706 = arith.subf %702, %705 : vector<2x16x128xf32>
    %707 = vector.broadcast %684 : vector<2x1x128xf32> to vector<2x16x128xf32>
    %708 = vector.broadcast %698 : vector<1x16x128xf32> to vector<2x16x128xf32>
    %709 = arith.mulf %707, %708 : vector<2x16x128xf32>
    %710 = arith.addf %680, %709 : vector<2x16x128xf32>
    %711 = vector.broadcast %688 : vector<2x1x128xf32> to vector<2x16x128xf32>
    %712 = vector.broadcast %693 : vector<1x16x128xf32> to vector<2x16x128xf32>
    %713 = arith.mulf %711, %712 : vector<2x16x128xf32>
    %714 = arith.addf %710, %713 : vector<2x16x128xf32>
    %c21_i32 = arith.constant 21 : i32
    %715 = arith.index_cast %c21_i32 : i32 to index
    %c0_167 = arith.constant 0 : index
    %c0_168 = arith.constant 0 : index
    %716 = vector.load %arg2[%715, %c0_167, %c0_168] : memref<32x2x128xf32, #tpu.memory_space<vmem>>, vector<1x2x128xf32>
    %717 = vector.shape_cast %716 : vector<1x2x128xf32> to vector<2x128xf32>
    %718 = vector.shape_cast %717 : vector<2x128xf32> to vector<2x1x128xf32>
    %719 = arith.index_cast %c21_i32 : i32 to index
    %c0_169 = arith.constant 0 : index
    %c0_170 = arith.constant 0 : index
    %720 = vector.load %arg3[%719, %c0_169, %c0_170] : memref<32x2x128xf32, #tpu.memory_space<vmem>>, vector<1x2x128xf32>
    %721 = vector.shape_cast %720 : vector<1x2x128xf32> to vector<2x128xf32>
    %722 = vector.shape_cast %721 : vector<2x128xf32> to vector<2x1x128xf32>
    %723 = arith.index_cast %c21_i32 : i32 to index
    %c0_171 = arith.constant 0 : index
    %c0_172 = arith.constant 0 : index
    %724 = vector.load %arg4[%723, %c0_171, %c0_172] : memref<32x16x128xbf16, #tpu.memory_space<vmem>>, vector<1x16x128xbf16>
    %725 = vector.shape_cast %724 : vector<1x16x128xbf16> to vector<16x128xbf16>
    %726 = arith.extf %725 : vector<16x128xbf16> to vector<16x128xf32>
    %727 = vector.shape_cast %726 : vector<16x128xf32> to vector<1x16x128xf32>
    %728 = arith.index_cast %c21_i32 : i32 to index
    %c0_173 = arith.constant 0 : index
    %c0_174 = arith.constant 0 : index
    %729 = vector.load %arg5[%728, %c0_173, %c0_174] : memref<32x16x128xbf16, #tpu.memory_space<vmem>>, vector<1x16x128xbf16>
    %730 = vector.shape_cast %729 : vector<1x16x128xbf16> to vector<16x128xbf16>
    %731 = arith.extf %730 : vector<16x128xbf16> to vector<16x128xf32>
    %732 = vector.shape_cast %731 : vector<16x128xf32> to vector<1x16x128xf32>
    %733 = vector.broadcast %718 : vector<2x1x128xf32> to vector<2x16x128xf32>
    %734 = vector.broadcast %727 : vector<1x16x128xf32> to vector<2x16x128xf32>
    %735 = arith.mulf %733, %734 : vector<2x16x128xf32>
    %736 = arith.addf %706, %735 : vector<2x16x128xf32>
    %737 = vector.broadcast %722 : vector<2x1x128xf32> to vector<2x16x128xf32>
    %738 = vector.broadcast %732 : vector<1x16x128xf32> to vector<2x16x128xf32>
    %739 = arith.mulf %737, %738 : vector<2x16x128xf32>
    %740 = arith.subf %736, %739 : vector<2x16x128xf32>
    %741 = vector.broadcast %718 : vector<2x1x128xf32> to vector<2x16x128xf32>
    %742 = vector.broadcast %732 : vector<1x16x128xf32> to vector<2x16x128xf32>
    %743 = arith.mulf %741, %742 : vector<2x16x128xf32>
    %744 = arith.addf %714, %743 : vector<2x16x128xf32>
    %745 = vector.broadcast %722 : vector<2x1x128xf32> to vector<2x16x128xf32>
    %746 = vector.broadcast %727 : vector<1x16x128xf32> to vector<2x16x128xf32>
    %747 = arith.mulf %745, %746 : vector<2x16x128xf32>
    %748 = arith.addf %744, %747 : vector<2x16x128xf32>
    %c22_i32 = arith.constant 22 : i32
    %749 = arith.index_cast %c22_i32 : i32 to index
    %c0_175 = arith.constant 0 : index
    %c0_176 = arith.constant 0 : index
    %750 = vector.load %arg2[%749, %c0_175, %c0_176] : memref<32x2x128xf32, #tpu.memory_space<vmem>>, vector<1x2x128xf32>
    %751 = vector.shape_cast %750 : vector<1x2x128xf32> to vector<2x128xf32>
    %752 = vector.shape_cast %751 : vector<2x128xf32> to vector<2x1x128xf32>
    %753 = arith.index_cast %c22_i32 : i32 to index
    %c0_177 = arith.constant 0 : index
    %c0_178 = arith.constant 0 : index
    %754 = vector.load %arg3[%753, %c0_177, %c0_178] : memref<32x2x128xf32, #tpu.memory_space<vmem>>, vector<1x2x128xf32>
    %755 = vector.shape_cast %754 : vector<1x2x128xf32> to vector<2x128xf32>
    %756 = vector.shape_cast %755 : vector<2x128xf32> to vector<2x1x128xf32>
    %757 = arith.index_cast %c22_i32 : i32 to index
    %c0_179 = arith.constant 0 : index
    %c0_180 = arith.constant 0 : index
    %758 = vector.load %arg4[%757, %c0_179, %c0_180] : memref<32x16x128xbf16, #tpu.memory_space<vmem>>, vector<1x16x128xbf16>
    %759 = vector.shape_cast %758 : vector<1x16x128xbf16> to vector<16x128xbf16>
    %760 = arith.extf %759 : vector<16x128xbf16> to vector<16x128xf32>
    %761 = vector.shape_cast %760 : vector<16x128xf32> to vector<1x16x128xf32>
    %762 = arith.index_cast %c22_i32 : i32 to index
    %c0_181 = arith.constant 0 : index
    %c0_182 = arith.constant 0 : index
    %763 = vector.load %arg5[%762, %c0_181, %c0_182] : memref<32x16x128xbf16, #tpu.memory_space<vmem>>, vector<1x16x128xbf16>
    %764 = vector.shape_cast %763 : vector<1x16x128xbf16> to vector<16x128xbf16>
    %765 = arith.extf %764 : vector<16x128xbf16> to vector<16x128xf32>
    %766 = vector.shape_cast %765 : vector<16x128xf32> to vector<1x16x128xf32>
    %767 = vector.broadcast %752 : vector<2x1x128xf32> to vector<2x16x128xf32>
    %768 = vector.broadcast %761 : vector<1x16x128xf32> to vector<2x16x128xf32>
    %769 = arith.mulf %767, %768 : vector<2x16x128xf32>
    %770 = arith.addf %740, %769 : vector<2x16x128xf32>
    %771 = vector.broadcast %756 : vector<2x1x128xf32> to vector<2x16x128xf32>
    %772 = vector.broadcast %766 : vector<1x16x128xf32> to vector<2x16x128xf32>
    %773 = arith.mulf %771, %772 : vector<2x16x128xf32>
    %774 = arith.subf %770, %773 : vector<2x16x128xf32>
    %775 = vector.broadcast %752 : vector<2x1x128xf32> to vector<2x16x128xf32>
    %776 = vector.broadcast %766 : vector<1x16x128xf32> to vector<2x16x128xf32>
    %777 = arith.mulf %775, %776 : vector<2x16x128xf32>
    %778 = arith.addf %748, %777 : vector<2x16x128xf32>
    %779 = vector.broadcast %756 : vector<2x1x128xf32> to vector<2x16x128xf32>
    %780 = vector.broadcast %761 : vector<1x16x128xf32> to vector<2x16x128xf32>
    %781 = arith.mulf %779, %780 : vector<2x16x128xf32>
    %782 = arith.addf %778, %781 : vector<2x16x128xf32>
    %c23_i32 = arith.constant 23 : i32
    %783 = arith.index_cast %c23_i32 : i32 to index
    %c0_183 = arith.constant 0 : index
    %c0_184 = arith.constant 0 : index
    %784 = vector.load %arg2[%783, %c0_183, %c0_184] : memref<32x2x128xf32, #tpu.memory_space<vmem>>, vector<1x2x128xf32>
    %785 = vector.shape_cast %784 : vector<1x2x128xf32> to vector<2x128xf32>
    %786 = vector.shape_cast %785 : vector<2x128xf32> to vector<2x1x128xf32>
    %787 = arith.index_cast %c23_i32 : i32 to index
    %c0_185 = arith.constant 0 : index
    %c0_186 = arith.constant 0 : index
    %788 = vector.load %arg3[%787, %c0_185, %c0_186] : memref<32x2x128xf32, #tpu.memory_space<vmem>>, vector<1x2x128xf32>
    %789 = vector.shape_cast %788 : vector<1x2x128xf32> to vector<2x128xf32>
    %790 = vector.shape_cast %789 : vector<2x128xf32> to vector<2x1x128xf32>
    %791 = arith.index_cast %c23_i32 : i32 to index
    %c0_187 = arith.constant 0 : index
    %c0_188 = arith.constant 0 : index
    %792 = vector.load %arg4[%791, %c0_187, %c0_188] : memref<32x16x128xbf16, #tpu.memory_space<vmem>>, vector<1x16x128xbf16>
    %793 = vector.shape_cast %792 : vector<1x16x128xbf16> to vector<16x128xbf16>
    %794 = arith.extf %793 : vector<16x128xbf16> to vector<16x128xf32>
    %795 = vector.shape_cast %794 : vector<16x128xf32> to vector<1x16x128xf32>
    %796 = arith.index_cast %c23_i32 : i32 to index
    %c0_189 = arith.constant 0 : index
    %c0_190 = arith.constant 0 : index
    %797 = vector.load %arg5[%796, %c0_189, %c0_190] : memref<32x16x128xbf16, #tpu.memory_space<vmem>>, vector<1x16x128xbf16>
    %798 = vector.shape_cast %797 : vector<1x16x128xbf16> to vector<16x128xbf16>
    %799 = arith.extf %798 : vector<16x128xbf16> to vector<16x128xf32>
    %800 = vector.shape_cast %799 : vector<16x128xf32> to vector<1x16x128xf32>
    %801 = vector.broadcast %786 : vector<2x1x128xf32> to vector<2x16x128xf32>
    %802 = vector.broadcast %795 : vector<1x16x128xf32> to vector<2x16x128xf32>
    %803 = arith.mulf %801, %802 : vector<2x16x128xf32>
    %804 = arith.addf %774, %803 : vector<2x16x128xf32>
    %805 = vector.broadcast %790 : vector<2x1x128xf32> to vector<2x16x128xf32>
    %806 = vector.broadcast %800 : vector<1x16x128xf32> to vector<2x16x128xf32>
    %807 = arith.mulf %805, %806 : vector<2x16x128xf32>
    %808 = arith.subf %804, %807 : vector<2x16x128xf32>
    %809 = vector.broadcast %786 : vector<2x1x128xf32> to vector<2x16x128xf32>
    %810 = vector.broadcast %800 : vector<1x16x128xf32> to vector<2x16x128xf32>
    %811 = arith.mulf %809, %810 : vector<2x16x128xf32>
    %812 = arith.addf %782, %811 : vector<2x16x128xf32>
    %813 = vector.broadcast %790 : vector<2x1x128xf32> to vector<2x16x128xf32>
    %814 = vector.broadcast %795 : vector<1x16x128xf32> to vector<2x16x128xf32>
    %815 = arith.mulf %813, %814 : vector<2x16x128xf32>
    %816 = arith.addf %812, %815 : vector<2x16x128xf32>
    %c24_i32 = arith.constant 24 : i32
    %817 = arith.index_cast %c24_i32 : i32 to index
    %c0_191 = arith.constant 0 : index
    %c0_192 = arith.constant 0 : index
    %818 = vector.load %arg2[%817, %c0_191, %c0_192] : memref<32x2x128xf32, #tpu.memory_space<vmem>>, vector<1x2x128xf32>
    %819 = vector.shape_cast %818 : vector<1x2x128xf32> to vector<2x128xf32>
    %820 = vector.shape_cast %819 : vector<2x128xf32> to vector<2x1x128xf32>
    %821 = arith.index_cast %c24_i32 : i32 to index
    %c0_193 = arith.constant 0 : index
    %c0_194 = arith.constant 0 : index
    %822 = vector.load %arg3[%821, %c0_193, %c0_194] : memref<32x2x128xf32, #tpu.memory_space<vmem>>, vector<1x2x128xf32>
    %823 = vector.shape_cast %822 : vector<1x2x128xf32> to vector<2x128xf32>
    %824 = vector.shape_cast %823 : vector<2x128xf32> to vector<2x1x128xf32>
    %825 = arith.index_cast %c24_i32 : i32 to index
    %c0_195 = arith.constant 0 : index
    %c0_196 = arith.constant 0 : index
    %826 = vector.load %arg4[%825, %c0_195, %c0_196] : memref<32x16x128xbf16, #tpu.memory_space<vmem>>, vector<1x16x128xbf16>
    %827 = vector.shape_cast %826 : vector<1x16x128xbf16> to vector<16x128xbf16>
    %828 = arith.extf %827 : vector<16x128xbf16> to vector<16x128xf32>
    %829 = vector.shape_cast %828 : vector<16x128xf32> to vector<1x16x128xf32>
    %830 = arith.index_cast %c24_i32 : i32 to index
    %c0_197 = arith.constant 0 : index
    %c0_198 = arith.constant 0 : index
    %831 = vector.load %arg5[%830, %c0_197, %c0_198] : memref<32x16x128xbf16, #tpu.memory_space<vmem>>, vector<1x16x128xbf16>
    %832 = vector.shape_cast %831 : vector<1x16x128xbf16> to vector<16x128xbf16>
    %833 = arith.extf %832 : vector<16x128xbf16> to vector<16x128xf32>
    %834 = vector.shape_cast %833 : vector<16x128xf32> to vector<1x16x128xf32>
    %835 = vector.broadcast %820 : vector<2x1x128xf32> to vector<2x16x128xf32>
    %836 = vector.broadcast %829 : vector<1x16x128xf32> to vector<2x16x128xf32>
    %837 = arith.mulf %835, %836 : vector<2x16x128xf32>
    %838 = arith.addf %808, %837 : vector<2x16x128xf32>
    %839 = vector.broadcast %824 : vector<2x1x128xf32> to vector<2x16x128xf32>
    %840 = vector.broadcast %834 : vector<1x16x128xf32> to vector<2x16x128xf32>
    %841 = arith.mulf %839, %840 : vector<2x16x128xf32>
    %842 = arith.subf %838, %841 : vector<2x16x128xf32>
    %843 = vector.broadcast %820 : vector<2x1x128xf32> to vector<2x16x128xf32>
    %844 = vector.broadcast %834 : vector<1x16x128xf32> to vector<2x16x128xf32>
    %845 = arith.mulf %843, %844 : vector<2x16x128xf32>
    %846 = arith.addf %816, %845 : vector<2x16x128xf32>
    %847 = vector.broadcast %824 : vector<2x1x128xf32> to vector<2x16x128xf32>
    %848 = vector.broadcast %829 : vector<1x16x128xf32> to vector<2x16x128xf32>
    %849 = arith.mulf %847, %848 : vector<2x16x128xf32>
    %850 = arith.addf %846, %849 : vector<2x16x128xf32>
    %c25_i32 = arith.constant 25 : i32
    %851 = arith.index_cast %c25_i32 : i32 to index
    %c0_199 = arith.constant 0 : index
    %c0_200 = arith.constant 0 : index
    %852 = vector.load %arg2[%851, %c0_199, %c0_200] : memref<32x2x128xf32, #tpu.memory_space<vmem>>, vector<1x2x128xf32>
    %853 = vector.shape_cast %852 : vector<1x2x128xf32> to vector<2x128xf32>
    %854 = vector.shape_cast %853 : vector<2x128xf32> to vector<2x1x128xf32>
    %855 = arith.index_cast %c25_i32 : i32 to index
    %c0_201 = arith.constant 0 : index
    %c0_202 = arith.constant 0 : index
    %856 = vector.load %arg3[%855, %c0_201, %c0_202] : memref<32x2x128xf32, #tpu.memory_space<vmem>>, vector<1x2x128xf32>
    %857 = vector.shape_cast %856 : vector<1x2x128xf32> to vector<2x128xf32>
    %858 = vector.shape_cast %857 : vector<2x128xf32> to vector<2x1x128xf32>
    %859 = arith.index_cast %c25_i32 : i32 to index
    %c0_203 = arith.constant 0 : index
    %c0_204 = arith.constant 0 : index
    %860 = vector.load %arg4[%859, %c0_203, %c0_204] : memref<32x16x128xbf16, #tpu.memory_space<vmem>>, vector<1x16x128xbf16>
    %861 = vector.shape_cast %860 : vector<1x16x128xbf16> to vector<16x128xbf16>
    %862 = arith.extf %861 : vector<16x128xbf16> to vector<16x128xf32>
    %863 = vector.shape_cast %862 : vector<16x128xf32> to vector<1x16x128xf32>
    %864 = arith.index_cast %c25_i32 : i32 to index
    %c0_205 = arith.constant 0 : index
    %c0_206 = arith.constant 0 : index
    %865 = vector.load %arg5[%864, %c0_205, %c0_206] : memref<32x16x128xbf16, #tpu.memory_space<vmem>>, vector<1x16x128xbf16>
    %866 = vector.shape_cast %865 : vector<1x16x128xbf16> to vector<16x128xbf16>
    %867 = arith.extf %866 : vector<16x128xbf16> to vector<16x128xf32>
    %868 = vector.shape_cast %867 : vector<16x128xf32> to vector<1x16x128xf32>
    %869 = vector.broadcast %854 : vector<2x1x128xf32> to vector<2x16x128xf32>
    %870 = vector.broadcast %863 : vector<1x16x128xf32> to vector<2x16x128xf32>
    %871 = arith.mulf %869, %870 : vector<2x16x128xf32>
    %872 = arith.addf %842, %871 : vector<2x16x128xf32>
    %873 = vector.broadcast %858 : vector<2x1x128xf32> to vector<2x16x128xf32>
    %874 = vector.broadcast %868 : vector<1x16x128xf32> to vector<2x16x128xf32>
    %875 = arith.mulf %873, %874 : vector<2x16x128xf32>
    %876 = arith.subf %872, %875 : vector<2x16x128xf32>
    %877 = vector.broadcast %854 : vector<2x1x128xf32> to vector<2x16x128xf32>
    %878 = vector.broadcast %868 : vector<1x16x128xf32> to vector<2x16x128xf32>
    %879 = arith.mulf %877, %878 : vector<2x16x128xf32>
    %880 = arith.addf %850, %879 : vector<2x16x128xf32>
    %881 = vector.broadcast %858 : vector<2x1x128xf32> to vector<2x16x128xf32>
    %882 = vector.broadcast %863 : vector<1x16x128xf32> to vector<2x16x128xf32>
    %883 = arith.mulf %881, %882 : vector<2x16x128xf32>
    %884 = arith.addf %880, %883 : vector<2x16x128xf32>
    %c26_i32 = arith.constant 26 : i32
    %885 = arith.index_cast %c26_i32 : i32 to index
    %c0_207 = arith.constant 0 : index
    %c0_208 = arith.constant 0 : index
    %886 = vector.load %arg2[%885, %c0_207, %c0_208] : memref<32x2x128xf32, #tpu.memory_space<vmem>>, vector<1x2x128xf32>
    %887 = vector.shape_cast %886 : vector<1x2x128xf32> to vector<2x128xf32>
    %888 = vector.shape_cast %887 : vector<2x128xf32> to vector<2x1x128xf32>
    %889 = arith.index_cast %c26_i32 : i32 to index
    %c0_209 = arith.constant 0 : index
    %c0_210 = arith.constant 0 : index
    %890 = vector.load %arg3[%889, %c0_209, %c0_210] : memref<32x2x128xf32, #tpu.memory_space<vmem>>, vector<1x2x128xf32>
    %891 = vector.shape_cast %890 : vector<1x2x128xf32> to vector<2x128xf32>
    %892 = vector.shape_cast %891 : vector<2x128xf32> to vector<2x1x128xf32>
    %893 = arith.index_cast %c26_i32 : i32 to index
    %c0_211 = arith.constant 0 : index
    %c0_212 = arith.constant 0 : index
    %894 = vector.load %arg4[%893, %c0_211, %c0_212] : memref<32x16x128xbf16, #tpu.memory_space<vmem>>, vector<1x16x128xbf16>
    %895 = vector.shape_cast %894 : vector<1x16x128xbf16> to vector<16x128xbf16>
    %896 = arith.extf %895 : vector<16x128xbf16> to vector<16x128xf32>
    %897 = vector.shape_cast %896 : vector<16x128xf32> to vector<1x16x128xf32>
    %898 = arith.index_cast %c26_i32 : i32 to index
    %c0_213 = arith.constant 0 : index
    %c0_214 = arith.constant 0 : index
    %899 = vector.load %arg5[%898, %c0_213, %c0_214] : memref<32x16x128xbf16, #tpu.memory_space<vmem>>, vector<1x16x128xbf16>
    %900 = vector.shape_cast %899 : vector<1x16x128xbf16> to vector<16x128xbf16>
    %901 = arith.extf %900 : vector<16x128xbf16> to vector<16x128xf32>
    %902 = vector.shape_cast %901 : vector<16x128xf32> to vector<1x16x128xf32>
    %903 = vector.broadcast %888 : vector<2x1x128xf32> to vector<2x16x128xf32>
    %904 = vector.broadcast %897 : vector<1x16x128xf32> to vector<2x16x128xf32>
    %905 = arith.mulf %903, %904 : vector<2x16x128xf32>
    %906 = arith.addf %876, %905 : vector<2x16x128xf32>
    %907 = vector.broadcast %892 : vector<2x1x128xf32> to vector<2x16x128xf32>
    %908 = vector.broadcast %902 : vector<1x16x128xf32> to vector<2x16x128xf32>
    %909 = arith.mulf %907, %908 : vector<2x16x128xf32>
    %910 = arith.subf %906, %909 : vector<2x16x128xf32>
    %911 = vector.broadcast %888 : vector<2x1x128xf32> to vector<2x16x128xf32>
    %912 = vector.broadcast %902 : vector<1x16x128xf32> to vector<2x16x128xf32>
    %913 = arith.mulf %911, %912 : vector<2x16x128xf32>
    %914 = arith.addf %884, %913 : vector<2x16x128xf32>
    %915 = vector.broadcast %892 : vector<2x1x128xf32> to vector<2x16x128xf32>
    %916 = vector.broadcast %897 : vector<1x16x128xf32> to vector<2x16x128xf32>
    %917 = arith.mulf %915, %916 : vector<2x16x128xf32>
    %918 = arith.addf %914, %917 : vector<2x16x128xf32>
    %c27_i32 = arith.constant 27 : i32
    %919 = arith.index_cast %c27_i32 : i32 to index
    %c0_215 = arith.constant 0 : index
    %c0_216 = arith.constant 0 : index
    %920 = vector.load %arg2[%919, %c0_215, %c0_216] : memref<32x2x128xf32, #tpu.memory_space<vmem>>, vector<1x2x128xf32>
    %921 = vector.shape_cast %920 : vector<1x2x128xf32> to vector<2x128xf32>
    %922 = vector.shape_cast %921 : vector<2x128xf32> to vector<2x1x128xf32>
    %923 = arith.index_cast %c27_i32 : i32 to index
    %c0_217 = arith.constant 0 : index
    %c0_218 = arith.constant 0 : index
    %924 = vector.load %arg3[%923, %c0_217, %c0_218] : memref<32x2x128xf32, #tpu.memory_space<vmem>>, vector<1x2x128xf32>
    %925 = vector.shape_cast %924 : vector<1x2x128xf32> to vector<2x128xf32>
    %926 = vector.shape_cast %925 : vector<2x128xf32> to vector<2x1x128xf32>
    %927 = arith.index_cast %c27_i32 : i32 to index
    %c0_219 = arith.constant 0 : index
    %c0_220 = arith.constant 0 : index
    %928 = vector.load %arg4[%927, %c0_219, %c0_220] : memref<32x16x128xbf16, #tpu.memory_space<vmem>>, vector<1x16x128xbf16>
    %929 = vector.shape_cast %928 : vector<1x16x128xbf16> to vector<16x128xbf16>
    %930 = arith.extf %929 : vector<16x128xbf16> to vector<16x128xf32>
    %931 = vector.shape_cast %930 : vector<16x128xf32> to vector<1x16x128xf32>
    %932 = arith.index_cast %c27_i32 : i32 to index
    %c0_221 = arith.constant 0 : index
    %c0_222 = arith.constant 0 : index
    %933 = vector.load %arg5[%932, %c0_221, %c0_222] : memref<32x16x128xbf16, #tpu.memory_space<vmem>>, vector<1x16x128xbf16>
    %934 = vector.shape_cast %933 : vector<1x16x128xbf16> to vector<16x128xbf16>
    %935 = arith.extf %934 : vector<16x128xbf16> to vector<16x128xf32>
    %936 = vector.shape_cast %935 : vector<16x128xf32> to vector<1x16x128xf32>
    %937 = vector.broadcast %922 : vector<2x1x128xf32> to vector<2x16x128xf32>
    %938 = vector.broadcast %931 : vector<1x16x128xf32> to vector<2x16x128xf32>
    %939 = arith.mulf %937, %938 : vector<2x16x128xf32>
    %940 = arith.addf %910, %939 : vector<2x16x128xf32>
    %941 = vector.broadcast %926 : vector<2x1x128xf32> to vector<2x16x128xf32>
    %942 = vector.broadcast %936 : vector<1x16x128xf32> to vector<2x16x128xf32>
    %943 = arith.mulf %941, %942 : vector<2x16x128xf32>
    %944 = arith.subf %940, %943 : vector<2x16x128xf32>
    %945 = vector.broadcast %922 : vector<2x1x128xf32> to vector<2x16x128xf32>
    %946 = vector.broadcast %936 : vector<1x16x128xf32> to vector<2x16x128xf32>
    %947 = arith.mulf %945, %946 : vector<2x16x128xf32>
    %948 = arith.addf %918, %947 : vector<2x16x128xf32>
    %949 = vector.broadcast %926 : vector<2x1x128xf32> to vector<2x16x128xf32>
    %950 = vector.broadcast %931 : vector<1x16x128xf32> to vector<2x16x128xf32>
    %951 = arith.mulf %949, %950 : vector<2x16x128xf32>
    %952 = arith.addf %948, %951 : vector<2x16x128xf32>
    %c28_i32 = arith.constant 28 : i32
    %953 = arith.index_cast %c28_i32 : i32 to index
    %c0_223 = arith.constant 0 : index
    %c0_224 = arith.constant 0 : index
    %954 = vector.load %arg2[%953, %c0_223, %c0_224] : memref<32x2x128xf32, #tpu.memory_space<vmem>>, vector<1x2x128xf32>
    %955 = vector.shape_cast %954 : vector<1x2x128xf32> to vector<2x128xf32>
    %956 = vector.shape_cast %955 : vector<2x128xf32> to vector<2x1x128xf32>
    %957 = arith.index_cast %c28_i32 : i32 to index
    %c0_225 = arith.constant 0 : index
    %c0_226 = arith.constant 0 : index
    %958 = vector.load %arg3[%957, %c0_225, %c0_226] : memref<32x2x128xf32, #tpu.memory_space<vmem>>, vector<1x2x128xf32>
    %959 = vector.shape_cast %958 : vector<1x2x128xf32> to vector<2x128xf32>
    %960 = vector.shape_cast %959 : vector<2x128xf32> to vector<2x1x128xf32>
    %961 = arith.index_cast %c28_i32 : i32 to index
    %c0_227 = arith.constant 0 : index
    %c0_228 = arith.constant 0 : index
    %962 = vector.load %arg4[%961, %c0_227, %c0_228] : memref<32x16x128xbf16, #tpu.memory_space<vmem>>, vector<1x16x128xbf16>
    %963 = vector.shape_cast %962 : vector<1x16x128xbf16> to vector<16x128xbf16>
    %964 = arith.extf %963 : vector<16x128xbf16> to vector<16x128xf32>
    %965 = vector.shape_cast %964 : vector<16x128xf32> to vector<1x16x128xf32>
    %966 = arith.index_cast %c28_i32 : i32 to index
    %c0_229 = arith.constant 0 : index
    %c0_230 = arith.constant 0 : index
    %967 = vector.load %arg5[%966, %c0_229, %c0_230] : memref<32x16x128xbf16, #tpu.memory_space<vmem>>, vector<1x16x128xbf16>
    %968 = vector.shape_cast %967 : vector<1x16x128xbf16> to vector<16x128xbf16>
    %969 = arith.extf %968 : vector<16x128xbf16> to vector<16x128xf32>
    %970 = vector.shape_cast %969 : vector<16x128xf32> to vector<1x16x128xf32>
    %971 = vector.broadcast %956 : vector<2x1x128xf32> to vector<2x16x128xf32>
    %972 = vector.broadcast %965 : vector<1x16x128xf32> to vector<2x16x128xf32>
    %973 = arith.mulf %971, %972 : vector<2x16x128xf32>
    %974 = arith.addf %944, %973 : vector<2x16x128xf32>
    %975 = vector.broadcast %960 : vector<2x1x128xf32> to vector<2x16x128xf32>
    %976 = vector.broadcast %970 : vector<1x16x128xf32> to vector<2x16x128xf32>
    %977 = arith.mulf %975, %976 : vector<2x16x128xf32>
    %978 = arith.subf %974, %977 : vector<2x16x128xf32>
    %979 = vector.broadcast %956 : vector<2x1x128xf32> to vector<2x16x128xf32>
    %980 = vector.broadcast %970 : vector<1x16x128xf32> to vector<2x16x128xf32>
    %981 = arith.mulf %979, %980 : vector<2x16x128xf32>
    %982 = arith.addf %952, %981 : vector<2x16x128xf32>
    %983 = vector.broadcast %960 : vector<2x1x128xf32> to vector<2x16x128xf32>
    %984 = vector.broadcast %965 : vector<1x16x128xf32> to vector<2x16x128xf32>
    %985 = arith.mulf %983, %984 : vector<2x16x128xf32>
    %986 = arith.addf %982, %985 : vector<2x16x128xf32>
    %c29_i32 = arith.constant 29 : i32
    %987 = arith.index_cast %c29_i32 : i32 to index
    %c0_231 = arith.constant 0 : index
    %c0_232 = arith.constant 0 : index
    %988 = vector.load %arg2[%987, %c0_231, %c0_232] : memref<32x2x128xf32, #tpu.memory_space<vmem>>, vector<1x2x128xf32>
    %989 = vector.shape_cast %988 : vector<1x2x128xf32> to vector<2x128xf32>
    %990 = vector.shape_cast %989 : vector<2x128xf32> to vector<2x1x128xf32>
    %991 = arith.index_cast %c29_i32 : i32 to index
    %c0_233 = arith.constant 0 : index
    %c0_234 = arith.constant 0 : index
    %992 = vector.load %arg3[%991, %c0_233, %c0_234] : memref<32x2x128xf32, #tpu.memory_space<vmem>>, vector<1x2x128xf32>
    %993 = vector.shape_cast %992 : vector<1x2x128xf32> to vector<2x128xf32>
    %994 = vector.shape_cast %993 : vector<2x128xf32> to vector<2x1x128xf32>
    %995 = arith.index_cast %c29_i32 : i32 to index
    %c0_235 = arith.constant 0 : index
    %c0_236 = arith.constant 0 : index
    %996 = vector.load %arg4[%995, %c0_235, %c0_236] : memref<32x16x128xbf16, #tpu.memory_space<vmem>>, vector<1x16x128xbf16>
    %997 = vector.shape_cast %996 : vector<1x16x128xbf16> to vector<16x128xbf16>
    %998 = arith.extf %997 : vector<16x128xbf16> to vector<16x128xf32>
    %999 = vector.shape_cast %998 : vector<16x128xf32> to vector<1x16x128xf32>
    %1000 = arith.index_cast %c29_i32 : i32 to index
    %c0_237 = arith.constant 0 : index
    %c0_238 = arith.constant 0 : index
    %1001 = vector.load %arg5[%1000, %c0_237, %c0_238] : memref<32x16x128xbf16, #tpu.memory_space<vmem>>, vector<1x16x128xbf16>
    %1002 = vector.shape_cast %1001 : vector<1x16x128xbf16> to vector<16x128xbf16>
    %1003 = arith.extf %1002 : vector<16x128xbf16> to vector<16x128xf32>
    %1004 = vector.shape_cast %1003 : vector<16x128xf32> to vector<1x16x128xf32>
    %1005 = vector.broadcast %990 : vector<2x1x128xf32> to vector<2x16x128xf32>
    %1006 = vector.broadcast %999 : vector<1x16x128xf32> to vector<2x16x128xf32>
    %1007 = arith.mulf %1005, %1006 : vector<2x16x128xf32>
    %1008 = arith.addf %978, %1007 : vector<2x16x128xf32>
    %1009 = vector.broadcast %994 : vector<2x1x128xf32> to vector<2x16x128xf32>
    %1010 = vector.broadcast %1004 : vector<1x16x128xf32> to vector<2x16x128xf32>
    %1011 = arith.mulf %1009, %1010 : vector<2x16x128xf32>
    %1012 = arith.subf %1008, %1011 : vector<2x16x128xf32>
    %1013 = vector.broadcast %990 : vector<2x1x128xf32> to vector<2x16x128xf32>
    %1014 = vector.broadcast %1004 : vector<1x16x128xf32> to vector<2x16x128xf32>
    %1015 = arith.mulf %1013, %1014 : vector<2x16x128xf32>
    %1016 = arith.addf %986, %1015 : vector<2x16x128xf32>
    %1017 = vector.broadcast %994 : vector<2x1x128xf32> to vector<2x16x128xf32>
    %1018 = vector.broadcast %999 : vector<1x16x128xf32> to vector<2x16x128xf32>
    %1019 = arith.mulf %1017, %1018 : vector<2x16x128xf32>
    %1020 = arith.addf %1016, %1019 : vector<2x16x128xf32>
    %c30_i32 = arith.constant 30 : i32
    %1021 = arith.index_cast %c30_i32 : i32 to index
    %c0_239 = arith.constant 0 : index
    %c0_240 = arith.constant 0 : index
    %1022 = vector.load %arg2[%1021, %c0_239, %c0_240] : memref<32x2x128xf32, #tpu.memory_space<vmem>>, vector<1x2x128xf32>
    %1023 = vector.shape_cast %1022 : vector<1x2x128xf32> to vector<2x128xf32>
    %1024 = vector.shape_cast %1023 : vector<2x128xf32> to vector<2x1x128xf32>
    %1025 = arith.index_cast %c30_i32 : i32 to index
    %c0_241 = arith.constant 0 : index
    %c0_242 = arith.constant 0 : index
    %1026 = vector.load %arg3[%1025, %c0_241, %c0_242] : memref<32x2x128xf32, #tpu.memory_space<vmem>>, vector<1x2x128xf32>
    %1027 = vector.shape_cast %1026 : vector<1x2x128xf32> to vector<2x128xf32>
    %1028 = vector.shape_cast %1027 : vector<2x128xf32> to vector<2x1x128xf32>
    %1029 = arith.index_cast %c30_i32 : i32 to index
    %c0_243 = arith.constant 0 : index
    %c0_244 = arith.constant 0 : index
    %1030 = vector.load %arg4[%1029, %c0_243, %c0_244] : memref<32x16x128xbf16, #tpu.memory_space<vmem>>, vector<1x16x128xbf16>
    %1031 = vector.shape_cast %1030 : vector<1x16x128xbf16> to vector<16x128xbf16>
    %1032 = arith.extf %1031 : vector<16x128xbf16> to vector<16x128xf32>
    %1033 = vector.shape_cast %1032 : vector<16x128xf32> to vector<1x16x128xf32>
    %1034 = arith.index_cast %c30_i32 : i32 to index
    %c0_245 = arith.constant 0 : index
    %c0_246 = arith.constant 0 : index
    %1035 = vector.load %arg5[%1034, %c0_245, %c0_246] : memref<32x16x128xbf16, #tpu.memory_space<vmem>>, vector<1x16x128xbf16>
    %1036 = vector.shape_cast %1035 : vector<1x16x128xbf16> to vector<16x128xbf16>
    %1037 = arith.extf %1036 : vector<16x128xbf16> to vector<16x128xf32>
    %1038 = vector.shape_cast %1037 : vector<16x128xf32> to vector<1x16x128xf32>
    %1039 = vector.broadcast %1024 : vector<2x1x128xf32> to vector<2x16x128xf32>
    %1040 = vector.broadcast %1033 : vector<1x16x128xf32> to vector<2x16x128xf32>
    %1041 = arith.mulf %1039, %1040 : vector<2x16x128xf32>
    %1042 = arith.addf %1012, %1041 : vector<2x16x128xf32>
    %1043 = vector.broadcast %1028 : vector<2x1x128xf32> to vector<2x16x128xf32>
    %1044 = vector.broadcast %1038 : vector<1x16x128xf32> to vector<2x16x128xf32>
    %1045 = arith.mulf %1043, %1044 : vector<2x16x128xf32>
    %1046 = arith.subf %1042, %1045 : vector<2x16x128xf32>
    %1047 = vector.broadcast %1024 : vector<2x1x128xf32> to vector<2x16x128xf32>
    %1048 = vector.broadcast %1038 : vector<1x16x128xf32> to vector<2x16x128xf32>
    %1049 = arith.mulf %1047, %1048 : vector<2x16x128xf32>
    %1050 = arith.addf %1020, %1049 : vector<2x16x128xf32>
    %1051 = vector.broadcast %1028 : vector<2x1x128xf32> to vector<2x16x128xf32>
    %1052 = vector.broadcast %1033 : vector<1x16x128xf32> to vector<2x16x128xf32>
    %1053 = arith.mulf %1051, %1052 : vector<2x16x128xf32>
    %1054 = arith.addf %1050, %1053 : vector<2x16x128xf32>
    %c31_i32 = arith.constant 31 : i32
    %1055 = arith.index_cast %c31_i32 : i32 to index
    %c0_247 = arith.constant 0 : index
    %c0_248 = arith.constant 0 : index
    %1056 = vector.load %arg2[%1055, %c0_247, %c0_248] : memref<32x2x128xf32, #tpu.memory_space<vmem>>, vector<1x2x128xf32>
    %1057 = vector.shape_cast %1056 : vector<1x2x128xf32> to vector<2x128xf32>
    %1058 = vector.shape_cast %1057 : vector<2x128xf32> to vector<2x1x128xf32>
    %1059 = arith.index_cast %c31_i32 : i32 to index
    %c0_249 = arith.constant 0 : index
    %c0_250 = arith.constant 0 : index
    %1060 = vector.load %arg3[%1059, %c0_249, %c0_250] : memref<32x2x128xf32, #tpu.memory_space<vmem>>, vector<1x2x128xf32>
    %1061 = vector.shape_cast %1060 : vector<1x2x128xf32> to vector<2x128xf32>
    %1062 = vector.shape_cast %1061 : vector<2x128xf32> to vector<2x1x128xf32>
    %1063 = arith.index_cast %c31_i32 : i32 to index
    %c0_251 = arith.constant 0 : index
    %c0_252 = arith.constant 0 : index
    %1064 = vector.load %arg4[%1063, %c0_251, %c0_252] : memref<32x16x128xbf16, #tpu.memory_space<vmem>>, vector<1x16x128xbf16>
    %1065 = vector.shape_cast %1064 : vector<1x16x128xbf16> to vector<16x128xbf16>
    %1066 = arith.extf %1065 : vector<16x128xbf16> to vector<16x128xf32>
    %1067 = vector.shape_cast %1066 : vector<16x128xf32> to vector<1x16x128xf32>
    %1068 = arith.index_cast %c31_i32 : i32 to index
    %c0_253 = arith.constant 0 : index
    %c0_254 = arith.constant 0 : index
    %1069 = vector.load %arg5[%1068, %c0_253, %c0_254] : memref<32x16x128xbf16, #tpu.memory_space<vmem>>, vector<1x16x128xbf16>
    %1070 = vector.shape_cast %1069 : vector<1x16x128xbf16> to vector<16x128xbf16>
    %1071 = arith.extf %1070 : vector<16x128xbf16> to vector<16x128xf32>
    %1072 = vector.shape_cast %1071 : vector<16x128xf32> to vector<1x16x128xf32>
    %1073 = vector.broadcast %1058 : vector<2x1x128xf32> to vector<2x16x128xf32>
    %1074 = vector.broadcast %1067 : vector<1x16x128xf32> to vector<2x16x128xf32>
    %1075 = arith.mulf %1073, %1074 : vector<2x16x128xf32>
    %1076 = arith.addf %1046, %1075 : vector<2x16x128xf32>
    %1077 = vector.broadcast %1062 : vector<2x1x128xf32> to vector<2x16x128xf32>
    %1078 = vector.broadcast %1072 : vector<1x16x128xf32> to vector<2x16x128xf32>
    %1079 = arith.mulf %1077, %1078 : vector<2x16x128xf32>
    %1080 = arith.subf %1076, %1079 : vector<2x16x128xf32>
    %1081 = vector.broadcast %1058 : vector<2x1x128xf32> to vector<2x16x128xf32>
    %1082 = vector.broadcast %1072 : vector<1x16x128xf32> to vector<2x16x128xf32>
    %1083 = arith.mulf %1081, %1082 : vector<2x16x128xf32>
    %1084 = arith.addf %1054, %1083 : vector<2x16x128xf32>
    %1085 = vector.broadcast %1062 : vector<2x1x128xf32> to vector<2x16x128xf32>
    %1086 = vector.broadcast %1067 : vector<1x16x128xf32> to vector<2x16x128xf32>
    %1087 = arith.mulf %1085, %1086 : vector<2x16x128xf32>
    %1088 = arith.addf %1084, %1087 : vector<2x16x128xf32>
    %c32_i32 = arith.constant 32 : i32
    %c0_255 = arith.constant 0 : index
    %c0_256 = arith.constant 0 : index
    %c0_257 = arith.constant 0 : index
    %1089 = vector.load %arg6[%c0_255, %c0_256, %c0_257] : memref<2x16x128xf32, #tpu.memory_space<vmem>>, vector<2x16x128xf32>
    tpu.vector_store %arg6[%c0_255, %c0_256, %c0_257], %1080 {strides = array<i32>} : memref<2x16x128xf32, #tpu.memory_space<vmem>>, vector<2x16x128xf32>,
    %c0_258 = arith.constant 0 : index
    %c0_259 = arith.constant 0 : index
    %c0_260 = arith.constant 0 : index
    %1090 = vector.load %arg7[%c0_258, %c0_259, %c0_260] : memref<2x16x128xf32, #tpu.memory_space<vmem>>, vector<2x16x128xf32>
    tpu.vector_store %arg7[%c0_258, %c0_259, %c0_260], %1088 {strides = array<i32>} : memref<2x16x128xf32, #tpu.memory_space<vmem>>, vector<2x16x128xf32>,
    return
  }
  func.func @transform_0(%arg0: i32, %arg1: i32) -> (i32, i32, i32) {
    %c0_i32 = arith.constant 0 : i32
    %c0_i32_0 = arith.constant 0 : i32
    %c0_i32_1 = arith.constant 0 : i32
    return %c0_i32, %c0_i32_0, %arg1 : i32, i32, i32
  }
  func.func @transform_1(%arg0: i32, %arg1: i32) -> (i32, i32, i32) {
    %c0_i32 = arith.constant 0 : i32
    %c0_i32_0 = arith.constant 0 : i32
    %c0_i32_1 = arith.constant 0 : i32
    return %c0_i32, %c0_i32_0, %arg1 : i32, i32, i32
  }
  func.func @transform_2(%arg0: i32, %arg1: i32) -> (i32, i32, i32) {
    %c0_i32 = arith.constant 0 : i32
    %c0_i32_0 = arith.constant 0 : i32
    return %c0_i32, %arg0, %arg1 : i32, i32, i32
  }
  func.func @transform_3(%arg0: i32, %arg1: i32) -> (i32, i32, i32) {
    %c0_i32 = arith.constant 0 : i32
    %c0_i32_0 = arith.constant 0 : i32
    return %c0_i32, %arg0, %arg1 : i32, i32, i32
  }
  func.func @transform_4(%arg0: i32, %arg1: i32) -> (i32, i32, i32) {
    %c0_i32 = arith.constant 0 : i32
    %c0_i32_0 = arith.constant 0 : i32
    return %c0_i32, %arg0, %arg1 : i32, i32, i32
  }
  func.func @transform_5(%arg0: i32, %arg1: i32) -> (i32, i32, i32) {
    %c0_i32 = arith.constant 0 : i32
    %c0_i32_0 = arith.constant 0 : i32
    return %c0_i32, %arg0, %arg1 : i32, i32, i32
  }
}

module attributes {stable_mosaic.version = 11 : i64} {
  func.func @_fno_block_kernel(%arg0: i32, %arg1: memref<32x512xbf16, #tpu.memory_space<vmem>>, %arg2: memref<32x512xf32, #tpu.memory_space<vmem>>, %arg3: memref<32x32xbf16, #tpu.memory_space<vmem>>, %arg4: memref<32x1xf32, #tpu.memory_space<vmem>>, %arg5: memref<32x512xbf16, #tpu.memory_space<vmem>>) attributes {dimension_semantics = [#tpu.dimension_semantics<parallel>], iteration_bounds = array<i64: 1>, scalar_prefetch = 0 : i64, scratch_operands = 0 : i64, tpu.core_type = #tpu.core_type<tc>, window_params = [{transform_indices = @transform_0, window_bounds = array<i64: 32, 512>}, {transform_indices = @transform_1, window_bounds = array<i64: 32, 512>}, {pipeline_mode = #tpu.pipeline_mode<synchronous>, transform_indices = @transform_2, window_bounds = array<i64: 32, 32>}, {pipeline_mode = #tpu.pipeline_mode<synchronous>, transform_indices = @transform_3, window_bounds = array<i64: 32, 1>}, {transform_indices = @transform_4, window_bounds = array<i64: 32, 512>}]} {
    %c0 = arith.constant 0 : index
    %c0_0 = arith.constant 0 : index
    %0 = vector.load %arg3[%c0, %c0_0] : memref<32x32xbf16, #tpu.memory_space<vmem>>, vector<32x32xbf16>
    %c0_1 = arith.constant 0 : index
    %c0_2 = arith.constant 0 : index
    %1 = vector.load %arg1[%c0_1, %c0_2] : memref<32x512xbf16, #tpu.memory_space<vmem>>, vector<32x512xbf16>
    %cst = arith.constant dense<0.000000e+00> : vector<32x512xf32>
    %2 = tpu.matmul %0, %1, %cst {dimension_numbers = #tpu.dot_dimension_numbers<[1], [0], [0], [1], [0, 0, 1, 1], [], []>} : vector<32x32xbf16>, vector<32x512xbf16>, vector<32x512xf32> -> vector<32x512xf32>
    %c0_3 = arith.constant 0 : index
    %c0_4 = arith.constant 0 : index
    %3 = vector.load %arg2[%c0_3, %c0_4] : memref<32x512xf32, #tpu.memory_space<vmem>>, vector<32x512xf32>
    %c0_5 = arith.constant 0 : index
    %c0_6 = arith.constant 0 : index
    %4 = vector.load %arg4[%c0_5, %c0_6] : memref<32x1xf32, #tpu.memory_space<vmem>>, vector<32x1xf32>
    %5 = vector.broadcast %4 : vector<32x1xf32> to vector<32x512xf32>
    %6 = arith.addf %3, %5 : vector<32x512xf32>
    %7 = arith.addf %6, %2 : vector<32x512xf32>
    %cst_7 = arith.constant 5.000000e-01 : f32
    %8 = vector.broadcast %cst_7 : f32 to vector<32x512xf32>
    %9 = arith.mulf %8, %7 : vector<32x512xf32>
    %cst_8 = arith.constant 4.471500e-02 : f32
    %10 = vector.broadcast %cst_8 : f32 to vector<32x512xf32>
    %11 = arith.mulf %10, %7 : vector<32x512xf32>
    %12 = arith.mulf %11, %7 : vector<32x512xf32>
    %13 = arith.mulf %12, %7 : vector<32x512xf32>
    %14 = arith.addf %7, %13 : vector<32x512xf32>
    %cst_9 = arith.constant 0.797884583 : f32
    %15 = vector.broadcast %cst_9 : f32 to vector<32x512xf32>
    %16 = arith.mulf %15, %14 : vector<32x512xf32>
    %17 = math.tanh %16 : vector<32x512xf32>
    %cst_10 = arith.constant 1.000000e+00 : f32
    %18 = vector.broadcast %cst_10 : f32 to vector<32x512xf32>
    %19 = arith.addf %18, %17 : vector<32x512xf32>
    %20 = arith.mulf %9, %19 : vector<32x512xf32>
    %21 = arith.truncf %20 : vector<32x512xf32> to vector<32x512xbf16>
    %c0_11 = arith.constant 0 : index
    %c0_12 = arith.constant 0 : index
    %22 = vector.load %arg5[%c0_11, %c0_12] : memref<32x512xbf16, #tpu.memory_space<vmem>>, vector<32x512xbf16>
    tpu.vector_store %arg5[%c0_11, %c0_12], %21 {strides = array<i32>} : memref<32x512xbf16, #tpu.memory_space<vmem>>, vector<32x512xbf16>,
    return
  }
  func.func @transform_0(%arg0: i32) -> (i32, i32) {
    %c0_i32 = arith.constant 0 : i32
    %c0_i32_0 = arith.constant 0 : i32
    return %c0_i32, %arg0 : i32, i32
  }
  func.func @transform_1(%arg0: i32) -> (i32, i32) {
    %c0_i32 = arith.constant 0 : i32
    %c0_i32_0 = arith.constant 0 : i32
    return %c0_i32, %arg0 : i32, i32
  }
  func.func @transform_2(%arg0: i32) -> (i32, i32) {
    %c0_i32 = arith.constant 0 : i32
    %c0_i32_0 = arith.constant 0 : i32
    %c0_i32_1 = arith.constant 0 : i32
    return %c0_i32, %c0_i32_0 : i32, i32
  }
  func.func @transform_3(%arg0: i32) -> (i32, i32) {
    %c0_i32 = arith.constant 0 : i32
    %c0_i32_0 = arith.constant 0 : i32
    %c0_i32_1 = arith.constant 0 : i32
    return %c0_i32, %c0_i32_0 : i32, i32
  }
  func.func @transform_4(%arg0: i32) -> (i32, i32) {
    %c0_i32 = arith.constant 0 : i32
    %c0_i32_0 = arith.constant 0 : i32
    return %c0_i32, %arg0 : i32, i32
  }
}

module attributes {stable_mosaic.version = 11 : i64} {
  func.func @_fno_block_kernel(%arg0: i32, %arg1: memref<32x512xbf16, #tpu.memory_space<vmem>>, %arg2: memref<32x512xf32, #tpu.memory_space<vmem>>, %arg3: memref<32x32xbf16, #tpu.memory_space<vmem>>, %arg4: memref<32x1xf32, #tpu.memory_space<vmem>>, %arg5: memref<32x512xbf16, #tpu.memory_space<vmem>>) attributes {dimension_semantics = [#tpu.dimension_semantics<parallel>], iteration_bounds = array<i64: 1>, scalar_prefetch = 0 : i64, scratch_operands = 0 : i64, tpu.core_type = #tpu.core_type<tc>, window_params = [{transform_indices = @transform_0, window_bounds = array<i64: 32, 512>}, {transform_indices = @transform_1, window_bounds = array<i64: 32, 512>}, {pipeline_mode = #tpu.pipeline_mode<synchronous>, transform_indices = @transform_2, window_bounds = array<i64: 32, 32>}, {pipeline_mode = #tpu.pipeline_mode<synchronous>, transform_indices = @transform_3, window_bounds = array<i64: 32, 1>}, {transform_indices = @transform_4, window_bounds = array<i64: 32, 512>}]} {
    %c0 = arith.constant 0 : index
    %c0_0 = arith.constant 0 : index
    %0 = vector.load %arg3[%c0, %c0_0] : memref<32x32xbf16, #tpu.memory_space<vmem>>, vector<32x32xbf16>
    %c0_1 = arith.constant 0 : index
    %c0_2 = arith.constant 0 : index
    %1 = vector.load %arg1[%c0_1, %c0_2] : memref<32x512xbf16, #tpu.memory_space<vmem>>, vector<32x512xbf16>
    %cst = arith.constant dense<0.000000e+00> : vector<32x512xf32>
    %2 = tpu.matmul %0, %1, %cst {dimension_numbers = #tpu.dot_dimension_numbers<[1], [0], [0], [1], [0, 0, 1, 1], [], []>} : vector<32x32xbf16>, vector<32x512xbf16>, vector<32x512xf32> -> vector<32x512xf32>
    %c0_3 = arith.constant 0 : index
    %c0_4 = arith.constant 0 : index
    %3 = vector.load %arg2[%c0_3, %c0_4] : memref<32x512xf32, #tpu.memory_space<vmem>>, vector<32x512xf32>
    %c0_5 = arith.constant 0 : index
    %c0_6 = arith.constant 0 : index
    %4 = vector.load %arg4[%c0_5, %c0_6] : memref<32x1xf32, #tpu.memory_space<vmem>>, vector<32x1xf32>
    %5 = vector.broadcast %4 : vector<32x1xf32> to vector<32x512xf32>
    %6 = arith.addf %3, %5 : vector<32x512xf32>
    %7 = arith.addf %6, %2 : vector<32x512xf32>
    %8 = arith.truncf %7 : vector<32x512xf32> to vector<32x512xbf16>
    %c0_7 = arith.constant 0 : index
    %c0_8 = arith.constant 0 : index
    %9 = vector.load %arg5[%c0_7, %c0_8] : memref<32x512xbf16, #tpu.memory_space<vmem>>, vector<32x512xbf16>
    tpu.vector_store %arg5[%c0_7, %c0_8], %8 {strides = array<i32>} : memref<32x512xbf16, #tpu.memory_space<vmem>>, vector<32x512xbf16>,
    return
  }
  func.func @transform_0(%arg0: i32) -> (i32, i32) {
    %c0_i32 = arith.constant 0 : i32
    %c0_i32_0 = arith.constant 0 : i32
    return %c0_i32, %arg0 : i32, i32
  }
  func.func @transform_1(%arg0: i32) -> (i32, i32) {
    %c0_i32 = arith.constant 0 : i32
    %c0_i32_0 = arith.constant 0 : i32
    return %c0_i32, %arg0 : i32, i32
  }
  func.func @transform_2(%arg0: i32) -> (i32, i32) {
    %c0_i32 = arith.constant 0 : i32
    %c0_i32_0 = arith.constant 0 : i32
    %c0_i32_1 = arith.constant 0 : i32
    return %c0_i32, %c0_i32_0 : i32, i32
  }
  func.func @transform_3(%arg0: i32) -> (i32, i32) {
    %c0_i32 = arith.constant 0 : i32
    %c0_i32_0 = arith.constant 0 : i32
    %c0_i32_1 = arith.constant 0 : i32
    return %c0_i32, %c0_i32_0 : i32, i32
  }
  func.func @transform_4(%arg0: i32) -> (i32, i32) {
    %c0_i32 = arith.constant 0 : i32
    %c0_i32_0 = arith.constant 0 : i32
    return %c0_i32, %arg0 : i32, i32
  }
}

module attributes {stable_mosaic.version = 11 : i64} {
  func.func @_mlp2_kernel(%arg0: i32, %arg1: memref<32x512xbf16, #tpu.memory_space<vmem>>, %arg2: memref<64x32xbf16, #tpu.memory_space<vmem>>, %arg3: memref<64x1xf32, #tpu.memory_space<vmem>>, %arg4: memref<1x64xbf16, #tpu.memory_space<vmem>>, %arg5: memref<1x1xf32, #tpu.memory_space<vmem>>, %arg6: memref<1x512xf32, #tpu.memory_space<vmem>>, %arg7: memref<64x512xbf16, #tpu.memory_space<vmem>>) attributes {dimension_semantics = [#tpu.dimension_semantics<parallel>], iteration_bounds = array<i64: 1>, scalar_prefetch = 0 : i64, scratch_operands = 1 : i64, tpu.core_type = #tpu.core_type<tc>, window_params = [{transform_indices = @transform_0, window_bounds = array<i64: 32, 512>}, {pipeline_mode = #tpu.pipeline_mode<synchronous>, transform_indices = @transform_1, window_bounds = array<i64: 64, 32>}, {pipeline_mode = #tpu.pipeline_mode<synchronous>, transform_indices = @transform_2, window_bounds = array<i64: 64, 1>}, {pipeline_mode = #tpu.pipeline_mode<synchronous>, transform_indices = @transform_3, window_bounds = array<i64: 1, 64>}, {pipeline_mode = #tpu.pipeline_mode<synchronous>, transform_indices = @transform_4, window_bounds = array<i64: 1, 1>}, {transform_indices = @transform_5, window_bounds = array<i64: 1, 512>}]} {
    %c0 = arith.constant 0 : index
    %c0_0 = arith.constant 0 : index
    %0 = vector.load %arg2[%c0, %c0_0] : memref<64x32xbf16, #tpu.memory_space<vmem>>, vector<64x32xbf16>
    %c0_1 = arith.constant 0 : index
    %c0_2 = arith.constant 0 : index
    %1 = vector.load %arg1[%c0_1, %c0_2] : memref<32x512xbf16, #tpu.memory_space<vmem>>, vector<32x512xbf16>
    %cst = arith.constant dense<0.000000e+00> : vector<64x512xf32>
    %2 = tpu.matmul %0, %1, %cst {dimension_numbers = #tpu.dot_dimension_numbers<[1], [0], [0], [1], [0, 0, 1, 1], [], []>} : vector<64x32xbf16>, vector<32x512xbf16>, vector<64x512xf32> -> vector<64x512xf32>
    %c0_3 = arith.constant 0 : index
    %c0_4 = arith.constant 0 : index
    %3 = vector.load %arg3[%c0_3, %c0_4] : memref<64x1xf32, #tpu.memory_space<vmem>>, vector<64x1xf32>
    %4 = vector.broadcast %3 : vector<64x1xf32> to vector<64x512xf32>
    %5 = arith.addf %2, %4 : vector<64x512xf32>
    %cst_5 = arith.constant 5.000000e-01 : f32
    %6 = vector.broadcast %cst_5 : f32 to vector<64x512xf32>
    %7 = arith.mulf %6, %5 : vector<64x512xf32>
    %cst_6 = arith.constant 4.471500e-02 : f32
    %8 = vector.broadcast %cst_6 : f32 to vector<64x512xf32>
    %9 = arith.mulf %8, %5 : vector<64x512xf32>
    %10 = arith.mulf %9, %5 : vector<64x512xf32>
    %11 = arith.mulf %10, %5 : vector<64x512xf32>
    %12 = arith.addf %5, %11 : vector<64x512xf32>
    %cst_7 = arith.constant 0.797884583 : f32
    %13 = vector.broadcast %cst_7 : f32 to vector<64x512xf32>
    %14 = arith.mulf %13, %12 : vector<64x512xf32>
    %15 = math.tanh %14 : vector<64x512xf32>
    %cst_8 = arith.constant 1.000000e+00 : f32
    %16 = vector.broadcast %cst_8 : f32 to vector<64x512xf32>
    %17 = arith.addf %16, %15 : vector<64x512xf32>
    %18 = arith.mulf %7, %17 : vector<64x512xf32>
    %19 = arith.truncf %18 : vector<64x512xf32> to vector<64x512xbf16>
    %c0_9 = arith.constant 0 : index
    %c0_10 = arith.constant 0 : index
    %20 = vector.load %arg7[%c0_9, %c0_10] : memref<64x512xbf16, #tpu.memory_space<vmem>>, vector<64x512xbf16>
    tpu.vector_store %arg7[%c0_9, %c0_10], %19 {strides = array<i32>} : memref<64x512xbf16, #tpu.memory_space<vmem>>, vector<64x512xbf16>,
    %c0_11 = arith.constant 0 : index
    %c0_12 = arith.constant 0 : index
    %21 = vector.load %arg4[%c0_11, %c0_12] : memref<1x64xbf16, #tpu.memory_space<vmem>>, vector<1x64xbf16>
    %c0_13 = arith.constant 0 : index
    %c0_14 = arith.constant 0 : index
    %22 = vector.load %arg7[%c0_13, %c0_14] : memref<64x512xbf16, #tpu.memory_space<vmem>>, vector<64x512xbf16>
    %cst_15 = arith.constant dense<0.000000e+00> : vector<1x512xf32>
    %23 = tpu.matmul %21, %22, %cst_15 {dimension_numbers = #tpu.dot_dimension_numbers<[1], [0], [0], [1], [0, 0, 1, 1], [], []>} : vector<1x64xbf16>, vector<64x512xbf16>, vector<1x512xf32> -> vector<1x512xf32>
    %c0_16 = arith.constant 0 : index
    %c0_17 = arith.constant 0 : index
    %24 = vector.load %arg5[%c0_16, %c0_17] : memref<1x1xf32, #tpu.memory_space<vmem>>, vector<1x1xf32>
    %25 = vector.broadcast %24 : vector<1x1xf32> to vector<1x512xf32>
    %26 = arith.addf %23, %25 : vector<1x512xf32>
    %c0_18 = arith.constant 0 : index
    %c0_19 = arith.constant 0 : index
    %27 = vector.load %arg6[%c0_18, %c0_19] : memref<1x512xf32, #tpu.memory_space<vmem>>, vector<1x512xf32>
    tpu.vector_store %arg6[%c0_18, %c0_19], %26 {strides = array<i32>} : memref<1x512xf32, #tpu.memory_space<vmem>>, vector<1x512xf32>,
    return
  }
  func.func @transform_0(%arg0: i32) -> (i32, i32) {
    %c0_i32 = arith.constant 0 : i32
    %c0_i32_0 = arith.constant 0 : i32
    return %c0_i32, %arg0 : i32, i32
  }
  func.func @transform_1(%arg0: i32) -> (i32, i32) {
    %c0_i32 = arith.constant 0 : i32
    %c0_i32_0 = arith.constant 0 : i32
    %c0_i32_1 = arith.constant 0 : i32
    return %c0_i32, %c0_i32_0 : i32, i32
  }
  func.func @transform_2(%arg0: i32) -> (i32, i32) {
    %c0_i32 = arith.constant 0 : i32
    %c0_i32_0 = arith.constant 0 : i32
    %c0_i32_1 = arith.constant 0 : i32
    return %c0_i32, %c0_i32_0 : i32, i32
  }
  func.func @transform_3(%arg0: i32) -> (i32, i32) {
    %c0_i32 = arith.constant 0 : i32
    %c0_i32_0 = arith.constant 0 : i32
    %c0_i32_1 = arith.constant 0 : i32
    return %c0_i32, %c0_i32_0 : i32, i32
  }
  func.func @transform_4(%arg0: i32) -> (i32, i32) {
    %c0_i32 = arith.constant 0 : i32
    %c0_i32_0 = arith.constant 0 : i32
    %c0_i32_1 = arith.constant 0 : i32
    return %c0_i32, %c0_i32_0 : i32, i32
  }
  func.func @transform_5(%arg0: i32) -> (i32, i32) {
    %c0_i32 = arith.constant 0 : i32
    %c0_i32_0 = arith.constant 0 : i32
    return %c0_i32, %arg0 : i32, i32
  }
}

</mosaic_0001>

<llo_original>
// kernel: fno_forward.10
$region0: #{fno_forward.10}
  #allocation0 [shape = 'u32[]', space=smem, size = 0x4, offset = 0x4, fixed_abs, tag = 'smem constant byte address 0x4 - core index']
  #allocation1 [shape = 'u32[144,128]{1,0:T(1,128)}', space=vmem, size = 0x12000, scoped, tag = 'internal scratch']
  #allocation2 [shape = 'bf16[64,512]{1,0:T(16,128)(2,1)}', space=vmem, size = 0x10000, scoped, tag = 'scratch operand']
  %s0 = inlined_call_operand.vmem [shape: bf16[3,512], index: 0, kind: input, shape index: {}]
  %s1 = inlined_call_operand.vmem [shape: bf16[64,3], index: 1, kind: input, shape index: {}]
  %s2 = inlined_call_operand.vmem [shape: f32[64,1], index: 2, kind: input, shape index: {}]
  %s3 = inlined_call_operand.vmem [shape: bf16[32,64], index: 3, kind: input, shape index: {}]
  %s4 = inlined_call_operand.vmem [shape: f32[32,1], index: 4, kind: input, shape index: {}]
  %s5 = inlined_call_operand.vmem [shape: bf16[32,512], index: 5, kind: output, shape index: {}]
  %s6 = sld [smem:[#allocation0]]
  $region30: #{fno_forward.10} parent=0
    _
  %s8 = ssub.s32 1, %s6
  %s9 = scalar_select 0, %s8, %s6
  // Predicated region
  $region2: #{fno_forward.10} parent=0 // pred_check
    _
  $region3: #{fno_forward.10} parent=0 // pred_check_branch
    %11 = sbr.rel (0) target = $region5
  $region4: #{fno_forward.10} parent=0 // pred_region
    _
  $region5: #{fno_forward.10} parent=0 // pred_fallthru
    _
  // Predicated region
  $region6: #{fno_forward.10} parent=0 // pred_check
    _
  $region7: #{fno_forward.10} parent=0 // pred_check_branch
    %13 = sbr.rel (0) target = $region9
  $region8: #{fno_forward.10} parent=0 // pred_region
    _
  $region9: #{fno_forward.10} parent=0 // pred_fallthru
    _
  // Predicated region
  $region10: #{fno_forward.10} parent=0 // pred_check
    _
  $region11: #{fno_forward.10} parent=0 // pred_check_branch
    %15 = sbr.rel (0) target = $region13
  $region12: #{fno_forward.10} parent=0 // pred_region
    _
  $region13: #{fno_forward.10} parent=0 // pred_fallthru
    _
  // Predicated region
  $region14: #{fno_forward.10} parent=0 // pred_check
    _
  $region15: #{fno_forward.10} parent=0 // pred_check_branch
    %17 = sbr.rel (0) target = $region17
  $region16: #{fno_forward.10} parent=0 // pred_region
    _
  $region17: #{fno_forward.10} parent=0 // pred_fallthru
    _
  // Predicated region
  $region18: #{fno_forward.10} parent=0 // pred_check
    _
  $region19: #{fno_forward.10} parent=0 // pred_check_branch
    %19 = sbr.rel (0) target = $region21
  $region20: #{fno_forward.10} parent=0 // pred_region
    _
  $region21: #{fno_forward.10} parent=0 // pred_fallthru
    _
  %v21 = vld [vmem:[%s1] sm:$0xf]
  %v22 = vld [vmem:[%s1 + $0x4] sm:$0xf]
  %v23 = vld [vmem:[%s1 + $0x8] sm:$0xf]
  %v24 = vld [vmem:[%s1 + $0xc] sm:$0xf]
  %v25 = vld [vmem:[%s1 + $0x10] sm:$0xf]
  %v26 = vld [vmem:[%s1 + $0x14] sm:$0xf]
  %v27 = vld [vmem:[%s1 + $0x18] sm:$0xf]
  %v28 = vld [vmem:[%s1 + $0x1c] sm:$0xf]
  %v29 = vunpack.c.l.bf16 %v21
  %v30 = vunpack.c.l.bf16 %v22
  %v31 = vunpack.c.l.bf16 %v23
  %v32 = vunpack.c.l.bf16 %v24
  %v33 = vunpack.c.l.bf16 %v25
  %v34 = vunpack.c.l.bf16 %v26
  %v35 = vunpack.c.l.bf16 %v27
  %v36 = vunpack.c.l.bf16 %v28
  %38 = vset.pattern.permute.xlu0 0
  %39 = vperm.xlu0 %38, %v29
  %v40 = vpop.permute.xlu0 %39
  %43 = vset.pattern.permute.xlu0 0
  %44 = vperm.xlu0 %43, %v30
  %v45 = vpop.permute.xlu0 %44
  %48 = vset.pattern.permute.xlu0 0
  %49 = vperm.xlu0 %48, %v31
  %v50 = vpop.permute.xlu0 %49
  %53 = vset.pattern.permute.xlu0 0
  %54 = vperm.xlu0 %53, %v32
  %v55 = vpop.permute.xlu0 %54
  %58 = vset.pattern.permute.xlu0 0
  %59 = vperm.xlu0 %58, %v33
  %v60 = vpop.permute.xlu0 %59
  %63 = vset.pattern.permute.xlu0 0
  %64 = vperm.xlu0 %63, %v34
  %v65 = vpop.permute.xlu0 %64
  %68 = vset.pattern.permute.xlu0 0
  %69 = vperm.xlu0 %68, %v35
  %v70 = vpop.permute.xlu0 %69
  %73 = vset.pattern.permute.xlu0 0
  %74 = vperm.xlu0 %73, %v36
  %v75 = vpop.permute.xlu0 %74
  %v77 = vld [vmem:[%s0] sm:$0x55]
  %v78 = vunpack.c.l.bf16 %v77
  %v79 = vunpack.c.h.bf16 %v77
  %v82 = vlaneseq
  %v83 = vshrl.u32 %v82, 7
  %v84 = vsub.s32 0, %v83
  %v85 = vrot.slane %v78, %v84
  %v86 = vlaneseq
  %v87 = vshrl.u32 %v86, 7
  %v88 = vsub.s32 4, %v87
  %v89 = vrot.slane %v78, %v88
  %v90 = vlaneseq
  %v91 = vshrl.u32 %v90, 7
  %v92 = vsub.s32 0, %v91
  %v93 = vrot.slane %v79, %v92
  %v94 = vlaneseq
  %v95 = vshrl.u32 %v94, 7
  %v96 = vsub.s32 4, %v95
  %v97 = vrot.slane %v79, %v96
  %v102 = vlaneseq
  %v103 = vshrl.u32 %v102, 7
  %v104 = vsub.s32 0, %v103
  %v105 = vrot.slane %v85, %v104
  %v106 = vlaneseq
  %v107 = vshrl.u32 %v106, 7
  %v108 = vsub.s32 0, %v107
  %v109 = vrot.slane %v89, %v108
  %v110 = vlaneseq
  %v111 = vshrl.u32 %v110, 7
  %v112 = vsub.s32 0, %v111
  %v113 = vrot.slane %v93, %v112
  %v114 = vlaneseq
  %v115 = vshrl.u32 %v114, 7
  %v116 = vsub.s32 0, %v115
  %v117 = vrot.slane %v97, %v116
  %v118 = vmul.f32 %v40, %v105
  %v119 = vmul.f32 %v40, %v109
  %v120 = vmul.f32 %v40, %v113
  %v121 = vmul.f32 %v40, %v117
  %v122 = vmul.f32 %v45, %v105
  %v123 = vmul.f32 %v45, %v109
  %v124 = vmul.f32 %v45, %v113
  %v125 = vmul.f32 %v45, %v117
  %v126 = vmul.f32 %v50, %v105
  %v127 = vmul.f32 %v50, %v109
  %v128 = vmul.f32 %v50, %v113
  %v129 = vmul.f32 %v50, %v117
  %v130 = vmul.f32 %v55, %v105
  %v131 = vmul.f32 %v55, %v109
  %v132 = vmul.f32 %v55, %v113
  %v133 = vmul.f32 %v55, %v117
  %v134 = vmul.f32 %v60, %v105
  %v135 = vmul.f32 %v60, %v109
  %v136 = vmul.f32 %v60, %v113
  %v137 = vmul.f32 %v60, %v117
  %v138 = vmul.f32 %v65, %v105
  %v139 = vmul.f32 %v65, %v109
  %v140 = vmul.f32 %v65, %v113
  %v141 = vmul.f32 %v65, %v117
  %v142 = vmul.f32 %v70, %v105
  %v143 = vmul.f32 %v70, %v109
  %v144 = vmul.f32 %v70, %v113
  %v145 = vmul.f32 %v70, %v117
  %v146 = vmul.f32 %v75, %v105
  %v147 = vmul.f32 %v75, %v109
  %v148 = vmul.f32 %v75, %v113
  %v149 = vmul.f32 %v75, %v117
  %v150 = vadd.f32 %v118, 0.0
  %v151 = vadd.f32 %v119, 0.0
  %v152 = vadd.f32 %v120, 0.0
  %v153 = vadd.f32 %v121, 0.0
  %v154 = vadd.f32 %v122, 0.0
  %v155 = vadd.f32 %v123, 0.0
  %v156 = vadd.f32 %v124, 0.0
  %v157 = vadd.f32 %v125, 0.0
  %v158 = vadd.f32 %v126, 0.0
  %v159 = vadd.f32 %v127, 0.0
  %v160 = vadd.f32 %v128, 0.0
  %v161 = vadd.f32 %v129, 0.0
  %v162 = vadd.f32 %v130, 0.0
  %v163 = vadd.f32 %v131, 0.0
  %v164 = vadd.f32 %v132, 0.0
  %v165 = vadd.f32 %v133, 0.0
  %v166 = vadd.f32 %v134, 0.0
  %v167 = vadd.f32 %v135, 0.0
  %v168 = vadd.f32 %v136, 0.0
  %v169 = vadd.f32 %v137, 0.0
  %v170 = vadd.f32 %v138, 0.0
  %v171 = vadd.f32 %v139, 0.0
  %v172 = vadd.f32 %v140, 0.0
  %v173 = vadd.f32 %v141, 0.0
  %v174 = vadd.f32 %v142, 0.0
  %v175 = vadd.f32 %v143, 0.0
  %v176 = vadd.f32 %v144, 0.0
  %v177 = vadd.f32 %v145, 0.0
  %v178 = vadd.f32 %v146, 0.0
  %v179 = vadd.f32 %v147, 0.0
  %v180 = vadd.f32 %v148, 0.0
  %v181 = vadd.f32 %v149, 0.0
  %182 = vset.pattern.permute.xlu0 1
  %183 = vperm.xlu0 %182, %v29
  %v184 = vpop.permute.xlu0 %183
  %186 = vset.pattern.permute.xlu0 1
  %187 = vperm.xlu0 %186, %v30
  %v188 = vpop.permute.xlu0 %187
  %190 = vset.pattern.permute.xlu0 1
  %191 = vperm.xlu0 %190, %v31
  %v192 = vpop.permute.xlu0 %191
  %194 = vset.pattern.permute.xlu0 1
  %195 = vperm.xlu0 %194, %v32
  %v196 = vpop.permute.xlu0 %195
  %198 = vset.pattern.permute.xlu0 1
  %199 = vperm.xlu0 %198, %v33
  %v200 = vpop.permute.xlu0 %199
  %202 = vset.pattern.permute.xlu0 1
  %203 = vperm.xlu0 %202, %v34
  %v204 = vpop.permute.xlu0 %203
  %206 = vset.pattern.permute.xlu0 1
  %207 = vperm.xlu0 %206, %v35
  %v208 = vpop.permute.xlu0 %207
  %210 = vset.pattern.permute.xlu0 1
  %211 = vperm.xlu0 %210, %v36
  %v212 = vpop.permute.xlu0 %211
  %v214 = vlaneseq
  %v215 = vshrl.u32 %v214, 7
  %v216 = vsub.s32 1, %v215
  %v217 = vrot.slane %v78, %v216
  %v218 = vlaneseq
  %v219 = vshrl.u32 %v218, 7
  %v220 = vsub.s32 5, %v219
  %v221 = vrot.slane %v78, %v220
  %v222 = vlaneseq
  %v223 = vshrl.u32 %v222, 7
  %v224 = vsub.s32 1, %v223
  %v225 = vrot.slane %v79, %v224
  %v226 = vlaneseq
  %v227 = vshrl.u32 %v226, 7
  %v228 = vsub.s32 5, %v227
  %v229 = vrot.slane %v79, %v228
  %v234 = vlaneseq
  %v235 = vshrl.u32 %v234, 7
  %v236 = vsub.s32 1, %v235
  %v237 = vrot.slane %v217, %v236
  %v238 = vlaneseq
  %v239 = vshrl.u32 %v238, 7
  %v240 = vsub.s32 1, %v239
  %v241 = vrot.slane %v221, %v240
  %v242 = vlaneseq
  %v243 = vshrl.u32 %v242, 7
  %v244 = vsub.s32 1, %v243
  %v245 = vrot.slane %v225, %v244
  %v246 = vlaneseq
  %v247 = vshrl.u32 %v246, 7
  %v248 = vsub.s32 1, %v247
  %v249 = vrot.slane %v229, %v248
  %v250 = vmul.f32 %v184, %v237
  %v251 = vmul.f32 %v184, %v241
  %v252 = vmul.f32 %v184, %v245
  %v253 = vmul.f32 %v184, %v249
  %v254 = vmul.f32 %v188, %v237
  %v255 = vmul.f32 %v188, %v241
  %v256 = vmul.f32 %v188, %v245
  %v257 = vmul.f32 %v188, %v249
  %v258 = vmul.f32 %v192, %v237
  %v259 = vmul.f32 %v192, %v241
  %v260 = vmul.f32 %v192, %v245
  %v261 = vmul.f32 %v192, %v249
  %v262 = vmul.f32 %v196, %v237
  %v263 = vmul.f32 %v196, %v241
  %v264 = vmul.f32 %v196, %v245
  %v265 = vmul.f32 %v196, %v249
  %v266 = vmul.f32 %v200, %v237
  %v267 = vmul.f32 %v200, %v241
  %v268 = vmul.f32 %v200, %v245
  %v269 = vmul.f32 %v200, %v249
  %v270 = vmul.f32 %v204, %v237
  %v271 = vmul.f32 %v204, %v241
  %v272 = vmul.f32 %v204, %v245
  %v273 = vmul.f32 %v204, %v249
  %v274 = vmul.f32 %v208, %v237
  %v275 = vmul.f32 %v208, %v241
  %v276 = vmul.f32 %v208, %v245
  %v277 = vmul.f32 %v208, %v249
  %v278 = vmul.f32 %v212, %v237
  %v279 = vmul.f32 %v212, %v241
  %v280 = vmul.f32 %v212, %v245
  %v281 = vmul.f32 %v212, %v249
  %v282 = vadd.f32 %v150, %v250
  %v283 = vadd.f32 %v151, %v251
  %v284 = vadd.f32 %v152, %v252
  %v285 = vadd.f32 %v153, %v253
  %v286 = vadd.f32 %v154, %v254
  %v287 = vadd.f32 %v155, %v255
  %v288 = vadd.f32 %v156, %v256
  %v289 = vadd.f32 %v157, %v257
  %v290 = vadd.f32 %v158, %v258
  %v291 = vadd.f32 %v159, %v259
  %v292 = vadd.f32 %v160, %v260
  %v293 = vadd.f32 %v161, %v261
  %v294 = vadd.f32 %v162, %v262
  %v295 = vadd.f32 %v163, %v263
  %v296 = vadd.f32 %v164, %v264
  %v297 = vadd.f32 %v165, %v265
  %v298 = vadd.f32 %v166, %v266
  %v299 = vadd.f32 %v167, %v267
  %v300 = vadd.f32 %v168, %v268
  %v301 = vadd.f32 %v169, %v269
  %v302 = vadd.f32 %v170, %v270
  %v303 = vadd.f32 %v171, %v271
  %v304 = vadd.f32 %v172, %v272
  %v305 = vadd.f32 %v173, %v273
  %v306 = vadd.f32 %v174, %v274
  %v307 = vadd.f32 %v175, %v275
  %v308 = vadd.f32 %v176, %v276
  %v309 = vadd.f32 %v177, %v277
  %v310 = vadd.f32 %v178, %v278
  %v311 = vadd.f32 %v179, %v279
  %v312 = vadd.f32 %v180, %v280
  %v313 = vadd.f32 %v181, %v281
  %314 = vset.pattern.permute.xlu0 2
  %315 = vperm.xlu0 %314, %v29
  %v316 = vpop.permute.xlu0 %315
  %318 = vset.pattern.permute.xlu0 2
  %319 = vperm.xlu0 %318, %v30
  %v320 = vpop.permute.xlu0 %319
  %322 = vset.pattern.permute.xlu0 2
  %323 = vperm.xlu0 %322, %v31
  %v324 = vpop.permute.xlu0 %323
  %326 = vset.pattern.permute.xlu0 2
  %327 = vperm.xlu0 %326, %v32
  %v328 = vpop.permute.xlu0 %327
  %330 = vset.pattern.permute.xlu0 2
  %331 = vperm.xlu0 %330, %v33
  %v332 = vpop.permute.xlu0 %331
  %334 = vset.pattern.permute.xlu0 2
  %335 = vperm.xlu0 %334, %v34
  %v336 = vpop.permute.xlu0 %335
  %338 = vset.pattern.permute.xlu0 2
  %339 = vperm.xlu0 %338, %v35
  %v340 = vpop.permute.xlu0 %339
  %342 = vset.pattern.permute.xlu0 2
  %343 = vperm.xlu0 %342, %v36
  %v344 = vpop.permute.xlu0 %343
  %v346 = vld [vmem:[%s0] sm:$0xaa]
  %v347 = vunpack.c.l.bf16 %v346
  %v348 = vunpack.c.h.bf16 %v346
  %v351 = vlaneseq
  %v352 = vshrl.u32 %v351, 7
  %v353 = vsub.s32 2, %v352
  %v354 = vrot.slane %v347, %v353
  %v355 = vlaneseq
  %v356 = vshrl.u32 %v355, 7
  %v357 = vsub.s32 6, %v356
  %v358 = vrot.slane %v347, %v357
  %v359 = vlaneseq
  %v360 = vshrl.u32 %v359, 7
  %v361 = vsub.s32 2, %v360
  %v362 = vrot.slane %v348, %v361
  %v363 = vlaneseq
  %v364 = vshrl.u32 %v363, 7
  %v365 = vsub.s32 6, %v364
  %v366 = vrot.slane %v348, %v365
  %v371 = vlaneseq
  %v372 = vshrl.u32 %v371, 7
  %v373 = vsub.s32 2, %v372
  %v374 = vrot.slane %v354, %v373
  %v375 = vlaneseq
  %v376 = vshrl.u32 %v375, 7
  %v377 = vsub.s32 2, %v376
  %v378 = vrot.slane %v358, %v377
  %v379 = vlaneseq
  %v380 = vshrl.u32 %v379, 7
  %v381 = vsub.s32 2, %v380
  %v382 = vrot.slane %v362, %v381
  %v383 = vlaneseq
  %v384 = vshrl.u32 %v383, 7
  %v385 = vsub.s32 2, %v384
  %v386 = vrot.slane %v366, %v385
  %v387 = vmul.f32 %v316, %v374
  %v388 = vmul.f32 %v316, %v378
  %v389 = vmul.f32 %v316, %v382
  %v390 = vmul.f32 %v316, %v386
  %v391 = vmul.f32 %v320, %v374
  %v392 = vmul.f32 %v320, %v378
  %v393 = vmul.f32 %v320, %v382
  %v394 = vmul.f32 %v320, %v386
  %v395 = vmul.f32 %v324, %v374
  %v396 = vmul.f32 %v324, %v378
  %v397 = vmul.f32 %v324, %v382
  %v398 = vmul.f32 %v324, %v386
  %v399 = vmul.f32 %v328, %v374
  %v400 = vmul.f32 %v328, %v378
  %v401 = vmul.f32 %v328, %v382
  %v402 = vmul.f32 %v328, %v386
  %v403 = vmul.f32 %v332, %v374
  %v404 = vmul.f32 %v332, %v378
  %v405 = vmul.f32 %v332, %v382
  %v406 = vmul.f32 %v332, %v386
  %v407 = vmul.f32 %v336, %v374
  %v408 = vmul.f32 %v336, %v378
  %v409 = vmul.f32 %v336, %v382
  %v410 = vmul.f32 %v336, %v386
  %v411 = vmul.f32 %v340, %v374
  %v412 = vmul.f32 %v340, %v378
  %v413 = vmul.f32 %v340, %v382
  %v414 = vmul.f32 %v340, %v386
  %v415 = vmul.f32 %v344, %v374
  %v416 = vmul.f32 %v344, %v378
  %v417 = vmul.f32 %v344, %v382
  %v418 = vmul.f32 %v344, %v386
  %v419 = vadd.f32 %v282, %v387
  %v420 = vadd.f32 %v283, %v388
  %v421 = vadd.f32 %v284, %v389
  %v422 = vadd.f32 %v285, %v390
  %v423 = vadd.f32 %v286, %v391
  %v424 = vadd.f32 %v287, %v392
  %v425 = vadd.f32 %v288, %v393
  %v426 = vadd.f32 %v289, %v394
  %v427 = vadd.f32 %v290, %v395
  %v428 = vadd.f32 %v291, %v396
  %v429 = vadd.f32 %v292, %v397
  %v430 = vadd.f32 %v293, %v398
  %v431 = vadd.f32 %v294, %v399
  %v432 = vadd.f32 %v295, %v400
  %v433 = vadd.f32 %v296, %v401
  %v434 = vadd.f32 %v297, %v402
  %v435 = vadd.f32 %v298, %v403
  %v436 = vadd.f32 %v299, %v404
  %v437 = vadd.f32 %v300, %v405
  %v438 = vadd.f32 %v301, %v406
  %v439 = vadd.f32 %v302, %v407
  %v440 = vadd.f32 %v303, %v408
  %v441 = vadd.f32 %v304, %v409
  %v442 = vadd.f32 %v305, %v410
  %v443 = vadd.f32 %v306, %v411
  %v444 = vadd.f32 %v307, %v412
  %v445 = vadd.f32 %v308, %v413
  %v446 = vadd.f32 %v309, %v414
  %v447 = vadd.f32 %v310, %v415
  %v448 = vadd.f32 %v311, %v416
  %v449 = vadd.f32 %v312, %v417
  %v450 = vadd.f32 %v313, %v418
  %v451 = vld [vmem:[%s2] sm:$0xff]
  %v452 = vld [vmem:[%s2 + $0x8] sm:$0xff]
  %v453 = vld [vmem:[%s2 + $0x10] sm:$0xff]
  %v454 = vld [vmem:[%s2 + $0x18] sm:$0xff]
  %v455 = vld [vmem:[%s2 + $0x20] sm:$0xff]
  %v456 = vld [vmem:[%s2 + $0x28] sm:$0xff]
  %v457 = vld [vmem:[%s2 + $0x30] sm:$0xff]
  %v458 = vld [vmem:[%s2 + $0x38] sm:$0xff]
  %460 = vset.pattern.permute.xlu0 0
  %461 = vperm.xlu0 %460, %v451
  %v462 = vpop.permute.xlu0 %461
  %465 = vset.pattern.permute.xlu0 0
  %466 = vperm.xlu0 %465, %v452
  %v467 = vpop.permute.xlu0 %466
  %470 = vset.pattern.permute.xlu0 0
  %471 = vperm.xlu0 %470, %v453
  %v472 = vpop.permute.xlu0 %471
  %475 = vset.pattern.permute.xlu0 0
  %476 = vperm.xlu0 %475, %v454
  %v477 = vpop.permute.xlu0 %476
  %480 = vset.pattern.permute.xlu0 0
  %481 = vperm.xlu0 %480, %v455
  %v482 = vpop.permute.xlu0 %481
  %485 = vset.pattern.permute.xlu0 0
  %486 = vperm.xlu0 %485, %v456
  %v487 = vpop.permute.xlu0 %486
  %490 = vset.pattern.permute.xlu0 0
  %491 = vperm.xlu0 %490, %v457
  %v492 = vpop.permute.xlu0 %491
  %495 = vset.pattern.permute.xlu0 0
  %496 = vperm.xlu0 %495, %v458
  %v497 = vpop.permute.xlu0 %496
  %v499 = vadd.f32 %v419, %v462
  %v500 = vadd.f32 %v420, %v462
  %v501 = vadd.f32 %v421, %v462
  %v502 = vadd.f32 %v422, %v462
  %v503 = vadd.f32 %v423, %v467
  %v504 = vadd.f32 %v424, %v467
  %v505 = vadd.f32 %v425, %v467
  %v506 = vadd.f32 %v426, %v467
  %v507 = vadd.f32 %v427, %v472
  %v508 = vadd.f32 %v428, %v472
  %v509 = vadd.f32 %v429, %v472
  %v510 = vadd.f32 %v430, %v472
  %v511 = vadd.f32 %v431, %v477
  %v512 = vadd.f32 %v432, %v477
  %v513 = vadd.f32 %v433, %v477
  %v514 = vadd.f32 %v434, %v477
  %v515 = vadd.f32 %v435, %v482
  %v516 = vadd.f32 %v436, %v482
  %v517 = vadd.f32 %v437, %v482
  %v518 = vadd.f32 %v438, %v482
  %v519 = vadd.f32 %v439, %v487
  %v520 = vadd.f32 %v440, %v487
  %v521 = vadd.f32 %v441, %v487
  %v522 = vadd.f32 %v442, %v487
  %v523 = vadd.f32 %v443, %v492
  %v524 = vadd.f32 %v444, %v492
  %v525 = vadd.f32 %v445, %v492
  %v526 = vadd.f32 %v446, %v492
  %v527 = vadd.f32 %v447, %v497
  %v528 = vadd.f32 %v448, %v497
  %v529 = vadd.f32 %v449, %v497
  %v530 = vadd.f32 %v450, %v497
  %v531 = vmul.f32 %v499, 0.5
  %v532 = vmul.f32 %v500, 0.5
  %v533 = vmul.f32 %v501, 0.5
  %v534 = vmul.f32 %v502, 0.5
  %v535 = vmul.f32 %v503, 0.5
  %v536 = vmul.f32 %v504, 0.5
  %v537 = vmul.f32 %v505, 0.5
  %v538 = vmul.f32 %v506, 0.5
  %v539 = vmul.f32 %v507, 0.5
  %v540 = vmul.f32 %v508, 0.5
  %v541 = vmul.f32 %v509, 0.5
  %v542 = vmul.f32 %v510, 0.5
  %v543 = vmul.f32 %v511, 0.5
  %v544 = vmul.f32 %v512, 0.5
  %v545 = vmul.f32 %v513, 0.5
  %v546 = vmul.f32 %v514, 0.5
  %v547 = vmul.f32 %v515, 0.5
  %v548 = vmul.f32 %v516, 0.5
  %v549 = vmul.f32 %v517, 0.5
  %v550 = vmul.f32 %v518, 0.5
  %v551 = vmul.f32 %v519, 0.5
  %v552 = vmul.f32 %v520, 0.5
  %v553 = vmul.f32 %v521, 0.5
  %v554 = vmul.f32 %v522, 0.5
  %v555 = vmul.f32 %v523, 0.5
  %v556 = vmul.f32 %v524, 0.5
  %v557 = vmul.f32 %v525, 0.5
  %v558 = vmul.f32 %v526, 0.5
  %v559 = vmul.f32 %v527, 0.5
  %v560 = vmul.f32 %v528, 0.5
  %v561 = vmul.f32 %v529, 0.5
  %v562 = vmul.f32 %v530, 0.5
  %v563 = vmul.f32 %v499, 0.044715
  %v564 = vmul.f32 %v500, 0.044715
  %v565 = vmul.f32 %v501, 0.044715
  %v566 = vmul.f32 %v502, 0.044715
  %v567 = vmul.f32 %v503, 0.044715
  %v568 = vmul.f32 %v504, 0.044715
  %v569 = vmul.f32 %v505, 0.044715
  %v570 = vmul.f32 %v506, 0.044715
  %v571 = vmul.f32 %v507, 0.044715
  %v572 = vmul.f32 %v508, 0.044715
  %v573 = vmul.f32 %v509, 0.044715
  %v574 = vmul.f32 %v510, 0.044715
  %v575 = vmul.f32 %v511, 0.044715
  %v576 = vmul.f32 %v512, 0.044715
  %v577 = vmul.f32 %v513, 0.044715
  %v578 = vmul.f32 %v514, 0.044715
  %v579 = vmul.f32 %v515, 0.044715
  %v580 = vmul.f32 %v516, 0.044715
  %v581 = vmul.f32 %v517, 0.044715
  %v582 = vmul.f32 %v518, 0.044715
  %v583 = vmul.f32 %v519, 0.044715
  %v584 = vmul.f32 %v520, 0.044715
  %v585 = vmul.f32 %v521, 0.044715
  %v586 = vmul.f32 %v522, 0.044715
  %v587 = vmul.f32 %v523, 0.044715
  %v588 = vmul.f32 %v524, 0.044715
  %v589 = vmul.f32 %v525, 0.044715
  %v590 = vmul.f32 %v526, 0.044715
  %v591 = vmul.f32 %v527, 0.044715
  %v592 = vmul.f32 %v528, 0.044715
  %v593 = vmul.f32 %v529, 0.044715
  %v594 = vmul.f32 %v530, 0.044715
  %v595 = vmul.f32 %v563, %v499
  %v596 = vmul.f32 %v564, %v500
  %v597 = vmul.f32 %v565, %v501
  %v598 = vmul.f32 %v566, %v502
  %v599 = vmul.f32 %v567, %v503
  %v600 = vmul.f32 %v568, %v504
  %v601 = vmul.f32 %v569, %v505
  %v602 = vmul.f32 %v570, %v506
  %v603 = vmul.f32 %v571, %v507
  %v604 = vmul.f32 %v572, %v508
  %v605 = vmul.f32 %v573, %v509
  %v606 = vmul.f32 %v574, %v510
  %v607 = vmul.f32 %v575, %v511
  %v608 = vmul.f32 %v576, %v512
  %v609 = vmul.f32 %v577, %v513
  %v610 = vmul.f32 %v578, %v514
  %v611 = vmul.f32 %v579, %v515
  %v612 = vmul.f32 %v580, %v516
  %v613 = vmul.f32 %v581, %v517
  %v614 = vmul.f32 %v582, %v518
  %v615 = vmul.f32 %v583, %v519
  %v616 = vmul.f32 %v584, %v520
  %v617 = vmul.f32 %v585, %v521
  %v618 = vmul.f32 %v586, %v522
  %v619 = vmul.f32 %v587, %v523
  %v620 = vmul.f32 %v588, %v524
  %v621 = vmul.f32 %v589, %v525
  %v622 = vmul.f32 %v590, %v526
  %v623 = vmul.f32 %v591, %v527
  %v624 = vmul.f32 %v592, %v528
  %v625 = vmul.f32 %v593, %v529
  %v626 = vmul.f32 %v594, %v530
  %v627 = vmul.f32 %v595, %v499
  %v628 = vmul.f32 %v596, %v500
  %v629 = vmul.f32 %v597, %v501
  %v630 = vmul.f32 %v598, %v502
  %v631 = vmul.f32 %v599, %v503
  %v632 = vmul.f32 %v600, %v504
  %v633 = vmul.f32 %v601, %v505
  %v634 = vmul.f32 %v602, %v506
  %v635 = vmul.f32 %v603, %v507
  %v636 = vmul.f32 %v604, %v508
  %v637 = vmul.f32 %v605, %v509
  %v638 = vmul.f32 %v606, %v510
  %v639 = vmul.f32 %v607, %v511
  %v640 = vmul.f32 %v608, %v512
  %v641 = vmul.f32 %v609, %v513
  %v642 = vmul.f32 %v610, %v514
  %v643 = vmul.f32 %v611, %v515
  %v644 = vmul.f32 %v612, %v516
  %v645 = vmul.f32 %v613, %v517
  %v646 = vmul.f32 %v614, %v518
  %v647 = vmul.f32 %v615, %v519
  %v648 = vmul.f32 %v616, %v520
  %v649 = vmul.f32 %v617, %v521
  %v650 = vmul.f32 %v618, %v522
  %v651 = vmul.f32 %v619, %v523
  %v652 = vmul.f32 %v620, %v524
  %v653 = vmul.f32 %v621, %v525
  %v654 = vmul.f32 %v622, %v526
  %v655 = vmul.f32 %v623, %v527
  %v656 = vmul.f32 %v624, %v528
  %v657 = vmul.f32 %v625, %v529
  %v658 = vmul.f32 %v626, %v530
  %v659 = vadd.f32 %v499, %v627
  %v660 = vadd.f32 %v500, %v628
  %v661 = vadd.f32 %v501, %v629
  %v662 = vadd.f32 %v502, %v630
  %v663 = vadd.f32 %v503, %v631
  %v664 = vadd.f32 %v504, %v632
  %v665 = vadd.f32 %v505, %v633
  %v666 = vadd.f32 %v506, %v634
  %v667 = vadd.f32 %v507, %v635
  %v668 = vadd.f32 %v508, %v636
  %v669 = vadd.f32 %v509, %v637
  %v670 = vadd.f32 %v510, %v638
  %v671 = vadd.f32 %v511, %v639
  %v672 = vadd.f32 %v512, %v640
  %v673 = vadd.f32 %v513, %v641
  %v674 = vadd.f32 %v514, %v642
  %v675 = vadd.f32 %v515, %v643
  %v676 = vadd.f32 %v516, %v644
  %v677 = vadd.f32 %v517, %v645
  %v678 = vadd.f32 %v518, %v646
  %v679 = vadd.f32 %v519, %v647
  %v680 = vadd.f32 %v520, %v648
  %v681 = vadd.f32 %v521, %v649
  %v682 = vadd.f32 %v522, %v650
  %v683 = vadd.f32 %v523, %v651
  %v684 = vadd.f32 %v524, %v652
  %v685 = vadd.f32 %v525, %v653
  %v686 = vadd.f32 %v526, %v654
  %v687 = vadd.f32 %v527, %v655
  %v688 = vadd.f32 %v528, %v656
  %v689 = vadd.f32 %v529, %v657
  %v690 = vadd.f32 %v530, %v658
  %v691 = vmul.f32 %v659, 0.7978846
  %v692 = vmul.f32 %v660, 0.7978846
  %v693 = vmul.f32 %v661, 0.7978846
  %v694 = vmul.f32 %v662, 0.7978846
  %v695 = vmul.f32 %v663, 0.7978846
  %v696 = vmul.f32 %v664, 0.7978846
  %v697 = vmul.f32 %v665, 0.7978846
  %v698 = vmul.f32 %v666, 0.7978846
  %v699 = vmul.f32 %v667, 0.7978846
  %v700 = vmul.f32 %v668, 0.7978846
  %v701 = vmul.f32 %v669, 0.7978846
  %v702 = vmul.f32 %v670, 0.7978846
  %v703 = vmul.f32 %v671, 0.7978846
  %v704 = vmul.f32 %v672, 0.7978846
  %v705 = vmul.f32 %v673, 0.7978846
  %v706 = vmul.f32 %v674, 0.7978846
  %v707 = vmul.f32 %v675, 0.7978846
  %v708 = vmul.f32 %v676, 0.7978846
  %v709 = vmul.f32 %v677, 0.7978846
  %v710 = vmul.f32 %v678, 0.7978846
  %v711 = vmul.f32 %v679, 0.7978846
  %v712 = vmul.f32 %v680, 0.7978846
  %v713 = vmul.f32 %v681, 0.7978846
  %v714 = vmul.f32 %v682, 0.7978846
  %v715 = vmul.f32 %v683, 0.7978846
  %v716 = vmul.f32 %v684, 0.7978846
  %v717 = vmul.f32 %v685, 0.7978846
  %v718 = vmul.f32 %v686, 0.7978846
  %v719 = vmul.f32 %v687, 0.7978846
  %v720 = vmul.f32 %v688, 0.7978846
  %v721 = vmul.f32 %v689, 0.7978846
  %v722 = vmul.f32 %v690, 0.7978846
  %v723 = vtanh.pop %v691
  %v724 = vtanh.pop %v692
  %v725 = vtanh.pop %v693
  %v726 = vtanh.pop %v694
  %v727 = vtanh.pop %v695
  %v728 = vtanh.pop %v696
  %v729 = vtanh.pop %v697
  %v730 = vtanh.pop %v698
  %v731 = vtanh.pop %v699
  %v732 = vtanh.pop %v700
  %v733 = vtanh.pop %v701
  %v734 = vtanh.pop %v702
  %v735 = vtanh.pop %v703
  %v736 = vtanh.pop %v704
  %v737 = vtanh.pop %v705
  %v738 = vtanh.pop %v706
  %v739 = vtanh.pop %v707
  %v740 = vtanh.pop %v708
  %v741 = vtanh.pop %v709
  %v742 = vtanh.pop %v710
  %v743 = vtanh.pop %v711
  %v744 = vtanh.pop %v712
  %v745 = vtanh.pop %v713
  %v746 = vtanh.pop %v714
  %v747 = vtanh.pop %v715
  %v748 = vtanh.pop %v716
  %v749 = vtanh.pop %v717
  %v750 = vtanh.pop %v718
  %v751 = vtanh.pop %v719
  %v752 = vtanh.pop %v720
  %v753 = vtanh.pop %v721
  %v754 = vtanh.pop %v722
  %v755 = vadd.f32 %v723, 1.0
  %v756 = vadd.f32 %v724, 1.0
  %v757 = vadd.f32 %v725, 1.0
  %v758 = vadd.f32 %v726, 1.0
  %v759 = vadd.f32 %v727, 1.0
  %v760 = vadd.f32 %v728, 1.0
  %v761 = vadd.f32 %v729, 1.0
  %v762 = vadd.f32 %v730, 1.0
  %v763 = vadd.f32 %v731, 1.0
  %v764 = vadd.f32 %v732, 1.0
  %v765 = vadd.f32 %v733, 1.0
  %v766 = vadd.f32 %v734, 1.0
  %v767 = vadd.f32 %v735, 1.0
  %v768 = vadd.f32 %v736, 1.0
  %v769 = vadd.f32 %v737, 1.0
  %v770 = vadd.f32 %v738, 1.0
  %v771 = vadd.f32 %v739, 1.0
  %v772 = vadd.f32 %v740, 1.0
  %v773 = vadd.f32 %v741, 1.0
  %v774 = vadd.f32 %v742, 1.0
  %v775 = vadd.f32 %v743, 1.0
  %v776 = vadd.f32 %v744, 1.0
  %v777 = vadd.f32 %v745, 1.0
  %v778 = vadd.f32 %v746, 1.0
  %v779 = vadd.f32 %v747, 1.0
  %v780 = vadd.f32 %v748, 1.0
  %v781 = vadd.f32 %v749, 1.0
  %v782 = vadd.f32 %v750, 1.0
  %v783 = vadd.f32 %v751, 1.0
  %v784 = vadd.f32 %v752, 1.0
  %v785 = vadd.f32 %v753, 1.0
  %v786 = vadd.f32 %v754, 1.0
  %v787 = vmul.f32 %v531, %v755
  %v788 = vmul.f32 %v532, %v756
  %v789 = vmul.f32 %v533, %v757
  %v790 = vmul.f32 %v534, %v758
  %v791 = vmul.f32 %v535, %v759
  %v792 = vmul.f32 %v536, %v760
  %v793 = vmul.f32 %v537, %v761
  %v794 = vmul.f32 %v538, %v762
  %v795 = vmul.f32 %v539, %v763
  %v796 = vmul.f32 %v540, %v764
  %v797 = vmul.f32 %v541, %v765
  %v798 = vmul.f32 %v542, %v766
  %v799 = vmul.f32 %v543, %v767
  %v800 = vmul.f32 %v544, %v768
  %v801 = vmul.f32 %v545, %v769
  %v802 = vmul.f32 %v546, %v770
  %v803 = vmul.f32 %v547, %v771
  %v804 = vmul.f32 %v548, %v772
  %v805 = vmul.f32 %v549, %v773
  %v806 = vmul.f32 %v550, %v774
  %v807 = vmul.f32 %v551, %v775
  %v808 = vmul.f32 %v552, %v776
  %v809 = vmul.f32 %v553, %v777
  %v810 = vmul.f32 %v554, %v778
  %v811 = vmul.f32 %v555, %v779
  %v812 = vmul.f32 %v556, %v780
  %v813 = vmul.f32 %v557, %v781
  %v814 = vmul.f32 %v558, %v782
  %v815 = vmul.f32 %v559, %v783
  %v816 = vmul.f32 %v560, %v784
  %v817 = vmul.f32 %v561, %v785
  %v818 = vmul.f32 %v562, %v786
  %v819 = vpack.c.bf16 %v791, %v787
  %v820 = vpack.c.bf16 %v792, %v788
  %v821 = vpack.c.bf16 %v793, %v789
  %v822 = vpack.c.bf16 %v794, %v790
  %v823 = vpack.c.bf16 %v799, %v795
  %v824 = vpack.c.bf16 %v800, %v796
  %v825 = vpack.c.bf16 %v801, %v797
  %v826 = vpack.c.bf16 %v802, %v798
  %v827 = vpack.c.bf16 %v807, %v803
  %v828 = vpack.c.bf16 %v808, %v804
  %v829 = vpack.c.bf16 %v809, %v805
  %v830 = vpack.c.bf16 %v810, %v806
  %v831 = vpack.c.bf16 %v815, %v811
  %v832 = vpack.c.bf16 %v816, %v812
  %v833 = vpack.c.bf16 %v817, %v813
  %v834 = vpack.c.bf16 %v818, %v814
  %835 = vst [vmem:[#allocation2] sm:$0xff] %v819
  %836 = vst [vmem:[#allocation2 + $0x8] sm:$0xff] %v820
  %837 = vst [vmem:[#allocation2 + $0x10] sm:$0xff] %v821
  %838 = vst [vmem:[#allocation2 + $0x18] sm:$0xff] %v822
  %839 = vst [vmem:[#allocation2 + $0x20] sm:$0xff] %v823
  %840 = vst [vmem:[#allocation2 + $0x28] sm:$0xff] %v824
  %841 = vst [vmem:[#allocation2 + $0x30] sm:$0xff] %v825
  %842 = vst [vmem:[#allocation2 + $0x38] sm:$0xff] %v826
  %843 = vst [vmem:[#allocation2 + $0x40] sm:$0xff] %v827
  %844 = vst [vmem:[#allocation2 + $0x48] sm:$0xff] %v828
  %845 = vst [vmem:[#allocation2 + $0x50] sm:$0xff] %v829
  %846 = vst [vmem:[#allocation2 + $0x58] sm:$0xff] %v830
  %847 = vst [vmem:[#allocation2 + $0x60] sm:$0xff] %v831
  %848 = vst [vmem:[#allocation2 + $0x68] sm:$0xff] %v832
  %849 = vst [vmem:[#allocation2 + $0x70] sm:$0xff] %v833
  %850 = vst [vmem:[#allocation2 + $0x78] sm:$0xff] %v834
  %v851 = vld [vmem:[%s3] sm:$0xf]
  %v852 = vld [vmem:[%s3 + $0x4] sm:$0xf]
  %v853 = vld [vmem:[%s3 + $0x8] sm:$0xf]
  %v854 = vld [vmem:[%s3 + $0xc] sm:$0xf]
  %v855 = vld [vmem:[#allocation2] sm:$0xff]
  %v856 = vld [vmem:[#allocation2 + $0x8] sm:$0xff]
  %v857 = vld [vmem:[#allocation2 + $0x10] sm:$0xff]
  %v858 = vld [vmem:[#allocation2 + $0x18] sm:$0xff]
  %v859 = vld [vmem:[#allocation2 + $0x20] sm:$0xff]
  %v860 = vld [vmem:[#allocation2 + $0x28] sm:$0xff]
  %v861 = vld [vmem:[#allocation2 + $0x30] sm:$0xff]
  %v862 = vld [vmem:[#allocation2 + $0x38] sm:$0xff]
  %v863 = vld [vmem:[#allocation2 + $0x40] sm:$0xff]
  %v864 = vld [vmem:[#allocation2 + $0x48] sm:$0xff]
  %v865 = vld [vmem:[#allocation2 + $0x50] sm:$0xff]
  %v866 = vld [vmem:[#allocation2 + $0x58] sm:$0xff]
  %v867 = vld [vmem:[#allocation2 + $0x60] sm:$0xff]
  %v868 = vld [vmem:[#allocation2 + $0x68] sm:$0xff]
  %v869 = vld [vmem:[#allocation2 + $0x70] sm:$0xff]
  %v870 = vld [vmem:[#allocation2 + $0x78] sm:$0xff]
  %v871 = vld [vmem:[%s4] sm:$0xff]
  %v872 = vld [vmem:[%s4 + $0x8] sm:$0xff]
  %v873 = vld [vmem:[%s4 + $0x10] sm:$0xff]
  %v874 = vld [vmem:[%s4 + $0x18] sm:$0xff]
  %876 = vset.pattern.permute.xlu0 0
  %877 = vperm.xlu0 %876, %v871
  %v878 = vpop.permute.xlu0 %877
  %881 = vset.pattern.permute.xlu0 0
  %882 = vperm.xlu0 %881, %v872
  %v883 = vpop.permute.xlu0 %882
  %886 = vset.pattern.permute.xlu0 0
  %887 = vperm.xlu0 %886, %v873
  %v888 = vpop.permute.xlu0 %887
  %891 = vset.pattern.permute.xlu0 0
  %892 = vperm.xlu0 %891, %v874
  %v893 = vpop.permute.xlu0 %892
  %v899 = vunpack.c.l.b16 %v851
  %v900 = vunpack.c.l.b16 %v852
  %v901 = vunpack.c.l.b16 %v853
  %v902 = vunpack.c.l.b16 %v854
  %v903 = vpack.c.b16 %v900, %v899
  %v904 = vpack.c.b16 %v902, %v901
  %vm905 = vcmask 523264
  %v907 = vsel %vm905, %v903, 0
  %v910 = vsel %vm905, %v904, 0
  %912 = vmatprep.subr.bf16.mxu0 %v856
  %913 = vmatpush1.bf16.msra.mxu0 %v855
  %914 = vmatprep.subr.bf16.mxu0 %v860
  %915 = vmatpush1.bf16.msra.mxu0 %v859
  %916 = vmatprep.subr.bf16.mxu0 %v864
  %917 = vmatpush1.bf16.msra.mxu0 %v863
  %918 = vmatprep.subr.bf16.mxu0 %v868
  %919 = vmatpush1.bf16.msra.mxu0 %v867
  %920 = vmatprep.subr.bf16.mxu0 0
  %921 = vmatpush1.bf16.msra.mxu0 0
  %922 = vmatprep.subr.bf16.mxu0 0
  %923 = vmatpush1.bf16.msra.mxu0 0
  %924 = vmatprep.subr.bf16.mxu0 0
  %925 = vmatpush1.bf16.msra.mxu0 0
  %926 = vmatprep.subr.bf16.mxu0 0
  %927 = vmatpush1.bf16.msra.mxu0 0
  %928 = vmatprep.subr.bf16.mxu0 0
  %929 = vmatpush1.bf16.msra.mxu0 0
  %930 = vmatprep.subr.bf16.mxu0 0
  %931 = vmatpush1.bf16.msra.mxu0 0
  %932 = vmatprep.subr.bf16.mxu0 0
  %933 = vmatpush1.bf16.msra.mxu0 0
  %934 = vmatprep.subr.bf16.mxu0 0
  %935 = vmatpush1.bf16.msra.mxu0 0
  %936 = vmatprep.subr.bf16.mxu0 0
  %937 = vmatpush1.bf16.msra.mxu0 0
  %938 = vmatprep.subr.bf16.mxu0 0
  %939 = vmatpush1.bf16.msra.mxu0 0
  %940 = vmatprep.subr.bf16.mxu0 0
  %941 = vmatpush1.bf16.msra.mxu0 0
  %942 = vmatprep.subr.bf16.mxu0 0
  %943 = vmatpush1.bf16.msra.mxu0 0
  %944 = vmatprep.mubr.bf16.mxu0 0
  %945 = vmatmul.mubr.bf16.gmra.mrb[0].mxu0 %v907
  %v946 = vpop.f32.mrb[0].mxu0
  %v947 = vadd.f32 %v878, %v946
  %v948 = vpop.f32.mrb[0].mxu0
  %v949 = vadd.f32 %v878, %v948
  %v950 = vpop.f32.mrb[0].mxu0
  %v951 = vadd.f32 %v883, %v950
  %v952 = vpop.f32.mrb[0].mxu0
  %v953 = vadd.f32 %v883, %v952
  %954 = vmatprep.mubr.bf16.mxu0 0
  %955 = vmatmul.mubr.bf16.gmra.mrb[0].mxu0 %v910
  %v956 = vpop.f32.mrb[0].mxu0
  %v957 = vadd.f32 %v888, %v956
  %v958 = vpop.f32.mrb[0].mxu0
  %v959 = vadd.f32 %v888, %v958
  %v960 = vpop.f32.mrb[0].mxu0
  %v961 = vadd.f32 %v893, %v960
  %v962 = vpop.f32.mrb[0].mxu0
  %v963 = vadd.f32 %v893, %v962
  %964 = vdwg.mxu0
  %965 = vmatprep.subr.bf16.mxu0 %v858
  %966 = vmatpush1.bf16.msra.mxu0 %v857
  %967 = vmatprep.subr.bf16.mxu0 %v862
  %968 = vmatpush1.bf16.msra.mxu0 %v861
  %969 = vmatprep.subr.bf16.mxu0 %v866
  %970 = vmatpush1.bf16.msra.mxu0 %v865
  %971 = vmatprep.subr.bf16.mxu0 %v870
  %972 = vmatpush1.bf16.msra.mxu0 %v869
  %973 = vmatprep.subr.bf16.mxu0 0
  %974 = vmatpush1.bf16.msra.mxu0 0
  %975 = vmatprep.subr.bf16.mxu0 0
  %976 = vmatpush1.bf16.msra.mxu0 0
  %977 = vmatprep.subr.bf16.mxu0 0
  %978 = vmatpush1.bf16.msra.mxu0 0
  %979 = vmatprep.subr.bf16.mxu0 0
  %980 = vmatpush1.bf16.msra.mxu0 0
  %981 = vmatprep.subr.bf16.mxu0 0
  %982 = vmatpush1.bf16.msra.mxu0 0
  %983 = vmatprep.subr.bf16.mxu0 0
  %984 = vmatpush1.bf16.msra.mxu0 0
  %985 = vmatprep.subr.bf16.mxu0 0
  %986 = vmatpush1.bf16.msra.mxu0 0
  %987 = vmatprep.subr.bf16.mxu0 0
  %988 = vmatpush1.bf16.msra.mxu0 0
  %989 = vmatprep.subr.bf16.mxu0 0
  %990 = vmatpush1.bf16.msra.mxu0 0
  %991 = vmatprep.subr.bf16.mxu0 0
  %992 = vmatpush1.bf16.msra.mxu0 0
  %993 = vmatprep.subr.bf16.mxu0 0
  %994 = vmatpush1.bf16.msra.mxu0 0
  %995 = vmatprep.subr.bf16.mxu0 0
  %996 = vmatpush1.bf16.msra.mxu0 0
  %997 = vmatprep.mubr.bf16.mxu0 0
  %998 = vmatmul.mubr.bf16.gmra.mrb[0].mxu0 %v907
  %v999 = vpop.f32.mrb[0].mxu0
  %v1000 = vadd.f32 %v878, %v999
  %v1001 = vpop.f32.mrb[0].mxu0
  %v1002 = vadd.f32 %v878, %v1001
  %v1003 = vpop.f32.mrb[0].mxu0
  %v1004 = vadd.f32 %v883, %v1003
  %v1005 = vpop.f32.mrb[0].mxu0
  %v1006 = vadd.f32 %v883, %v1005
  %1007 = vmatprep.mubr.bf16.mxu0 0
  %1008 = vmatmul.mubr.bf16.gmra.mrb[0].mxu0 %v910
  %v1009 = vpop.f32.mrb[0].mxu0
  %v1010 = vadd.f32 %v888, %v1009
  %v1011 = vpop.f32.mrb[0].mxu0
  %v1012 = vadd.f32 %v888, %v1011
  %v1013 = vpop.f32.mrb[0].mxu0
  %v1014 = vadd.f32 %v893, %v1013
  %v1015 = vpop.f32.mrb[0].mxu0
  %v1016 = vadd.f32 %v893, %v1015
  %1017 = vdwg.mxu0
  %v1018 = vpack.c.bf16 %v951, %v947
  %v1019 = vpack.c.bf16 %v953, %v949
  %v1020 = vpack.c.bf16 %v1004, %v1000
  %v1021 = vpack.c.bf16 %v1006, %v1002
  %v1022 = vpack.c.bf16 %v961, %v957
  %v1023 = vpack.c.bf16 %v963, %v959
  %v1024 = vpack.c.bf16 %v1014, %v1010
  %v1025 = vpack.c.bf16 %v1016, %v1012
  %v1034 = vunpack.c.l.b16 %v1018
  %v1035 = vunpack.c.l.b16 %v1019
  %v1036 = vunpack.c.l.b16 %v1020
  %v1037 = vunpack.c.l.b16 %v1021
  %v1038 = vunpack.c.h.b16 %v1018
  %v1039 = vunpack.c.h.b16 %v1019
  %v1040 = vunpack.c.h.b16 %v1020
  %v1041 = vunpack.c.h.b16 %v1021
  %v1042 = vunpack.c.l.b16 %v1022
  %v1043 = vunpack.c.l.b16 %v1023
  %v1044 = vunpack.c.l.b16 %v1024
  %v1045 = vunpack.c.l.b16 %v1025
  %v1046 = vunpack.c.h.b16 %v1022
  %v1047 = vunpack.c.h.b16 %v1023
  %v1048 = vunpack.c.h.b16 %v1024
  %v1049 = vunpack.c.h.b16 %v1025
  %v1050 = vpack.c.b16 %v1035, %v1034
  %v1051 = vpack.c.b16 %v1037, %v1036
  %v1052 = vpack.c.b16 %v1039, %v1038
  %v1053 = vpack.c.b16 %v1041, %v1040
  %v1054 = vpack.c.b16 %v1043, %v1042
  %v1055 = vpack.c.b16 %v1045, %v1044
  %v1056 = vpack.c.b16 %v1047, %v1046
  %v1057 = vpack.c.b16 %v1049, %v1048
  %1066 = vst [vmem:[%s5] sm:$0xff] %v1050
  %1067 = vst [vmem:[%s5 + $0x8] sm:$0xff] %v1051
  %1068 = vst [vmem:[%s5 + $0x10] sm:$0xff] %v1052
  %1069 = vst [vmem:[%s5 + $0x18] sm:$0xff] %v1053
  %1070 = vst [vmem:[%s5 + $0x20] sm:$0xff] %v1054
  %1071 = vst [vmem:[%s5 + $0x28] sm:$0xff] %v1055
  %1072 = vst [vmem:[%s5 + $0x30] sm:$0xff] %v1056
  %1073 = vst [vmem:[%s5 + $0x38] sm:$0xff] %v1057
  // Predicated region
  $region22: #{fno_forward.10} parent=0 // pred_check
    _
  $region23: #{fno_forward.10} parent=0 // pred_check_branch
    %1075 = sbr.rel (0) target = $region25
  $region24: #{fno_forward.10} parent=0 // pred_region
    _
  $region25: #{fno_forward.10} parent=0 // pred_fallthru
    _
  // Predicated region
  $region26: #{fno_forward.10} parent=0 // pred_check
    _
  $region27: #{fno_forward.10} parent=0 // pred_check_branch
    %1077 = sbr.rel (0) target = $region29
  $region28: #{fno_forward.10} parent=0 // pred_region
    _
  $region29: #{fno_forward.10} parent=0 // pred_fallthru
    _

// kernel: fno_forward.11
$region0: #{fno_forward.11}
  #allocation0 [shape = 'u32[]', space=smem, size = 0x4, offset = 0x4, fixed_abs, tag = 'smem constant byte address 0x4 - core index']
  #allocation1 [shape = 'u32[144,128]{1,0:T(1,128)}', space=vmem, size = 0x12000, scoped, tag = 'internal scratch']
  %s0 = inlined_call_operand.vmem [shape: f32[32,2,128], index: 0, kind: input, shape index: {}]
  %s1 = inlined_call_operand.vmem [shape: f32[32,2,128], index: 1, kind: input, shape index: {}]
  %s2 = inlined_call_operand.vmem [shape: bf16[32,32,128], index: 2, kind: input, shape index: {}]
  %s3 = inlined_call_operand.vmem [shape: bf16[32,32,128], index: 3, kind: input, shape index: {}]
  %s4 = inlined_call_operand.vmem [shape: f32[2,32,128], index: 4, kind: output, shape index: {0}]
  %s5 = inlined_call_operand.vmem [shape: f32[2,32,128], index: 5, kind: output, shape index: {1}]
  %6 = xla_tuple %s4, %s5
  %s7 = sld [smem:[#allocation0]]
  $region207: #{fno_forward.11} parent=0
    _
  %s9 = ssub.s32 1, %s7
  %s10 = scalar_select 0, %s9, %s7
  $region1: #{fno_forward.11} parent=0
    #allocation2 [shape = 'u8[262144]{0}', space=vmem, size = 0x40000, scoped, tag = 'input window, operand 2']
    #allocation3 [shape = 'u8[262144]{0}', space=vmem, size = 0x40000, scoped, tag = 'input window, operand 3']
    #allocation4 [shape = 'u8[32768]{0}', space=vmem, size = 0x8000, scoped, tag = 'output window, operand 0']
    #allocation5 [shape = 'u8[32768]{0}', space=vmem, size = 0x8000, scoped, tag = 'output window, operand 1']
    loop: start=0, step=1, limit=4
    $region2: #{fno_forward.11} parent=1 // loop_pre_header
      _
    $region3: #{fno_forward.11} parent=1 // loop_header
      %s12 = sphi 0, %s16
      %p13 = scmp.ge.s32.totalorder %s12, 4
      %s19 = sphi 0, %s31
      %s20 = sphi 0, %s27
      %s21 = sphi 0, %s19
      %s22 = sphi 0, %s20
      %s23 = sphi 0, %s21
      %s24 = sphi 0, %s22
      %s34 = sphi 0, %s36
      %s37 = sphi 0, %s34
      %s38 = sphi 0, %s37
      %s54 = sphi 0, %s38
      %s60 = sphi 0, %s62
      %s63 = sphi 0, %s60
      %s64 = sphi 0, %s63
      %s80 = sphi 0, %s64
      %s88 = sphi 0, %s90
      %s91 = sphi 0, %s88
      %s92 = sphi 0, %s91
      %s108 = sphi 0, %s92
      %s116 = sphi 0, %s118
      %s119 = sphi 0, %s116
      %s120 = sphi 0, %s119
      %s136 = sphi 0, %s120
      %s144 = sphi 0, %s146
      %s147 = sphi 0, %s144
      %s148 = sphi 0, %s147
      %s164 = sphi 0, %s148
      %s172 = sphi 0, %s174
      %s175 = sphi 0, %s172
      %s176 = sphi 0, %s175
      %s192 = sphi 0, %s176
    $region4: #{fno_forward.11} parent=1 // loop_header_branch
      %15 = sbr.rel (%p13) target = $region8
    $region5: #{fno_forward.11} parent=1 // loop_body
      %s17 = ssub.s32 %s12, 1
      %s18 = ssub.s32 %s12, 2
      %s25 = sadd.s32 1, %s20
      %p26 = scmp.ge.s32.totalorder %s25, 1
      %s27 = scalar_select %p26, 0, %s25
      %s28 = sadd.s32 1, %s19
      %s29 = scalar_select %p26, %s28, %s19
      %p30 = scmp.ge.s32.totalorder %s29, 2
      %s31 = scalar_select %p30, 0, %s29
      %s32 = ssub.s32 %s20, %s27
      %p33 = scmp.eq.s32.totalorder %s32, 0
      %s35 = sadd.s32 %s34, 1
      %s36 = scalar_select %p33, %s34, %s35
      %p39 = pneg %p33
      %p40 = scmp.eq.s32.totalorder %s12, 1
      %p41 = por %p39, %p40
      %p42 = scmp.ne.s32.totalorder %s34, %s37
      %p43 = scmp.eq.s32.totalorder %s12, 0
      %p44 = por %p42, %p43
      %p45 = scmp.ne.s32.totalorder %s34, %s37
      %p46 = scmp.eq.s32.totalorder %s17, 1
      %p47 = por %p45, %p46
      %p48 = scmp.ne.s32.totalorder %s37, %s38
      %p49 = scmp.eq.s32.totalorder %s17, 0
      %p50 = por %p48, %p49
      %p51 = scmp.ne.s32.totalorder %s37, %s38
      %p52 = scmp.eq.s32.totalorder %s18, 1
      %p53 = por %p51, %p52
      %p55 = scmp.ne.s32.totalorder %s38, %s54
      %p56 = scmp.eq.s32.totalorder %s18, 0
      %p57 = por %p55, %p56
      %s58 = ssub.s32 %s20, %s27
      %p59 = scmp.eq.s32.totalorder %s58, 0
      %s61 = sadd.s32 %s60, 1
      %s62 = scalar_select %p59, %s60, %s61
      %p65 = pneg %p59
      %p66 = scmp.eq.s32.totalorder %s12, 1
      %p67 = por %p65, %p66
      %p68 = scmp.ne.s32.totalorder %s60, %s63
      %p69 = scmp.eq.s32.totalorder %s12, 0
      %p70 = por %p68, %p69
      %p71 = scmp.ne.s32.totalorder %s60, %s63
      %p72 = scmp.eq.s32.totalorder %s17, 1
      %p73 = por %p71, %p72
      %p74 = scmp.ne.s32.totalorder %s63, %s64
      %p75 = scmp.eq.s32.totalorder %s17, 0
      %p76 = por %p74, %p75
      %p77 = scmp.ne.s32.totalorder %s63, %s64
      %p78 = scmp.eq.s32.totalorder %s18, 1
      %p79 = por %p77, %p78
      %p81 = scmp.ne.s32.totalorder %s64, %s80
      %p82 = scmp.eq.s32.totalorder %s18, 0
      %p83 = por %p81, %p82
      %s84 = ssub.s32 %s19, %s31
      %s85 = ssub.s32 %s20, %s27
      %s86 = sor.u32 %s84, %s85
      %p87 = scmp.eq.s32.totalorder %s86, 0
      %s89 = sadd.s32 %s88, 1
      %s90 = scalar_select %p87, %s88, %s89
      %p93 = pneg %p87
      %p94 = scmp.eq.s32.totalorder %s12, 1
      %p95 = por %p93, %p94
      %p96 = scmp.ne.s32.totalorder %s88, %s91
      %p97 = scmp.eq.s32.totalorder %s12, 0
      %p98 = por %p96, %p97
      %p99 = scmp.ne.s32.totalorder %s88, %s91
      %p100 = scmp.eq.s32.totalorder %s17, 1
      %p101 = por %p99, %p100
      %p102 = scmp.ne.s32.totalorder %s91, %s92
      %p103 = scmp.eq.s32.totalorder %s17, 0
      %p104 = por %p102, %p103
      %p105 = scmp.ne.s32.totalorder %s91, %s92
      %p106 = scmp.eq.s32.totalorder %s18, 1
      %p107 = por %p105, %p106
      %p109 = scmp.ne.s32.totalorder %s92, %s108
      %p110 = scmp.eq.s32.totalorder %s18, 0
      %p111 = por %p109, %p110
      %s112 = ssub.s32 %s19, %s31
      %s113 = ssub.s32 %s20, %s27
      %s114 = sor.u32 %s112, %s113
      %p115 = scmp.eq.s32.totalorder %s114, 0
      %s117 = sadd.s32 %s116, 1
      %s118 = scalar_select %p115, %s116, %s117
      %p121 = pneg %p115
      %p122 = scmp.eq.s32.totalorder %s12, 1
      %p123 = por %p121, %p122
      %p124 = scmp.ne.s32.totalorder %s116, %s119
      %p125 = scmp.eq.s32.totalorder %s12, 0
      %p126 = por %p124, %p125
      %p127 = scmp.ne.s32.totalorder %s116, %s119
      %p128 = scmp.eq.s32.totalorder %s17, 1
      %p129 = por %p127, %p128
      %p130 = scmp.ne.s32.totalorder %s119, %s120
      %p131 = scmp.eq.s32.totalorder %s17, 0
      %p132 = por %p130, %p131
      %p133 = scmp.ne.s32.totalorder %s119, %s120
      %p134 = scmp.eq.s32.totalorder %s18, 1
      %p135 = por %p133, %p134
      %p137 = scmp.ne.s32.totalorder %s120, %s136
      %p138 = scmp.eq.s32.totalorder %s18, 0
      %p139 = por %p137, %p138
      %s140 = ssub.s32 %s19, %s31
      %s141 = ssub.s32 %s20, %s27
      %s142 = sor.u32 %s140, %s141
      %p143 = scmp.eq.s32.totalorder %s142, 0
      %s145 = sadd.s32 %s144, 1
      %s146 = scalar_select %p143, %s144, %s145
      %p149 = pneg %p143
      %p150 = scmp.eq.s32.totalorder %s12, 1
      %p151 = por %p149, %p150
      %p152 = scmp.ne.s32.totalorder %s144, %s147
      %p153 = scmp.eq.s32.totalorder %s12, 0
      %p154 = por %p152, %p153
      %p155 = scmp.ne.s32.totalorder %s144, %s147
      %p156 = scmp.eq.s32.totalorder %s17, 1
      %p157 = por %p155, %p156
      %p158 = scmp.ne.s32.totalorder %s147, %s148
      %p159 = scmp.eq.s32.totalorder %s17, 0
      %p160 = por %p158, %p159
      %p161 = scmp.ne.s32.totalorder %s147, %s148
      %p162 = scmp.eq.s32.totalorder %s18, 1
      %p163 = por %p161, %p162
      %p165 = scmp.ne.s32.totalorder %s148, %s164
      %p166 = scmp.eq.s32.totalorder %s18, 0
      %p167 = por %p165, %p166
      %s168 = ssub.s32 %s19, %s31
      %s169 = ssub.s32 %s20, %s27
      %s170 = sor.u32 %s168, %s169
      %p171 = scmp.eq.s32.totalorder %s170, 0
      %s173 = sadd.s32 %s172, 1
      %s174 = scalar_select %p171, %s172, %s173
      %p177 = pneg %p171
      %p178 = scmp.eq.s32.totalorder %s12, 1
      %p179 = por %p177, %p178
      %p180 = scmp.ne.s32.totalorder %s172, %s175
      %p181 = scmp.eq.s32.totalorder %s12, 0
      %p182 = por %p180, %p181
      %p183 = scmp.ne.s32.totalorder %s172, %s175
      %p184 = scmp.eq.s32.totalorder %s17, 1
      %p185 = por %p183, %p184
      %p186 = scmp.ne.s32.totalorder %s175, %s176
      %p187 = scmp.eq.s32.totalorder %s17, 0
      %p188 = por %p186, %p187
      %p189 = scmp.ne.s32.totalorder %s175, %s176
      %p190 = scmp.eq.s32.totalorder %s18, 1
      %p191 = por %p189, %p190
      %p193 = scmp.ne.s32.totalorder %s176, %s192
      %p194 = scmp.eq.s32.totalorder %s18, 0
      %p195 = por %p193, %p194
      %p196 = scmp.le.s32.totalorder 1, %s12
      %p197 = scmp.lt.s32.totalorder %s12, 3
      %p198 = pnand %p196, %p197
      %p199 = pneg %p198
      // Predicated region
      $region9: #{fno_forward.11} parent=5 // pred_check
        _
      $region10: #{fno_forward.11} parent=5 // pred_check_branch
        %201 = sbr.rel (%p198) target = $region12
      $region11: #{fno_forward.11} parent=5 // pred_region
        %s202 = ssub.s32 %s12, 1
        // Predicated region
        $region13: #{fno_forward.11} parent=11 // pred_check
          %p203 = pneg %p50
        $region14: #{fno_forward.11} parent=11 // pred_check_branch
          %205 = sbr.rel (%p203) target = $region16
        $region15: #{fno_forward.11} parent=11 // pred_region
          %p206 = scmp.lt.s32.totalorder %s22, 0
          %s207 = scalar_select %p206, %s22, 0
          %s208 = smul.addr %s207, 2
          %s209 = scalar_lea.vmem %s0, %s208
        $region16: #{fno_forward.11} parent=11 // pred_fallthru
          _
        // Predicated region
        $region17: #{fno_forward.11} parent=11 // pred_check
          %p210 = pneg %p76
        $region18: #{fno_forward.11} parent=11 // pred_check_branch
          %212 = sbr.rel (%p210) target = $region20
        $region19: #{fno_forward.11} parent=11 // pred_region
          %p213 = scmp.lt.s32.totalorder %s22, 0
          %s214 = scalar_select %p213, %s22, 0
          %s215 = smul.addr %s214, 2
          %s216 = scalar_lea.vmem %s1, %s215
        $region20: #{fno_forward.11} parent=11 // pred_fallthru
          _
      $region12: #{fno_forward.11} parent=5 // pred_fallthru
        _
      %p217 = scmp.lt.s32.totalorder %s12, 2
      // Predicated region
      $region21: #{fno_forward.11} parent=5 // pred_check
        %p218 = pneg %p217
      $region22: #{fno_forward.11} parent=5 // pred_check_branch
        %220 = sbr.rel (%p218) target = $region24
      $region23: #{fno_forward.11} parent=5 // pred_region
        // Predicated region
        $region25: #{fno_forward.11} parent=23 // pred_check
          %p221 = pneg %p98
        $region26: #{fno_forward.11} parent=23 // pred_check_branch
          %223 = sbr.rel (%p221) target = $region28
        $region27: #{fno_forward.11} parent=23 // pred_region
          %s224 = sand.u32 %s88, 1
          %s225 = sand.u32 %s88, 1
          %s226 = smul.addr %s225, 256
          %s227 = scalar_lea.vmem [#allocation2], %s226
          %s228 = smul.u32 2, %s19
          %s229 = sadd.s32 %s20, %s228
          %s230 = smul.addr %s229, 4
          %s231 = scalar_lea.vmem %s2, %s230
          // Predicated region
          $region29: #{fno_forward.11} parent=27 // pred_check
            _
          $region30: #{fno_forward.11} parent=27 // pred_check_branch
            %233 = sbr.rel (0) target = $region32
          $region31: #{fno_forward.11} parent=27 // pred_region
            // Predicated region
            $region33: #{fno_forward.11} parent=31 // pred_check
              _
            $region34: #{fno_forward.11} parent=31 // pred_check_branch
              %235 = sbr.rel target = $region36
            $region35: #{fno_forward.11} parent=31 // pred_region
              // Predicated region
              $region48: #{fno_forward.11} parent=35 // pred_check
                _
              $region49: #{fno_forward.11} parent=35 // pred_check_branch
                %376 = sbr.rel (0) target = $region51
              $region50: #{fno_forward.11} parent=35 // pred_region
                loop: start=0, step=1, limit=1
                $region52: #{fno_forward.11} parent=50 // loop_pre_header
                  _
                $region53: #{fno_forward.11} parent=50 // loop_header
                  %s378 = sphi 0, %s382
                  %p379 = scmp.ge.s32.totalorder %s378, 1
                  %s383 = sphi %s231, %s231
                  %s384 = sphi %s227, %s227
                $region54: #{fno_forward.11} parent=50 // loop_header_branch
                  %381 = sbr.rel (%p379) target = $region58
                $region55: #{fno_forward.11} parent=50 // loop_body
                  _
                $region56: #{fno_forward.11} parent=50 // loop_footer
                  %s382 = sadd.s32 1, %s378
                $region57: #{fno_forward.11} parent=50 // loop_footer_branch
                  %377 = sbr.rel target = $region53
                $region58: #{fno_forward.11} parent=50 // loop_exit
                  _
                loop: start=0, step=1, limit=1
                $region59: #{fno_forward.11} parent=50 // loop_pre_header
                  _
                $region60: #{fno_forward.11} parent=50 // loop_header
                  %s387 = sphi 0, %s391
                  %p388 = scmp.ge.s32.totalorder %s387, 1
                  %s392 = sphi %s231, %s231
                  %s393 = sphi %s227, %s227
                $region61: #{fno_forward.11} parent=50 // loop_header_branch
                  %390 = sbr.rel (%p388) target = $region65
                $region62: #{fno_forward.11} parent=50 // loop_body
                  %v394 = vld [vmem:[%s392] sm:$0xf]
                  %395 = vst [vmem:[%s393] sm:$0xf] %v394
                  %v396 = vld [vmem:[%s392 + $0x4] sm:$0xf]
                  %397 = vst [vmem:[%s393 + $0x4] sm:$0xf] %v396
                  %v398 = vld [vmem:[%s392 + $0x10] sm:$0xf]
                  %399 = vst [vmem:[%s393 + $0x8] sm:$0xf] %v398
                  %v400 = vld [vmem:[%s392 + $0x14] sm:$0xf]
                  %401 = vst [vmem:[%s393 + $0xc] sm:$0xf] %v400
                  %v402 = vld [vmem:[%s392 + $0x20] sm:$0xf]
                  %403 = vst [vmem:[%s393 + $0x10] sm:$0xf] %v402
                  %v404 = vld [vmem:[%s392 + $0x24] sm:$0xf]
                  %405 = vst [vmem:[%s393 + $0x14] sm:$0xf] %v404
                  %v406 = vld [vmem:[%s392 + $0x30] sm:$0xf]
                  %407 = vst [vmem:[%s393 + $0x18] sm:$0xf] %v406
                  %v408 = vld [vmem:[%s392 + $0x34] sm:$0xf]
                  %409 = vst [vmem:[%s393 + $0x1c] sm:$0xf] %v408
                  %v410 = vld [vmem:[%s392 + $0x40] sm:$0xf]
                  %411 = vst [vmem:[%s393 + $0x20] sm:$0xf] %v410
                  %v412 = vld [vmem:[%s392 + $0x44] sm:$0xf]
                  %413 = vst [vmem:[%s393 + $0x24] sm:$0xf] %v412
                  %v414 = vld [vmem:[%s392 + $0x50] sm:$0xf]
                  %415 = vst [vmem:[%s393 + $0x28] sm:$0xf] %v414
                  %v416 = vld [vmem:[%s392 + $0x54] sm:$0xf]
                  %417 = vst [vmem:[%s393 + $0x2c] sm:$0xf] %v416
                  %v418 = vld [vmem:[%s392 + $0x60] sm:$0xf]
                  %419 = vst [vmem:[%s393 + $0x30] sm:$0xf] %v418
                  %v420 = vld [vmem:[%s392 + $0x64] sm:$0xf]
                  %421 = vst [vmem:[%s393 + $0x34] sm:$0xf] %v420
                  %v422 = vld [vmem:[%s392 + $0x70] sm:$0xf]
                  %423 = vst [vmem:[%s393 + $0x38] sm:$0xf] %v422
                  %v424 = vld [vmem:[%s392 + $0x74] sm:$0xf]
                  %425 = vst [vmem:[%s393 + $0x3c] sm:$0xf] %v424
                  %v426 = vld [vmem:[%s392 + $0x80] sm:$0xf]
                  %427 = vst [vmem:[%s393 + $0x40] sm:$0xf] %v426
                  %v428 = vld [vmem:[%s392 + $0x84] sm:$0xf]
                  %429 = vst [vmem:[%s393 + $0x44] sm:$0xf] %v428
                  %v430 = vld [vmem:[%s392 + $0x90] sm:$0xf]
                  %431 = vst [vmem:[%s393 + $0x48] sm:$0xf] %v430
                  %v432 = vld [vmem:[%s392 + $0x94] sm:$0xf]
                  %433 = vst [vmem:[%s393 + $0x4c] sm:$0xf] %v432
                  %v434 = vld [vmem:[%s392 + $0xa0] sm:$0xf]
                  %435 = vst [vmem:[%s393 + $0x50] sm:$0xf] %v434
                  %v436 = vld [vmem:[%s392 + $0xa4] sm:$0xf]
                  %437 = vst [vmem:[%s393 + $0x54] sm:$0xf] %v436
                  %v438 = vld [vmem:[%s392 + $0xb0] sm:$0xf]
                  %439 = vst [vmem:[%s393 + $0x58] sm:$0xf] %v438
                  %v440 = vld [vmem:[%s392 + $0xb4] sm:$0xf]
                  %441 = vst [vmem:[%s393 + $0x5c] sm:$0xf] %v440
                  %v442 = vld [vmem:[%s392 + $0xc0] sm:$0xf]
                  %443 = vst [vmem:[%s393 + $0x60] sm:$0xf] %v442
                  %v444 = vld [vmem:[%s392 + $0xc4] sm:$0xf]
                  %445 = vst [vmem:[%s393 + $0x64] sm:$0xf] %v444
                  %v446 = vld [vmem:[%s392 + $0xd0] sm:$0xf]
                  %447 = vst [vmem:[%s393 + $0x68] sm:$0xf] %v446
                  %v448 = vld [vmem:[%s392 + $0xd4] sm:$0xf]
                  %449 = vst [vmem:[%s393 + $0x6c] sm:$0xf] %v448
                  %v450 = vld [vmem:[%s392 + $0xe0] sm:$0xf]
                  %451 = vst [vmem:[%s393 + $0x70] sm:$0xf] %v450
                  %v452 = vld [vmem:[%s392 + $0xe4] sm:$0xf]
                  %453 = vst [vmem:[%s393 + $0x74] sm:$0xf] %v452
                  %v454 = vld [vmem:[%s392 + $0xf0] sm:$0xf]
                  %455 = vst [vmem:[%s393 + $0x78] sm:$0xf] %v454
                  %v456 = vld [vmem:[%s392 + $0xf4] sm:$0xf]
                  %457 = vst [vmem:[%s393 + $0x7c] sm:$0xf] %v456
                  %v458 = vld [vmem:[%s392 + $0x100] sm:$0xf]
                  %459 = vst [vmem:[%s393 + $0x80] sm:$0xf] %v458
                  %v460 = vld [vmem:[%s392 + $0x104] sm:$0xf]
                  %461 = vst [vmem:[%s393 + $0x84] sm:$0xf] %v460
                  %v462 = vld [vmem:[%s392 + $0x110] sm:$0xf]
                  %463 = vst [vmem:[%s393 + $0x88] sm:$0xf] %v462
                  %v464 = vld [vmem:[%s392 + $0x114] sm:$0xf]
                  %465 = vst [vmem:[%s393 + $0x8c] sm:$0xf] %v464
                  %v466 = vld [vmem:[%s392 + $0x120] sm:$0xf]
                  %467 = vst [vmem:[%s393 + $0x90] sm:$0xf] %v466
                  %v468 = vld [vmem:[%s392 + $0x124] sm:$0xf]
                  %469 = vst [vmem:[%s393 + $0x94] sm:$0xf] %v468
                  %v470 = vld [vmem:[%s392 + $0x130] sm:$0xf]
                  %471 = vst [vmem:[%s393 + $0x98] sm:$0xf] %v470
                  %v472 = vld [vmem:[%s392 + $0x134] sm:$0xf]
                  %473 = vst [vmem:[%s393 + $0x9c] sm:$0xf] %v472
                  %v474 = vld [vmem:[%s392 + $0x140] sm:$0xf]
                  %475 = vst [vmem:[%s393 + $0xa0] sm:$0xf] %v474
                  %v476 = vld [vmem:[%s392 + $0x144] sm:$0xf]
                  %477 = vst [vmem:[%s393 + $0xa4] sm:$0xf] %v476
                  %v478 = vld [vmem:[%s392 + $0x150] sm:$0xf]
                  %479 = vst [vmem:[%s393 + $0xa8] sm:$0xf] %v478
                  %v480 = vld [vmem:[%s392 + $0x154] sm:$0xf]
                  %481 = vst [vmem:[%s393 + $0xac] sm:$0xf] %v480
                  %v482 = vld [vmem:[%s392 + $0x160] sm:$0xf]
                  %483 = vst [vmem:[%s393 + $0xb0] sm:$0xf] %v482
                  %v484 = vld [vmem:[%s392 + $0x164] sm:$0xf]
                  %485 = vst [vmem:[%s393 + $0xb4] sm:$0xf] %v484
                  %v486 = vld [vmem:[%s392 + $0x170] sm:$0xf]
                  %487 = vst [vmem:[%s393 + $0xb8] sm:$0xf] %v486
                  %v488 = vld [vmem:[%s392 + $0x174] sm:$0xf]
                  %489 = vst [vmem:[%s393 + $0xbc] sm:$0xf] %v488
                  %v490 = vld [vmem:[%s392 + $0x180] sm:$0xf]
                  %491 = vst [vmem:[%s393 + $0xc0] sm:$0xf] %v490
                  %v492 = vld [vmem:[%s392 + $0x184] sm:$0xf]
                  %493 = vst [vmem:[%s393 + $0xc4] sm:$0xf] %v492
                  %v494 = vld [vmem:[%s392 + $0x190] sm:$0xf]
                  %495 = vst [vmem:[%s393 + $0xc8] sm:$0xf] %v494
                  %v496 = vld [vmem:[%s392 + $0x194] sm:$0xf]
                  %497 = vst [vmem:[%s393 + $0xcc] sm:$0xf] %v496
                  %v498 = vld [vmem:[%s392 + $0x1a0] sm:$0xf]
                  %499 = vst [vmem:[%s393 + $0xd0] sm:$0xf] %v498
                  %v500 = vld [vmem:[%s392 + $0x1a4] sm:$0xf]
                  %501 = vst [vmem:[%s393 + $0xd4] sm:$0xf] %v500
                  %v502 = vld [vmem:[%s392 + $0x1b0] sm:$0xf]
                  %503 = vst [vmem:[%s393 + $0xd8] sm:$0xf] %v502
                  %v504 = vld [vmem:[%s392 + $0x1b4] sm:$0xf]
                  %505 = vst [vmem:[%s393 + $0xdc] sm:$0xf] %v504
                  %v506 = vld [vmem:[%s392 + $0x1c0] sm:$0xf]
                  %507 = vst [vmem:[%s393 + $0xe0] sm:$0xf] %v506
                  %v508 = vld [vmem:[%s392 + $0x1c4] sm:$0xf]
                  %509 = vst [vmem:[%s393 + $0xe4] sm:$0xf] %v508
                  %v510 = vld [vmem:[%s392 + $0x1d0] sm:$0xf]
                  %511 = vst [vmem:[%s393 + $0xe8] sm:$0xf] %v510
                  %v512 = vld [vmem:[%s392 + $0x1d4] sm:$0xf]
                  %513 = vst [vmem:[%s393 + $0xec] sm:$0xf] %v512
                  %v514 = vld [vmem:[%s392 + $0x1e0] sm:$0xf]
                  %515 = vst [vmem:[%s393 + $0xf0] sm:$0xf] %v514
                  %v516 = vld [vmem:[%s392 + $0x1e4] sm:$0xf]
                  %517 = vst [vmem:[%s393 + $0xf4] sm:$0xf] %v516
                  %v518 = vld [vmem:[%s392 + $0x1f0] sm:$0xf]
                  %519 = vst [vmem:[%s393 + $0xf8] sm:$0xf] %v518
                  %v520 = vld [vmem:[%s392 + $0x1f4] sm:$0xf]
                  %521 = vst [vmem:[%s393 + $0xfc] sm:$0xf] %v520
                $region63: #{fno_forward.11} parent=50 // loop_footer
                  %s391 = sadd.s32 1, %s387
                $region64: #{fno_forward.11} parent=50 // loop_footer_branch
                  %386 = sbr.rel target = $region60
                $region65: #{fno_forward.11} parent=50 // loop_exit
                  _
              $region51: #{fno_forward.11} parent=35 // pred_fallthru
                _
            $region36: #{fno_forward.11} parent=31 // pred_fallthru
              _
            // Predicated region
            $region37: #{fno_forward.11} parent=31 // pred_check
              _
            $region38: #{fno_forward.11} parent=31 // pred_check_branch
              %237 = sbr.rel (0) target = $region40
            $region39: #{fno_forward.11} parent=31 // pred_region
              loop: start=0, step=1, limit=1
              $region41: #{fno_forward.11} parent=39 // loop_pre_header
                _
              $region42: #{fno_forward.11} parent=39 // loop_header
                %s240 = sphi 0, %s244
                %p241 = scmp.ge.s32.totalorder %s240, 1
                %s245 = sphi %s231, %s231
                %s246 = sphi %s227, %s227
              $region43: #{fno_forward.11} parent=39 // loop_header_branch
                %243 = sbr.rel (%p241) target = $region47
              $region44: #{fno_forward.11} parent=39 // loop_body
                %v247 = vld [vmem:[%s245] sm:$0xf]
                %248 = vst [vmem:[%s246] sm:$0xf] %v247
                %v249 = vld [vmem:[%s245 + $0x4] sm:$0xf]
                %250 = vst [vmem:[%s246 + $0x4] sm:$0xf] %v249
                %v251 = vld [vmem:[%s245 + $0x10] sm:$0xf]
                %252 = vst [vmem:[%s246 + $0x8] sm:$0xf] %v251
                %v253 = vld [vmem:[%s245 + $0x14] sm:$0xf]
                %254 = vst [vmem:[%s246 + $0xc] sm:$0xf] %v253
                %v255 = vld [vmem:[%s245 + $0x20] sm:$0xf]
                %256 = vst [vmem:[%s246 + $0x10] sm:$0xf] %v255
                %v257 = vld [vmem:[%s245 + $0x24] sm:$0xf]
                %258 = vst [vmem:[%s246 + $0x14] sm:$0xf] %v257
                %v259 = vld [vmem:[%s245 + $0x30] sm:$0xf]
                %260 = vst [vmem:[%s246 + $0x18] sm:$0xf] %v259
                %v261 = vld [vmem:[%s245 + $0x34] sm:$0xf]
                %262 = vst [vmem:[%s246 + $0x1c] sm:$0xf] %v261
                %v263 = vld [vmem:[%s245 + $0x40] sm:$0xf]
                %264 = vst [vmem:[%s246 + $0x20] sm:$0xf] %v263
                %v265 = vld [vmem:[%s245 + $0x44] sm:$0xf]
                %266 = vst [vmem:[%s246 + $0x24] sm:$0xf] %v265
                %v267 = vld [vmem:[%s245 + $0x50] sm:$0xf]
                %268 = vst [vmem:[%s246 + $0x28] sm:$0xf] %v267
                %v269 = vld [vmem:[%s245 + $0x54] sm:$0xf]
                %270 = vst [vmem:[%s246 + $0x2c] sm:$0xf] %v269
                %v271 = vld [vmem:[%s245 + $0x60] sm:$0xf]
                %272 = vst [vmem:[%s246 + $0x30] sm:$0xf] %v271
                %v273 = vld [vmem:[%s245 + $0x64] sm:$0xf]
                %274 = vst [vmem:[%s246 + $0x34] sm:$0xf] %v273
                %v275 = vld [vmem:[%s245 + $0x70] sm:$0xf]
                %276 = vst [vmem:[%s246 + $0x38] sm:$0xf] %v275
                %v277 = vld [vmem:[%s245 + $0x74] sm:$0xf]
                %278 = vst [vmem:[%s246 + $0x3c] sm:$0xf] %v277
                %v279 = vld [vmem:[%s245 + $0x80] sm:$0xf]
                %280 = vst [vmem:[%s246 + $0x40] sm:$0xf] %v279
                %v281 = vld [vmem:[%s245 + $0x84] sm:$0xf]
                %282 = vst [vmem:[%s246 + $0x44] sm:$0xf] %v281
                %v283 = vld [vmem:[%s245 + $0x90] sm:$0xf]
                %284 = vst [vmem:[%s246 + $0x48] sm:$0xf] %v283
                %v285 = vld [vmem:[%s245 + $0x94] sm:$0xf]
                %286 = vst [vmem:[%s246 + $0x4c] sm:$0xf] %v285
                %v287 = vld [vmem:[%s245 + $0xa0] sm:$0xf]
                %288 = vst [vmem:[%s246 + $0x50] sm:$0xf] %v287
                %v289 = vld [vmem:[%s245 + $0xa4] sm:$0xf]
                %290 = vst [vmem:[%s246 + $0x54] sm:$0xf] %v289
                %v291 = vld [vmem:[%s245 + $0xb0] sm:$0xf]
                %292 = vst [vmem:[%s246 + $0x58] sm:$0xf] %v291
                %v293 = vld [vmem:[%s245 + $0xb4] sm:$0xf]
                %294 = vst [vmem:[%s246 + $0x5c] sm:$0xf] %v293
                %v295 = vld [vmem:[%s245 + $0xc0] sm:$0xf]
                %296 = vst [vmem:[%s246 + $0x60] sm:$0xf] %v295
                %v297 = vld [vmem:[%s245 + $0xc4] sm:$0xf]
                %298 = vst [vmem:[%s246 + $0x64] sm:$0xf] %v297
                %v299 = vld [vmem:[%s245 + $0xd0] sm:$0xf]
                %300 = vst [vmem:[%s246 + $0x68] sm:$0xf] %v299
                %v301 = vld [vmem:[%s245 + $0xd4] sm:$0xf]
                %302 = vst [vmem:[%s246 + $0x6c] sm:$0xf] %v301
                %v303 = vld [vmem:[%s245 + $0xe0] sm:$0xf]
                %304 = vst [vmem:[%s246 + $0x70] sm:$0xf] %v303
                %v305 = vld [vmem:[%s245 + $0xe4] sm:$0xf]
                %306 = vst [vmem:[%s246 + $0x74] sm:$0xf] %v305
                %v307 = vld [vmem:[%s245 + $0xf0] sm:$0xf]
                %308 = vst [vmem:[%s246 + $0x78] sm:$0xf] %v307
                %v309 = vld [vmem:[%s245 + $0xf4] sm:$0xf]
                %310 = vst [vmem:[%s246 + $0x7c] sm:$0xf] %v309
                %v311 = vld [vmem:[%s245 + $0x100] sm:$0xf]
                %312 = vst [vmem:[%s246 + $0x80] sm:$0xf] %v311
                %v313 = vld [vmem:[%s245 + $0x104] sm:$0xf]
                %314 = vst [vmem:[%s246 + $0x84] sm:$0xf] %v313
                %v315 = vld [vmem:[%s245 + $0x110] sm:$0xf]
                %316 = vst [vmem:[%s246 + $0x88] sm:$0xf] %v315
                %v317 = vld [vmem:[%s245 + $0x114] sm:$0xf]
                %318 = vst [vmem:[%s246 + $0x8c] sm:$0xf] %v317
                %v319 = vld [vmem:[%s245 + $0x120] sm:$0xf]
                %320 = vst [vmem:[%s246 + $0x90] sm:$0xf] %v319
                %v321 = vld [vmem:[%s245 + $0x124] sm:$0xf]
                %322 = vst [vmem:[%s246 + $0x94] sm:$0xf] %v321
                %v323 = vld [vmem:[%s245 + $0x130] sm:$0xf]
                %324 = vst [vmem:[%s246 + $0x98] sm:$0xf] %v323
                %v325 = vld [vmem:[%s245 + $0x134] sm:$0xf]
                %326 = vst [vmem:[%s246 + $0x9c] sm:$0xf] %v325
                %v327 = vld [vmem:[%s245 + $0x140] sm:$0xf]
                %328 = vst [vmem:[%s246 + $0xa0] sm:$0xf] %v327
                %v329 = vld [vmem:[%s245 + $0x144] sm:$0xf]
                %330 = vst [vmem:[%s246 + $0xa4] sm:$0xf] %v329
                %v331 = vld [vmem:[%s245 + $0x150] sm:$0xf]
                %332 = vst [vmem:[%s246 + $0xa8] sm:$0xf] %v331
                %v333 = vld [vmem:[%s245 + $0x154] sm:$0xf]
                %334 = vst [vmem:[%s246 + $0xac] sm:$0xf] %v333
                %v335 = vld [vmem:[%s245 + $0x160] sm:$0xf]
                %336 = vst [vmem:[%s246 + $0xb0] sm:$0xf] %v335
                %v337 = vld [vmem:[%s245 + $0x164] sm:$0xf]
                %338 = vst [vmem:[%s246 + $0xb4] sm:$0xf] %v337
                %v339 = vld [vmem:[%s245 + $0x170] sm:$0xf]
                %340 = vst [vmem:[%s246 + $0xb8] sm:$0xf] %v339
                %v341 = vld [vmem:[%s245 + $0x174] sm:$0xf]
                %342 = vst [vmem:[%s246 + $0xbc] sm:$0xf] %v341
                %v343 = vld [vmem:[%s245 + $0x180] sm:$0xf]
                %344 = vst [vmem:[%s246 + $0xc0] sm:$0xf] %v343
                %v345 = vld [vmem:[%s245 + $0x184] sm:$0xf]
                %346 = vst [vmem:[%s246 + $0xc4] sm:$0xf] %v345
                %v347 = vld [vmem:[%s245 + $0x190] sm:$0xf]
                %348 = vst [vmem:[%s246 + $0xc8] sm:$0xf] %v347
                %v349 = vld [vmem:[%s245 + $0x194] sm:$0xf]
                %350 = vst [vmem:[%s246 + $0xcc] sm:$0xf] %v349
                %v351 = vld [vmem:[%s245 + $0x1a0] sm:$0xf]
                %352 = vst [vmem:[%s246 + $0xd0] sm:$0xf] %v351
                %v353 = vld [vmem:[%s245 + $0x1a4] sm:$0xf]
                %354 = vst [vmem:[%s246 + $0xd4] sm:$0xf] %v353
                %v355 = vld [vmem:[%s245 + $0x1b0] sm:$0xf]
                %356 = vst [vmem:[%s246 + $0xd8] sm:$0xf] %v355
                %v357 = vld [vmem:[%s245 + $0x1b4] sm:$0xf]
                %358 = vst [vmem:[%s246 + $0xdc] sm:$0xf] %v357
                %v359 = vld [vmem:[%s245 + $0x1c0] sm:$0xf]
                %360 = vst [vmem:[%s246 + $0xe0] sm:$0xf] %v359
                %v361 = vld [vmem:[%s245 + $0x1c4] sm:$0xf]
                %362 = vst [vmem:[%s246 + $0xe4] sm:$0xf] %v361
                %v363 = vld [vmem:[%s245 + $0x1d0] sm:$0xf]
                %364 = vst [vmem:[%s246 + $0xe8] sm:$0xf] %v363
                %v365 = vld [vmem:[%s245 + $0x1d4] sm:$0xf]
                %366 = vst [vmem:[%s246 + $0xec] sm:$0xf] %v365
                %v367 = vld [vmem:[%s245 + $0x1e0] sm:$0xf]
                %368 = vst [vmem:[%s246 + $0xf0] sm:$0xf] %v367
                %v369 = vld [vmem:[%s245 + $0x1e4] sm:$0xf]
                %370 = vst [vmem:[%s246 + $0xf4] sm:$0xf] %v369
                %v371 = vld [vmem:[%s245 + $0x1f0] sm:$0xf]
                %372 = vst [vmem:[%s246 + $0xf8] sm:$0xf] %v371
                %v373 = vld [vmem:[%s245 + $0x1f4] sm:$0xf]
                %374 = vst [vmem:[%s246 + $0xfc] sm:$0xf] %v373
              $region45: #{fno_forward.11} parent=39 // loop_footer
                %s244 = sadd.s32 1, %s240
              $region46: #{fno_forward.11} parent=39 // loop_footer_branch
                %239 = sbr.rel target = $region42
              $region47: #{fno_forward.11} parent=39 // loop_exit
                _
            $region40: #{fno_forward.11} parent=31 // pred_fallthru
              _
          $region32: #{fno_forward.11} parent=27 // pred_fallthru
            _
          %522 = vnop
        $region28: #{fno_forward.11} parent=23 // pred_fallthru
          _
        // Predicated region
        $region66: #{fno_forward.11} parent=23 // pred_check
          %p523 = pneg %p126
        $region67: #{fno_forward.11} parent=23 // pred_check_branch
          %525 = sbr.rel (%p523) target = $region69
        $region68: #{fno_forward.11} parent=23 // pred_region
          %s526 = sand.u32 %s116, 1
          %s527 = sand.u32 %s116, 1
          %s528 = smul.addr %s527, 256
          %s529 = scalar_lea.vmem [#allocation3], %s528
          %s530 = smul.u32 2, %s19
          %s531 = sadd.s32 %s20, %s530
          %s532 = smul.addr %s531, 4
          %s533 = scalar_lea.vmem %s3, %s532
          // Predicated region
          $region70: #{fno_forward.11} parent=68 // pred_check
            _
          $region71: #{fno_forward.11} parent=68 // pred_check_branch
            %535 = sbr.rel (0) target = $region73
          $region72: #{fno_forward.11} parent=68 // pred_region
            // Predicated region
            $region74: #{fno_forward.11} parent=72 // pred_check
              _
            $region75: #{fno_forward.11} parent=72 // pred_check_branch
              %537 = sbr.rel target = $region77
            $region76: #{fno_forward.11} parent=72 // pred_region
              // Predicated region
              $region89: #{fno_forward.11} parent=76 // pred_check
                _
              $region90: #{fno_forward.11} parent=76 // pred_check_branch
                %678 = sbr.rel (0) target = $region92
              $region91: #{fno_forward.11} parent=76 // pred_region
                loop: start=0, step=1, limit=1
                $region93: #{fno_forward.11} parent=91 // loop_pre_header
                  _
                $region94: #{fno_forward.11} parent=91 // loop_header
                  %s680 = sphi 0, %s684
                  %p681 = scmp.ge.s32.totalorder %s680, 1
                  %s685 = sphi %s533, %s533
                  %s686 = sphi %s529, %s529
                $region95: #{fno_forward.11} parent=91 // loop_header_branch
                  %683 = sbr.rel (%p681) target = $region99
                $region96: #{fno_forward.11} parent=91 // loop_body
                  _
                $region97: #{fno_forward.11} parent=91 // loop_footer
                  %s684 = sadd.s32 1, %s680
                $region98: #{fno_forward.11} parent=91 // loop_footer_branch
                  %679 = sbr.rel target = $region94
                $region99: #{fno_forward.11} parent=91 // loop_exit
                  _
                loop: start=0, step=1, limit=1
                $region100: #{fno_forward.11} parent=91 // loop_pre_header
                  _
                $region101: #{fno_forward.11} parent=91 // loop_header
                  %s689 = sphi 0, %s693
                  %p690 = scmp.ge.s32.totalorder %s689, 1
                  %s694 = sphi %s533, %s533
                  %s695 = sphi %s529, %s529
                $region102: #{fno_forward.11} parent=91 // loop_header_branch
                  %692 = sbr.rel (%p690) target = $region106
                $region103: #{fno_forward.11} parent=91 // loop_body
                  %v696 = vld [vmem:[%s694] sm:$0xf]
                  %697 = vst [vmem:[%s695] sm:$0xf] %v696
                  %v698 = vld [vmem:[%s694 + $0x4] sm:$0xf]
                  %699 = vst [vmem:[%s695 + $0x4] sm:$0xf] %v698
                  %v700 = vld [vmem:[%s694 + $0x10] sm:$0xf]
                  %701 = vst [vmem:[%s695 + $0x8] sm:$0xf] %v700
                  %v702 = vld [vmem:[%s694 + $0x14] sm:$0xf]
                  %703 = vst [vmem:[%s695 + $0xc] sm:$0xf] %v702
                  %v704 = vld [vmem:[%s694 + $0x20] sm:$0xf]
                  %705 = vst [vmem:[%s695 + $0x10] sm:$0xf] %v704
                  %v706 = vld [vmem:[%s694 + $0x24] sm:$0xf]
                  %707 = vst [vmem:[%s695 + $0x14] sm:$0xf] %v706
                  %v708 = vld [vmem:[%s694 + $0x30] sm:$0xf]
                  %709 = vst [vmem:[%s695 + $0x18] sm:$0xf] %v708
                  %v710 = vld [vmem:[%s694 + $0x34] sm:$0xf]
                  %711 = vst [vmem:[%s695 + $0x1c] sm:$0xf] %v710
                  %v712 = vld [vmem:[%s694 + $0x40] sm:$0xf]
                  %713 = vst [vmem:[%s695 + $0x20] sm:$0xf] %v712
                  %v714 = vld [vmem:[%s694 + $0x44] sm:$0xf]
                  %715 = vst [vmem:[%s695 + $0x24] sm:$0xf] %v714
                  %v716 = vld [vmem:[%s694 + $0x50] sm:$0xf]
                  %717 = vst [vmem:[%s695 + $0x28] sm:$0xf] %v716
                  %v718 = vld [vmem:[%s694 + $0x54] sm:$0xf]
                  %719 = vst [vmem:[%s695 + $0x2c] sm:$0xf] %v718
                  %v720 = vld [vmem:[%s694 + $0x60] sm:$0xf]
                  %721 = vst [vmem:[%s695 + $0x30] sm:$0xf] %v720
                  %v722 = vld [vmem:[%s694 + $0x64] sm:$0xf]
                  %723 = vst [vmem:[%s695 + $0x34] sm:$0xf] %v722
                  %v724 = vld [vmem:[%s694 + $0x70] sm:$0xf]
                  %725 = vst [vmem:[%s695 + $0x38] sm:$0xf] %v724
                  %v726 = vld [vmem:[%s694 + $0x74] sm:$0xf]
                  %727 = vst [vmem:[%s695 + $0x3c] sm:$0xf] %v726
                  %v728 = vld [vmem:[%s694 + $0x80] sm:$0xf]
                  %729 = vst [vmem:[%s695 + $0x40] sm:$0xf] %v728
                  %v730 = vld [vmem:[%s694 + $0x84] sm:$0xf]
                  %731 = vst [vmem:[%s695 + $0x44] sm:$0xf] %v730
                  %v732 = vld [vmem:[%s694 + $0x90] sm:$0xf]
                  %733 = vst [vmem:[%s695 + $0x48] sm:$0xf] %v732
                  %v734 = vld [vmem:[%s694 + $0x94] sm:$0xf]
                  %735 = vst [vmem:[%s695 + $0x4c] sm:$0xf] %v734
                  %v736 = vld [vmem:[%s694 + $0xa0] sm:$0xf]
                  %737 = vst [vmem:[%s695 + $0x50] sm:$0xf] %v736
                  %v738 = vld [vmem:[%s694 + $0xa4] sm:$0xf]
                  %739 = vst [vmem:[%s695 + $0x54] sm:$0xf] %v738
                  %v740 = vld [vmem:[%s694 + $0xb0] sm:$0xf]
                  %741 = vst [vmem:[%s695 + $0x58] sm:$0xf] %v740
                  %v742 = vld [vmem:[%s694 + $0xb4] sm:$0xf]
                  %743 = vst [vmem:[%s695 + $0x5c] sm:$0xf] %v742
                  %v744 = vld [vmem:[%s694 + $0xc0] sm:$0xf]
                  %745 = vst [vmem:[%s695 + $0x60] sm:$0xf] %v744
                  %v746 = vld [vmem:[%s694 + $0xc4] sm:$0xf]
                  %747 = vst [vmem:[%s695 + $0x64] sm:$0xf] %v746
                  %v748 = vld [vmem:[%s694 + $0xd0] sm:$0xf]
                  %749 = vst [vmem:[%s695 + $0x68] sm:$0xf] %v748
                  %v750 = vld [vmem:[%s694 + $0xd4] sm:$0xf]
                  %751 = vst [vmem:[%s695 + $0x6c] sm:$0xf] %v750
                  %v752 = vld [vmem:[%s694 + $0xe0] sm:$0xf]
                  %753 = vst [vmem:[%s695 + $0x70] sm:$0xf] %v752
                  %v754 = vld [vmem:[%s694 + $0xe4] sm:$0xf]
                  %755 = vst [vmem:[%s695 + $0x74] sm:$0xf] %v754
                  %v756 = vld [vmem:[%s694 + $0xf0] sm:$0xf]
                  %757 = vst [vmem:[%s695 + $0x78] sm:$0xf] %v756
                  %v758 = vld [vmem:[%s694 + $0xf4] sm:$0xf]
                  %759 = vst [vmem:[%s695 + $0x7c] sm:$0xf] %v758
                  %v760 = vld [vmem:[%s694 + $0x100] sm:$0xf]
                  %761 = vst [vmem:[%s695 + $0x80] sm:$0xf] %v760
                  %v762 = vld [vmem:[%s694 + $0x104] sm:$0xf]
                  %763 = vst [vmem:[%s695 + $0x84] sm:$0xf] %v762
                  %v764 = vld [vmem:[%s694 + $0x110] sm:$0xf]
                  %765 = vst [vmem:[%s695 + $0x88] sm:$0xf] %v764
                  %v766 = vld [vmem:[%s694 + $0x114] sm:$0xf]
                  %767 = vst [vmem:[%s695 + $0x8c] sm:$0xf] %v766
                  %v768 = vld [vmem:[%s694 + $0x120] sm:$0xf]
                  %769 = vst [vmem:[%s695 + $0x90] sm:$0xf] %v768
                  %v770 = vld [vmem:[%s694 + $0x124] sm:$0xf]
                  %771 = vst [vmem:[%s695 + $0x94] sm:$0xf] %v770
                  %v772 = vld [vmem:[%s694 + $0x130] sm:$0xf]
                  %773 = vst [vmem:[%s695 + $0x98] sm:$0xf] %v772
                  %v774 = vld [vmem:[%s694 + $0x134] sm:$0xf]
                  %775 = vst [vmem:[%s695 + $0x9c] sm:$0xf] %v774
                  %v776 = vld [vmem:[%s694 + $0x140] sm:$0xf]
                  %777 = vst [vmem:[%s695 + $0xa0] sm:$0xf] %v776
                  %v778 = vld [vmem:[%s694 + $0x144] sm:$0xf]
                  %779 = vst [vmem:[%s695 + $0xa4] sm:$0xf] %v778
                  %v780 = vld [vmem:[%s694 + $0x150] sm:$0xf]
                  %781 = vst [vmem:[%s695 + $0xa8] sm:$0xf] %v780
                  %v782 = vld [vmem:[%s694 + $0x154] sm:$0xf]
                  %783 = vst [vmem:[%s695 + $0xac] sm:$0xf] %v782
                  %v784 = vld [vmem:[%s694 + $0x160] sm:$0xf]
                  %785 = vst [vmem:[%s695 + $0xb0] sm:$0xf] %v784
                  %v786 = vld [vmem:[%s694 + $0x164] sm:$0xf]
                  %787 = vst [vmem:[%s695 + $0xb4] sm:$0xf] %v786
                  %v788 = vld [vmem:[%s694 + $0x170] sm:$0xf]
                  %789 = vst [vmem:[%s695 + $0xb8] sm:$0xf] %v788
                  %v790 = vld [vmem:[%s694 + $0x174] sm:$0xf]
                  %791 = vst [vmem:[%s695 + $0xbc] sm:$0xf] %v790
                  %v792 = vld [vmem:[%s694 + $0x180] sm:$0xf]
                  %793 = vst [vmem:[%s695 + $0xc0] sm:$0xf] %v792
                  %v794 = vld [vmem:[%s694 + $0x184] sm:$0xf]
                  %795 = vst [vmem:[%s695 + $0xc4] sm:$0xf] %v794
                  %v796 = vld [vmem:[%s694 + $0x190] sm:$0xf]
                  %797 = vst [vmem:[%s695 + $0xc8] sm:$0xf] %v796
                  %v798 = vld [vmem:[%s694 + $0x194] sm:$0xf]
                  %799 = vst [vmem:[%s695 + $0xcc] sm:$0xf] %v798
                  %v800 = vld [vmem:[%s694 + $0x1a0] sm:$0xf]
                  %801 = vst [vmem:[%s695 + $0xd0] sm:$0xf] %v800
                  %v802 = vld [vmem:[%s694 + $0x1a4] sm:$0xf]
                  %803 = vst [vmem:[%s695 + $0xd4] sm:$0xf] %v802
                  %v804 = vld [vmem:[%s694 + $0x1b0] sm:$0xf]
                  %805 = vst [vmem:[%s695 + $0xd8] sm:$0xf] %v804
                  %v806 = vld [vmem:[%s694 + $0x1b4] sm:$0xf]
                  %807 = vst [vmem:[%s695 + $0xdc] sm:$0xf] %v806
                  %v808 = vld [vmem:[%s694 + $0x1c0] sm:$0xf]
                  %809 = vst [vmem:[%s695 + $0xe0] sm:$0xf] %v808
                  %v810 = vld [vmem:[%s694 + $0x1c4] sm:$0xf]
                  %811 = vst [vmem:[%s695 + $0xe4] sm:$0xf] %v810
                  %v812 = vld [vmem:[%s694 + $0x1d0] sm:$0xf]
                  %813 = vst [vmem:[%s695 + $0xe8] sm:$0xf] %v812
                  %v814 = vld [vmem:[%s694 + $0x1d4] sm:$0xf]
                  %815 = vst [vmem:[%s695 + $0xec] sm:$0xf] %v814
                  %v816 = vld [vmem:[%s694 + $0x1e0] sm:$0xf]
                  %817 = vst [vmem:[%s695 + $0xf0] sm:$0xf] %v816
                  %v818 = vld [vmem:[%s694 + $0x1e4] sm:$0xf]
                  %819 = vst [vmem:[%s695 + $0xf4] sm:$0xf] %v818
                  %v820 = vld [vmem:[%s694 + $0x1f0] sm:$0xf]
                  %821 = vst [vmem:[%s695 + $0xf8] sm:$0xf] %v820
                  %v822 = vld [vmem:[%s694 + $0x1f4] sm:$0xf]
                  %823 = vst [vmem:[%s695 + $0xfc] sm:$0xf] %v822
                $region104: #{fno_forward.11} parent=91 // loop_footer
                  %s693 = sadd.s32 1, %s689
                $region105: #{fno_forward.11} parent=91 // loop_footer_branch
                  %688 = sbr.rel target = $region101
                $region106: #{fno_forward.11} parent=91 // loop_exit
                  _
              $region92: #{fno_forward.11} parent=76 // pred_fallthru
                _
            $region77: #{fno_forward.11} parent=72 // pred_fallthru
              _
            // Predicated region
            $region78: #{fno_forward.11} parent=72 // pred_check
              _
            $region79: #{fno_forward.11} parent=72 // pred_check_branch
              %539 = sbr.rel (0) target = $region81
            $region80: #{fno_forward.11} parent=72 // pred_region
              loop: start=0, step=1, limit=1
              $region82: #{fno_forward.11} parent=80 // loop_pre_header
                _
              $region83: #{fno_forward.11} parent=80 // loop_header
                %s542 = sphi 0, %s546
                %p543 = scmp.ge.s32.totalorder %s542, 1
                %s547 = sphi %s533, %s533
                %s548 = sphi %s529, %s529
              $region84: #{fno_forward.11} parent=80 // loop_header_branch
                %545 = sbr.rel (%p543) target = $region88
              $region85: #{fno_forward.11} parent=80 // loop_body
                %v549 = vld [vmem:[%s547] sm:$0xf]
                %550 = vst [vmem:[%s548] sm:$0xf] %v549
                %v551 = vld [vmem:[%s547 + $0x4] sm:$0xf]
                %552 = vst [vmem:[%s548 + $0x4] sm:$0xf] %v551
                %v553 = vld [vmem:[%s547 + $0x10] sm:$0xf]
                %554 = vst [vmem:[%s548 + $0x8] sm:$0xf] %v553
                %v555 = vld [vmem:[%s547 + $0x14] sm:$0xf]
                %556 = vst [vmem:[%s548 + $0xc] sm:$0xf] %v555
                %v557 = vld [vmem:[%s547 + $0x20] sm:$0xf]
                %558 = vst [vmem:[%s548 + $0x10] sm:$0xf] %v557
                %v559 = vld [vmem:[%s547 + $0x24] sm:$0xf]
                %560 = vst [vmem:[%s548 + $0x14] sm:$0xf] %v559
                %v561 = vld [vmem:[%s547 + $0x30] sm:$0xf]
                %562 = vst [vmem:[%s548 + $0x18] sm:$0xf] %v561
                %v563 = vld [vmem:[%s547 + $0x34] sm:$0xf]
                %564 = vst [vmem:[%s548 + $0x1c] sm:$0xf] %v563
                %v565 = vld [vmem:[%s547 + $0x40] sm:$0xf]
                %566 = vst [vmem:[%s548 + $0x20] sm:$0xf] %v565
                %v567 = vld [vmem:[%s547 + $0x44] sm:$0xf]
                %568 = vst [vmem:[%s548 + $0x24] sm:$0xf] %v567
                %v569 = vld [vmem:[%s547 + $0x50] sm:$0xf]
                %570 = vst [vmem:[%s548 + $0x28] sm:$0xf] %v569
                %v571 = vld [vmem:[%s547 + $0x54] sm:$0xf]
                %572 = vst [vmem:[%s548 + $0x2c] sm:$0xf] %v571
                %v573 = vld [vmem:[%s547 + $0x60] sm:$0xf]
                %574 = vst [vmem:[%s548 + $0x30] sm:$0xf] %v573
                %v575 = vld [vmem:[%s547 + $0x64] sm:$0xf]
                %576 = vst [vmem:[%s548 + $0x34] sm:$0xf] %v575
                %v577 = vld [vmem:[%s547 + $0x70] sm:$0xf]
                %578 = vst [vmem:[%s548 + $0x38] sm:$0xf] %v577
                %v579 = vld [vmem:[%s547 + $0x74] sm:$0xf]
                %580 = vst [vmem:[%s548 + $0x3c] sm:$0xf] %v579
                %v581 = vld [vmem:[%s547 + $0x80] sm:$0xf]
                %582 = vst [vmem:[%s548 + $0x40] sm:$0xf] %v581
                %v583 = vld [vmem:[%s547 + $0x84] sm:$0xf]
                %584 = vst [vmem:[%s548 + $0x44] sm:$0xf] %v583
                %v585 = vld [vmem:[%s547 + $0x90] sm:$0xf]
                %586 = vst [vmem:[%s548 + $0x48] sm:$0xf] %v585
                %v587 = vld [vmem:[%s547 + $0x94] sm:$0xf]
                %588 = vst [vmem:[%s548 + $0x4c] sm:$0xf] %v587
                %v589 = vld [vmem:[%s547 + $0xa0] sm:$0xf]
                %590 = vst [vmem:[%s548 + $0x50] sm:$0xf] %v589
                %v591 = vld [vmem:[%s547 + $0xa4] sm:$0xf]
                %592 = vst [vmem:[%s548 + $0x54] sm:$0xf] %v591
                %v593 = vld [vmem:[%s547 + $0xb0] sm:$0xf]
                %594 = vst [vmem:[%s548 + $0x58] sm:$0xf] %v593
                %v595 = vld [vmem:[%s547 + $0xb4] sm:$0xf]
                %596 = vst [vmem:[%s548 + $0x5c] sm:$0xf] %v595
                %v597 = vld [vmem:[%s547 + $0xc0] sm:$0xf]
                %598 = vst [vmem:[%s548 + $0x60] sm:$0xf] %v597
                %v599 = vld [vmem:[%s547 + $0xc4] sm:$0xf]
                %600 = vst [vmem:[%s548 + $0x64] sm:$0xf] %v599
                %v601 = vld [vmem:[%s547 + $0xd0] sm:$0xf]
                %602 = vst [vmem:[%s548 + $0x68] sm:$0xf] %v601
                %v603 = vld [vmem:[%s547 + $0xd4] sm:$0xf]
                %604 = vst [vmem:[%s548 + $0x6c] sm:$0xf] %v603
                %v605 = vld [vmem:[%s547 + $0xe0] sm:$0xf]
                %606 = vst [vmem:[%s548 + $0x70] sm:$0xf] %v605
                %v607 = vld [vmem:[%s547 + $0xe4] sm:$0xf]
                %608 = vst [vmem:[%s548 + $0x74] sm:$0xf] %v607
                %v609 = vld [vmem:[%s547 + $0xf0] sm:$0xf]
                %610 = vst [vmem:[%s548 + $0x78] sm:$0xf] %v609
                %v611 = vld [vmem:[%s547 + $0xf4] sm:$0xf]
                %612 = vst [vmem:[%s548 + $0x7c] sm:$0xf] %v611
                %v613 = vld [vmem:[%s547 + $0x100] sm:$0xf]
                %614 = vst [vmem:[%s548 + $0x80] sm:$0xf] %v613
                %v615 = vld [vmem:[%s547 + $0x104] sm:$0xf]
                %616 = vst [vmem:[%s548 + $0x84] sm:$0xf] %v615
                %v617 = vld [vmem:[%s547 + $0x110] sm:$0xf]
                %618 = vst [vmem:[%s548 + $0x88] sm:$0xf] %v617
                %v619 = vld [vmem:[%s547 + $0x114] sm:$0xf]
                %620 = vst [vmem:[%s548 + $0x8c] sm:$0xf] %v619
                %v621 = vld [vmem:[%s547 + $0x120] sm:$0xf]
                %622 = vst [vmem:[%s548 + $0x90] sm:$0xf] %v621
                %v623 = vld [vmem:[%s547 + $0x124] sm:$0xf]
                %624 = vst [vmem:[%s548 + $0x94] sm:$0xf] %v623
                %v625 = vld [vmem:[%s547 + $0x130] sm:$0xf]
                %626 = vst [vmem:[%s548 + $0x98] sm:$0xf] %v625
                %v627 = vld [vmem:[%s547 + $0x134] sm:$0xf]
                %628 = vst [vmem:[%s548 + $0x9c] sm:$0xf] %v627
                %v629 = vld [vmem:[%s547 + $0x140] sm:$0xf]
                %630 = vst [vmem:[%s548 + $0xa0] sm:$0xf] %v629
                %v631 = vld [vmem:[%s547 + $0x144] sm:$0xf]
                %632 = vst [vmem:[%s548 + $0xa4] sm:$0xf] %v631
                %v633 = vld [vmem:[%s547 + $0x150] sm:$0xf]
                %634 = vst [vmem:[%s548 + $0xa8] sm:$0xf] %v633
                %v635 = vld [vmem:[%s547 + $0x154] sm:$0xf]
                %636 = vst [vmem:[%s548 + $0xac] sm:$0xf] %v635
                %v637 = vld [vmem:[%s547 + $0x160] sm:$0xf]
                %638 = vst [vmem:[%s548 + $0xb0] sm:$0xf] %v637
                %v639 = vld [vmem:[%s547 + $0x164] sm:$0xf]
                %640 = vst [vmem:[%s548 + $0xb4] sm:$0xf] %v639
                %v641 = vld [vmem:[%s547 + $0x170] sm:$0xf]
                %642 = vst [vmem:[%s548 + $0xb8] sm:$0xf] %v641
                %v643 = vld [vmem:[%s547 + $0x174] sm:$0xf]
                %644 = vst [vmem:[%s548 + $0xbc] sm:$0xf] %v643
                %v645 = vld [vmem:[%s547 + $0x180] sm:$0xf]
                %646 = vst [vmem:[%s548 + $0xc0] sm:$0xf] %v645
                %v647 = vld [vmem:[%s547 + $0x184] sm:$0xf]
                %648 = vst [vmem:[%s548 + $0xc4] sm:$0xf] %v647
                %v649 = vld [vmem:[%s547 + $0x190] sm:$0xf]
                %650 = vst [vmem:[%s548 + $0xc8] sm:$0xf] %v649
                %v651 = vld [vmem:[%s547 + $0x194] sm:$0xf]
                %652 = vst [vmem:[%s548 + $0xcc] sm:$0xf] %v651
                %v653 = vld [vmem:[%s547 + $0x1a0] sm:$0xf]
                %654 = vst [vmem:[%s548 + $0xd0] sm:$0xf] %v653
                %v655 = vld [vmem:[%s547 + $0x1a4] sm:$0xf]
                %656 = vst [vmem:[%s548 + $0xd4] sm:$0xf] %v655
                %v657 = vld [vmem:[%s547 + $0x1b0] sm:$0xf]
                %658 = vst [vmem:[%s548 + $0xd8] sm:$0xf] %v657
                %v659 = vld [vmem:[%s547 + $0x1b4] sm:$0xf]
                %660 = vst [vmem:[%s548 + $0xdc] sm:$0xf] %v659
                %v661 = vld [vmem:[%s547 + $0x1c0] sm:$0xf]
                %662 = vst [vmem:[%s548 + $0xe0] sm:$0xf] %v661
                %v663 = vld [vmem:[%s547 + $0x1c4] sm:$0xf]
                %664 = vst [vmem:[%s548 + $0xe4] sm:$0xf] %v663
                %v665 = vld [vmem:[%s547 + $0x1d0] sm:$0xf]
                %666 = vst [vmem:[%s548 + $0xe8] sm:$0xf] %v665
                %v667 = vld [vmem:[%s547 + $0x1d4] sm:$0xf]
                %668 = vst [vmem:[%s548 + $0xec] sm:$0xf] %v667
                %v669 = vld [vmem:[%s547 + $0x1e0] sm:$0xf]
                %670 = vst [vmem:[%s548 + $0xf0] sm:$0xf] %v669
                %v671 = vld [vmem:[%s547 + $0x1e4] sm:$0xf]
                %672 = vst [vmem:[%s548 + $0xf4] sm:$0xf] %v671
                %v673 = vld [vmem:[%s547 + $0x1f0] sm:$0xf]
                %674 = vst [vmem:[%s548 + $0xf8] sm:$0xf] %v673
                %v675 = vld [vmem:[%s547 + $0x1f4] sm:$0xf]
                %676 = vst [vmem:[%s548 + $0xfc] sm:$0xf] %v675
              $region86: #{fno_forward.11} parent=80 // loop_footer
                %s546 = sadd.s32 1, %s542
              $region87: #{fno_forward.11} parent=80 // loop_footer_branch
                %541 = sbr.rel target = $region83
              $region88: #{fno_forward.11} parent=80 // loop_exit
                _
            $region81: #{fno_forward.11} parent=72 // pred_fallthru
              _
          $region73: #{fno_forward.11} parent=68 // pred_fallthru
            _
          %824 = vnop
        $region69: #{fno_forward.11} parent=23 // pred_fallthru
          _
      $region24: #{fno_forward.11} parent=5 // pred_fallthru
        _
      %p825 = scmp.le.s32.totalorder 1, %s12
      %p826 = scmp.lt.s32.totalorder %s12, 3
      %p827 = pnand %p825, %p826
      %p828 = pneg %p827
      // Predicated region
      $region107: #{fno_forward.11} parent=5 // pred_check
        _
      $region108: #{fno_forward.11} parent=5 // pred_check_branch
        %830 = sbr.rel (%p827) target = $region110
      $region109: #{fno_forward.11} parent=5 // pred_region
        %s831 = ssub.s32 %s12, 1
        %s832 = sand.u32 %s91, 1
        %s833 = sand.u32 %s91, 1
        %s834 = smul.addr %s833, 256
        %s835 = scalar_lea.vmem [#allocation2], %s834
        // Predicated region
        $region111: #{fno_forward.11} parent=109 // pred_check
          %p836 = pneg %p104
        $region112: #{fno_forward.11} parent=109 // pred_check_branch
          %838 = sbr.rel (%p836) target = $region114
        $region113: #{fno_forward.11} parent=109 // pred_region
          _
        $region114: #{fno_forward.11} parent=109 // pred_fallthru
          _
        %s839 = sand.u32 %s119, 1
        %s840 = sand.u32 %s119, 1
        %s841 = smul.addr %s840, 256
        %s842 = scalar_lea.vmem [#allocation3], %s841
        // Predicated region
        $region115: #{fno_forward.11} parent=109 // pred_check
          %p843 = pneg %p132
        $region116: #{fno_forward.11} parent=109 // pred_check_branch
          %845 = sbr.rel (%p843) target = $region118
        $region117: #{fno_forward.11} parent=109 // pred_region
          _
        $region118: #{fno_forward.11} parent=109 // pred_fallthru
          _
        %p846 = scmp.lt.s32.totalorder %s22, 0
        %s847 = scalar_select %p846, %s22, 0
        %s848 = smul.addr %s847, 2
        %s849 = scalar_lea.vmem %s0, %s848
        %p850 = pneg %p50
        %p851 = pneg %p47
        %p852 = scmp.lt.s32.totalorder %s22, 0
        %s853 = scalar_select %p852, %s22, 0
        %s854 = smul.addr %s853, 2
        %s855 = scalar_lea.vmem %s1, %s854
        %p856 = pneg %p76
        %p857 = pneg %p73
        %s858 = sand.u32 %s91, 1
        %s859 = sand.u32 %s91, 1
        %s860 = smul.addr %s859, 256
        %s861 = scalar_lea.vmem [#allocation2], %s860
        %p862 = pneg %p104
        %p863 = pneg %p101
        %s864 = sand.u32 %s119, 1
        %s865 = sand.u32 %s119, 1
        %s866 = smul.addr %s865, 256
        %s867 = scalar_lea.vmem [#allocation3], %s866
        %p868 = pneg %p132
        %p869 = pneg %p129
        %p870 = pneg %p160
        %p871 = pneg %p157
        %s872 = sand.u32 %s147, 1
        %s873 = sand.u32 %s147, 1
        %s874 = smul.addr %s873, 32
        %s875 = scalar_lea.vmem [#allocation4], %s874
        %p876 = pneg %p188
        %p877 = pneg %p185
        %s878 = sand.u32 %s175, 1
        %s879 = sand.u32 %s175, 1
        %s880 = smul.addr %s879, 32
        %s881 = scalar_lea.vmem [#allocation5], %s880
        %p882 = scmp.lt.s32.totalorder %s22, 0
        %s883 = scalar_select %p882, %s22, 0
        %s884 = smul.addr %s883, 2
        %s885 = scalar_lea.vmem %s0, %s884
        %p886 = scmp.lt.s32.totalorder %s22, 0
        %s887 = scalar_select %p886, %s22, 0
        %s888 = smul.addr %s887, 2
        %s889 = scalar_lea.vmem %s1, %s888
        %s890 = smul.u32 2, %s21
        %s891 = smul.u32 2, %s21
        %s892 = smul.u32 2, %s21
        %s893 = smul.u32 2, %s21
        %v894 = vld [vmem:[%s885] sm:$0x3]
        %v897 = vunpack.c.l.s4 1966171168
        %v898 = vunpack.c.0.s8 %v897
        %v899 = vlaneseq
        %v900 = vshrl.u32 %v899, 7
        %v901 = vsub.s32 %v898, %v900
        %v902 = vrot.slane %v894, %v901
        %v903 = vcombine.high %v902, %v902
        %v905 = vunpack.c.l.s4 1966171168
        %v906 = vunpack.c.0.s8 %v905
        %v907 = vlaneseq
        %v908 = vshrl.u32 %v907, 7
        %v909 = vsub.s32 %v906, %v908
        %v910 = vrot.slane %v902, %v909
        %v912 = vunpack.c.l.s4 1966171168
        %v913 = vunpack.c.0.s8 %v912
        %v914 = vlaneseq
        %v915 = vshrl.u32 %v914, 7
        %v916 = vsub.s32 %v913, %v915
        %v917 = vrot.slane %v903, %v916
        %v918 = vld [vmem:[%s889] sm:$0x3]
        %v921 = vunpack.c.l.s4 1966171168
        %v922 = vunpack.c.0.s8 %v921
        %v923 = vlaneseq
        %v924 = vshrl.u32 %v923, 7
        %v925 = vsub.s32 %v922, %v924
        %v926 = vrot.slane %v918, %v925
        %v927 = vcombine.high %v926, %v926
        %v929 = vunpack.c.l.s4 1966171168
        %v930 = vunpack.c.0.s8 %v929
        %v931 = vlaneseq
        %v932 = vshrl.u32 %v931, 7
        %v933 = vsub.s32 %v930, %v932
        %v934 = vrot.slane %v926, %v933
        %v936 = vunpack.c.l.s4 1966171168
        %v937 = vunpack.c.0.s8 %v936
        %v938 = vlaneseq
        %v939 = vshrl.u32 %v938, 7
        %v940 = vsub.s32 %v937, %v939
        %v941 = vrot.slane %v927, %v940
        %v942 = vld [vmem:[%s835] sm:$0xf]
        %v943 = vld [vmem:[%s835 + $0x4] sm:$0xf]
        %v944 = vunpack.c.l.bf16 %v942
        %v945 = vunpack.c.l.bf16 %v943
        %v946 = vld [vmem:[%s842] sm:$0xf]
        %v947 = vld [vmem:[%s842 + $0x4] sm:$0xf]
        %v948 = vunpack.c.l.bf16 %v946
        %v949 = vunpack.c.l.bf16 %v947
        %v950 = vlaneseq
        %v951 = vshrl.u32 %v950, 7
        %v952 = vsub.s32 0, %v951
        %v953 = vrot.slane %v910, %v952
        %v954 = vlaneseq
        %v955 = vshrl.u32 %v954, 7
        %v956 = vsub.s32 0, %v955
        %v957 = vrot.slane %v917, %v956
        %v960 = vmul.f32 %v953, %v944
        %v961 = vmul.f32 %v953, %v945
        %v962 = vmul.f32 %v957, %v944
        %v963 = vmul.f32 %v957, %v945
        %v964 = vadd.f32 %v960, 0.0
        %v965 = vadd.f32 %v961, 0.0
        %v966 = vadd.f32 %v962, 0.0
        %v967 = vadd.f32 %v963, 0.0
        %v968 = vlaneseq
        %v969 = vshrl.u32 %v968, 7
        %v970 = vsub.s32 0, %v969
        %v971 = vrot.slane %v934, %v970
        %v972 = vlaneseq
        %v973 = vshrl.u32 %v972, 7
        %v974 = vsub.s32 0, %v973
        %v975 = vrot.slane %v941, %v974
        %v978 = vmul.f32 %v971, %v948
        %v979 = vmul.f32 %v971, %v949
        %v980 = vmul.f32 %v975, %v948
        %v981 = vmul.f32 %v975, %v949
        %v982 = vsub.f32 %v964, %v978
        %v983 = vsub.f32 %v965, %v979
        %v984 = vsub.f32 %v966, %v980
        %v985 = vsub.f32 %v967, %v981
        %v986 = vmul.f32 %v953, %v948
        %v987 = vmul.f32 %v953, %v949
        %v988 = vmul.f32 %v957, %v948
        %v989 = vmul.f32 %v957, %v949
        %v990 = vadd.f32 %v986, 0.0
        %v991 = vadd.f32 %v987, 0.0
        %v992 = vadd.f32 %v988, 0.0
        %v993 = vadd.f32 %v989, 0.0
        %v994 = vmul.f32 %v971, %v944
        %v995 = vmul.f32 %v971, %v945
        %v996 = vmul.f32 %v975, %v944
        %v997 = vmul.f32 %v975, %v945
        %v998 = vadd.f32 %v990, %v994
        %v999 = vadd.f32 %v991, %v995
        %v1000 = vadd.f32 %v992, %v996
        %v1001 = vadd.f32 %v993, %v997
        %s1002 = scalar_lea.vmem %s885, 2
        %v1003 = vld [vmem:[%s1002] sm:$0x3]
        %v1006 = vunpack.c.l.s4 1966171168
        %v1007 = vunpack.c.0.s8 %v1006
        %v1008 = vlaneseq
        %v1009 = vshrl.u32 %v1008, 7
        %v1010 = vsub.s32 %v1007, %v1009
        %v1011 = vrot.slane %v1003, %v1010
        %v1012 = vcombine.high %v1011, %v1011
        %v1014 = vunpack.c.l.s4 1966171168
        %v1015 = vunpack.c.0.s8 %v1014
        %v1016 = vlaneseq
        %v1017 = vshrl.u32 %v1016, 7
        %v1018 = vsub.s32 %v1015, %v1017
        %v1019 = vrot.slane %v1011, %v1018
        %v1021 = vunpack.c.l.s4 1966171168
        %v1022 = vunpack.c.0.s8 %v1021
        %v1023 = vlaneseq
        %v1024 = vshrl.u32 %v1023, 7
        %v1025 = vsub.s32 %v1022, %v1024
        %v1026 = vrot.slane %v1012, %v1025
        %s1027 = scalar_lea.vmem %s889, 2
        %v1028 = vld [vmem:[%s1027] sm:$0x3]
        %v1031 = vunpack.c.l.s4 1966171168
        %v1032 = vunpack.c.0.s8 %v1031
        %v1033 = vlaneseq
        %v1034 = vshrl.u32 %v1033, 7
        %v1035 = vsub.s32 %v1032, %v1034
        %v1036 = vrot.slane %v1028, %v1035
        %v1037 = vcombine.high %v1036, %v1036
        %v1039 = vunpack.c.l.s4 1966171168
        %v1040 = vunpack.c.0.s8 %v1039
        %v1041 = vlaneseq
        %v1042 = vshrl.u32 %v1041, 7
        %v1043 = vsub.s32 %v1040, %v1042
        %v1044 = vrot.slane %v1036, %v1043
        %v1046 = vunpack.c.l.s4 1966171168
        %v1047 = vunpack.c.0.s8 %v1046
        %v1048 = vlaneseq
        %v1049 = vshrl.u32 %v1048, 7
        %v1050 = vsub.s32 %v1047, %v1049
        %v1051 = vrot.slane %v1037, %v1050
        %s1052 = scalar_lea.vmem %s835, 8 [#allocation2]
        %v1053 = vld [vmem:[%s1052] sm:$0xf]
        %v1054 = vld [vmem:[%s1052 + $0x4] sm:$0xf]
        %v1055 = vunpack.c.l.bf16 %v1053
        %v1056 = vunpack.c.l.bf16 %v1054
        %s1057 = scalar_lea.vmem %s842, 8 [#allocation3]
        %v1058 = vld [vmem:[%s1057] sm:$0xf]
        %v1059 = vld [vmem:[%s1057 + $0x4] sm:$0xf]
        %v1060 = vunpack.c.l.bf16 %v1058
        %v1061 = vunpack.c.l.bf16 %v1059
        %v1062 = vlaneseq
        %v1063 = vshrl.u32 %v1062, 7
        %v1064 = vsub.s32 0, %v1063
        %v1065 = vrot.slane %v1019, %v1064
        %v1066 = vlaneseq
        %v1067 = vshrl.u32 %v1066, 7
        %v1068 = vsub.s32 0, %v1067
        %v1069 = vrot.slane %v1026, %v1068
        %v1072 = vmul.f32 %v1065, %v1055
        %v1073 = vmul.f32 %v1065, %v1056
        %v1074 = vmul.f32 %v1069, %v1055
        %v1075 = vmul.f32 %v1069, %v1056
        %v1076 = vadd.f32 %v982, %v1072
        %v1077 = vadd.f32 %v983, %v1073
        %v1078 = vadd.f32 %v984, %v1074
        %v1079 = vadd.f32 %v985, %v1075
        %v1080 = vlaneseq
        %v1081 = vshrl.u32 %v1080, 7
        %v1082 = vsub.s32 0, %v1081
        %v1083 = vrot.slane %v1044, %v1082
        %v1084 = vlaneseq
        %v1085 = vshrl.u32 %v1084, 7
        %v1086 = vsub.s32 0, %v1085
        %v1087 = vrot.slane %v1051, %v1086
        %v1090 = vmul.f32 %v1083, %v1060
        %v1091 = vmul.f32 %v1083, %v1061
        %v1092 = vmul.f32 %v1087, %v1060
        %v1093 = vmul.f32 %v1087, %v1061
        %v1094 = vsub.f32 %v1076, %v1090
        %v1095 = vsub.f32 %v1077, %v1091
        %v1096 = vsub.f32 %v1078, %v1092
        %v1097 = vsub.f32 %v1079, %v1093
        %v1098 = vmul.f32 %v1065, %v1060
        %v1099 = vmul.f32 %v1065, %v1061
        %v1100 = vmul.f32 %v1069, %v1060
        %v1101 = vmul.f32 %v1069, %v1061
        %v1102 = vadd.f32 %v998, %v1098
        %v1103 = vadd.f32 %v999, %v1099
        %v1104 = vadd.f32 %v1000, %v1100
        %v1105 = vadd.f32 %v1001, %v1101
        %v1106 = vmul.f32 %v1083, %v1055
        %v1107 = vmul.f32 %v1083, %v1056
        %v1108 = vmul.f32 %v1087, %v1055
        %v1109 = vmul.f32 %v1087, %v1056
        %v1110 = vadd.f32 %v1102, %v1106
        %v1111 = vadd.f32 %v1103, %v1107
        %v1112 = vadd.f32 %v1104, %v1108
        %v1113 = vadd.f32 %v1105, %v1109
        %s1114 = scalar_lea.vmem %s885, 4
        %v1115 = vld [vmem:[%s1114] sm:$0x3]
        %v1118 = vunpack.c.l.s4 1966171168
        %v1119 = vunpack.c.0.s8 %v1118
        %v1120 = vlaneseq
        %v1121 = vshrl.u32 %v1120, 7
        %v1122 = vsub.s32 %v1119, %v1121
        %v1123 = vrot.slane %v1115, %v1122
        %v1124 = vcombine.high %v1123, %v1123
        %v1126 = vunpack.c.l.s4 1966171168
        %v1127 = vunpack.c.0.s8 %v1126
        %v1128 = vlaneseq
        %v1129 = vshrl.u32 %v1128, 7
        %v1130 = vsub.s32 %v1127, %v1129
        %v1131 = vrot.slane %v1123, %v1130
        %v1133 = vunpack.c.l.s4 1966171168
        %v1134 = vunpack.c.0.s8 %v1133
        %v1135 = vlaneseq
        %v1136 = vshrl.u32 %v1135, 7
        %v1137 = vsub.s32 %v1134, %v1136
        %v1138 = vrot.slane %v1124, %v1137
        %s1139 = scalar_lea.vmem %s889, 4
        %v1140 = vld [vmem:[%s1139] sm:$0x3]
        %v1143 = vunpack.c.l.s4 1966171168
        %v1144 = vunpack.c.0.s8 %v1143
        %v1145 = vlaneseq
        %v1146 = vshrl.u32 %v1145, 7
        %v1147 = vsub.s32 %v1144, %v1146
        %v1148 = vrot.slane %v1140, %v1147
        %v1149 = vcombine.high %v1148, %v1148
        %v1151 = vunpack.c.l.s4 1966171168
        %v1152 = vunpack.c.0.s8 %v1151
        %v1153 = vlaneseq
        %v1154 = vshrl.u32 %v1153, 7
        %v1155 = vsub.s32 %v1152, %v1154
        %v1156 = vrot.slane %v1148, %v1155
        %v1158 = vunpack.c.l.s4 1966171168
        %v1159 = vunpack.c.0.s8 %v1158
        %v1160 = vlaneseq
        %v1161 = vshrl.u32 %v1160, 7
        %v1162 = vsub.s32 %v1159, %v1161
        %v1163 = vrot.slane %v1149, %v1162
        %s1164 = scalar_lea.vmem %s835, 16 [#allocation2]
        %v1165 = vld [vmem:[%s1164] sm:$0xf]
        %v1166 = vld [vmem:[%s1164 + $0x4] sm:$0xf]
        %v1167 = vunpack.c.l.bf16 %v1165
        %v1168 = vunpack.c.l.bf16 %v1166
        %s1169 = scalar_lea.vmem %s842, 16 [#allocation3]
        %v1170 = vld [vmem:[%s1169] sm:$0xf]
        %v1171 = vld [vmem:[%s1169 + $0x4] sm:$0xf]
        %v1172 = vunpack.c.l.bf16 %v1170
        %v1173 = vunpack.c.l.bf16 %v1171
        %v1174 = vlaneseq
        %v1175 = vshrl.u32 %v1174, 7
        %v1176 = vsub.s32 0, %v1175
        %v1177 = vrot.slane %v1131, %v1176
        %v1178 = vlaneseq
        %v1179 = vshrl.u32 %v1178, 7
        %v1180 = vsub.s32 0, %v1179
        %v1181 = vrot.slane %v1138, %v1180
        %v1184 = vmul.f32 %v1177, %v1167
        %v1185 = vmul.f32 %v1177, %v1168
        %v1186 = vmul.f32 %v1181, %v1167
        %v1187 = vmul.f32 %v1181, %v1168
        %v1188 = vadd.f32 %v1094, %v1184
        %v1189 = vadd.f32 %v1095, %v1185
        %v1190 = vadd.f32 %v1096, %v1186
        %v1191 = vadd.f32 %v1097, %v1187
        %v1192 = vlaneseq
        %v1193 = vshrl.u32 %v1192, 7
        %v1194 = vsub.s32 0, %v1193
        %v1195 = vrot.slane %v1156, %v1194
        %v1196 = vlaneseq
        %v1197 = vshrl.u32 %v1196, 7
        %v1198 = vsub.s32 0, %v1197
        %v1199 = vrot.slane %v1163, %v1198
        %v1202 = vmul.f32 %v1195, %v1172
        %v1203 = vmul.f32 %v1195, %v1173
        %v1204 = vmul.f32 %v1199, %v1172
        %v1205 = vmul.f32 %v1199, %v1173
        %v1206 = vsub.f32 %v1188, %v1202
        %v1207 = vsub.f32 %v1189, %v1203
        %v1208 = vsub.f32 %v1190, %v1204
        %v1209 = vsub.f32 %v1191, %v1205
        %v1210 = vmul.f32 %v1177, %v1172
        %v1211 = vmul.f32 %v1177, %v1173
        %v1212 = vmul.f32 %v1181, %v1172
        %v1213 = vmul.f32 %v1181, %v1173
        %v1214 = vadd.f32 %v1110, %v1210
        %v1215 = vadd.f32 %v1111, %v1211
        %v1216 = vadd.f32 %v1112, %v1212
        %v1217 = vadd.f32 %v1113, %v1213
        %v1218 = vmul.f32 %v1195, %v1167
        %v1219 = vmul.f32 %v1195, %v1168
        %v1220 = vmul.f32 %v1199, %v1167
        %v1221 = vmul.f32 %v1199, %v1168
        %v1222 = vadd.f32 %v1214, %v1218
        %v1223 = vadd.f32 %v1215, %v1219
        %v1224 = vadd.f32 %v1216, %v1220
        %v1225 = vadd.f32 %v1217, %v1221
        %s1226 = scalar_lea.vmem %s885, 6
        %v1227 = vld [vmem:[%s1226] sm:$0x3]
        %v1230 = vunpack.c.l.s4 1966171168
        %v1231 = vunpack.c.0.s8 %v1230
        %v1232 = vlaneseq
        %v1233 = vshrl.u32 %v1232, 7
        %v1234 = vsub.s32 %v1231, %v1233
        %v1235 = vrot.slane %v1227, %v1234
        %v1236 = vcombine.high %v1235, %v1235
        %v1238 = vunpack.c.l.s4 1966171168
        %v1239 = vunpack.c.0.s8 %v1238
        %v1240 = vlaneseq
        %v1241 = vshrl.u32 %v1240, 7
        %v1242 = vsub.s32 %v1239, %v1241
        %v1243 = vrot.slane %v1235, %v1242
        %v1245 = vunpack.c.l.s4 1966171168
        %v1246 = vunpack.c.0.s8 %v1245
        %v1247 = vlaneseq
        %v1248 = vshrl.u32 %v1247, 7
        %v1249 = vsub.s32 %v1246, %v1248
        %v1250 = vrot.slane %v1236, %v1249
        %s1251 = scalar_lea.vmem %s889, 6
        %v1252 = vld [vmem:[%s1251] sm:$0x3]
        %v1255 = vunpack.c.l.s4 1966171168
        %v1256 = vunpack.c.0.s8 %v1255
        %v1257 = vlaneseq
        %v1258 = vshrl.u32 %v1257, 7
        %v1259 = vsub.s32 %v1256, %v1258
        %v1260 = vrot.slane %v1252, %v1259
        %v1261 = vcombine.high %v1260, %v1260
        %v1263 = vunpack.c.l.s4 1966171168
        %v1264 = vunpack.c.0.s8 %v1263
        %v1265 = vlaneseq
        %v1266 = vshrl.u32 %v1265, 7
        %v1267 = vsub.s32 %v1264, %v1266
        %v1268 = vrot.slane %v1260, %v1267
        %v1270 = vunpack.c.l.s4 1966171168
        %v1271 = vunpack.c.0.s8 %v1270
        %v1272 = vlaneseq
        %v1273 = vshrl.u32 %v1272, 7
        %v1274 = vsub.s32 %v1271, %v1273
        %v1275 = vrot.slane %v1261, %v1274
        %s1276 = scalar_lea.vmem %s835, 24 [#allocation2]
        %v1277 = vld [vmem:[%s1276] sm:$0xf]
        %v1278 = vld [vmem:[%s1276 + $0x4] sm:$0xf]
        %v1279 = vunpack.c.l.bf16 %v1277
        %v1280 = vunpack.c.l.bf16 %v1278
        %s1281 = scalar_lea.vmem %s842, 24 [#allocation3]
        %v1282 = vld [vmem:[%s1281] sm:$0xf]
        %v1283 = vld [vmem:[%s1281 + $0x4] sm:$0xf]
        %v1284 = vunpack.c.l.bf16 %v1282
        %v1285 = vunpack.c.l.bf16 %v1283
        %v1286 = vlaneseq
        %v1287 = vshrl.u32 %v1286, 7
        %v1288 = vsub.s32 0, %v1287
        %v1289 = vrot.slane %v1243, %v1288
        %v1290 = vlaneseq
        %v1291 = vshrl.u32 %v1290, 7
        %v1292 = vsub.s32 0, %v1291
        %v1293 = vrot.slane %v1250, %v1292
        %v1296 = vmul.f32 %v1289, %v1279
        %v1297 = vmul.f32 %v1289, %v1280
        %v1298 = vmul.f32 %v1293, %v1279
        %v1299 = vmul.f32 %v1293, %v1280
        %v1300 = vadd.f32 %v1206, %v1296
        %v1301 = vadd.f32 %v1207, %v1297
        %v1302 = vadd.f32 %v1208, %v1298
        %v1303 = vadd.f32 %v1209, %v1299
        %v1304 = vlaneseq
        %v1305 = vshrl.u32 %v1304, 7
        %v1306 = vsub.s32 0, %v1305
        %v1307 = vrot.slane %v1268, %v1306
        %v1308 = vlaneseq
        %v1309 = vshrl.u32 %v1308, 7
        %v1310 = vsub.s32 0, %v1309
        %v1311 = vrot.slane %v1275, %v1310
        %v1314 = vmul.f32 %v1307, %v1284
        %v1315 = vmul.f32 %v1307, %v1285
        %v1316 = vmul.f32 %v1311, %v1284
        %v1317 = vmul.f32 %v1311, %v1285
        %v1318 = vsub.f32 %v1300, %v1314
        %v1319 = vsub.f32 %v1301, %v1315
        %v1320 = vsub.f32 %v1302, %v1316
        %v1321 = vsub.f32 %v1303, %v1317
        %v1322 = vmul.f32 %v1289, %v1284
        %v1323 = vmul.f32 %v1289, %v1285
        %v1324 = vmul.f32 %v1293, %v1284
        %v1325 = vmul.f32 %v1293, %v1285
        %v1326 = vadd.f32 %v1222, %v1322
        %v1327 = vadd.f32 %v1223, %v1323
        %v1328 = vadd.f32 %v1224, %v1324
        %v1329 = vadd.f32 %v1225, %v1325
        %v1330 = vmul.f32 %v1307, %v1279
        %v1331 = vmul.f32 %v1307, %v1280
        %v1332 = vmul.f32 %v1311, %v1279
        %v1333 = vmul.f32 %v1311, %v1280
        %v1334 = vadd.f32 %v1326, %v1330
        %v1335 = vadd.f32 %v1327, %v1331
        %v1336 = vadd.f32 %v1328, %v1332
        %v1337 = vadd.f32 %v1329, %v1333
        %s1338 = scalar_lea.vmem %s885, 8
        %v1339 = vld [vmem:[%s1338] sm:$0x3]
        %v1342 = vunpack.c.l.s4 1966171168
        %v1343 = vunpack.c.0.s8 %v1342
        %v1344 = vlaneseq
        %v1345 = vshrl.u32 %v1344, 7
        %v1346 = vsub.s32 %v1343, %v1345
        %v1347 = vrot.slane %v1339, %v1346
        %v1348 = vcombine.high %v1347, %v1347
        %v1350 = vunpack.c.l.s4 1966171168
        %v1351 = vunpack.c.0.s8 %v1350
        %v1352 = vlaneseq
        %v1353 = vshrl.u32 %v1352, 7
        %v1354 = vsub.s32 %v1351, %v1353
        %v1355 = vrot.slane %v1347, %v1354
        %v1357 = vunpack.c.l.s4 1966171168
        %v1358 = vunpack.c.0.s8 %v1357
        %v1359 = vlaneseq
        %v1360 = vshrl.u32 %v1359, 7
        %v1361 = vsub.s32 %v1358, %v1360
        %v1362 = vrot.slane %v1348, %v1361
        %s1363 = scalar_lea.vmem %s889, 8
        %v1364 = vld [vmem:[%s1363] sm:$0x3]
        %v1367 = vunpack.c.l.s4 1966171168
        %v1368 = vunpack.c.0.s8 %v1367
        %v1369 = vlaneseq
        %v1370 = vshrl.u32 %v1369, 7
        %v1371 = vsub.s32 %v1368, %v1370
        %v1372 = vrot.slane %v1364, %v1371
        %v1373 = vcombine.high %v1372, %v1372
        %v1375 = vunpack.c.l.s4 1966171168
        %v1376 = vunpack.c.0.s8 %v1375
        %v1377 = vlaneseq
        %v1378 = vshrl.u32 %v1377, 7
        %v1379 = vsub.s32 %v1376, %v1378
        %v1380 = vrot.slane %v1372, %v1379
        %v1382 = vunpack.c.l.s4 1966171168
        %v1383 = vunpack.c.0.s8 %v1382
        %v1384 = vlaneseq
        %v1385 = vshrl.u32 %v1384, 7
        %v1386 = vsub.s32 %v1383, %v1385
        %v1387 = vrot.slane %v1373, %v1386
        %s1388 = scalar_lea.vmem %s835, 32 [#allocation2]
        %v1389 = vld [vmem:[%s1388] sm:$0xf]
        %v1390 = vld [vmem:[%s1388 + $0x4] sm:$0xf]
        %v1391 = vunpack.c.l.bf16 %v1389
        %v1392 = vunpack.c.l.bf16 %v1390
        %s1393 = scalar_lea.vmem %s842, 32 [#allocation3]
        %v1394 = vld [vmem:[%s1393] sm:$0xf]
        %v1395 = vld [vmem:[%s1393 + $0x4] sm:$0xf]
        %v1396 = vunpack.c.l.bf16 %v1394
        %v1397 = vunpack.c.l.bf16 %v1395
        %v1398 = vlaneseq
        %v1399 = vshrl.u32 %v1398, 7
        %v1400 = vsub.s32 0, %v1399
        %v1401 = vrot.slane %v1355, %v1400
        %v1402 = vlaneseq
        %v1403 = vshrl.u32 %v1402, 7
        %v1404 = vsub.s32 0, %v1403
        %v1405 = vrot.slane %v1362, %v1404
        %v1408 = vmul.f32 %v1401, %v1391
        %v1409 = vmul.f32 %v1401, %v1392
        %v1410 = vmul.f32 %v1405, %v1391
        %v1411 = vmul.f32 %v1405, %v1392
        %v1412 = vadd.f32 %v1318, %v1408
        %v1413 = vadd.f32 %v1319, %v1409
        %v1414 = vadd.f32 %v1320, %v1410
        %v1415 = vadd.f32 %v1321, %v1411
        %v1416 = vlaneseq
        %v1417 = vshrl.u32 %v1416, 7
        %v1418 = vsub.s32 0, %v1417
        %v1419 = vrot.slane %v1380, %v1418
        %v1420 = vlaneseq
        %v1421 = vshrl.u32 %v1420, 7
        %v1422 = vsub.s32 0, %v1421
        %v1423 = vrot.slane %v1387, %v1422
        %v1426 = vmul.f32 %v1419, %v1396
        %v1427 = vmul.f32 %v1419, %v1397
        %v1428 = vmul.f32 %v1423, %v1396
        %v1429 = vmul.f32 %v1423, %v1397
        %v1430 = vsub.f32 %v1412, %v1426
        %v1431 = vsub.f32 %v1413, %v1427
        %v1432 = vsub.f32 %v1414, %v1428
        %v1433 = vsub.f32 %v1415, %v1429
        %v1434 = vmul.f32 %v1401, %v1396
        %v1435 = vmul.f32 %v1401, %v1397
        %v1436 = vmul.f32 %v1405, %v1396
        %v1437 = vmul.f32 %v1405, %v1397
        %v1438 = vadd.f32 %v1334, %v1434
        %v1439 = vadd.f32 %v1335, %v1435
        %v1440 = vadd.f32 %v1336, %v1436
        %v1441 = vadd.f32 %v1337, %v1437
        %v1442 = vmul.f32 %v1419, %v1391
        %v1443 = vmul.f32 %v1419, %v1392
        %v1444 = vmul.f32 %v1423, %v1391
        %v1445 = vmul.f32 %v1423, %v1392
        %v1446 = vadd.f32 %v1438, %v1442
        %v1447 = vadd.f32 %v1439, %v1443
        %v1448 = vadd.f32 %v1440, %v1444
        %v1449 = vadd.f32 %v1441, %v1445
        %s1450 = scalar_lea.vmem %s885, 10
        %v1451 = vld [vmem:[%s1450] sm:$0x3]
        %v1454 = vunpack.c.l.s4 1966171168
        %v1455 = vunpack.c.0.s8 %v1454
        %v1456 = vlaneseq
        %v1457 = vshrl.u32 %v1456, 7
        %v1458 = vsub.s32 %v1455, %v1457
        %v1459 = vrot.slane %v1451, %v1458
        %v1460 = vcombine.high %v1459, %v1459
        %v1462 = vunpack.c.l.s4 1966171168
        %v1463 = vunpack.c.0.s8 %v1462
        %v1464 = vlaneseq
        %v1465 = vshrl.u32 %v1464, 7
        %v1466 = vsub.s32 %v1463, %v1465
        %v1467 = vrot.slane %v1459, %v1466
        %v1469 = vunpack.c.l.s4 1966171168
        %v1470 = vunpack.c.0.s8 %v1469
        %v1471 = vlaneseq
        %v1472 = vshrl.u32 %v1471, 7
        %v1473 = vsub.s32 %v1470, %v1472
        %v1474 = vrot.slane %v1460, %v1473
        %s1475 = scalar_lea.vmem %s889, 10
        %v1476 = vld [vmem:[%s1475] sm:$0x3]
        %v1479 = vunpack.c.l.s4 1966171168
        %v1480 = vunpack.c.0.s8 %v1479
        %v1481 = vlaneseq
        %v1482 = vshrl.u32 %v1481, 7
        %v1483 = vsub.s32 %v1480, %v1482
        %v1484 = vrot.slane %v1476, %v1483
        %v1485 = vcombine.high %v1484, %v1484
        %v1487 = vunpack.c.l.s4 1966171168
        %v1488 = vunpack.c.0.s8 %v1487
        %v1489 = vlaneseq
        %v1490 = vshrl.u32 %v1489, 7
        %v1491 = vsub.s32 %v1488, %v1490
        %v1492 = vrot.slane %v1484, %v1491
        %v1494 = vunpack.c.l.s4 1966171168
        %v1495 = vunpack.c.0.s8 %v1494
        %v1496 = vlaneseq
        %v1497 = vshrl.u32 %v1496, 7
        %v1498 = vsub.s32 %v1495, %v1497
        %v1499 = vrot.slane %v1485, %v1498
        %s1500 = scalar_lea.vmem %s835, 40 [#allocation2]
        %v1501 = vld [vmem:[%s1500] sm:$0xf]
        %v1502 = vld [vmem:[%s1500 + $0x4] sm:$0xf]
        %v1503 = vunpack.c.l.bf16 %v1501
        %v1504 = vunpack.c.l.bf16 %v1502
        %s1505 = scalar_lea.vmem %s842, 40 [#allocation3]
        %v1506 = vld [vmem:[%s1505] sm:$0xf]
        %v1507 = vld [vmem:[%s1505 + $0x4] sm:$0xf]
        %v1508 = vunpack.c.l.bf16 %v1506
        %v1509 = vunpack.c.l.bf16 %v1507
        %v1510 = vlaneseq
        %v1511 = vshrl.u32 %v1510, 7
        %v1512 = vsub.s32 0, %v1511
        %v1513 = vrot.slane %v1467, %v1512
        %v1514 = vlaneseq
        %v1515 = vshrl.u32 %v1514, 7
        %v1516 = vsub.s32 0, %v1515
        %v1517 = vrot.slane %v1474, %v1516
        %v1520 = vmul.f32 %v1513, %v1503
        %v1521 = vmul.f32 %v1513, %v1504
        %v1522 = vmul.f32 %v1517, %v1503
        %v1523 = vmul.f32 %v1517, %v1504
        %v1524 = vadd.f32 %v1430, %v1520
        %v1525 = vadd.f32 %v1431, %v1521
        %v1526 = vadd.f32 %v1432, %v1522
        %v1527 = vadd.f32 %v1433, %v1523
        %v1528 = vlaneseq
        %v1529 = vshrl.u32 %v1528, 7
        %v1530 = vsub.s32 0, %v1529
        %v1531 = vrot.slane %v1492, %v1530
        %v1532 = vlaneseq
        %v1533 = vshrl.u32 %v1532, 7
        %v1534 = vsub.s32 0, %v1533
        %v1535 = vrot.slane %v1499, %v1534
        %v1538 = vmul.f32 %v1531, %v1508
        %v1539 = vmul.f32 %v1531, %v1509
        %v1540 = vmul.f32 %v1535, %v1508
        %v1541 = vmul.f32 %v1535, %v1509
        %v1542 = vsub.f32 %v1524, %v1538
        %v1543 = vsub.f32 %v1525, %v1539
        %v1544 = vsub.f32 %v1526, %v1540
        %v1545 = vsub.f32 %v1527, %v1541
        %v1546 = vmul.f32 %v1513, %v1508
        %v1547 = vmul.f32 %v1513, %v1509
        %v1548 = vmul.f32 %v1517, %v1508
        %v1549 = vmul.f32 %v1517, %v1509
        %v1550 = vadd.f32 %v1446, %v1546
        %v1551 = vadd.f32 %v1447, %v1547
        %v1552 = vadd.f32 %v1448, %v1548
        %v1553 = vadd.f32 %v1449, %v1549
        %v1554 = vmul.f32 %v1531, %v1503
        %v1555 = vmul.f32 %v1531, %v1504
        %v1556 = vmul.f32 %v1535, %v1503
        %v1557 = vmul.f32 %v1535, %v1504
        %v1558 = vadd.f32 %v1550, %v1554
        %v1559 = vadd.f32 %v1551, %v1555
        %v1560 = vadd.f32 %v1552, %v1556
        %v1561 = vadd.f32 %v1553, %v1557
        %s1562 = scalar_lea.vmem %s885, 12
        %v1563 = vld [vmem:[%s1562] sm:$0x3]
        %v1566 = vunpack.c.l.s4 1966171168
        %v1567 = vunpack.c.0.s8 %v1566
        %v1568 = vlaneseq
        %v1569 = vshrl.u32 %v1568, 7
        %v1570 = vsub.s32 %v1567, %v1569
        %v1571 = vrot.slane %v1563, %v1570
        %v1572 = vcombine.high %v1571, %v1571
        %v1574 = vunpack.c.l.s4 1966171168
        %v1575 = vunpack.c.0.s8 %v1574
        %v1576 = vlaneseq
        %v1577 = vshrl.u32 %v1576, 7
        %v1578 = vsub.s32 %v1575, %v1577
        %v1579 = vrot.slane %v1571, %v1578
        %v1581 = vunpack.c.l.s4 1966171168
        %v1582 = vunpack.c.0.s8 %v1581
        %v1583 = vlaneseq
        %v1584 = vshrl.u32 %v1583, 7
        %v1585 = vsub.s32 %v1582, %v1584
        %v1586 = vrot.slane %v1572, %v1585
        %s1587 = scalar_lea.vmem %s889, 12
        %v1588 = vld [vmem:[%s1587] sm:$0x3]
        %v1591 = vunpack.c.l.s4 1966171168
        %v1592 = vunpack.c.0.s8 %v1591
        %v1593 = vlaneseq
        %v1594 = vshrl.u32 %v1593, 7
        %v1595 = vsub.s32 %v1592, %v1594
        %v1596 = vrot.slane %v1588, %v1595
        %v1597 = vcombine.high %v1596, %v1596
        %v1599 = vunpack.c.l.s4 1966171168
        %v1600 = vunpack.c.0.s8 %v1599
        %v1601 = vlaneseq
        %v1602 = vshrl.u32 %v1601, 7
        %v1603 = vsub.s32 %v1600, %v1602
        %v1604 = vrot.slane %v1596, %v1603
        %v1606 = vunpack.c.l.s4 1966171168
        %v1607 = vunpack.c.0.s8 %v1606
        %v1608 = vlaneseq
        %v1609 = vshrl.u32 %v1608, 7
        %v1610 = vsub.s32 %v1607, %v1609
        %v1611 = vrot.slane %v1597, %v1610
        %s1612 = scalar_lea.vmem %s835, 48 [#allocation2]
        %v1613 = vld [vmem:[%s1612] sm:$0xf]
        %v1614 = vld [vmem:[%s1612 + $0x4] sm:$0xf]
        %v1615 = vunpack.c.l.bf16 %v1613
        %v1616 = vunpack.c.l.bf16 %v1614
        %s1617 = scalar_lea.vmem %s842, 48 [#allocation3]
        %v1618 = vld [vmem:[%s1617] sm:$0xf]
        %v1619 = vld [vmem:[%s1617 + $0x4] sm:$0xf]
        %v1620 = vunpack.c.l.bf16 %v1618
        %v1621 = vunpack.c.l.bf16 %v1619
        %v1622 = vlaneseq
        %v1623 = vshrl.u32 %v1622, 7
        %v1624 = vsub.s32 0, %v1623
        %v1625 = vrot.slane %v1579, %v1624
        %v1626 = vlaneseq
        %v1627 = vshrl.u32 %v1626, 7
        %v1628 = vsub.s32 0, %v1627
        %v1629 = vrot.slane %v1586, %v1628
        %v1632 = vmul.f32 %v1625, %v1615
        %v1633 = vmul.f32 %v1625, %v1616
        %v1634 = vmul.f32 %v1629, %v1615
        %v1635 = vmul.f32 %v1629, %v1616
        %v1636 = vadd.f32 %v1542, %v1632
        %v1637 = vadd.f32 %v1543, %v1633
        %v1638 = vadd.f32 %v1544, %v1634
        %v1639 = vadd.f32 %v1545, %v1635
        %v1640 = vlaneseq
        %v1641 = vshrl.u32 %v1640, 7
        %v1642 = vsub.s32 0, %v1641
        %v1643 = vrot.slane %v1604, %v1642
        %v1644 = vlaneseq
        %v1645 = vshrl.u32 %v1644, 7
        %v1646 = vsub.s32 0, %v1645
        %v1647 = vrot.slane %v1611, %v1646
        %v1650 = vmul.f32 %v1643, %v1620
        %v1651 = vmul.f32 %v1643, %v1621
        %v1652 = vmul.f32 %v1647, %v1620
        %v1653 = vmul.f32 %v1647, %v1621
        %v1654 = vsub.f32 %v1636, %v1650
        %v1655 = vsub.f32 %v1637, %v1651
        %v1656 = vsub.f32 %v1638, %v1652
        %v1657 = vsub.f32 %v1639, %v1653
        %v1658 = vmul.f32 %v1625, %v1620
        %v1659 = vmul.f32 %v1625, %v1621
        %v1660 = vmul.f32 %v1629, %v1620
        %v1661 = vmul.f32 %v1629, %v1621
        %v1662 = vadd.f32 %v1558, %v1658
        %v1663 = vadd.f32 %v1559, %v1659
        %v1664 = vadd.f32 %v1560, %v1660
        %v1665 = vadd.f32 %v1561, %v1661
        %v1666 = vmul.f32 %v1643, %v1615
        %v1667 = vmul.f32 %v1643, %v1616
        %v1668 = vmul.f32 %v1647, %v1615
        %v1669 = vmul.f32 %v1647, %v1616
        %v1670 = vadd.f32 %v1662, %v1666
        %v1671 = vadd.f32 %v1663, %v1667
        %v1672 = vadd.f32 %v1664, %v1668
        %v1673 = vadd.f32 %v1665, %v1669
        %s1674 = scalar_lea.vmem %s885, 14
        %v1675 = vld [vmem:[%s1674] sm:$0x3]
        %v1678 = vunpack.c.l.s4 1966171168
        %v1679 = vunpack.c.0.s8 %v1678
        %v1680 = vlaneseq
        %v1681 = vshrl.u32 %v1680, 7
        %v1682 = vsub.s32 %v1679, %v1681
        %v1683 = vrot.slane %v1675, %v1682
        %v1684 = vcombine.high %v1683, %v1683
        %v1686 = vunpack.c.l.s4 1966171168
        %v1687 = vunpack.c.0.s8 %v1686
        %v1688 = vlaneseq
        %v1689 = vshrl.u32 %v1688, 7
        %v1690 = vsub.s32 %v1687, %v1689
        %v1691 = vrot.slane %v1683, %v1690
        %v1693 = vunpack.c.l.s4 1966171168
        %v1694 = vunpack.c.0.s8 %v1693
        %v1695 = vlaneseq
        %v1696 = vshrl.u32 %v1695, 7
        %v1697 = vsub.s32 %v1694, %v1696
        %v1698 = vrot.slane %v1684, %v1697
        %s1699 = scalar_lea.vmem %s889, 14
        %v1700 = vld [vmem:[%s1699] sm:$0x3]
        %v1703 = vunpack.c.l.s4 1966171168
        %v1704 = vunpack.c.0.s8 %v1703
        %v1705 = vlaneseq
        %v1706 = vshrl.u32 %v1705, 7
        %v1707 = vsub.s32 %v1704, %v1706
        %v1708 = vrot.slane %v1700, %v1707
        %v1709 = vcombine.high %v1708, %v1708
        %v1711 = vunpack.c.l.s4 1966171168
        %v1712 = vunpack.c.0.s8 %v1711
        %v1713 = vlaneseq
        %v1714 = vshrl.u32 %v1713, 7
        %v1715 = vsub.s32 %v1712, %v1714
        %v1716 = vrot.slane %v1708, %v1715
        %v1718 = vunpack.c.l.s4 1966171168
        %v1719 = vunpack.c.0.s8 %v1718
        %v1720 = vlaneseq
        %v1721 = vshrl.u32 %v1720, 7
        %v1722 = vsub.s32 %v1719, %v1721
        %v1723 = vrot.slane %v1709, %v1722
        %s1724 = scalar_lea.vmem %s835, 56 [#allocation2]
        %v1725 = vld [vmem:[%s1724] sm:$0xf]
        %v1726 = vld [vmem:[%s1724 + $0x4] sm:$0xf]
        %v1727 = vunpack.c.l.bf16 %v1725
        %v1728 = vunpack.c.l.bf16 %v1726
        %s1729 = scalar_lea.vmem %s842, 56 [#allocation3]
        %v1730 = vld [vmem:[%s1729] sm:$0xf]
        %v1731 = vld [vmem:[%s1729 + $0x4] sm:$0xf]
        %v1732 = vunpack.c.l.bf16 %v1730
        %v1733 = vunpack.c.l.bf16 %v1731
        %v1734 = vlaneseq
        %v1735 = vshrl.u32 %v1734, 7
        %v1736 = vsub.s32 0, %v1735
        %v1737 = vrot.slane %v1691, %v1736
        %v1738 = vlaneseq
        %v1739 = vshrl.u32 %v1738, 7
        %v1740 = vsub.s32 0, %v1739
        %v1741 = vrot.slane %v1698, %v1740
        %v1744 = vmul.f32 %v1737, %v1727
        %v1745 = vmul.f32 %v1737, %v1728
        %v1746 = vmul.f32 %v1741, %v1727
        %v1747 = vmul.f32 %v1741, %v1728
        %v1748 = vadd.f32 %v1654, %v1744
        %v1749 = vadd.f32 %v1655, %v1745
        %v1750 = vadd.f32 %v1656, %v1746
        %v1751 = vadd.f32 %v1657, %v1747
        %v1752 = vlaneseq
        %v1753 = vshrl.u32 %v1752, 7
        %v1754 = vsub.s32 0, %v1753
        %v1755 = vrot.slane %v1716, %v1754
        %v1756 = vlaneseq
        %v1757 = vshrl.u32 %v1756, 7
        %v1758 = vsub.s32 0, %v1757
        %v1759 = vrot.slane %v1723, %v1758
        %v1762 = vmul.f32 %v1755, %v1732
        %v1763 = vmul.f32 %v1755, %v1733
        %v1764 = vmul.f32 %v1759, %v1732
        %v1765 = vmul.f32 %v1759, %v1733
        %v1766 = vsub.f32 %v1748, %v1762
        %v1767 = vsub.f32 %v1749, %v1763
        %v1768 = vsub.f32 %v1750, %v1764
        %v1769 = vsub.f32 %v1751, %v1765
        %v1770 = vmul.f32 %v1737, %v1732
        %v1771 = vmul.f32 %v1737, %v1733
        %v1772 = vmul.f32 %v1741, %v1732
        %v1773 = vmul.f32 %v1741, %v1733
        %v1774 = vadd.f32 %v1670, %v1770
        %v1775 = vadd.f32 %v1671, %v1771
        %v1776 = vadd.f32 %v1672, %v1772
        %v1777 = vadd.f32 %v1673, %v1773
        %v1778 = vmul.f32 %v1755, %v1727
        %v1779 = vmul.f32 %v1755, %v1728
        %v1780 = vmul.f32 %v1759, %v1727
        %v1781 = vmul.f32 %v1759, %v1728
        %v1782 = vadd.f32 %v1774, %v1778
        %v1783 = vadd.f32 %v1775, %v1779
        %v1784 = vadd.f32 %v1776, %v1780
        %v1785 = vadd.f32 %v1777, %v1781
        %s1786 = scalar_lea.vmem %s885, 16
        %v1787 = vld [vmem:[%s1786] sm:$0x3]
        %v1790 = vunpack.c.l.s4 1966171168
        %v1791 = vunpack.c.0.s8 %v1790
        %v1792 = vlaneseq
        %v1793 = vshrl.u32 %v1792, 7
        %v1794 = vsub.s32 %v1791, %v1793
        %v1795 = vrot.slane %v1787, %v1794
        %v1796 = vcombine.high %v1795, %v1795
        %v1798 = vunpack.c.l.s4 1966171168
        %v1799 = vunpack.c.0.s8 %v1798
        %v1800 = vlaneseq
        %v1801 = vshrl.u32 %v1800, 7
        %v1802 = vsub.s32 %v1799, %v1801
        %v1803 = vrot.slane %v1795, %v1802
        %v1805 = vunpack.c.l.s4 1966171168
        %v1806 = vunpack.c.0.s8 %v1805
        %v1807 = vlaneseq
        %v1808 = vshrl.u32 %v1807, 7
        %v1809 = vsub.s32 %v1806, %v1808
        %v1810 = vrot.slane %v1796, %v1809
        %s1811 = scalar_lea.vmem %s889, 16
        %v1812 = vld [vmem:[%s1811] sm:$0x3]
        %v1815 = vunpack.c.l.s4 1966171168
        %v1816 = vunpack.c.0.s8 %v1815
        %v1817 = vlaneseq
        %v1818 = vshrl.u32 %v1817, 7
        %v1819 = vsub.s32 %v1816, %v1818
        %v1820 = vrot.slane %v1812, %v1819
        %v1821 = vcombine.high %v1820, %v1820
        %v1823 = vunpack.c.l.s4 1966171168
        %v1824 = vunpack.c.0.s8 %v1823
        %v1825 = vlaneseq
        %v1826 = vshrl.u32 %v1825, 7
        %v1827 = vsub.s32 %v1824, %v1826
        %v1828 = vrot.slane %v1820, %v1827
        %v1830 = vunpack.c.l.s4 1966171168
        %v1831 = vunpack.c.0.s8 %v1830
        %v1832 = vlaneseq
        %v1833 = vshrl.u32 %v1832, 7
        %v1834 = vsub.s32 %v1831, %v1833
        %v1835 = vrot.slane %v1821, %v1834
        %s1836 = scalar_lea.vmem %s835, 64 [#allocation2]
        %v1837 = vld [vmem:[%s1836] sm:$0xf]
        %v1838 = vld [vmem:[%s1836 + $0x4] sm:$0xf]
        %v1839 = vunpack.c.l.bf16 %v1837
        %v1840 = vunpack.c.l.bf16 %v1838
        %s1841 = scalar_lea.vmem %s842, 64 [#allocation3]
        %v1842 = vld [vmem:[%s1841] sm:$0xf]
        %v1843 = vld [vmem:[%s1841 + $0x4] sm:$0xf]
        %v1844 = vunpack.c.l.bf16 %v1842
        %v1845 = vunpack.c.l.bf16 %v1843
        %v1846 = vlaneseq
        %v1847 = vshrl.u32 %v1846, 7
        %v1848 = vsub.s32 0, %v1847
        %v1849 = vrot.slane %v1803, %v1848
        %v1850 = vlaneseq
        %v1851 = vshrl.u32 %v1850, 7
        %v1852 = vsub.s32 0, %v1851
        %v1853 = vrot.slane %v1810, %v1852
        %v1856 = vmul.f32 %v1849, %v1839
        %v1857 = vmul.f32 %v1849, %v1840
        %v1858 = vmul.f32 %v1853, %v1839
        %v1859 = vmul.f32 %v1853, %v1840
        %v1860 = vadd.f32 %v1766, %v1856
        %v1861 = vadd.f32 %v1767, %v1857
        %v1862 = vadd.f32 %v1768, %v1858
        %v1863 = vadd.f32 %v1769, %v1859
        %v1864 = vlaneseq
        %v1865 = vshrl.u32 %v1864, 7
        %v1866 = vsub.s32 0, %v1865
        %v1867 = vrot.slane %v1828, %v1866
        %v1868 = vlaneseq
        %v1869 = vshrl.u32 %v1868, 7
        %v1870 = vsub.s32 0, %v1869
        %v1871 = vrot.slane %v1835, %v1870
        %v1874 = vmul.f32 %v1867, %v1844
        %v1875 = vmul.f32 %v1867, %v1845
        %v1876 = vmul.f32 %v1871, %v1844
        %v1877 = vmul.f32 %v1871, %v1845
        %v1878 = vsub.f32 %v1860, %v1874
        %v1879 = vsub.f32 %v1861, %v1875
        %v1880 = vsub.f32 %v1862, %v1876
        %v1881 = vsub.f32 %v1863, %v1877
        %v1882 = vmul.f32 %v1849, %v1844
        %v1883 = vmul.f32 %v1849, %v1845
        %v1884 = vmul.f32 %v1853, %v1844
        %v1885 = vmul.f32 %v1853, %v1845
        %v1886 = vadd.f32 %v1782, %v1882
        %v1887 = vadd.f32 %v1783, %v1883
        %v1888 = vadd.f32 %v1784, %v1884
        %v1889 = vadd.f32 %v1785, %v1885
        %v1890 = vmul.f32 %v1867, %v1839
        %v1891 = vmul.f32 %v1867, %v1840
        %v1892 = vmul.f32 %v1871, %v1839
        %v1893 = vmul.f32 %v1871, %v1840
        %v1894 = vadd.f32 %v1886, %v1890
        %v1895 = vadd.f32 %v1887, %v1891
        %v1896 = vadd.f32 %v1888, %v1892
        %v1897 = vadd.f32 %v1889, %v1893
        %s1898 = scalar_lea.vmem %s885, 18
        %v1899 = vld [vmem:[%s1898] sm:$0x3]
        %v1902 = vunpack.c.l.s4 1966171168
        %v1903 = vunpack.c.0.s8 %v1902
        %v1904 = vlaneseq
        %v1905 = vshrl.u32 %v1904, 7
        %v1906 = vsub.s32 %v1903, %v1905
        %v1907 = vrot.slane %v1899, %v1906
        %v1908 = vcombine.high %v1907, %v1907
        %v1910 = vunpack.c.l.s4 1966171168
        %v1911 = vunpack.c.0.s8 %v1910
        %v1912 = vlaneseq
        %v1913 = vshrl.u32 %v1912, 7
        %v1914 = vsub.s32 %v1911, %v1913
        %v1915 = vrot.slane %v1907, %v1914
        %v1917 = vunpack.c.l.s4 1966171168
        %v1918 = vunpack.c.0.s8 %v1917
        %v1919 = vlaneseq
        %v1920 = vshrl.u32 %v1919, 7
        %v1921 = vsub.s32 %v1918, %v1920
        %v1922 = vrot.slane %v1908, %v1921
        %s1923 = scalar_lea.vmem %s889, 18
        %v1924 = vld [vmem:[%s1923] sm:$0x3]
        %v1927 = vunpack.c.l.s4 1966171168
        %v1928 = vunpack.c.0.s8 %v1927
        %v1929 = vlaneseq
        %v1930 = vshrl.u32 %v1929, 7
        %v1931 = vsub.s32 %v1928, %v1930
        %v1932 = vrot.slane %v1924, %v1931
        %v1933 = vcombine.high %v1932, %v1932
        %v1935 = vunpack.c.l.s4 1966171168
        %v1936 = vunpack.c.0.s8 %v1935
        %v1937 = vlaneseq
        %v1938 = vshrl.u32 %v1937, 7
        %v1939 = vsub.s32 %v1936, %v1938
        %v1940 = vrot.slane %v1932, %v1939
        %v1942 = vunpack.c.l.s4 1966171168
        %v1943 = vunpack.c.0.s8 %v1942
        %v1944 = vlaneseq
        %v1945 = vshrl.u32 %v1944, 7
        %v1946 = vsub.s32 %v1943, %v1945
        %v1947 = vrot.slane %v1933, %v1946
        %s1948 = scalar_lea.vmem %s835, 72 [#allocation2]
        %v1949 = vld [vmem:[%s1948] sm:$0xf]
        %v1950 = vld [vmem:[%s1948 + $0x4] sm:$0xf]
        %v1951 = vunpack.c.l.bf16 %v1949
        %v1952 = vunpack.c.l.bf16 %v1950
        %s1953 = scalar_lea.vmem %s842, 72 [#allocation3]
        %v1954 = vld [vmem:[%s1953] sm:$0xf]
        %v1955 = vld [vmem:[%s1953 + $0x4] sm:$0xf]
        %v1956 = vunpack.c.l.bf16 %v1954
        %v1957 = vunpack.c.l.bf16 %v1955
        %v1958 = vlaneseq
        %v1959 = vshrl.u32 %v1958, 7
        %v1960 = vsub.s32 0, %v1959
        %v1961 = vrot.slane %v1915, %v1960
        %v1962 = vlaneseq
        %v1963 = vshrl.u32 %v1962, 7
        %v1964 = vsub.s32 0, %v1963
        %v1965 = vrot.slane %v1922, %v1964
        %v1968 = vmul.f32 %v1961, %v1951
        %v1969 = vmul.f32 %v1961, %v1952
        %v1970 = vmul.f32 %v1965, %v1951
        %v1971 = vmul.f32 %v1965, %v1952
        %v1972 = vadd.f32 %v1878, %v1968
        %v1973 = vadd.f32 %v1879, %v1969
        %v1974 = vadd.f32 %v1880, %v1970
        %v1975 = vadd.f32 %v1881, %v1971
        %v1976 = vlaneseq
        %v1977 = vshrl.u32 %v1976, 7
        %v1978 = vsub.s32 0, %v1977
        %v1979 = vrot.slane %v1940, %v1978
        %v1980 = vlaneseq
        %v1981 = vshrl.u32 %v1980, 7
        %v1982 = vsub.s32 0, %v1981
        %v1983 = vrot.slane %v1947, %v1982
        %v1986 = vmul.f32 %v1979, %v1956
        %v1987 = vmul.f32 %v1979, %v1957
        %v1988 = vmul.f32 %v1983, %v1956
        %v1989 = vmul.f32 %v1983, %v1957
        %v1990 = vsub.f32 %v1972, %v1986
        %v1991 = vsub.f32 %v1973, %v1987
        %v1992 = vsub.f32 %v1974, %v1988
        %v1993 = vsub.f32 %v1975, %v1989
        %v1994 = vmul.f32 %v1961, %v1956
        %v1995 = vmul.f32 %v1961, %v1957
        %v1996 = vmul.f32 %v1965, %v1956
        %v1997 = vmul.f32 %v1965, %v1957
        %v1998 = vadd.f32 %v1894, %v1994
        %v1999 = vadd.f32 %v1895, %v1995
        %v2000 = vadd.f32 %v1896, %v1996
        %v2001 = vadd.f32 %v1897, %v1997
        %v2002 = vmul.f32 %v1979, %v1951
        %v2003 = vmul.f32 %v1979, %v1952
        %v2004 = vmul.f32 %v1983, %v1951
        %v2005 = vmul.f32 %v1983, %v1952
        %v2006 = vadd.f32 %v1998, %v2002
        %v2007 = vadd.f32 %v1999, %v2003
        %v2008 = vadd.f32 %v2000, %v2004
        %v2009 = vadd.f32 %v2001, %v2005
        %s2010 = scalar_lea.vmem %s885, 20
        %v2011 = vld [vmem:[%s2010] sm:$0x3]
        %v2014 = vunpack.c.l.s4 1966171168
        %v2015 = vunpack.c.0.s8 %v2014
        %v2016 = vlaneseq
        %v2017 = vshrl.u32 %v2016, 7
        %v2018 = vsub.s32 %v2015, %v2017
        %v2019 = vrot.slane %v2011, %v2018
        %v2020 = vcombine.high %v2019, %v2019
        %v2022 = vunpack.c.l.s4 1966171168
        %v2023 = vunpack.c.0.s8 %v2022
        %v2024 = vlaneseq
        %v2025 = vshrl.u32 %v2024, 7
        %v2026 = vsub.s32 %v2023, %v2025
        %v2027 = vrot.slane %v2019, %v2026
        %v2029 = vunpack.c.l.s4 1966171168
        %v2030 = vunpack.c.0.s8 %v2029
        %v2031 = vlaneseq
        %v2032 = vshrl.u32 %v2031, 7
        %v2033 = vsub.s32 %v2030, %v2032
        %v2034 = vrot.slane %v2020, %v2033
        %s2035 = scalar_lea.vmem %s889, 20
        %v2036 = vld [vmem:[%s2035] sm:$0x3]
        %v2039 = vunpack.c.l.s4 1966171168
        %v2040 = vunpack.c.0.s8 %v2039
        %v2041 = vlaneseq
        %v2042 = vshrl.u32 %v2041, 7
        %v2043 = vsub.s32 %v2040, %v2042
        %v2044 = vrot.slane %v2036, %v2043
        %v2045 = vcombine.high %v2044, %v2044
        %v2047 = vunpack.c.l.s4 1966171168
        %v2048 = vunpack.c.0.s8 %v2047
        %v2049 = vlaneseq
        %v2050 = vshrl.u32 %v2049, 7
        %v2051 = vsub.s32 %v2048, %v2050
        %v2052 = vrot.slane %v2044, %v2051
        %v2054 = vunpack.c.l.s4 1966171168
        %v2055 = vunpack.c.0.s8 %v2054
        %v2056 = vlaneseq
        %v2057 = vshrl.u32 %v2056, 7
        %v2058 = vsub.s32 %v2055, %v2057
        %v2059 = vrot.slane %v2045, %v2058
        %s2060 = scalar_lea.vmem %s835, 80 [#allocation2]
        %v2061 = vld [vmem:[%s2060] sm:$0xf]
        %v2062 = vld [vmem:[%s2060 + $0x4] sm:$0xf]
        %v2063 = vunpack.c.l.bf16 %v2061
        %v2064 = vunpack.c.l.bf16 %v2062
        %s2065 = scalar_lea.vmem %s842, 80 [#allocation3]
        %v2066 = vld [vmem:[%s2065] sm:$0xf]
        %v2067 = vld [vmem:[%s2065 + $0x4] sm:$0xf]
        %v2068 = vunpack.c.l.bf16 %v2066
        %v2069 = vunpack.c.l.bf16 %v2067
        %v2070 = vlaneseq
        %v2071 = vshrl.u32 %v2070, 7
        %v2072 = vsub.s32 0, %v2071
        %v2073 = vrot.slane %v2027, %v2072
        %v2074 = vlaneseq
        %v2075 = vshrl.u32 %v2074, 7
        %v2076 = vsub.s32 0, %v2075
        %v2077 = vrot.slane %v2034, %v2076
        %v2080 = vmul.f32 %v2073, %v2063
        %v2081 = vmul.f32 %v2073, %v2064
        %v2082 = vmul.f32 %v2077, %v2063
        %v2083 = vmul.f32 %v2077, %v2064
        %v2084 = vadd.f32 %v1990, %v2080
        %v2085 = vadd.f32 %v1991, %v2081
        %v2086 = vadd.f32 %v1992, %v2082
        %v2087 = vadd.f32 %v1993, %v2083
        %v2088 = vlaneseq
        %v2089 = vshrl.u32 %v2088, 7
        %v2090 = vsub.s32 0, %v2089
        %v2091 = vrot.slane %v2052, %v2090
        %v2092 = vlaneseq
        %v2093 = vshrl.u32 %v2092, 7
        %v2094 = vsub.s32 0, %v2093
        %v2095 = vrot.slane %v2059, %v2094
        %v2098 = vmul.f32 %v2091, %v2068
        %v2099 = vmul.f32 %v2091, %v2069
        %v2100 = vmul.f32 %v2095, %v2068
        %v2101 = vmul.f32 %v2095, %v2069
        %v2102 = vsub.f32 %v2084, %v2098
        %v2103 = vsub.f32 %v2085, %v2099
        %v2104 = vsub.f32 %v2086, %v2100
        %v2105 = vsub.f32 %v2087, %v2101
        %v2106 = vmul.f32 %v2073, %v2068
        %v2107 = vmul.f32 %v2073, %v2069
        %v2108 = vmul.f32 %v2077, %v2068
        %v2109 = vmul.f32 %v2077, %v2069
        %v2110 = vadd.f32 %v2006, %v2106
        %v2111 = vadd.f32 %v2007, %v2107
        %v2112 = vadd.f32 %v2008, %v2108
        %v2113 = vadd.f32 %v2009, %v2109
        %v2114 = vmul.f32 %v2091, %v2063
        %v2115 = vmul.f32 %v2091, %v2064
        %v2116 = vmul.f32 %v2095, %v2063
        %v2117 = vmul.f32 %v2095, %v2064
        %v2118 = vadd.f32 %v2110, %v2114
        %v2119 = vadd.f32 %v2111, %v2115
        %v2120 = vadd.f32 %v2112, %v2116
        %v2121 = vadd.f32 %v2113, %v2117
        %s2122 = scalar_lea.vmem %s885, 22
        %v2123 = vld [vmem:[%s2122] sm:$0x3]
        %v2126 = vunpack.c.l.s4 1966171168
        %v2127 = vunpack.c.0.s8 %v2126
        %v2128 = vlaneseq
        %v2129 = vshrl.u32 %v2128, 7
        %v2130 = vsub.s32 %v2127, %v2129
        %v2131 = vrot.slane %v2123, %v2130
        %v2132 = vcombine.high %v2131, %v2131
        %v2134 = vunpack.c.l.s4 1966171168
        %v2135 = vunpack.c.0.s8 %v2134
        %v2136 = vlaneseq
        %v2137 = vshrl.u32 %v2136, 7
        %v2138 = vsub.s32 %v2135, %v2137
        %v2139 = vrot.slane %v2131, %v2138
        %v2141 = vunpack.c.l.s4 1966171168
        %v2142 = vunpack.c.0.s8 %v2141
        %v2143 = vlaneseq
        %v2144 = vshrl.u32 %v2143, 7
        %v2145 = vsub.s32 %v2142, %v2144
        %v2146 = vrot.slane %v2132, %v2145
        %s2147 = scalar_lea.vmem %s889, 22
        %v2148 = vld [vmem:[%s2147] sm:$0x3]
        %v2151 = vunpack.c.l.s4 1966171168
        %v2152 = vunpack.c.0.s8 %v2151
        %v2153 = vlaneseq
        %v2154 = vshrl.u32 %v2153, 7
        %v2155 = vsub.s32 %v2152, %v2154
        %v2156 = vrot.slane %v2148, %v2155
        %v2157 = vcombine.high %v2156, %v2156
        %v2159 = vunpack.c.l.s4 1966171168
        %v2160 = vunpack.c.0.s8 %v2159
        %v2161 = vlaneseq
        %v2162 = vshrl.u32 %v2161, 7
        %v2163 = vsub.s32 %v2160, %v2162
        %v2164 = vrot.slane %v2156, %v2163
        %v2166 = vunpack.c.l.s4 1966171168
        %v2167 = vunpack.c.0.s8 %v2166
        %v2168 = vlaneseq
        %v2169 = vshrl.u32 %v2168, 7
        %v2170 = vsub.s32 %v2167, %v2169
        %v2171 = vrot.slane %v2157, %v2170
        %s2172 = scalar_lea.vmem %s835, 88 [#allocation2]
        %v2173 = vld [vmem:[%s2172] sm:$0xf]
        %v2174 = vld [vmem:[%s2172 + $0x4] sm:$0xf]
        %v2175 = vunpack.c.l.bf16 %v2173
        %v2176 = vunpack.c.l.bf16 %v2174
        %s2177 = scalar_lea.vmem %s842, 88 [#allocation3]
        %v2178 = vld [vmem:[%s2177] sm:$0xf]
        %v2179 = vld [vmem:[%s2177 + $0x4] sm:$0xf]
        %v2180 = vunpack.c.l.bf16 %v2178
        %v2181 = vunpack.c.l.bf16 %v2179
        %v2182 = vlaneseq
        %v2183 = vshrl.u32 %v2182, 7
        %v2184 = vsub.s32 0, %v2183
        %v2185 = vrot.slane %v2139, %v2184
        %v2186 = vlaneseq
        %v2187 = vshrl.u32 %v2186, 7
        %v2188 = vsub.s32 0, %v2187
        %v2189 = vrot.slane %v2146, %v2188
        %v2192 = vmul.f32 %v2185, %v2175
        %v2193 = vmul.f32 %v2185, %v2176
        %v2194 = vmul.f32 %v2189, %v2175
        %v2195 = vmul.f32 %v2189, %v2176
        %v2196 = vadd.f32 %v2102, %v2192
        %v2197 = vadd.f32 %v2103, %v2193
        %v2198 = vadd.f32 %v2104, %v2194
        %v2199 = vadd.f32 %v2105, %v2195
        %v2200 = vlaneseq
        %v2201 = vshrl.u32 %v2200, 7
        %v2202 = vsub.s32 0, %v2201
        %v2203 = vrot.slane %v2164, %v2202
        %v2204 = vlaneseq
        %v2205 = vshrl.u32 %v2204, 7
        %v2206 = vsub.s32 0, %v2205
        %v2207 = vrot.slane %v2171, %v2206
        %v2210 = vmul.f32 %v2203, %v2180
        %v2211 = vmul.f32 %v2203, %v2181
        %v2212 = vmul.f32 %v2207, %v2180
        %v2213 = vmul.f32 %v2207, %v2181
        %v2214 = vsub.f32 %v2196, %v2210
        %v2215 = vsub.f32 %v2197, %v2211
        %v2216 = vsub.f32 %v2198, %v2212
        %v2217 = vsub.f32 %v2199, %v2213
        %v2218 = vmul.f32 %v2185, %v2180
        %v2219 = vmul.f32 %v2185, %v2181
        %v2220 = vmul.f32 %v2189, %v2180
        %v2221 = vmul.f32 %v2189, %v2181
        %v2222 = vadd.f32 %v2118, %v2218
        %v2223 = vadd.f32 %v2119, %v2219
        %v2224 = vadd.f32 %v2120, %v2220
        %v2225 = vadd.f32 %v2121, %v2221
        %v2226 = vmul.f32 %v2203, %v2175
        %v2227 = vmul.f32 %v2203, %v2176
        %v2228 = vmul.f32 %v2207, %v2175
        %v2229 = vmul.f32 %v2207, %v2176
        %v2230 = vadd.f32 %v2222, %v2226
        %v2231 = vadd.f32 %v2223, %v2227
        %v2232 = vadd.f32 %v2224, %v2228
        %v2233 = vadd.f32 %v2225, %v2229
        %s2234 = scalar_lea.vmem %s885, 24
        %v2235 = vld [vmem:[%s2234] sm:$0x3]
        %v2238 = vunpack.c.l.s4 1966171168
        %v2239 = vunpack.c.0.s8 %v2238
        %v2240 = vlaneseq
        %v2241 = vshrl.u32 %v2240, 7
        %v2242 = vsub.s32 %v2239, %v2241
        %v2243 = vrot.slane %v2235, %v2242
        %v2244 = vcombine.high %v2243, %v2243
        %v2246 = vunpack.c.l.s4 1966171168
        %v2247 = vunpack.c.0.s8 %v2246
        %v2248 = vlaneseq
        %v2249 = vshrl.u32 %v2248, 7
        %v2250 = vsub.s32 %v2247, %v2249
        %v2251 = vrot.slane %v2243, %v2250
        %v2253 = vunpack.c.l.s4 1966171168
        %v2254 = vunpack.c.0.s8 %v2253
        %v2255 = vlaneseq
        %v2256 = vshrl.u32 %v2255, 7
        %v2257 = vsub.s32 %v2254, %v2256
        %v2258 = vrot.slane %v2244, %v2257
        %s2259 = scalar_lea.vmem %s889, 24
        %v2260 = vld [vmem:[%s2259] sm:$0x3]
        %v2263 = vunpack.c.l.s4 1966171168
        %v2264 = vunpack.c.0.s8 %v2263
        %v2265 = vlaneseq
        %v2266 = vshrl.u32 %v2265, 7
        %v2267 = vsub.s32 %v2264, %v2266
        %v2268 = vrot.slane %v2260, %v2267
        %v2269 = vcombine.high %v2268, %v2268
        %v2271 = vunpack.c.l.s4 1966171168
        %v2272 = vunpack.c.0.s8 %v2271
        %v2273 = vlaneseq
        %v2274 = vshrl.u32 %v2273, 7
        %v2275 = vsub.s32 %v2272, %v2274
        %v2276 = vrot.slane %v2268, %v2275
        %v2278 = vunpack.c.l.s4 1966171168
        %v2279 = vunpack.c.0.s8 %v2278
        %v2280 = vlaneseq
        %v2281 = vshrl.u32 %v2280, 7
        %v2282 = vsub.s32 %v2279, %v2281
        %v2283 = vrot.slane %v2269, %v2282
        %s2284 = scalar_lea.vmem %s835, 96 [#allocation2]
        %v2285 = vld [vmem:[%s2284] sm:$0xf]
        %v2286 = vld [vmem:[%s2284 + $0x4] sm:$0xf]
        %v2287 = vunpack.c.l.bf16 %v2285
        %v2288 = vunpack.c.l.bf16 %v2286
        %s2289 = scalar_lea.vmem %s842, 96 [#allocation3]
        %v2290 = vld [vmem:[%s2289] sm:$0xf]
        %v2291 = vld [vmem:[%s2289 + $0x4] sm:$0xf]
        %v2292 = vunpack.c.l.bf16 %v2290
        %v2293 = vunpack.c.l.bf16 %v2291
        %v2294 = vlaneseq
        %v2295 = vshrl.u32 %v2294, 7
        %v2296 = vsub.s32 0, %v2295
        %v2297 = vrot.slane %v2251, %v2296
        %v2298 = vlaneseq
        %v2299 = vshrl.u32 %v2298, 7
        %v2300 = vsub.s32 0, %v2299
        %v2301 = vrot.slane %v2258, %v2300
        %v2304 = vmul.f32 %v2297, %v2287
        %v2305 = vmul.f32 %v2297, %v2288
        %v2306 = vmul.f32 %v2301, %v2287
        %v2307 = vmul.f32 %v2301, %v2288
        %v2308 = vadd.f32 %v2214, %v2304
        %v2309 = vadd.f32 %v2215, %v2305
        %v2310 = vadd.f32 %v2216, %v2306
        %v2311 = vadd.f32 %v2217, %v2307
        %v2312 = vlaneseq
        %v2313 = vshrl.u32 %v2312, 7
        %v2314 = vsub.s32 0, %v2313
        %v2315 = vrot.slane %v2276, %v2314
        %v2316 = vlaneseq
        %v2317 = vshrl.u32 %v2316, 7
        %v2318 = vsub.s32 0, %v2317
        %v2319 = vrot.slane %v2283, %v2318
        %v2322 = vmul.f32 %v2315, %v2292
        %v2323 = vmul.f32 %v2315, %v2293
        %v2324 = vmul.f32 %v2319, %v2292
        %v2325 = vmul.f32 %v2319, %v2293
        %v2326 = vsub.f32 %v2308, %v2322
        %v2327 = vsub.f32 %v2309, %v2323
        %v2328 = vsub.f32 %v2310, %v2324
        %v2329 = vsub.f32 %v2311, %v2325
        %v2330 = vmul.f32 %v2297, %v2292
        %v2331 = vmul.f32 %v2297, %v2293
        %v2332 = vmul.f32 %v2301, %v2292
        %v2333 = vmul.f32 %v2301, %v2293
        %v2334 = vadd.f32 %v2230, %v2330
        %v2335 = vadd.f32 %v2231, %v2331
        %v2336 = vadd.f32 %v2232, %v2332
        %v2337 = vadd.f32 %v2233, %v2333
        %v2338 = vmul.f32 %v2315, %v2287
        %v2339 = vmul.f32 %v2315, %v2288
        %v2340 = vmul.f32 %v2319, %v2287
        %v2341 = vmul.f32 %v2319, %v2288
        %v2342 = vadd.f32 %v2334, %v2338
        %v2343 = vadd.f32 %v2335, %v2339
        %v2344 = vadd.f32 %v2336, %v2340
        %v2345 = vadd.f32 %v2337, %v2341
        %s2346 = scalar_lea.vmem %s885, 26
        %v2347 = vld [vmem:[%s2346] sm:$0x3]
        %v2350 = vunpack.c.l.s4 1966171168
        %v2351 = vunpack.c.0.s8 %v2350
        %v2352 = vlaneseq
        %v2353 = vshrl.u32 %v2352, 7
        %v2354 = vsub.s32 %v2351, %v2353
        %v2355 = vrot.slane %v2347, %v2354
        %v2356 = vcombine.high %v2355, %v2355
        %v2358 = vunpack.c.l.s4 1966171168
        %v2359 = vunpack.c.0.s8 %v2358
        %v2360 = vlaneseq
        %v2361 = vshrl.u32 %v2360, 7
        %v2362 = vsub.s32 %v2359, %v2361
        %v2363 = vrot.slane %v2355, %v2362
        %v2365 = vunpack.c.l.s4 1966171168
        %v2366 = vunpack.c.0.s8 %v2365
        %v2367 = vlaneseq
        %v2368 = vshrl.u32 %v2367, 7
        %v2369 = vsub.s32 %v2366, %v2368
        %v2370 = vrot.slane %v2356, %v2369
        %s2371 = scalar_lea.vmem %s889, 26
        %v2372 = vld [vmem:[%s2371] sm:$0x3]
        %v2375 = vunpack.c.l.s4 1966171168
        %v2376 = vunpack.c.0.s8 %v2375
        %v2377 = vlaneseq
        %v2378 = vshrl.u32 %v2377, 7
        %v2379 = vsub.s32 %v2376, %v2378
        %v2380 = vrot.slane %v2372, %v2379
        %v2381 = vcombine.high %v2380, %v2380
        %v2383 = vunpack.c.l.s4 1966171168
        %v2384 = vunpack.c.0.s8 %v2383
        %v2385 = vlaneseq
        %v2386 = vshrl.u32 %v2385, 7
        %v2387 = vsub.s32 %v2384, %v2386
        %v2388 = vrot.slane %v2380, %v2387
        %v2390 = vunpack.c.l.s4 1966171168
        %v2391 = vunpack.c.0.s8 %v2390
        %v2392 = vlaneseq
        %v2393 = vshrl.u32 %v2392, 7
        %v2394 = vsub.s32 %v2391, %v2393
        %v2395 = vrot.slane %v2381, %v2394
        %s2396 = scalar_lea.vmem %s835, 104 [#allocation2]
        %v2397 = vld [vmem:[%s2396] sm:$0xf]
        %v2398 = vld [vmem:[%s2396 + $0x4] sm:$0xf]
        %v2399 = vunpack.c.l.bf16 %v2397
        %v2400 = vunpack.c.l.bf16 %v2398
        %s2401 = scalar_lea.vmem %s842, 104 [#allocation3]
        %v2402 = vld [vmem:[%s2401] sm:$0xf]
        %v2403 = vld [vmem:[%s2401 + $0x4] sm:$0xf]
        %v2404 = vunpack.c.l.bf16 %v2402
        %v2405 = vunpack.c.l.bf16 %v2403
        %v2406 = vlaneseq
        %v2407 = vshrl.u32 %v2406, 7
        %v2408 = vsub.s32 0, %v2407
        %v2409 = vrot.slane %v2363, %v2408
        %v2410 = vlaneseq
        %v2411 = vshrl.u32 %v2410, 7
        %v2412 = vsub.s32 0, %v2411
        %v2413 = vrot.slane %v2370, %v2412
        %v2416 = vmul.f32 %v2409, %v2399
        %v2417 = vmul.f32 %v2409, %v2400
        %v2418 = vmul.f32 %v2413, %v2399
        %v2419 = vmul.f32 %v2413, %v2400
        %v2420 = vadd.f32 %v2326, %v2416
        %v2421 = vadd.f32 %v2327, %v2417
        %v2422 = vadd.f32 %v2328, %v2418
        %v2423 = vadd.f32 %v2329, %v2419
        %v2424 = vlaneseq
        %v2425 = vshrl.u32 %v2424, 7
        %v2426 = vsub.s32 0, %v2425
        %v2427 = vrot.slane %v2388, %v2426
        %v2428 = vlaneseq
        %v2429 = vshrl.u32 %v2428, 7
        %v2430 = vsub.s32 0, %v2429
        %v2431 = vrot.slane %v2395, %v2430
        %v2434 = vmul.f32 %v2427, %v2404
        %v2435 = vmul.f32 %v2427, %v2405
        %v2436 = vmul.f32 %v2431, %v2404
        %v2437 = vmul.f32 %v2431, %v2405
        %v2438 = vsub.f32 %v2420, %v2434
        %v2439 = vsub.f32 %v2421, %v2435
        %v2440 = vsub.f32 %v2422, %v2436
        %v2441 = vsub.f32 %v2423, %v2437
        %v2442 = vmul.f32 %v2409, %v2404
        %v2443 = vmul.f32 %v2409, %v2405
        %v2444 = vmul.f32 %v2413, %v2404
        %v2445 = vmul.f32 %v2413, %v2405
        %v2446 = vadd.f32 %v2342, %v2442
        %v2447 = vadd.f32 %v2343, %v2443
        %v2448 = vadd.f32 %v2344, %v2444
        %v2449 = vadd.f32 %v2345, %v2445
        %v2450 = vmul.f32 %v2427, %v2399
        %v2451 = vmul.f32 %v2427, %v2400
        %v2452 = vmul.f32 %v2431, %v2399
        %v2453 = vmul.f32 %v2431, %v2400
        %v2454 = vadd.f32 %v2446, %v2450
        %v2455 = vadd.f32 %v2447, %v2451
        %v2456 = vadd.f32 %v2448, %v2452
        %v2457 = vadd.f32 %v2449, %v2453
        %s2458 = scalar_lea.vmem %s885, 28
        %v2459 = vld [vmem:[%s2458] sm:$0x3]
        %v2462 = vunpack.c.l.s4 1966171168
        %v2463 = vunpack.c.0.s8 %v2462
        %v2464 = vlaneseq
        %v2465 = vshrl.u32 %v2464, 7
        %v2466 = vsub.s32 %v2463, %v2465
        %v2467 = vrot.slane %v2459, %v2466
        %v2468 = vcombine.high %v2467, %v2467
        %v2470 = vunpack.c.l.s4 1966171168
        %v2471 = vunpack.c.0.s8 %v2470
        %v2472 = vlaneseq
        %v2473 = vshrl.u32 %v2472, 7
        %v2474 = vsub.s32 %v2471, %v2473
        %v2475 = vrot.slane %v2467, %v2474
        %v2477 = vunpack.c.l.s4 1966171168
        %v2478 = vunpack.c.0.s8 %v2477
        %v2479 = vlaneseq
        %v2480 = vshrl.u32 %v2479, 7
        %v2481 = vsub.s32 %v2478, %v2480
        %v2482 = vrot.slane %v2468, %v2481
        %s2483 = scalar_lea.vmem %s889, 28
        %v2484 = vld [vmem:[%s2483] sm:$0x3]
        %v2487 = vunpack.c.l.s4 1966171168
        %v2488 = vunpack.c.0.s8 %v2487
        %v2489 = vlaneseq
        %v2490 = vshrl.u32 %v2489, 7
        %v2491 = vsub.s32 %v2488, %v2490
        %v2492 = vrot.slane %v2484, %v2491
        %v2493 = vcombine.high %v2492, %v2492
        %v2495 = vunpack.c.l.s4 1966171168
        %v2496 = vunpack.c.0.s8 %v2495
        %v2497 = vlaneseq
        %v2498 = vshrl.u32 %v2497, 7
        %v2499 = vsub.s32 %v2496, %v2498
        %v2500 = vrot.slane %v2492, %v2499
        %v2502 = vunpack.c.l.s4 1966171168
        %v2503 = vunpack.c.0.s8 %v2502
        %v2504 = vlaneseq
        %v2505 = vshrl.u32 %v2504, 7
        %v2506 = vsub.s32 %v2503, %v2505
        %v2507 = vrot.slane %v2493, %v2506
        %s2508 = scalar_lea.vmem %s835, 112 [#allocation2]
        %v2509 = vld [vmem:[%s2508] sm:$0xf]
        %v2510 = vld [vmem:[%s2508 + $0x4] sm:$0xf]
        %v2511 = vunpack.c.l.bf16 %v2509
        %v2512 = vunpack.c.l.bf16 %v2510
        %s2513 = scalar_lea.vmem %s842, 112 [#allocation3]
        %v2514 = vld [vmem:[%s2513] sm:$0xf]
        %v2515 = vld [vmem:[%s2513 + $0x4] sm:$0xf]
        %v2516 = vunpack.c.l.bf16 %v2514
        %v2517 = vunpack.c.l.bf16 %v2515
        %v2518 = vlaneseq
        %v2519 = vshrl.u32 %v2518, 7
        %v2520 = vsub.s32 0, %v2519
        %v2521 = vrot.slane %v2475, %v2520
        %v2522 = vlaneseq
        %v2523 = vshrl.u32 %v2522, 7
        %v2524 = vsub.s32 0, %v2523
        %v2525 = vrot.slane %v2482, %v2524
        %v2528 = vmul.f32 %v2521, %v2511
        %v2529 = vmul.f32 %v2521, %v2512
        %v2530 = vmul.f32 %v2525, %v2511
        %v2531 = vmul.f32 %v2525, %v2512
        %v2532 = vadd.f32 %v2438, %v2528
        %v2533 = vadd.f32 %v2439, %v2529
        %v2534 = vadd.f32 %v2440, %v2530
        %v2535 = vadd.f32 %v2441, %v2531
        %v2536 = vlaneseq
        %v2537 = vshrl.u32 %v2536, 7
        %v2538 = vsub.s32 0, %v2537
        %v2539 = vrot.slane %v2500, %v2538
        %v2540 = vlaneseq
        %v2541 = vshrl.u32 %v2540, 7
        %v2542 = vsub.s32 0, %v2541
        %v2543 = vrot.slane %v2507, %v2542
        %v2546 = vmul.f32 %v2539, %v2516
        %v2547 = vmul.f32 %v2539, %v2517
        %v2548 = vmul.f32 %v2543, %v2516
        %v2549 = vmul.f32 %v2543, %v2517
        %v2550 = vsub.f32 %v2532, %v2546
        %v2551 = vsub.f32 %v2533, %v2547
        %v2552 = vsub.f32 %v2534, %v2548
        %v2553 = vsub.f32 %v2535, %v2549
        %v2554 = vmul.f32 %v2521, %v2516
        %v2555 = vmul.f32 %v2521, %v2517
        %v2556 = vmul.f32 %v2525, %v2516
        %v2557 = vmul.f32 %v2525, %v2517
        %v2558 = vadd.f32 %v2454, %v2554
        %v2559 = vadd.f32 %v2455, %v2555
        %v2560 = vadd.f32 %v2456, %v2556
        %v2561 = vadd.f32 %v2457, %v2557
        %v2562 = vmul.f32 %v2539, %v2511
        %v2563 = vmul.f32 %v2539, %v2512
        %v2564 = vmul.f32 %v2543, %v2511
        %v2565 = vmul.f32 %v2543, %v2512
        %v2566 = vadd.f32 %v2558, %v2562
        %v2567 = vadd.f32 %v2559, %v2563
        %v2568 = vadd.f32 %v2560, %v2564
        %v2569 = vadd.f32 %v2561, %v2565
        %s2570 = scalar_lea.vmem %s885, 30
        %v2571 = vld [vmem:[%s2570] sm:$0x3]
        %v2574 = vunpack.c.l.s4 1966171168
        %v2575 = vunpack.c.0.s8 %v2574
        %v2576 = vlaneseq
        %v2577 = vshrl.u32 %v2576, 7
        %v2578 = vsub.s32 %v2575, %v2577
        %v2579 = vrot.slane %v2571, %v2578
        %v2580 = vcombine.high %v2579, %v2579
        %v2582 = vunpack.c.l.s4 1966171168
        %v2583 = vunpack.c.0.s8 %v2582
        %v2584 = vlaneseq
        %v2585 = vshrl.u32 %v2584, 7
        %v2586 = vsub.s32 %v2583, %v2585
        %v2587 = vrot.slane %v2579, %v2586
        %v2589 = vunpack.c.l.s4 1966171168
        %v2590 = vunpack.c.0.s8 %v2589
        %v2591 = vlaneseq
        %v2592 = vshrl.u32 %v2591, 7
        %v2593 = vsub.s32 %v2590, %v2592
        %v2594 = vrot.slane %v2580, %v2593
        %s2595 = scalar_lea.vmem %s889, 30
        %v2596 = vld [vmem:[%s2595] sm:$0x3]
        %v2599 = vunpack.c.l.s4 1966171168
        %v2600 = vunpack.c.0.s8 %v2599
        %v2601 = vlaneseq
        %v2602 = vshrl.u32 %v2601, 7
        %v2603 = vsub.s32 %v2600, %v2602
        %v2604 = vrot.slane %v2596, %v2603
        %v2605 = vcombine.high %v2604, %v2604
        %v2607 = vunpack.c.l.s4 1966171168
        %v2608 = vunpack.c.0.s8 %v2607
        %v2609 = vlaneseq
        %v2610 = vshrl.u32 %v2609, 7
        %v2611 = vsub.s32 %v2608, %v2610
        %v2612 = vrot.slane %v2604, %v2611
        %v2614 = vunpack.c.l.s4 1966171168
        %v2615 = vunpack.c.0.s8 %v2614
        %v2616 = vlaneseq
        %v2617 = vshrl.u32 %v2616, 7
        %v2618 = vsub.s32 %v2615, %v2617
        %v2619 = vrot.slane %v2605, %v2618
        %s2620 = scalar_lea.vmem %s835, 120 [#allocation2]
        %v2621 = vld [vmem:[%s2620] sm:$0xf]
        %v2622 = vld [vmem:[%s2620 + $0x4] sm:$0xf]
        %v2623 = vunpack.c.l.bf16 %v2621
        %v2624 = vunpack.c.l.bf16 %v2622
        %s2625 = scalar_lea.vmem %s842, 120 [#allocation3]
        %v2626 = vld [vmem:[%s2625] sm:$0xf]
        %v2627 = vld [vmem:[%s2625 + $0x4] sm:$0xf]
        %v2628 = vunpack.c.l.bf16 %v2626
        %v2629 = vunpack.c.l.bf16 %v2627
        %v2630 = vlaneseq
        %v2631 = vshrl.u32 %v2630, 7
        %v2632 = vsub.s32 0, %v2631
        %v2633 = vrot.slane %v2587, %v2632
        %v2634 = vlaneseq
        %v2635 = vshrl.u32 %v2634, 7
        %v2636 = vsub.s32 0, %v2635
        %v2637 = vrot.slane %v2594, %v2636
        %v2640 = vmul.f32 %v2633, %v2623
        %v2641 = vmul.f32 %v2633, %v2624
        %v2642 = vmul.f32 %v2637, %v2623
        %v2643 = vmul.f32 %v2637, %v2624
        %v2644 = vadd.f32 %v2550, %v2640
        %v2645 = vadd.f32 %v2551, %v2641
        %v2646 = vadd.f32 %v2552, %v2642
        %v2647 = vadd.f32 %v2553, %v2643
        %v2648 = vlaneseq
        %v2649 = vshrl.u32 %v2648, 7
        %v2650 = vsub.s32 0, %v2649
        %v2651 = vrot.slane %v2612, %v2650
        %v2652 = vlaneseq
        %v2653 = vshrl.u32 %v2652, 7
        %v2654 = vsub.s32 0, %v2653
        %v2655 = vrot.slane %v2619, %v2654
        %v2658 = vmul.f32 %v2651, %v2628
        %v2659 = vmul.f32 %v2651, %v2629
        %v2660 = vmul.f32 %v2655, %v2628
        %v2661 = vmul.f32 %v2655, %v2629
        %v2662 = vsub.f32 %v2644, %v2658
        %v2663 = vsub.f32 %v2645, %v2659
        %v2664 = vsub.f32 %v2646, %v2660
        %v2665 = vsub.f32 %v2647, %v2661
        %v2666 = vmul.f32 %v2633, %v2628
        %v2667 = vmul.f32 %v2633, %v2629
        %v2668 = vmul.f32 %v2637, %v2628
        %v2669 = vmul.f32 %v2637, %v2629
        %v2670 = vadd.f32 %v2566, %v2666
        %v2671 = vadd.f32 %v2567, %v2667
        %v2672 = vadd.f32 %v2568, %v2668
        %v2673 = vadd.f32 %v2569, %v2669
        %v2674 = vmul.f32 %v2651, %v2623
        %v2675 = vmul.f32 %v2651, %v2624
        %v2676 = vmul.f32 %v2655, %v2623
        %v2677 = vmul.f32 %v2655, %v2624
        %v2678 = vadd.f32 %v2670, %v2674
        %v2679 = vadd.f32 %v2671, %v2675
        %v2680 = vadd.f32 %v2672, %v2676
        %v2681 = vadd.f32 %v2673, %v2677
        %s2682 = scalar_lea.vmem %s885, 32
        %v2683 = vld [vmem:[%s2682] sm:$0x3]
        %v2686 = vunpack.c.l.s4 1966171168
        %v2687 = vunpack.c.0.s8 %v2686
        %v2688 = vlaneseq
        %v2689 = vshrl.u32 %v2688, 7
        %v2690 = vsub.s32 %v2687, %v2689
        %v2691 = vrot.slane %v2683, %v2690
        %v2692 = vcombine.high %v2691, %v2691
        %v2694 = vunpack.c.l.s4 1966171168
        %v2695 = vunpack.c.0.s8 %v2694
        %v2696 = vlaneseq
        %v2697 = vshrl.u32 %v2696, 7
        %v2698 = vsub.s32 %v2695, %v2697
        %v2699 = vrot.slane %v2691, %v2698
        %v2701 = vunpack.c.l.s4 1966171168
        %v2702 = vunpack.c.0.s8 %v2701
        %v2703 = vlaneseq
        %v2704 = vshrl.u32 %v2703, 7
        %v2705 = vsub.s32 %v2702, %v2704
        %v2706 = vrot.slane %v2692, %v2705
        %s2707 = scalar_lea.vmem %s889, 32
        %v2708 = vld [vmem:[%s2707] sm:$0x3]
        %v2711 = vunpack.c.l.s4 1966171168
        %v2712 = vunpack.c.0.s8 %v2711
        %v2713 = vlaneseq
        %v2714 = vshrl.u32 %v2713, 7
        %v2715 = vsub.s32 %v2712, %v2714
        %v2716 = vrot.slane %v2708, %v2715
        %v2717 = vcombine.high %v2716, %v2716
        %v2719 = vunpack.c.l.s4 1966171168
        %v2720 = vunpack.c.0.s8 %v2719
        %v2721 = vlaneseq
        %v2722 = vshrl.u32 %v2721, 7
        %v2723 = vsub.s32 %v2720, %v2722
        %v2724 = vrot.slane %v2716, %v2723
        %v2726 = vunpack.c.l.s4 1966171168
        %v2727 = vunpack.c.0.s8 %v2726
        %v2728 = vlaneseq
        %v2729 = vshrl.u32 %v2728, 7
        %v2730 = vsub.s32 %v2727, %v2729
        %v2731 = vrot.slane %v2717, %v2730
        %s2732 = scalar_lea.vmem %s835, 128 [#allocation2]
        %v2733 = vld [vmem:[%s2732] sm:$0xf]
        %v2734 = vld [vmem:[%s2732 + $0x4] sm:$0xf]
        %v2735 = vunpack.c.l.bf16 %v2733
        %v2736 = vunpack.c.l.bf16 %v2734
        %s2737 = scalar_lea.vmem %s842, 128 [#allocation3]
        %v2738 = vld [vmem:[%s2737] sm:$0xf]
        %v2739 = vld [vmem:[%s2737 + $0x4] sm:$0xf]
        %v2740 = vunpack.c.l.bf16 %v2738
        %v2741 = vunpack.c.l.bf16 %v2739
        %v2742 = vlaneseq
        %v2743 = vshrl.u32 %v2742, 7
        %v2744 = vsub.s32 0, %v2743
        %v2745 = vrot.slane %v2699, %v2744
        %v2746 = vlaneseq
        %v2747 = vshrl.u32 %v2746, 7
        %v2748 = vsub.s32 0, %v2747
        %v2749 = vrot.slane %v2706, %v2748
        %v2752 = vmul.f32 %v2745, %v2735
        %v2753 = vmul.f32 %v2745, %v2736
        %v2754 = vmul.f32 %v2749, %v2735
        %v2755 = vmul.f32 %v2749, %v2736
        %v2756 = vadd.f32 %v2662, %v2752
        %v2757 = vadd.f32 %v2663, %v2753
        %v2758 = vadd.f32 %v2664, %v2754
        %v2759 = vadd.f32 %v2665, %v2755
        %v2760 = vlaneseq
        %v2761 = vshrl.u32 %v2760, 7
        %v2762 = vsub.s32 0, %v2761
        %v2763 = vrot.slane %v2724, %v2762
        %v2764 = vlaneseq
        %v2765 = vshrl.u32 %v2764, 7
        %v2766 = vsub.s32 0, %v2765
        %v2767 = vrot.slane %v2731, %v2766
        %v2770 = vmul.f32 %v2763, %v2740
        %v2771 = vmul.f32 %v2763, %v2741
        %v2772 = vmul.f32 %v2767, %v2740
        %v2773 = vmul.f32 %v2767, %v2741
        %v2774 = vsub.f32 %v2756, %v2770
        %v2775 = vsub.f32 %v2757, %v2771
        %v2776 = vsub.f32 %v2758, %v2772
        %v2777 = vsub.f32 %v2759, %v2773
        %v2778 = vmul.f32 %v2745, %v2740
        %v2779 = vmul.f32 %v2745, %v2741
        %v2780 = vmul.f32 %v2749, %v2740
        %v2781 = vmul.f32 %v2749, %v2741
        %v2782 = vadd.f32 %v2678, %v2778
        %v2783 = vadd.f32 %v2679, %v2779
        %v2784 = vadd.f32 %v2680, %v2780
        %v2785 = vadd.f32 %v2681, %v2781
        %v2786 = vmul.f32 %v2763, %v2735
        %v2787 = vmul.f32 %v2763, %v2736
        %v2788 = vmul.f32 %v2767, %v2735
        %v2789 = vmul.f32 %v2767, %v2736
        %v2790 = vadd.f32 %v2782, %v2786
        %v2791 = vadd.f32 %v2783, %v2787
        %v2792 = vadd.f32 %v2784, %v2788
        %v2793 = vadd.f32 %v2785, %v2789
        %s2794 = scalar_lea.vmem %s885, 34
        %v2795 = vld [vmem:[%s2794] sm:$0x3]
        %v2798 = vunpack.c.l.s4 1966171168
        %v2799 = vunpack.c.0.s8 %v2798
        %v2800 = vlaneseq
        %v2801 = vshrl.u32 %v2800, 7
        %v2802 = vsub.s32 %v2799, %v2801
        %v2803 = vrot.slane %v2795, %v2802
        %v2804 = vcombine.high %v2803, %v2803
        %v2806 = vunpack.c.l.s4 1966171168
        %v2807 = vunpack.c.0.s8 %v2806
        %v2808 = vlaneseq
        %v2809 = vshrl.u32 %v2808, 7
        %v2810 = vsub.s32 %v2807, %v2809
        %v2811 = vrot.slane %v2803, %v2810
        %v2813 = vunpack.c.l.s4 1966171168
        %v2814 = vunpack.c.0.s8 %v2813
        %v2815 = vlaneseq
        %v2816 = vshrl.u32 %v2815, 7
        %v2817 = vsub.s32 %v2814, %v2816
        %v2818 = vrot.slane %v2804, %v2817
        %s2819 = scalar_lea.vmem %s889, 34
        %v2820 = vld [vmem:[%s2819] sm:$0x3]
        %v2823 = vunpack.c.l.s4 1966171168
        %v2824 = vunpack.c.0.s8 %v2823
        %v2825 = vlaneseq
        %v2826 = vshrl.u32 %v2825, 7
        %v2827 = vsub.s32 %v2824, %v2826
        %v2828 = vrot.slane %v2820, %v2827
        %v2829 = vcombine.high %v2828, %v2828
        %v2831 = vunpack.c.l.s4 1966171168
        %v2832 = vunpack.c.0.s8 %v2831
        %v2833 = vlaneseq
        %v2834 = vshrl.u32 %v2833, 7
        %v2835 = vsub.s32 %v2832, %v2834
        %v2836 = vrot.slane %v2828, %v2835
        %v2838 = vunpack.c.l.s4 1966171168
        %v2839 = vunpack.c.0.s8 %v2838
        %v2840 = vlaneseq
        %v2841 = vshrl.u32 %v2840, 7
        %v2842 = vsub.s32 %v2839, %v2841
        %v2843 = vrot.slane %v2829, %v2842
        %s2844 = scalar_lea.vmem %s835, 136 [#allocation2]
        %v2845 = vld [vmem:[%s2844] sm:$0xf]
        %v2846 = vld [vmem:[%s2844 + $0x4] sm:$0xf]
        %v2847 = vunpack.c.l.bf16 %v2845
        %v2848 = vunpack.c.l.bf16 %v2846
        %s2849 = scalar_lea.vmem %s842, 136 [#allocation3]
        %v2850 = vld [vmem:[%s2849] sm:$0xf]
        %v2851 = vld [vmem:[%s2849 + $0x4] sm:$0xf]
        %v2852 = vunpack.c.l.bf16 %v2850
        %v2853 = vunpack.c.l.bf16 %v2851
        %v2854 = vlaneseq
        %v2855 = vshrl.u32 %v2854, 7
        %v2856 = vsub.s32 0, %v2855
        %v2857 = vrot.slane %v2811, %v2856
        %v2858 = vlaneseq
        %v2859 = vshrl.u32 %v2858, 7
        %v2860 = vsub.s32 0, %v2859
        %v2861 = vrot.slane %v2818, %v2860
        %v2864 = vmul.f32 %v2857, %v2847
        %v2865 = vmul.f32 %v2857, %v2848
        %v2866 = vmul.f32 %v2861, %v2847
        %v2867 = vmul.f32 %v2861, %v2848
        %v2868 = vadd.f32 %v2774, %v2864
        %v2869 = vadd.f32 %v2775, %v2865
        %v2870 = vadd.f32 %v2776, %v2866
        %v2871 = vadd.f32 %v2777, %v2867
        %v2872 = vlaneseq
        %v2873 = vshrl.u32 %v2872, 7
        %v2874 = vsub.s32 0, %v2873
        %v2875 = vrot.slane %v2836, %v2874
        %v2876 = vlaneseq
        %v2877 = vshrl.u32 %v2876, 7
        %v2878 = vsub.s32 0, %v2877
        %v2879 = vrot.slane %v2843, %v2878
        %v2882 = vmul.f32 %v2875, %v2852
        %v2883 = vmul.f32 %v2875, %v2853
        %v2884 = vmul.f32 %v2879, %v2852
        %v2885 = vmul.f32 %v2879, %v2853
        %v2886 = vsub.f32 %v2868, %v2882
        %v2887 = vsub.f32 %v2869, %v2883
        %v2888 = vsub.f32 %v2870, %v2884
        %v2889 = vsub.f32 %v2871, %v2885
        %v2890 = vmul.f32 %v2857, %v2852
        %v2891 = vmul.f32 %v2857, %v2853
        %v2892 = vmul.f32 %v2861, %v2852
        %v2893 = vmul.f32 %v2861, %v2853
        %v2894 = vadd.f32 %v2790, %v2890
        %v2895 = vadd.f32 %v2791, %v2891
        %v2896 = vadd.f32 %v2792, %v2892
        %v2897 = vadd.f32 %v2793, %v2893
        %v2898 = vmul.f32 %v2875, %v2847
        %v2899 = vmul.f32 %v2875, %v2848
        %v2900 = vmul.f32 %v2879, %v2847
        %v2901 = vmul.f32 %v2879, %v2848
        %v2902 = vadd.f32 %v2894, %v2898
        %v2903 = vadd.f32 %v2895, %v2899
        %v2904 = vadd.f32 %v2896, %v2900
        %v2905 = vadd.f32 %v2897, %v2901
        %s2906 = scalar_lea.vmem %s885, 36
        %v2907 = vld [vmem:[%s2906] sm:$0x3]
        %v2910 = vunpack.c.l.s4 1966171168
        %v2911 = vunpack.c.0.s8 %v2910
        %v2912 = vlaneseq
        %v2913 = vshrl.u32 %v2912, 7
        %v2914 = vsub.s32 %v2911, %v2913
        %v2915 = vrot.slane %v2907, %v2914
        %v2916 = vcombine.high %v2915, %v2915
        %v2918 = vunpack.c.l.s4 1966171168
        %v2919 = vunpack.c.0.s8 %v2918
        %v2920 = vlaneseq
        %v2921 = vshrl.u32 %v2920, 7
        %v2922 = vsub.s32 %v2919, %v2921
        %v2923 = vrot.slane %v2915, %v2922
        %v2925 = vunpack.c.l.s4 1966171168
        %v2926 = vunpack.c.0.s8 %v2925
        %v2927 = vlaneseq
        %v2928 = vshrl.u32 %v2927, 7
        %v2929 = vsub.s32 %v2926, %v2928
        %v2930 = vrot.slane %v2916, %v2929
        %s2931 = scalar_lea.vmem %s889, 36
        %v2932 = vld [vmem:[%s2931] sm:$0x3]
        %v2935 = vunpack.c.l.s4 1966171168
        %v2936 = vunpack.c.0.s8 %v2935
        %v2937 = vlaneseq
        %v2938 = vshrl.u32 %v2937, 7
        %v2939 = vsub.s32 %v2936, %v2938
        %v2940 = vrot.slane %v2932, %v2939
        %v2941 = vcombine.high %v2940, %v2940
        %v2943 = vunpack.c.l.s4 1966171168
        %v2944 = vunpack.c.0.s8 %v2943
        %v2945 = vlaneseq
        %v2946 = vshrl.u32 %v2945, 7
        %v2947 = vsub.s32 %v2944, %v2946
        %v2948 = vrot.slane %v2940, %v2947
        %v2950 = vunpack.c.l.s4 1966171168
        %v2951 = vunpack.c.0.s8 %v2950
        %v2952 = vlaneseq
        %v2953 = vshrl.u32 %v2952, 7
        %v2954 = vsub.s32 %v2951, %v2953
        %v2955 = vrot.slane %v2941, %v2954
        %s2956 = scalar_lea.vmem %s835, 144 [#allocation2]
        %v2957 = vld [vmem:[%s2956] sm:$0xf]
        %v2958 = vld [vmem:[%s2956 + $0x4] sm:$0xf]
        %v2959 = vunpack.c.l.bf16 %v2957
        %v2960 = vunpack.c.l.bf16 %v2958
        %s2961 = scalar_lea.vmem %s842, 144 [#allocation3]
        %v2962 = vld [vmem:[%s2961] sm:$0xf]
        %v2963 = vld [vmem:[%s2961 + $0x4] sm:$0xf]
        %v2964 = vunpack.c.l.bf16 %v2962
        %v2965 = vunpack.c.l.bf16 %v2963
        %v2966 = vlaneseq
        %v2967 = vshrl.u32 %v2966, 7
        %v2968 = vsub.s32 0, %v2967
        %v2969 = vrot.slane %v2923, %v2968
        %v2970 = vlaneseq
        %v2971 = vshrl.u32 %v2970, 7
        %v2972 = vsub.s32 0, %v2971
        %v2973 = vrot.slane %v2930, %v2972
        %v2976 = vmul.f32 %v2969, %v2959
        %v2977 = vmul.f32 %v2969, %v2960
        %v2978 = vmul.f32 %v2973, %v2959
        %v2979 = vmul.f32 %v2973, %v2960
        %v2980 = vadd.f32 %v2886, %v2976
        %v2981 = vadd.f32 %v2887, %v2977
        %v2982 = vadd.f32 %v2888, %v2978
        %v2983 = vadd.f32 %v2889, %v2979
        %v2984 = vlaneseq
        %v2985 = vshrl.u32 %v2984, 7
        %v2986 = vsub.s32 0, %v2985
        %v2987 = vrot.slane %v2948, %v2986
        %v2988 = vlaneseq
        %v2989 = vshrl.u32 %v2988, 7
        %v2990 = vsub.s32 0, %v2989
        %v2991 = vrot.slane %v2955, %v2990
        %v2994 = vmul.f32 %v2987, %v2964
        %v2995 = vmul.f32 %v2987, %v2965
        %v2996 = vmul.f32 %v2991, %v2964
        %v2997 = vmul.f32 %v2991, %v2965
        %v2998 = vsub.f32 %v2980, %v2994
        %v2999 = vsub.f32 %v2981, %v2995
        %v3000 = vsub.f32 %v2982, %v2996
        %v3001 = vsub.f32 %v2983, %v2997
        %v3002 = vmul.f32 %v2969, %v2964
        %v3003 = vmul.f32 %v2969, %v2965
        %v3004 = vmul.f32 %v2973, %v2964
        %v3005 = vmul.f32 %v2973, %v2965
        %v3006 = vadd.f32 %v2902, %v3002
        %v3007 = vadd.f32 %v2903, %v3003
        %v3008 = vadd.f32 %v2904, %v3004
        %v3009 = vadd.f32 %v2905, %v3005
        %v3010 = vmul.f32 %v2987, %v2959
        %v3011 = vmul.f32 %v2987, %v2960
        %v3012 = vmul.f32 %v2991, %v2959
        %v3013 = vmul.f32 %v2991, %v2960
        %v3014 = vadd.f32 %v3006, %v3010
        %v3015 = vadd.f32 %v3007, %v3011
        %v3016 = vadd.f32 %v3008, %v3012
        %v3017 = vadd.f32 %v3009, %v3013
        %s3018 = scalar_lea.vmem %s885, 38
        %v3019 = vld [vmem:[%s3018] sm:$0x3]
        %v3022 = vunpack.c.l.s4 1966171168
        %v3023 = vunpack.c.0.s8 %v3022
        %v3024 = vlaneseq
        %v3025 = vshrl.u32 %v3024, 7
        %v3026 = vsub.s32 %v3023, %v3025
        %v3027 = vrot.slane %v3019, %v3026
        %v3028 = vcombine.high %v3027, %v3027
        %v3030 = vunpack.c.l.s4 1966171168
        %v3031 = vunpack.c.0.s8 %v3030
        %v3032 = vlaneseq
        %v3033 = vshrl.u32 %v3032, 7
        %v3034 = vsub.s32 %v3031, %v3033
        %v3035 = vrot.slane %v3027, %v3034
        %v3037 = vunpack.c.l.s4 1966171168
        %v3038 = vunpack.c.0.s8 %v3037
        %v3039 = vlaneseq
        %v3040 = vshrl.u32 %v3039, 7
        %v3041 = vsub.s32 %v3038, %v3040
        %v3042 = vrot.slane %v3028, %v3041
        %s3043 = scalar_lea.vmem %s889, 38
        %v3044 = vld [vmem:[%s3043] sm:$0x3]
        %v3047 = vunpack.c.l.s4 1966171168
        %v3048 = vunpack.c.0.s8 %v3047
        %v3049 = vlaneseq
        %v3050 = vshrl.u32 %v3049, 7
        %v3051 = vsub.s32 %v3048, %v3050
        %v3052 = vrot.slane %v3044, %v3051
        %v3053 = vcombine.high %v3052, %v3052
        %v3055 = vunpack.c.l.s4 1966171168
        %v3056 = vunpack.c.0.s8 %v3055
        %v3057 = vlaneseq
        %v3058 = vshrl.u32 %v3057, 7
        %v3059 = vsub.s32 %v3056, %v3058
        %v3060 = vrot.slane %v3052, %v3059
        %v3062 = vunpack.c.l.s4 1966171168
        %v3063 = vunpack.c.0.s8 %v3062
        %v3064 = vlaneseq
        %v3065 = vshrl.u32 %v3064, 7
        %v3066 = vsub.s32 %v3063, %v3065
        %v3067 = vrot.slane %v3053, %v3066
        %s3068 = scalar_lea.vmem %s835, 152 [#allocation2]
        %v3069 = vld [vmem:[%s3068] sm:$0xf]
        %v3070 = vld [vmem:[%s3068 + $0x4] sm:$0xf]
        %v3071 = vunpack.c.l.bf16 %v3069
        %v3072 = vunpack.c.l.bf16 %v3070
        %s3073 = scalar_lea.vmem %s842, 152 [#allocation3]
        %v3074 = vld [vmem:[%s3073] sm:$0xf]
        %v3075 = vld [vmem:[%s3073 + $0x4] sm:$0xf]
        %v3076 = vunpack.c.l.bf16 %v3074
        %v3077 = vunpack.c.l.bf16 %v3075
        %v3078 = vlaneseq
        %v3079 = vshrl.u32 %v3078, 7
        %v3080 = vsub.s32 0, %v3079
        %v3081 = vrot.slane %v3035, %v3080
        %v3082 = vlaneseq
        %v3083 = vshrl.u32 %v3082, 7
        %v3084 = vsub.s32 0, %v3083
        %v3085 = vrot.slane %v3042, %v3084
        %v3088 = vmul.f32 %v3081, %v3071
        %v3089 = vmul.f32 %v3081, %v3072
        %v3090 = vmul.f32 %v3085, %v3071
        %v3091 = vmul.f32 %v3085, %v3072
        %v3092 = vadd.f32 %v2998, %v3088
        %v3093 = vadd.f32 %v2999, %v3089
        %v3094 = vadd.f32 %v3000, %v3090
        %v3095 = vadd.f32 %v3001, %v3091
        %v3096 = vlaneseq
        %v3097 = vshrl.u32 %v3096, 7
        %v3098 = vsub.s32 0, %v3097
        %v3099 = vrot.slane %v3060, %v3098
        %v3100 = vlaneseq
        %v3101 = vshrl.u32 %v3100, 7
        %v3102 = vsub.s32 0, %v3101
        %v3103 = vrot.slane %v3067, %v3102
        %v3106 = vmul.f32 %v3099, %v3076
        %v3107 = vmul.f32 %v3099, %v3077
        %v3108 = vmul.f32 %v3103, %v3076
        %v3109 = vmul.f32 %v3103, %v3077
        %v3110 = vsub.f32 %v3092, %v3106
        %v3111 = vsub.f32 %v3093, %v3107
        %v3112 = vsub.f32 %v3094, %v3108
        %v3113 = vsub.f32 %v3095, %v3109
        %v3114 = vmul.f32 %v3081, %v3076
        %v3115 = vmul.f32 %v3081, %v3077
        %v3116 = vmul.f32 %v3085, %v3076
        %v3117 = vmul.f32 %v3085, %v3077
        %v3118 = vadd.f32 %v3014, %v3114
        %v3119 = vadd.f32 %v3015, %v3115
        %v3120 = vadd.f32 %v3016, %v3116
        %v3121 = vadd.f32 %v3017, %v3117
        %v3122 = vmul.f32 %v3099, %v3071
        %v3123 = vmul.f32 %v3099, %v3072
        %v3124 = vmul.f32 %v3103, %v3071
        %v3125 = vmul.f32 %v3103, %v3072
        %v3126 = vadd.f32 %v3118, %v3122
        %v3127 = vadd.f32 %v3119, %v3123
        %v3128 = vadd.f32 %v3120, %v3124
        %v3129 = vadd.f32 %v3121, %v3125
        %s3130 = scalar_lea.vmem %s885, 40
        %v3131 = vld [vmem:[%s3130] sm:$0x3]
        %v3134 = vunpack.c.l.s4 1966171168
        %v3135 = vunpack.c.0.s8 %v3134
        %v3136 = vlaneseq
        %v3137 = vshrl.u32 %v3136, 7
        %v3138 = vsub.s32 %v3135, %v3137
        %v3139 = vrot.slane %v3131, %v3138
        %v3140 = vcombine.high %v3139, %v3139
        %v3142 = vunpack.c.l.s4 1966171168
        %v3143 = vunpack.c.0.s8 %v3142
        %v3144 = vlaneseq
        %v3145 = vshrl.u32 %v3144, 7
        %v3146 = vsub.s32 %v3143, %v3145
        %v3147 = vrot.slane %v3139, %v3146
        %v3149 = vunpack.c.l.s4 1966171168
        %v3150 = vunpack.c.0.s8 %v3149
        %v3151 = vlaneseq
        %v3152 = vshrl.u32 %v3151, 7
        %v3153 = vsub.s32 %v3150, %v3152
        %v3154 = vrot.slane %v3140, %v3153
        %s3155 = scalar_lea.vmem %s889, 40
        %v3156 = vld [vmem:[%s3155] sm:$0x3]
        %v3159 = vunpack.c.l.s4 1966171168
        %v3160 = vunpack.c.0.s8 %v3159
        %v3161 = vlaneseq
        %v3162 = vshrl.u32 %v3161, 7
        %v3163 = vsub.s32 %v3160, %v3162
        %v3164 = vrot.slane %v3156, %v3163
        %v3165 = vcombine.high %v3164, %v3164
        %v3167 = vunpack.c.l.s4 1966171168
        %v3168 = vunpack.c.0.s8 %v3167
        %v3169 = vlaneseq
        %v3170 = vshrl.u32 %v3169, 7
        %v3171 = vsub.s32 %v3168, %v3170
        %v3172 = vrot.slane %v3164, %v3171
        %v3174 = vunpack.c.l.s4 1966171168
        %v3175 = vunpack.c.0.s8 %v3174
        %v3176 = vlaneseq
        %v3177 = vshrl.u32 %v3176, 7
        %v3178 = vsub.s32 %v3175, %v3177
        %v3179 = vrot.slane %v3165, %v3178
        %s3180 = scalar_lea.vmem %s835, 160 [#allocation2]
        %v3181 = vld [vmem:[%s3180] sm:$0xf]
        %v3182 = vld [vmem:[%s3180 + $0x4] sm:$0xf]
        %v3183 = vunpack.c.l.bf16 %v3181
        %v3184 = vunpack.c.l.bf16 %v3182
        %s3185 = scalar_lea.vmem %s842, 160 [#allocation3]
        %v3186 = vld [vmem:[%s3185] sm:$0xf]
        %v3187 = vld [vmem:[%s3185 + $0x4] sm:$0xf]
        %v3188 = vunpack.c.l.bf16 %v3186
        %v3189 = vunpack.c.l.bf16 %v3187
        %v3190 = vlaneseq
        %v3191 = vshrl.u32 %v3190, 7
        %v3192 = vsub.s32 0, %v3191
        %v3193 = vrot.slane %v3147, %v3192
        %v3194 = vlaneseq
        %v3195 = vshrl.u32 %v3194, 7
        %v3196 = vsub.s32 0, %v3195
        %v3197 = vrot.slane %v3154, %v3196
        %v3200 = vmul.f32 %v3193, %v3183
        %v3201 = vmul.f32 %v3193, %v3184
        %v3202 = vmul.f32 %v3197, %v3183
        %v3203 = vmul.f32 %v3197, %v3184
        %v3204 = vadd.f32 %v3110, %v3200
        %v3205 = vadd.f32 %v3111, %v3201
        %v3206 = vadd.f32 %v3112, %v3202
        %v3207 = vadd.f32 %v3113, %v3203
        %v3208 = vlaneseq
        %v3209 = vshrl.u32 %v3208, 7
        %v3210 = vsub.s32 0, %v3209
        %v3211 = vrot.slane %v3172, %v3210
        %v3212 = vlaneseq
        %v3213 = vshrl.u32 %v3212, 7
        %v3214 = vsub.s32 0, %v3213
        %v3215 = vrot.slane %v3179, %v3214
        %v3218 = vmul.f32 %v3211, %v3188
        %v3219 = vmul.f32 %v3211, %v3189
        %v3220 = vmul.f32 %v3215, %v3188
        %v3221 = vmul.f32 %v3215, %v3189
        %v3222 = vsub.f32 %v3204, %v3218
        %v3223 = vsub.f32 %v3205, %v3219
        %v3224 = vsub.f32 %v3206, %v3220
        %v3225 = vsub.f32 %v3207, %v3221
        %v3226 = vmul.f32 %v3193, %v3188
        %v3227 = vmul.f32 %v3193, %v3189
        %v3228 = vmul.f32 %v3197, %v3188
        %v3229 = vmul.f32 %v3197, %v3189
        %v3230 = vadd.f32 %v3126, %v3226
        %v3231 = vadd.f32 %v3127, %v3227
        %v3232 = vadd.f32 %v3128, %v3228
        %v3233 = vadd.f32 %v3129, %v3229
        %v3234 = vmul.f32 %v3211, %v3183
        %v3235 = vmul.f32 %v3211, %v3184
        %v3236 = vmul.f32 %v3215, %v3183
        %v3237 = vmul.f32 %v3215, %v3184
        %v3238 = vadd.f32 %v3230, %v3234
        %v3239 = vadd.f32 %v3231, %v3235
        %v3240 = vadd.f32 %v3232, %v3236
        %v3241 = vadd.f32 %v3233, %v3237
        %s3242 = scalar_lea.vmem %s885, 42
        %v3243 = vld [vmem:[%s3242] sm:$0x3]
        %v3246 = vunpack.c.l.s4 1966171168
        %v3247 = vunpack.c.0.s8 %v3246
        %v3248 = vlaneseq
        %v3249 = vshrl.u32 %v3248, 7
        %v3250 = vsub.s32 %v3247, %v3249
        %v3251 = vrot.slane %v3243, %v3250
        %v3252 = vcombine.high %v3251, %v3251
        %v3254 = vunpack.c.l.s4 1966171168
        %v3255 = vunpack.c.0.s8 %v3254
        %v3256 = vlaneseq
        %v3257 = vshrl.u32 %v3256, 7
        %v3258 = vsub.s32 %v3255, %v3257
        %v3259 = vrot.slane %v3251, %v3258
        %v3261 = vunpack.c.l.s4 1966171168
        %v3262 = vunpack.c.0.s8 %v3261
        %v3263 = vlaneseq
        %v3264 = vshrl.u32 %v3263, 7
        %v3265 = vsub.s32 %v3262, %v3264
        %v3266 = vrot.slane %v3252, %v3265
        %s3267 = scalar_lea.vmem %s889, 42
        %v3268 = vld [vmem:[%s3267] sm:$0x3]
        %v3271 = vunpack.c.l.s4 1966171168
        %v3272 = vunpack.c.0.s8 %v3271
        %v3273 = vlaneseq
        %v3274 = vshrl.u32 %v3273, 7
        %v3275 = vsub.s32 %v3272, %v3274
        %v3276 = vrot.slane %v3268, %v3275
        %v3277 = vcombine.high %v3276, %v3276
        %v3279 = vunpack.c.l.s4 1966171168
        %v3280 = vunpack.c.0.s8 %v3279
        %v3281 = vlaneseq
        %v3282 = vshrl.u32 %v3281, 7
        %v3283 = vsub.s32 %v3280, %v3282
        %v3284 = vrot.slane %v3276, %v3283
        %v3286 = vunpack.c.l.s4 1966171168
        %v3287 = vunpack.c.0.s8 %v3286
        %v3288 = vlaneseq
        %v3289 = vshrl.u32 %v3288, 7
        %v3290 = vsub.s32 %v3287, %v3289
        %v3291 = vrot.slane %v3277, %v3290
        %s3292 = scalar_lea.vmem %s835, 168 [#allocation2]
        %v3293 = vld [vmem:[%s3292] sm:$0xf]
        %v3294 = vld [vmem:[%s3292 + $0x4] sm:$0xf]
        %v3295 = vunpack.c.l.bf16 %v3293
        %v3296 = vunpack.c.l.bf16 %v3294
        %s3297 = scalar_lea.vmem %s842, 168 [#allocation3]
        %v3298 = vld [vmem:[%s3297] sm:$0xf]
        %v3299 = vld [vmem:[%s3297 + $0x4] sm:$0xf]
        %v3300 = vunpack.c.l.bf16 %v3298
        %v3301 = vunpack.c.l.bf16 %v3299
        %v3302 = vlaneseq
        %v3303 = vshrl.u32 %v3302, 7
        %v3304 = vsub.s32 0, %v3303
        %v3305 = vrot.slane %v3259, %v3304
        %v3306 = vlaneseq
        %v3307 = vshrl.u32 %v3306, 7
        %v3308 = vsub.s32 0, %v3307
        %v3309 = vrot.slane %v3266, %v3308
        %v3312 = vmul.f32 %v3305, %v3295
        %v3313 = vmul.f32 %v3305, %v3296
        %v3314 = vmul.f32 %v3309, %v3295
        %v3315 = vmul.f32 %v3309, %v3296
        %v3316 = vadd.f32 %v3222, %v3312
        %v3317 = vadd.f32 %v3223, %v3313
        %v3318 = vadd.f32 %v3224, %v3314
        %v3319 = vadd.f32 %v3225, %v3315
        %v3320 = vlaneseq
        %v3321 = vshrl.u32 %v3320, 7
        %v3322 = vsub.s32 0, %v3321
        %v3323 = vrot.slane %v3284, %v3322
        %v3324 = vlaneseq
        %v3325 = vshrl.u32 %v3324, 7
        %v3326 = vsub.s32 0, %v3325
        %v3327 = vrot.slane %v3291, %v3326
        %v3330 = vmul.f32 %v3323, %v3300
        %v3331 = vmul.f32 %v3323, %v3301
        %v3332 = vmul.f32 %v3327, %v3300
        %v3333 = vmul.f32 %v3327, %v3301
        %v3334 = vsub.f32 %v3316, %v3330
        %v3335 = vsub.f32 %v3317, %v3331
        %v3336 = vsub.f32 %v3318, %v3332
        %v3337 = vsub.f32 %v3319, %v3333
        %v3338 = vmul.f32 %v3305, %v3300
        %v3339 = vmul.f32 %v3305, %v3301
        %v3340 = vmul.f32 %v3309, %v3300
        %v3341 = vmul.f32 %v3309, %v3301
        %v3342 = vadd.f32 %v3238, %v3338
        %v3343 = vadd.f32 %v3239, %v3339
        %v3344 = vadd.f32 %v3240, %v3340
        %v3345 = vadd.f32 %v3241, %v3341
        %v3346 = vmul.f32 %v3323, %v3295
        %v3347 = vmul.f32 %v3323, %v3296
        %v3348 = vmul.f32 %v3327, %v3295
        %v3349 = vmul.f32 %v3327, %v3296
        %v3350 = vadd.f32 %v3342, %v3346
        %v3351 = vadd.f32 %v3343, %v3347
        %v3352 = vadd.f32 %v3344, %v3348
        %v3353 = vadd.f32 %v3345, %v3349
        %s3354 = scalar_lea.vmem %s885, 44
        %v3355 = vld [vmem:[%s3354] sm:$0x3]
        %v3358 = vunpack.c.l.s4 1966171168
        %v3359 = vunpack.c.0.s8 %v3358
        %v3360 = vlaneseq
        %v3361 = vshrl.u32 %v3360, 7
        %v3362 = vsub.s32 %v3359, %v3361
        %v3363 = vrot.slane %v3355, %v3362
        %v3364 = vcombine.high %v3363, %v3363
        %v3366 = vunpack.c.l.s4 1966171168
        %v3367 = vunpack.c.0.s8 %v3366
        %v3368 = vlaneseq
        %v3369 = vshrl.u32 %v3368, 7
        %v3370 = vsub.s32 %v3367, %v3369
        %v3371 = vrot.slane %v3363, %v3370
        %v3373 = vunpack.c.l.s4 1966171168
        %v3374 = vunpack.c.0.s8 %v3373
        %v3375 = vlaneseq
        %v3376 = vshrl.u32 %v3375, 7
        %v3377 = vsub.s32 %v3374, %v3376
        %v3378 = vrot.slane %v3364, %v3377
        %s3379 = scalar_lea.vmem %s889, 44
        %v3380 = vld [vmem:[%s3379] sm:$0x3]
        %v3383 = vunpack.c.l.s4 1966171168
        %v3384 = vunpack.c.0.s8 %v3383
        %v3385 = vlaneseq
        %v3386 = vshrl.u32 %v3385, 7
        %v3387 = vsub.s32 %v3384, %v3386
        %v3388 = vrot.slane %v3380, %v3387
        %v3389 = vcombine.high %v3388, %v3388
        %v3391 = vunpack.c.l.s4 1966171168
        %v3392 = vunpack.c.0.s8 %v3391
        %v3393 = vlaneseq
        %v3394 = vshrl.u32 %v3393, 7
        %v3395 = vsub.s32 %v3392, %v3394
        %v3396 = vrot.slane %v3388, %v3395
        %v3398 = vunpack.c.l.s4 1966171168
        %v3399 = vunpack.c.0.s8 %v3398
        %v3400 = vlaneseq
        %v3401 = vshrl.u32 %v3400, 7
        %v3402 = vsub.s32 %v3399, %v3401
        %v3403 = vrot.slane %v3389, %v3402
        %s3404 = scalar_lea.vmem %s835, 176 [#allocation2]
        %v3405 = vld [vmem:[%s3404] sm:$0xf]
        %v3406 = vld [vmem:[%s3404 + $0x4] sm:$0xf]
        %v3407 = vunpack.c.l.bf16 %v3405
        %v3408 = vunpack.c.l.bf16 %v3406
        %s3409 = scalar_lea.vmem %s842, 176 [#allocation3]
        %v3410 = vld [vmem:[%s3409] sm:$0xf]
        %v3411 = vld [vmem:[%s3409 + $0x4] sm:$0xf]
        %v3412 = vunpack.c.l.bf16 %v3410
        %v3413 = vunpack.c.l.bf16 %v3411
        %v3414 = vlaneseq
        %v3415 = vshrl.u32 %v3414, 7
        %v3416 = vsub.s32 0, %v3415
        %v3417 = vrot.slane %v3371, %v3416
        %v3418 = vlaneseq
        %v3419 = vshrl.u32 %v3418, 7
        %v3420 = vsub.s32 0, %v3419
        %v3421 = vrot.slane %v3378, %v3420
        %v3424 = vmul.f32 %v3417, %v3407
        %v3425 = vmul.f32 %v3417, %v3408
        %v3426 = vmul.f32 %v3421, %v3407
        %v3427 = vmul.f32 %v3421, %v3408
        %v3428 = vadd.f32 %v3334, %v3424
        %v3429 = vadd.f32 %v3335, %v3425
        %v3430 = vadd.f32 %v3336, %v3426
        %v3431 = vadd.f32 %v3337, %v3427
        %v3432 = vlaneseq
        %v3433 = vshrl.u32 %v3432, 7
        %v3434 = vsub.s32 0, %v3433
        %v3435 = vrot.slane %v3396, %v3434
        %v3436 = vlaneseq
        %v3437 = vshrl.u32 %v3436, 7
        %v3438 = vsub.s32 0, %v3437
        %v3439 = vrot.slane %v3403, %v3438
        %v3442 = vmul.f32 %v3435, %v3412
        %v3443 = vmul.f32 %v3435, %v3413
        %v3444 = vmul.f32 %v3439, %v3412
        %v3445 = vmul.f32 %v3439, %v3413
        %v3446 = vsub.f32 %v3428, %v3442
        %v3447 = vsub.f32 %v3429, %v3443
        %v3448 = vsub.f32 %v3430, %v3444
        %v3449 = vsub.f32 %v3431, %v3445
        %v3450 = vmul.f32 %v3417, %v3412
        %v3451 = vmul.f32 %v3417, %v3413
        %v3452 = vmul.f32 %v3421, %v3412
        %v3453 = vmul.f32 %v3421, %v3413
        %v3454 = vadd.f32 %v3350, %v3450
        %v3455 = vadd.f32 %v3351, %v3451
        %v3456 = vadd.f32 %v3352, %v3452
        %v3457 = vadd.f32 %v3353, %v3453
        %v3458 = vmul.f32 %v3435, %v3407
        %v3459 = vmul.f32 %v3435, %v3408
        %v3460 = vmul.f32 %v3439, %v3407
        %v3461 = vmul.f32 %v3439, %v3408
        %v3462 = vadd.f32 %v3454, %v3458
        %v3463 = vadd.f32 %v3455, %v3459
        %v3464 = vadd.f32 %v3456, %v3460
        %v3465 = vadd.f32 %v3457, %v3461
        %s3466 = scalar_lea.vmem %s885, 46
        %v3467 = vld [vmem:[%s3466] sm:$0x3]
        %v3470 = vunpack.c.l.s4 1966171168
        %v3471 = vunpack.c.0.s8 %v3470
        %v3472 = vlaneseq
        %v3473 = vshrl.u32 %v3472, 7
        %v3474 = vsub.s32 %v3471, %v3473
        %v3475 = vrot.slane %v3467, %v3474
        %v3476 = vcombine.high %v3475, %v3475
        %v3478 = vunpack.c.l.s4 1966171168
        %v3479 = vunpack.c.0.s8 %v3478
        %v3480 = vlaneseq
        %v3481 = vshrl.u32 %v3480, 7
        %v3482 = vsub.s32 %v3479, %v3481
        %v3483 = vrot.slane %v3475, %v3482
        %v3485 = vunpack.c.l.s4 1966171168
        %v3486 = vunpack.c.0.s8 %v3485
        %v3487 = vlaneseq
        %v3488 = vshrl.u32 %v3487, 7
        %v3489 = vsub.s32 %v3486, %v3488
        %v3490 = vrot.slane %v3476, %v3489
        %s3491 = scalar_lea.vmem %s889, 46
        %v3492 = vld [vmem:[%s3491] sm:$0x3]
        %v3495 = vunpack.c.l.s4 1966171168
        %v3496 = vunpack.c.0.s8 %v3495
        %v3497 = vlaneseq
        %v3498 = vshrl.u32 %v3497, 7
        %v3499 = vsub.s32 %v3496, %v3498
        %v3500 = vrot.slane %v3492, %v3499
        %v3501 = vcombine.high %v3500, %v3500
        %v3503 = vunpack.c.l.s4 1966171168
        %v3504 = vunpack.c.0.s8 %v3503
        %v3505 = vlaneseq
        %v3506 = vshrl.u32 %v3505, 7
        %v3507 = vsub.s32 %v3504, %v3506
        %v3508 = vrot.slane %v3500, %v3507
        %v3510 = vunpack.c.l.s4 1966171168
        %v3511 = vunpack.c.0.s8 %v3510
        %v3512 = vlaneseq
        %v3513 = vshrl.u32 %v3512, 7
        %v3514 = vsub.s32 %v3511, %v3513
        %v3515 = vrot.slane %v3501, %v3514
        %s3516 = scalar_lea.vmem %s835, 184 [#allocation2]
        %v3517 = vld [vmem:[%s3516] sm:$0xf]
        %v3518 = vld [vmem:[%s3516 + $0x4] sm:$0xf]
        %v3519 = vunpack.c.l.bf16 %v3517
        %v3520 = vunpack.c.l.bf16 %v3518
        %s3521 = scalar_lea.vmem %s842, 184 [#allocation3]
        %v3522 = vld [vmem:[%s3521] sm:$0xf]
        %v3523 = vld [vmem:[%s3521 + $0x4] sm:$0xf]
        %v3524 = vunpack.c.l.bf16 %v3522
        %v3525 = vunpack.c.l.bf16 %v3523
        %v3526 = vlaneseq
        %v3527 = vshrl.u32 %v3526, 7
        %v3528 = vsub.s32 0, %v3527
        %v3529 = vrot.slane %v3483, %v3528
        %v3530 = vlaneseq
        %v3531 = vshrl.u32 %v3530, 7
        %v3532 = vsub.s32 0, %v3531
        %v3533 = vrot.slane %v3490, %v3532
        %v3536 = vmul.f32 %v3529, %v3519
        %v3537 = vmul.f32 %v3529, %v3520
        %v3538 = vmul.f32 %v3533, %v3519
        %v3539 = vmul.f32 %v3533, %v3520
        %v3540 = vadd.f32 %v3446, %v3536
        %v3541 = vadd.f32 %v3447, %v3537
        %v3542 = vadd.f32 %v3448, %v3538
        %v3543 = vadd.f32 %v3449, %v3539
        %v3544 = vlaneseq
        %v3545 = vshrl.u32 %v3544, 7
        %v3546 = vsub.s32 0, %v3545
        %v3547 = vrot.slane %v3508, %v3546
        %v3548 = vlaneseq
        %v3549 = vshrl.u32 %v3548, 7
        %v3550 = vsub.s32 0, %v3549
        %v3551 = vrot.slane %v3515, %v3550
        %v3554 = vmul.f32 %v3547, %v3524
        %v3555 = vmul.f32 %v3547, %v3525
        %v3556 = vmul.f32 %v3551, %v3524
        %v3557 = vmul.f32 %v3551, %v3525
        %v3558 = vsub.f32 %v3540, %v3554
        %v3559 = vsub.f32 %v3541, %v3555
        %v3560 = vsub.f32 %v3542, %v3556
        %v3561 = vsub.f32 %v3543, %v3557
        %v3562 = vmul.f32 %v3529, %v3524
        %v3563 = vmul.f32 %v3529, %v3525
        %v3564 = vmul.f32 %v3533, %v3524
        %v3565 = vmul.f32 %v3533, %v3525
        %v3566 = vadd.f32 %v3462, %v3562
        %v3567 = vadd.f32 %v3463, %v3563
        %v3568 = vadd.f32 %v3464, %v3564
        %v3569 = vadd.f32 %v3465, %v3565
        %v3570 = vmul.f32 %v3547, %v3519
        %v3571 = vmul.f32 %v3547, %v3520
        %v3572 = vmul.f32 %v3551, %v3519
        %v3573 = vmul.f32 %v3551, %v3520
        %v3574 = vadd.f32 %v3566, %v3570
        %v3575 = vadd.f32 %v3567, %v3571
        %v3576 = vadd.f32 %v3568, %v3572
        %v3577 = vadd.f32 %v3569, %v3573
        %s3578 = scalar_lea.vmem %s885, 48
        %v3579 = vld [vmem:[%s3578] sm:$0x3]
        %v3582 = vunpack.c.l.s4 1966171168
        %v3583 = vunpack.c.0.s8 %v3582
        %v3584 = vlaneseq
        %v3585 = vshrl.u32 %v3584, 7
        %v3586 = vsub.s32 %v3583, %v3585
        %v3587 = vrot.slane %v3579, %v3586
        %v3588 = vcombine.high %v3587, %v3587
        %v3590 = vunpack.c.l.s4 1966171168
        %v3591 = vunpack.c.0.s8 %v3590
        %v3592 = vlaneseq
        %v3593 = vshrl.u32 %v3592, 7
        %v3594 = vsub.s32 %v3591, %v3593
        %v3595 = vrot.slane %v3587, %v3594
        %v3597 = vunpack.c.l.s4 1966171168
        %v3598 = vunpack.c.0.s8 %v3597
        %v3599 = vlaneseq
        %v3600 = vshrl.u32 %v3599, 7
        %v3601 = vsub.s32 %v3598, %v3600
        %v3602 = vrot.slane %v3588, %v3601
        %s3603 = scalar_lea.vmem %s889, 48
        %v3604 = vld [vmem:[%s3603] sm:$0x3]
        %v3607 = vunpack.c.l.s4 1966171168
        %v3608 = vunpack.c.0.s8 %v3607
        %v3609 = vlaneseq
        %v3610 = vshrl.u32 %v3609, 7
        %v3611 = vsub.s32 %v3608, %v3610
        %v3612 = vrot.slane %v3604, %v3611
        %v3613 = vcombine.high %v3612, %v3612
        %v3615 = vunpack.c.l.s4 1966171168
        %v3616 = vunpack.c.0.s8 %v3615
        %v3617 = vlaneseq
        %v3618 = vshrl.u32 %v3617, 7
        %v3619 = vsub.s32 %v3616, %v3618
        %v3620 = vrot.slane %v3612, %v3619
        %v3622 = vunpack.c.l.s4 1966171168
        %v3623 = vunpack.c.0.s8 %v3622
        %v3624 = vlaneseq
        %v3625 = vshrl.u32 %v3624, 7
        %v3626 = vsub.s32 %v3623, %v3625
        %v3627 = vrot.slane %v3613, %v3626
        %s3628 = scalar_lea.vmem %s835, 192 [#allocation2]
        %v3629 = vld [vmem:[%s3628] sm:$0xf]
        %v3630 = vld [vmem:[%s3628 + $0x4] sm:$0xf]
        %v3631 = vunpack.c.l.bf16 %v3629
        %v3632 = vunpack.c.l.bf16 %v3630
        %s3633 = scalar_lea.vmem %s842, 192 [#allocation3]
        %v3634 = vld [vmem:[%s3633] sm:$0xf]
        %v3635 = vld [vmem:[%s3633 + $0x4] sm:$0xf]
        %v3636 = vunpack.c.l.bf16 %v3634
        %v3637 = vunpack.c.l.bf16 %v3635
        %v3638 = vlaneseq
        %v3639 = vshrl.u32 %v3638, 7
        %v3640 = vsub.s32 0, %v3639
        %v3641 = vrot.slane %v3595, %v3640
        %v3642 = vlaneseq
        %v3643 = vshrl.u32 %v3642, 7
        %v3644 = vsub.s32 0, %v3643
        %v3645 = vrot.slane %v3602, %v3644
        %v3648 = vmul.f32 %v3641, %v3631
        %v3649 = vmul.f32 %v3641, %v3632
        %v3650 = vmul.f32 %v3645, %v3631
        %v3651 = vmul.f32 %v3645, %v3632
        %v3652 = vadd.f32 %v3558, %v3648
        %v3653 = vadd.f32 %v3559, %v3649
        %v3654 = vadd.f32 %v3560, %v3650
        %v3655 = vadd.f32 %v3561, %v3651
        %v3656 = vlaneseq
        %v3657 = vshrl.u32 %v3656, 7
        %v3658 = vsub.s32 0, %v3657
        %v3659 = vrot.slane %v3620, %v3658
        %v3660 = vlaneseq
        %v3661 = vshrl.u32 %v3660, 7
        %v3662 = vsub.s32 0, %v3661
        %v3663 = vrot.slane %v3627, %v3662
        %v3666 = vmul.f32 %v3659, %v3636
        %v3667 = vmul.f32 %v3659, %v3637
        %v3668 = vmul.f32 %v3663, %v3636
        %v3669 = vmul.f32 %v3663, %v3637
        %v3670 = vsub.f32 %v3652, %v3666
        %v3671 = vsub.f32 %v3653, %v3667
        %v3672 = vsub.f32 %v3654, %v3668
        %v3673 = vsub.f32 %v3655, %v3669
        %v3674 = vmul.f32 %v3641, %v3636
        %v3675 = vmul.f32 %v3641, %v3637
        %v3676 = vmul.f32 %v3645, %v3636
        %v3677 = vmul.f32 %v3645, %v3637
        %v3678 = vadd.f32 %v3574, %v3674
        %v3679 = vadd.f32 %v3575, %v3675
        %v3680 = vadd.f32 %v3576, %v3676
        %v3681 = vadd.f32 %v3577, %v3677
        %v3682 = vmul.f32 %v3659, %v3631
        %v3683 = vmul.f32 %v3659, %v3632
        %v3684 = vmul.f32 %v3663, %v3631
        %v3685 = vmul.f32 %v3663, %v3632
        %v3686 = vadd.f32 %v3678, %v3682
        %v3687 = vadd.f32 %v3679, %v3683
        %v3688 = vadd.f32 %v3680, %v3684
        %v3689 = vadd.f32 %v3681, %v3685
        %s3690 = scalar_lea.vmem %s885, 50
        %v3691 = vld [vmem:[%s3690] sm:$0x3]
        %v3694 = vunpack.c.l.s4 1966171168
        %v3695 = vunpack.c.0.s8 %v3694
        %v3696 = vlaneseq
        %v3697 = vshrl.u32 %v3696, 7
        %v3698 = vsub.s32 %v3695, %v3697
        %v3699 = vrot.slane %v3691, %v3698
        %v3700 = vcombine.high %v3699, %v3699
        %v3702 = vunpack.c.l.s4 1966171168
        %v3703 = vunpack.c.0.s8 %v3702
        %v3704 = vlaneseq
        %v3705 = vshrl.u32 %v3704, 7
        %v3706 = vsub.s32 %v3703, %v3705
        %v3707 = vrot.slane %v3699, %v3706
        %v3709 = vunpack.c.l.s4 1966171168
        %v3710 = vunpack.c.0.s8 %v3709
        %v3711 = vlaneseq
        %v3712 = vshrl.u32 %v3711, 7
        %v3713 = vsub.s32 %v3710, %v3712
        %v3714 = vrot.slane %v3700, %v3713
        %s3715 = scalar_lea.vmem %s889, 50
        %v3716 = vld [vmem:[%s3715] sm:$0x3]
        %v3719 = vunpack.c.l.s4 1966171168
        %v3720 = vunpack.c.0.s8 %v3719
        %v3721 = vlaneseq
        %v3722 = vshrl.u32 %v3721, 7
        %v3723 = vsub.s32 %v3720, %v3722
        %v3724 = vrot.slane %v3716, %v3723
        %v3725 = vcombine.high %v3724, %v3724
        %v3727 = vunpack.c.l.s4 1966171168
        %v3728 = vunpack.c.0.s8 %v3727
        %v3729 = vlaneseq
        %v3730 = vshrl.u32 %v3729, 7
        %v3731 = vsub.s32 %v3728, %v3730
        %v3732 = vrot.slane %v3724, %v3731
        %v3734 = vunpack.c.l.s4 1966171168
        %v3735 = vunpack.c.0.s8 %v3734
        %v3736 = vlaneseq
        %v3737 = vshrl.u32 %v3736, 7
        %v3738 = vsub.s32 %v3735, %v3737
        %v3739 = vrot.slane %v3725, %v3738
        %s3740 = scalar_lea.vmem %s835, 200 [#allocation2]
        %v3741 = vld [vmem:[%s3740] sm:$0xf]
        %v3742 = vld [vmem:[%s3740 + $0x4] sm:$0xf]
        %v3743 = vunpack.c.l.bf16 %v3741
        %v3744 = vunpack.c.l.bf16 %v3742
        %s3745 = scalar_lea.vmem %s842, 200 [#allocation3]
        %v3746 = vld [vmem:[%s3745] sm:$0xf]
        %v3747 = vld [vmem:[%s3745 + $0x4] sm:$0xf]
        %v3748 = vunpack.c.l.bf16 %v3746
        %v3749 = vunpack.c.l.bf16 %v3747
        %v3750 = vlaneseq
        %v3751 = vshrl.u32 %v3750, 7
        %v3752 = vsub.s32 0, %v3751
        %v3753 = vrot.slane %v3707, %v3752
        %v3754 = vlaneseq
        %v3755 = vshrl.u32 %v3754, 7
        %v3756 = vsub.s32 0, %v3755
        %v3757 = vrot.slane %v3714, %v3756
        %v3760 = vmul.f32 %v3753, %v3743
        %v3761 = vmul.f32 %v3753, %v3744
        %v3762 = vmul.f32 %v3757, %v3743
        %v3763 = vmul.f32 %v3757, %v3744
        %v3764 = vadd.f32 %v3670, %v3760
        %v3765 = vadd.f32 %v3671, %v3761
        %v3766 = vadd.f32 %v3672, %v3762
        %v3767 = vadd.f32 %v3673, %v3763
        %v3768 = vlaneseq
        %v3769 = vshrl.u32 %v3768, 7
        %v3770 = vsub.s32 0, %v3769
        %v3771 = vrot.slane %v3732, %v3770
        %v3772 = vlaneseq
        %v3773 = vshrl.u32 %v3772, 7
        %v3774 = vsub.s32 0, %v3773
        %v3775 = vrot.slane %v3739, %v3774
        %v3778 = vmul.f32 %v3771, %v3748
        %v3779 = vmul.f32 %v3771, %v3749
        %v3780 = vmul.f32 %v3775, %v3748
        %v3781 = vmul.f32 %v3775, %v3749
        %v3782 = vsub.f32 %v3764, %v3778
        %v3783 = vsub.f32 %v3765, %v3779
        %v3784 = vsub.f32 %v3766, %v3780
        %v3785 = vsub.f32 %v3767, %v3781
        %v3786 = vmul.f32 %v3753, %v3748
        %v3787 = vmul.f32 %v3753, %v3749
        %v3788 = vmul.f32 %v3757, %v3748
        %v3789 = vmul.f32 %v3757, %v3749
        %v3790 = vadd.f32 %v3686, %v3786
        %v3791 = vadd.f32 %v3687, %v3787
        %v3792 = vadd.f32 %v3688, %v3788
        %v3793 = vadd.f32 %v3689, %v3789
        %v3794 = vmul.f32 %v3771, %v3743
        %v3795 = vmul.f32 %v3771, %v3744
        %v3796 = vmul.f32 %v3775, %v3743
        %v3797 = vmul.f32 %v3775, %v3744
        %v3798 = vadd.f32 %v3790, %v3794
        %v3799 = vadd.f32 %v3791, %v3795
        %v3800 = vadd.f32 %v3792, %v3796
        %v3801 = vadd.f32 %v3793, %v3797
        %s3802 = scalar_lea.vmem %s885, 52
        %v3803 = vld [vmem:[%s3802] sm:$0x3]
        %v3806 = vunpack.c.l.s4 1966171168
        %v3807 = vunpack.c.0.s8 %v3806
        %v3808 = vlaneseq
        %v3809 = vshrl.u32 %v3808, 7
        %v3810 = vsub.s32 %v3807, %v3809
        %v3811 = vrot.slane %v3803, %v3810
        %v3812 = vcombine.high %v3811, %v3811
        %v3814 = vunpack.c.l.s4 1966171168
        %v3815 = vunpack.c.0.s8 %v3814
        %v3816 = vlaneseq
        %v3817 = vshrl.u32 %v3816, 7
        %v3818 = vsub.s32 %v3815, %v3817
        %v3819 = vrot.slane %v3811, %v3818
        %v3821 = vunpack.c.l.s4 1966171168
        %v3822 = vunpack.c.0.s8 %v3821
        %v3823 = vlaneseq
        %v3824 = vshrl.u32 %v3823, 7
        %v3825 = vsub.s32 %v3822, %v3824
        %v3826 = vrot.slane %v3812, %v3825
        %s3827 = scalar_lea.vmem %s889, 52
        %v3828 = vld [vmem:[%s3827] sm:$0x3]
        %v3831 = vunpack.c.l.s4 1966171168
        %v3832 = vunpack.c.0.s8 %v3831
        %v3833 = vlaneseq
        %v3834 = vshrl.u32 %v3833, 7
        %v3835 = vsub.s32 %v3832, %v3834
        %v3836 = vrot.slane %v3828, %v3835
        %v3837 = vcombine.high %v3836, %v3836
        %v3839 = vunpack.c.l.s4 1966171168
        %v3840 = vunpack.c.0.s8 %v3839
        %v3841 = vlaneseq
        %v3842 = vshrl.u32 %v3841, 7
        %v3843 = vsub.s32 %v3840, %v3842
        %v3844 = vrot.slane %v3836, %v3843
        %v3846 = vunpack.c.l.s4 1966171168
        %v3847 = vunpack.c.0.s8 %v3846
        %v3848 = vlaneseq
        %v3849 = vshrl.u32 %v3848, 7
        %v3850 = vsub.s32 %v3847, %v3849
        %v3851 = vrot.slane %v3837, %v3850
        %s3852 = scalar_lea.vmem %s835, 208 [#allocation2]
        %v3853 = vld [vmem:[%s3852] sm:$0xf]
        %v3854 = vld [vmem:[%s3852 + $0x4] sm:$0xf]
        %v3855 = vunpack.c.l.bf16 %v3853
        %v3856 = vunpack.c.l.bf16 %v3854
        %s3857 = scalar_lea.vmem %s842, 208 [#allocation3]
        %v3858 = vld [vmem:[%s3857] sm:$0xf]
        %v3859 = vld [vmem:[%s3857 + $0x4] sm:$0xf]
        %v3860 = vunpack.c.l.bf16 %v3858
        %v3861 = vunpack.c.l.bf16 %v3859
        %v3862 = vlaneseq
        %v3863 = vshrl.u32 %v3862, 7
        %v3864 = vsub.s32 0, %v3863
        %v3865 = vrot.slane %v3819, %v3864
        %v3866 = vlaneseq
        %v3867 = vshrl.u32 %v3866, 7
        %v3868 = vsub.s32 0, %v3867
        %v3869 = vrot.slane %v3826, %v3868
        %v3872 = vmul.f32 %v3865, %v3855
        %v3873 = vmul.f32 %v3865, %v3856
        %v3874 = vmul.f32 %v3869, %v3855
        %v3875 = vmul.f32 %v3869, %v3856
        %v3876 = vadd.f32 %v3782, %v3872
        %v3877 = vadd.f32 %v3783, %v3873
        %v3878 = vadd.f32 %v3784, %v3874
        %v3879 = vadd.f32 %v3785, %v3875
        %v3880 = vlaneseq
        %v3881 = vshrl.u32 %v3880, 7
        %v3882 = vsub.s32 0, %v3881
        %v3883 = vrot.slane %v3844, %v3882
        %v3884 = vlaneseq
        %v3885 = vshrl.u32 %v3884, 7
        %v3886 = vsub.s32 0, %v3885
        %v3887 = vrot.slane %v3851, %v3886
        %v3890 = vmul.f32 %v3883, %v3860
        %v3891 = vmul.f32 %v3883, %v3861
        %v3892 = vmul.f32 %v3887, %v3860
        %v3893 = vmul.f32 %v3887, %v3861
        %v3894 = vsub.f32 %v3876, %v3890
        %v3895 = vsub.f32 %v3877, %v3891
        %v3896 = vsub.f32 %v3878, %v3892
        %v3897 = vsub.f32 %v3879, %v3893
        %v3898 = vmul.f32 %v3865, %v3860
        %v3899 = vmul.f32 %v3865, %v3861
        %v3900 = vmul.f32 %v3869, %v3860
        %v3901 = vmul.f32 %v3869, %v3861
        %v3902 = vadd.f32 %v3798, %v3898
        %v3903 = vadd.f32 %v3799, %v3899
        %v3904 = vadd.f32 %v3800, %v3900
        %v3905 = vadd.f32 %v3801, %v3901
        %v3906 = vmul.f32 %v3883, %v3855
        %v3907 = vmul.f32 %v3883, %v3856
        %v3908 = vmul.f32 %v3887, %v3855
        %v3909 = vmul.f32 %v3887, %v3856
        %v3910 = vadd.f32 %v3902, %v3906
        %v3911 = vadd.f32 %v3903, %v3907
        %v3912 = vadd.f32 %v3904, %v3908
        %v3913 = vadd.f32 %v3905, %v3909
        %s3914 = scalar_lea.vmem %s885, 54
        %v3915 = vld [vmem:[%s3914] sm:$0x3]
        %v3918 = vunpack.c.l.s4 1966171168
        %v3919 = vunpack.c.0.s8 %v3918
        %v3920 = vlaneseq
        %v3921 = vshrl.u32 %v3920, 7
        %v3922 = vsub.s32 %v3919, %v3921
        %v3923 = vrot.slane %v3915, %v3922
        %v3924 = vcombine.high %v3923, %v3923
        %v3926 = vunpack.c.l.s4 1966171168
        %v3927 = vunpack.c.0.s8 %v3926
        %v3928 = vlaneseq
        %v3929 = vshrl.u32 %v3928, 7
        %v3930 = vsub.s32 %v3927, %v3929
        %v3931 = vrot.slane %v3923, %v3930
        %v3933 = vunpack.c.l.s4 1966171168
        %v3934 = vunpack.c.0.s8 %v3933
        %v3935 = vlaneseq
        %v3936 = vshrl.u32 %v3935, 7
        %v3937 = vsub.s32 %v3934, %v3936
        %v3938 = vrot.slane %v3924, %v3937
        %s3939 = scalar_lea.vmem %s889, 54
        %v3940 = vld [vmem:[%s3939] sm:$0x3]
        %v3943 = vunpack.c.l.s4 1966171168
        %v3944 = vunpack.c.0.s8 %v3943
        %v3945 = vlaneseq
        %v3946 = vshrl.u32 %v3945, 7
        %v3947 = vsub.s32 %v3944, %v3946
        %v3948 = vrot.slane %v3940, %v3947
        %v3949 = vcombine.high %v3948, %v3948
        %v3951 = vunpack.c.l.s4 1966171168
        %v3952 = vunpack.c.0.s8 %v3951
        %v3953 = vlaneseq
        %v3954 = vshrl.u32 %v3953, 7
        %v3955 = vsub.s32 %v3952, %v3954
        %v3956 = vrot.slane %v3948, %v3955
        %v3958 = vunpack.c.l.s4 1966171168
        %v3959 = vunpack.c.0.s8 %v3958
        %v3960 = vlaneseq
        %v3961 = vshrl.u32 %v3960, 7
        %v3962 = vsub.s32 %v3959, %v3961
        %v3963 = vrot.slane %v3949, %v3962
        %s3964 = scalar_lea.vmem %s835, 216 [#allocation2]
        %v3965 = vld [vmem:[%s3964] sm:$0xf]
        %v3966 = vld [vmem:[%s3964 + $0x4] sm:$0xf]
        %v3967 = vunpack.c.l.bf16 %v3965
        %v3968 = vunpack.c.l.bf16 %v3966
        %s3969 = scalar_lea.vmem %s842, 216 [#allocation3]
        %v3970 = vld [vmem:[%s3969] sm:$0xf]
        %v3971 = vld [vmem:[%s3969 + $0x4] sm:$0xf]
        %v3972 = vunpack.c.l.bf16 %v3970
        %v3973 = vunpack.c.l.bf16 %v3971
        %v3974 = vlaneseq
        %v3975 = vshrl.u32 %v3974, 7
        %v3976 = vsub.s32 0, %v3975
        %v3977 = vrot.slane %v3931, %v3976
        %v3978 = vlaneseq
        %v3979 = vshrl.u32 %v3978, 7
        %v3980 = vsub.s32 0, %v3979
        %v3981 = vrot.slane %v3938, %v3980
        %v3984 = vmul.f32 %v3977, %v3967
        %v3985 = vmul.f32 %v3977, %v3968
        %v3986 = vmul.f32 %v3981, %v3967
        %v3987 = vmul.f32 %v3981, %v3968
        %v3988 = vadd.f32 %v3894, %v3984
        %v3989 = vadd.f32 %v3895, %v3985
        %v3990 = vadd.f32 %v3896, %v3986
        %v3991 = vadd.f32 %v3897, %v3987
        %v3992 = vlaneseq
        %v3993 = vshrl.u32 %v3992, 7
        %v3994 = vsub.s32 0, %v3993
        %v3995 = vrot.slane %v3956, %v3994
        %v3996 = vlaneseq
        %v3997 = vshrl.u32 %v3996, 7
        %v3998 = vsub.s32 0, %v3997
        %v3999 = vrot.slane %v3963, %v3998
        %v4002 = vmul.f32 %v3995, %v3972
        %v4003 = vmul.f32 %v3995, %v3973
        %v4004 = vmul.f32 %v3999, %v3972
        %v4005 = vmul.f32 %v3999, %v3973
        %v4006 = vsub.f32 %v3988, %v4002
        %v4007 = vsub.f32 %v3989, %v4003
        %v4008 = vsub.f32 %v3990, %v4004
        %v4009 = vsub.f32 %v3991, %v4005
        %v4010 = vmul.f32 %v3977, %v3972
        %v4011 = vmul.f32 %v3977, %v3973
        %v4012 = vmul.f32 %v3981, %v3972
        %v4013 = vmul.f32 %v3981, %v3973
        %v4014 = vadd.f32 %v3910, %v4010
        %v4015 = vadd.f32 %v3911, %v4011
        %v4016 = vadd.f32 %v3912, %v4012
        %v4017 = vadd.f32 %v3913, %v4013
        %v4018 = vmul.f32 %v3995, %v3967
        %v4019 = vmul.f32 %v3995, %v3968
        %v4020 = vmul.f32 %v3999, %v3967
        %v4021 = vmul.f32 %v3999, %v3968
        %v4022 = vadd.f32 %v4014, %v4018
        %v4023 = vadd.f32 %v4015, %v4019
        %v4024 = vadd.f32 %v4016, %v4020
        %v4025 = vadd.f32 %v4017, %v4021
        %s4026 = scalar_lea.vmem %s885, 56
        %v4027 = vld [vmem:[%s4026] sm:$0x3]
        %v4030 = vunpack.c.l.s4 1966171168
        %v4031 = vunpack.c.0.s8 %v4030
        %v4032 = vlaneseq
        %v4033 = vshrl.u32 %v4032, 7
        %v4034 = vsub.s32 %v4031, %v4033
        %v4035 = vrot.slane %v4027, %v4034
        %v4036 = vcombine.high %v4035, %v4035
        %v4038 = vunpack.c.l.s4 1966171168
        %v4039 = vunpack.c.0.s8 %v4038
        %v4040 = vlaneseq
        %v4041 = vshrl.u32 %v4040, 7
        %v4042 = vsub.s32 %v4039, %v4041
        %v4043 = vrot.slane %v4035, %v4042
        %v4045 = vunpack.c.l.s4 1966171168
        %v4046 = vunpack.c.0.s8 %v4045
        %v4047 = vlaneseq
        %v4048 = vshrl.u32 %v4047, 7
        %v4049 = vsub.s32 %v4046, %v4048
        %v4050 = vrot.slane %v4036, %v4049
        %s4051 = scalar_lea.vmem %s889, 56
        %v4052 = vld [vmem:[%s4051] sm:$0x3]
        %v4055 = vunpack.c.l.s4 1966171168
        %v4056 = vunpack.c.0.s8 %v4055
        %v4057 = vlaneseq
        %v4058 = vshrl.u32 %v4057, 7
        %v4059 = vsub.s32 %v4056, %v4058
        %v4060 = vrot.slane %v4052, %v4059
        %v4061 = vcombine.high %v4060, %v4060
        %v4063 = vunpack.c.l.s4 1966171168
        %v4064 = vunpack.c.0.s8 %v4063
        %v4065 = vlaneseq
        %v4066 = vshrl.u32 %v4065, 7
        %v4067 = vsub.s32 %v4064, %v4066
        %v4068 = vrot.slane %v4060, %v4067
        %v4070 = vunpack.c.l.s4 1966171168
        %v4071 = vunpack.c.0.s8 %v4070
        %v4072 = vlaneseq
        %v4073 = vshrl.u32 %v4072, 7
        %v4074 = vsub.s32 %v4071, %v4073
        %v4075 = vrot.slane %v4061, %v4074
        %s4076 = scalar_lea.vmem %s835, 224 [#allocation2]
        %v4077 = vld [vmem:[%s4076] sm:$0xf]
        %v4078 = vld [vmem:[%s4076 + $0x4] sm:$0xf]
        %v4079 = vunpack.c.l.bf16 %v4077
        %v4080 = vunpack.c.l.bf16 %v4078
        %s4081 = scalar_lea.vmem %s842, 224 [#allocation3]
        %v4082 = vld [vmem:[%s4081] sm:$0xf]
        %v4083 = vld [vmem:[%s4081 + $0x4] sm:$0xf]
        %v4084 = vunpack.c.l.bf16 %v4082
        %v4085 = vunpack.c.l.bf16 %v4083
        %v4086 = vlaneseq
        %v4087 = vshrl.u32 %v4086, 7
        %v4088 = vsub.s32 0, %v4087
        %v4089 = vrot.slane %v4043, %v4088
        %v4090 = vlaneseq
        %v4091 = vshrl.u32 %v4090, 7
        %v4092 = vsub.s32 0, %v4091
        %v4093 = vrot.slane %v4050, %v4092
        %v4096 = vmul.f32 %v4089, %v4079
        %v4097 = vmul.f32 %v4089, %v4080
        %v4098 = vmul.f32 %v4093, %v4079
        %v4099 = vmul.f32 %v4093, %v4080
        %v4100 = vadd.f32 %v4006, %v4096
        %v4101 = vadd.f32 %v4007, %v4097
        %v4102 = vadd.f32 %v4008, %v4098
        %v4103 = vadd.f32 %v4009, %v4099
        %v4104 = vlaneseq
        %v4105 = vshrl.u32 %v4104, 7
        %v4106 = vsub.s32 0, %v4105
        %v4107 = vrot.slane %v4068, %v4106
        %v4108 = vlaneseq
        %v4109 = vshrl.u32 %v4108, 7
        %v4110 = vsub.s32 0, %v4109
        %v4111 = vrot.slane %v4075, %v4110
        %v4114 = vmul.f32 %v4107, %v4084
        %v4115 = vmul.f32 %v4107, %v4085
        %v4116 = vmul.f32 %v4111, %v4084
        %v4117 = vmul.f32 %v4111, %v4085
        %v4118 = vsub.f32 %v4100, %v4114
        %v4119 = vsub.f32 %v4101, %v4115
        %v4120 = vsub.f32 %v4102, %v4116
        %v4121 = vsub.f32 %v4103, %v4117
        %v4122 = vmul.f32 %v4089, %v4084
        %v4123 = vmul.f32 %v4089, %v4085
        %v4124 = vmul.f32 %v4093, %v4084
        %v4125 = vmul.f32 %v4093, %v4085
        %v4126 = vadd.f32 %v4022, %v4122
        %v4127 = vadd.f32 %v4023, %v4123
        %v4128 = vadd.f32 %v4024, %v4124
        %v4129 = vadd.f32 %v4025, %v4125
        %v4130 = vmul.f32 %v4107, %v4079
        %v4131 = vmul.f32 %v4107, %v4080
        %v4132 = vmul.f32 %v4111, %v4079
        %v4133 = vmul.f32 %v4111, %v4080
        %v4134 = vadd.f32 %v4126, %v4130
        %v4135 = vadd.f32 %v4127, %v4131
        %v4136 = vadd.f32 %v4128, %v4132
        %v4137 = vadd.f32 %v4129, %v4133
        %s4138 = scalar_lea.vmem %s885, 58
        %v4139 = vld [vmem:[%s4138] sm:$0x3]
        %v4142 = vunpack.c.l.s4 1966171168
        %v4143 = vunpack.c.0.s8 %v4142
        %v4144 = vlaneseq
        %v4145 = vshrl.u32 %v4144, 7
        %v4146 = vsub.s32 %v4143, %v4145
        %v4147 = vrot.slane %v4139, %v4146
        %v4148 = vcombine.high %v4147, %v4147
        %v4150 = vunpack.c.l.s4 1966171168
        %v4151 = vunpack.c.0.s8 %v4150
        %v4152 = vlaneseq
        %v4153 = vshrl.u32 %v4152, 7
        %v4154 = vsub.s32 %v4151, %v4153
        %v4155 = vrot.slane %v4147, %v4154
        %v4157 = vunpack.c.l.s4 1966171168
        %v4158 = vunpack.c.0.s8 %v4157
        %v4159 = vlaneseq
        %v4160 = vshrl.u32 %v4159, 7
        %v4161 = vsub.s32 %v4158, %v4160
        %v4162 = vrot.slane %v4148, %v4161
        %s4163 = scalar_lea.vmem %s889, 58
        %v4164 = vld [vmem:[%s4163] sm:$0x3]
        %v4167 = vunpack.c.l.s4 1966171168
        %v4168 = vunpack.c.0.s8 %v4167
        %v4169 = vlaneseq
        %v4170 = vshrl.u32 %v4169, 7
        %v4171 = vsub.s32 %v4168, %v4170
        %v4172 = vrot.slane %v4164, %v4171
        %v4173 = vcombine.high %v4172, %v4172
        %v4175 = vunpack.c.l.s4 1966171168
        %v4176 = vunpack.c.0.s8 %v4175
        %v4177 = vlaneseq
        %v4178 = vshrl.u32 %v4177, 7
        %v4179 = vsub.s32 %v4176, %v4178
        %v4180 = vrot.slane %v4172, %v4179
        %v4182 = vunpack.c.l.s4 1966171168
        %v4183 = vunpack.c.0.s8 %v4182
        %v4184 = vlaneseq
        %v4185 = vshrl.u32 %v4184, 7
        %v4186 = vsub.s32 %v4183, %v4185
        %v4187 = vrot.slane %v4173, %v4186
        %s4188 = scalar_lea.vmem %s835, 232 [#allocation2]
        %v4189 = vld [vmem:[%s4188] sm:$0xf]
        %v4190 = vld [vmem:[%s4188 + $0x4] sm:$0xf]
        %v4191 = vunpack.c.l.bf16 %v4189
        %v4192 = vunpack.c.l.bf16 %v4190
        %s4193 = scalar_lea.vmem %s842, 232 [#allocation3]
        %v4194 = vld [vmem:[%s4193] sm:$0xf]
        %v4195 = vld [vmem:[%s4193 + $0x4] sm:$0xf]
        %v4196 = vunpack.c.l.bf16 %v4194
        %v4197 = vunpack.c.l.bf16 %v4195
        %v4198 = vlaneseq
        %v4199 = vshrl.u32 %v4198, 7
        %v4200 = vsub.s32 0, %v4199
        %v4201 = vrot.slane %v4155, %v4200
        %v4202 = vlaneseq
        %v4203 = vshrl.u32 %v4202, 7
        %v4204 = vsub.s32 0, %v4203
        %v4205 = vrot.slane %v4162, %v4204
        %v4208 = vmul.f32 %v4201, %v4191
        %v4209 = vmul.f32 %v4201, %v4192
        %v4210 = vmul.f32 %v4205, %v4191
        %v4211 = vmul.f32 %v4205, %v4192
        %v4212 = vadd.f32 %v4118, %v4208
        %v4213 = vadd.f32 %v4119, %v4209
        %v4214 = vadd.f32 %v4120, %v4210
        %v4215 = vadd.f32 %v4121, %v4211
        %v4216 = vlaneseq
        %v4217 = vshrl.u32 %v4216, 7
        %v4218 = vsub.s32 0, %v4217
        %v4219 = vrot.slane %v4180, %v4218
        %v4220 = vlaneseq
        %v4221 = vshrl.u32 %v4220, 7
        %v4222 = vsub.s32 0, %v4221
        %v4223 = vrot.slane %v4187, %v4222
        %v4226 = vmul.f32 %v4219, %v4196
        %v4227 = vmul.f32 %v4219, %v4197
        %v4228 = vmul.f32 %v4223, %v4196
        %v4229 = vmul.f32 %v4223, %v4197
        %v4230 = vsub.f32 %v4212, %v4226
        %v4231 = vsub.f32 %v4213, %v4227
        %v4232 = vsub.f32 %v4214, %v4228
        %v4233 = vsub.f32 %v4215, %v4229
        %v4234 = vmul.f32 %v4201, %v4196
        %v4235 = vmul.f32 %v4201, %v4197
        %v4236 = vmul.f32 %v4205, %v4196
        %v4237 = vmul.f32 %v4205, %v4197
        %v4238 = vadd.f32 %v4134, %v4234
        %v4239 = vadd.f32 %v4135, %v4235
        %v4240 = vadd.f32 %v4136, %v4236
        %v4241 = vadd.f32 %v4137, %v4237
        %v4242 = vmul.f32 %v4219, %v4191
        %v4243 = vmul.f32 %v4219, %v4192
        %v4244 = vmul.f32 %v4223, %v4191
        %v4245 = vmul.f32 %v4223, %v4192
        %v4246 = vadd.f32 %v4238, %v4242
        %v4247 = vadd.f32 %v4239, %v4243
        %v4248 = vadd.f32 %v4240, %v4244
        %v4249 = vadd.f32 %v4241, %v4245
        %s4250 = scalar_lea.vmem %s885, 60
        %v4251 = vld [vmem:[%s4250] sm:$0x3]
        %v4254 = vunpack.c.l.s4 1966171168
        %v4255 = vunpack.c.0.s8 %v4254
        %v4256 = vlaneseq
        %v4257 = vshrl.u32 %v4256, 7
        %v4258 = vsub.s32 %v4255, %v4257
        %v4259 = vrot.slane %v4251, %v4258
        %v4260 = vcombine.high %v4259, %v4259
        %v4262 = vunpack.c.l.s4 1966171168
        %v4263 = vunpack.c.0.s8 %v4262
        %v4264 = vlaneseq
        %v4265 = vshrl.u32 %v4264, 7
        %v4266 = vsub.s32 %v4263, %v4265
        %v4267 = vrot.slane %v4259, %v4266
        %v4269 = vunpack.c.l.s4 1966171168
        %v4270 = vunpack.c.0.s8 %v4269
        %v4271 = vlaneseq
        %v4272 = vshrl.u32 %v4271, 7
        %v4273 = vsub.s32 %v4270, %v4272
        %v4274 = vrot.slane %v4260, %v4273
        %s4275 = scalar_lea.vmem %s889, 60
        %v4276 = vld [vmem:[%s4275] sm:$0x3]
        %v4279 = vunpack.c.l.s4 1966171168
        %v4280 = vunpack.c.0.s8 %v4279
        %v4281 = vlaneseq
        %v4282 = vshrl.u32 %v4281, 7
        %v4283 = vsub.s32 %v4280, %v4282
        %v4284 = vrot.slane %v4276, %v4283
        %v4285 = vcombine.high %v4284, %v4284
        %v4287 = vunpack.c.l.s4 1966171168
        %v4288 = vunpack.c.0.s8 %v4287
        %v4289 = vlaneseq
        %v4290 = vshrl.u32 %v4289, 7
        %v4291 = vsub.s32 %v4288, %v4290
        %v4292 = vrot.slane %v4284, %v4291
        %v4294 = vunpack.c.l.s4 1966171168
        %v4295 = vunpack.c.0.s8 %v4294
        %v4296 = vlaneseq
        %v4297 = vshrl.u32 %v4296, 7
        %v4298 = vsub.s32 %v4295, %v4297
        %v4299 = vrot.slane %v4285, %v4298
        %s4300 = scalar_lea.vmem %s835, 240 [#allocation2]
        %v4301 = vld [vmem:[%s4300] sm:$0xf]
        %v4302 = vld [vmem:[%s4300 + $0x4] sm:$0xf]
        %v4303 = vunpack.c.l.bf16 %v4301
        %v4304 = vunpack.c.l.bf16 %v4302
        %s4305 = scalar_lea.vmem %s842, 240 [#allocation3]
        %v4306 = vld [vmem:[%s4305] sm:$0xf]
        %v4307 = vld [vmem:[%s4305 + $0x4] sm:$0xf]
        %v4308 = vunpack.c.l.bf16 %v4306
        %v4309 = vunpack.c.l.bf16 %v4307
        %v4310 = vlaneseq
        %v4311 = vshrl.u32 %v4310, 7
        %v4312 = vsub.s32 0, %v4311
        %v4313 = vrot.slane %v4267, %v4312
        %v4314 = vlaneseq
        %v4315 = vshrl.u32 %v4314, 7
        %v4316 = vsub.s32 0, %v4315
        %v4317 = vrot.slane %v4274, %v4316
        %v4320 = vmul.f32 %v4313, %v4303
        %v4321 = vmul.f32 %v4313, %v4304
        %v4322 = vmul.f32 %v4317, %v4303
        %v4323 = vmul.f32 %v4317, %v4304
        %v4324 = vadd.f32 %v4230, %v4320
        %v4325 = vadd.f32 %v4231, %v4321
        %v4326 = vadd.f32 %v4232, %v4322
        %v4327 = vadd.f32 %v4233, %v4323
        %v4328 = vlaneseq
        %v4329 = vshrl.u32 %v4328, 7
        %v4330 = vsub.s32 0, %v4329
        %v4331 = vrot.slane %v4292, %v4330
        %v4332 = vlaneseq
        %v4333 = vshrl.u32 %v4332, 7
        %v4334 = vsub.s32 0, %v4333
        %v4335 = vrot.slane %v4299, %v4334
        %v4338 = vmul.f32 %v4331, %v4308
        %v4339 = vmul.f32 %v4331, %v4309
        %v4340 = vmul.f32 %v4335, %v4308
        %v4341 = vmul.f32 %v4335, %v4309
        %v4342 = vsub.f32 %v4324, %v4338
        %v4343 = vsub.f32 %v4325, %v4339
        %v4344 = vsub.f32 %v4326, %v4340
        %v4345 = vsub.f32 %v4327, %v4341
        %v4346 = vmul.f32 %v4313, %v4308
        %v4347 = vmul.f32 %v4313, %v4309
        %v4348 = vmul.f32 %v4317, %v4308
        %v4349 = vmul.f32 %v4317, %v4309
        %v4350 = vadd.f32 %v4246, %v4346
        %v4351 = vadd.f32 %v4247, %v4347
        %v4352 = vadd.f32 %v4248, %v4348
        %v4353 = vadd.f32 %v4249, %v4349
        %v4354 = vmul.f32 %v4331, %v4303
        %v4355 = vmul.f32 %v4331, %v4304
        %v4356 = vmul.f32 %v4335, %v4303
        %v4357 = vmul.f32 %v4335, %v4304
        %v4358 = vadd.f32 %v4350, %v4354
        %v4359 = vadd.f32 %v4351, %v4355
        %v4360 = vadd.f32 %v4352, %v4356
        %v4361 = vadd.f32 %v4353, %v4357
        %s4362 = scalar_lea.vmem %s885, 62
        %v4363 = vld [vmem:[%s4362] sm:$0x3]
        %v4366 = vunpack.c.l.s4 1966171168
        %v4367 = vunpack.c.0.s8 %v4366
        %v4368 = vlaneseq
        %v4369 = vshrl.u32 %v4368, 7
        %v4370 = vsub.s32 %v4367, %v4369
        %v4371 = vrot.slane %v4363, %v4370
        %v4372 = vcombine.high %v4371, %v4371
        %v4374 = vunpack.c.l.s4 1966171168
        %v4375 = vunpack.c.0.s8 %v4374
        %v4376 = vlaneseq
        %v4377 = vshrl.u32 %v4376, 7
        %v4378 = vsub.s32 %v4375, %v4377
        %v4379 = vrot.slane %v4371, %v4378
        %v4381 = vunpack.c.l.s4 1966171168
        %v4382 = vunpack.c.0.s8 %v4381
        %v4383 = vlaneseq
        %v4384 = vshrl.u32 %v4383, 7
        %v4385 = vsub.s32 %v4382, %v4384
        %v4386 = vrot.slane %v4372, %v4385
        %s4387 = scalar_lea.vmem %s889, 62
        %v4388 = vld [vmem:[%s4387] sm:$0x3]
        %v4391 = vunpack.c.l.s4 1966171168
        %v4392 = vunpack.c.0.s8 %v4391
        %v4393 = vlaneseq
        %v4394 = vshrl.u32 %v4393, 7
        %v4395 = vsub.s32 %v4392, %v4394
        %v4396 = vrot.slane %v4388, %v4395
        %v4397 = vcombine.high %v4396, %v4396
        %v4399 = vunpack.c.l.s4 1966171168
        %v4400 = vunpack.c.0.s8 %v4399
        %v4401 = vlaneseq
        %v4402 = vshrl.u32 %v4401, 7
        %v4403 = vsub.s32 %v4400, %v4402
        %v4404 = vrot.slane %v4396, %v4403
        %v4406 = vunpack.c.l.s4 1966171168
        %v4407 = vunpack.c.0.s8 %v4406
        %v4408 = vlaneseq
        %v4409 = vshrl.u32 %v4408, 7
        %v4410 = vsub.s32 %v4407, %v4409
        %v4411 = vrot.slane %v4397, %v4410
        %s4412 = scalar_lea.vmem %s835, 248 [#allocation2]
        %v4413 = vld [vmem:[%s4412] sm:$0xf]
        %v4414 = vld [vmem:[%s4412 + $0x4] sm:$0xf]
        %v4415 = vunpack.c.l.bf16 %v4413
        %v4416 = vunpack.c.l.bf16 %v4414
        %s4417 = scalar_lea.vmem %s842, 248 [#allocation3]
        %v4418 = vld [vmem:[%s4417] sm:$0xf]
        %v4419 = vld [vmem:[%s4417 + $0x4] sm:$0xf]
        %v4420 = vunpack.c.l.bf16 %v4418
        %v4421 = vunpack.c.l.bf16 %v4419
        %v4422 = vlaneseq
        %v4423 = vshrl.u32 %v4422, 7
        %v4424 = vsub.s32 0, %v4423
        %v4425 = vrot.slane %v4379, %v4424
        %v4426 = vlaneseq
        %v4427 = vshrl.u32 %v4426, 7
        %v4428 = vsub.s32 0, %v4427
        %v4429 = vrot.slane %v4386, %v4428
        %v4432 = vmul.f32 %v4425, %v4415
        %v4433 = vmul.f32 %v4425, %v4416
        %v4434 = vmul.f32 %v4429, %v4415
        %v4435 = vmul.f32 %v4429, %v4416
        %v4436 = vadd.f32 %v4342, %v4432
        %v4437 = vadd.f32 %v4343, %v4433
        %v4438 = vadd.f32 %v4344, %v4434
        %v4439 = vadd.f32 %v4345, %v4435
        %v4440 = vlaneseq
        %v4441 = vshrl.u32 %v4440, 7
        %v4442 = vsub.s32 0, %v4441
        %v4443 = vrot.slane %v4404, %v4442
        %v4444 = vlaneseq
        %v4445 = vshrl.u32 %v4444, 7
        %v4446 = vsub.s32 0, %v4445
        %v4447 = vrot.slane %v4411, %v4446
        %v4450 = vmul.f32 %v4443, %v4420
        %v4451 = vmul.f32 %v4443, %v4421
        %v4452 = vmul.f32 %v4447, %v4420
        %v4453 = vmul.f32 %v4447, %v4421
        %v4454 = vsub.f32 %v4436, %v4450
        %v4455 = vsub.f32 %v4437, %v4451
        %v4456 = vsub.f32 %v4438, %v4452
        %v4457 = vsub.f32 %v4439, %v4453
        %v4458 = vmul.f32 %v4425, %v4420
        %v4459 = vmul.f32 %v4425, %v4421
        %v4460 = vmul.f32 %v4429, %v4420
        %v4461 = vmul.f32 %v4429, %v4421
        %v4462 = vadd.f32 %v4358, %v4458
        %v4463 = vadd.f32 %v4359, %v4459
        %v4464 = vadd.f32 %v4360, %v4460
        %v4465 = vadd.f32 %v4361, %v4461
        %v4466 = vmul.f32 %v4443, %v4415
        %v4467 = vmul.f32 %v4443, %v4416
        %v4468 = vmul.f32 %v4447, %v4415
        %v4469 = vmul.f32 %v4447, %v4416
        %v4470 = vadd.f32 %v4462, %v4466
        %v4471 = vadd.f32 %v4463, %v4467
        %v4472 = vadd.f32 %v4464, %v4468
        %v4473 = vadd.f32 %v4465, %v4469
        %4474 = vst [vmem:[%s875] sm:$0xff] %v4454
        %4475 = vst [vmem:[%s875 + $0x8] sm:$0xff] %v4455
        %4476 = vst [vmem:[%s875 + $0x10] sm:$0xff] %v4456
        %4477 = vst [vmem:[%s875 + $0x18] sm:$0xff] %v4457
        %4478 = vst [vmem:[%s881] sm:$0xff] %v4470
        %4479 = vst [vmem:[%s881 + $0x8] sm:$0xff] %v4471
        %4480 = vst [vmem:[%s881 + $0x10] sm:$0xff] %v4472
        %4481 = vst [vmem:[%s881 + $0x18] sm:$0xff] %v4473
        %s4482 = sand.u32 %s147, 1
        %s4483 = sand.u32 %s147, 1
        %s4484 = smul.addr %s4483, 32
        %s4485 = scalar_lea.vmem [#allocation4], %s4484
        %s4486 = sand.u32 %s175, 1
        %s4487 = sand.u32 %s175, 1
        %s4488 = smul.addr %s4487, 32
        %s4489 = scalar_lea.vmem [#allocation5], %s4488
        // Predicated region
        $region119: #{fno_forward.11} parent=109 // pred_check
          %p4490 = pneg %p157
        $region120: #{fno_forward.11} parent=109 // pred_check_branch
          %4492 = sbr.rel (%p4490) target = $region122
        $region121: #{fno_forward.11} parent=109 // pred_region
          %s4493 = smul.u32 2, %s21
          %s4494 = sadd.s32 %s22, %s4493
          %s4495 = smul.addr %s4494, 8
          %s4496 = scalar_lea.vmem %s4, %s4495
          // Predicated region
          $region123: #{fno_forward.11} parent=121 // pred_check
            _
          $region124: #{fno_forward.11} parent=121 // pred_check_branch
            %4498 = sbr.rel (0) target = $region126
          $region125: #{fno_forward.11} parent=121 // pred_region
            // Predicated region
            $region127: #{fno_forward.11} parent=125 // pred_check
              _
            $region128: #{fno_forward.11} parent=125 // pred_check_branch
              %4500 = sbr.rel (0) target = $region130
            $region129: #{fno_forward.11} parent=125 // pred_region
              // Predicated region
              $region142: #{fno_forward.11} parent=129 // pred_check
                _
              $region143: #{fno_forward.11} parent=129 // pred_check_branch
                %4521 = sbr.rel (0) target = $region145
              $region144: #{fno_forward.11} parent=129 // pred_region
                loop: start=0, step=1, limit=1
                $region146: #{fno_forward.11} parent=144 // loop_pre_header
                  _
                $region147: #{fno_forward.11} parent=144 // loop_header
                  %s4523 = sphi 0, %s4527
                  %p4524 = scmp.ge.s32.totalorder %s4523, 1
                  %s4528 = sphi %s4485, %s4485
                  %s4529 = sphi %s4496, %s4496
                $region148: #{fno_forward.11} parent=144 // loop_header_branch
                  %4526 = sbr.rel (%p4524) target = $region152
                $region149: #{fno_forward.11} parent=144 // loop_body
                  %v4530 = vld [vmem:[%s4528] sm:$0xff]
                  %4531 = vst [vmem:[%s4529] sm:$0xff] %v4530
                  %v4532 = vld [vmem:[%s4528 + $0x8] sm:$0xff]
                  %4533 = vst [vmem:[%s4529 + $0x8] sm:$0xff] %v4532
                  %v4534 = vld [vmem:[%s4528 + $0x10] sm:$0xff]
                  %4535 = vst [vmem:[%s4529 + $0x20] sm:$0xff] %v4534
                  %v4536 = vld [vmem:[%s4528 + $0x18] sm:$0xff]
                  %4537 = vst [vmem:[%s4529 + $0x28] sm:$0xff] %v4536
                $region150: #{fno_forward.11} parent=144 // loop_footer
                  %s4527 = sadd.s32 1, %s4523
                $region151: #{fno_forward.11} parent=144 // loop_footer_branch
                  %4522 = sbr.rel target = $region147
                $region152: #{fno_forward.11} parent=144 // loop_exit
                  _
              $region145: #{fno_forward.11} parent=129 // pred_fallthru
                _
              // Predicated region
              $region153: #{fno_forward.11} parent=129 // pred_check
                _
              $region154: #{fno_forward.11} parent=129 // pred_check_branch
                %4539 = sbr.rel target = $region156
              $region155: #{fno_forward.11} parent=129 // pred_region
                _
              $region156: #{fno_forward.11} parent=129 // pred_fallthru
                _
            $region130: #{fno_forward.11} parent=125 // pred_fallthru
              _
            // Predicated region
            $region131: #{fno_forward.11} parent=125 // pred_check
              _
            $region132: #{fno_forward.11} parent=125 // pred_check_branch
              %4502 = sbr.rel target = $region134
            $region133: #{fno_forward.11} parent=125 // pred_region
              loop: start=0, step=1, limit=1
              $region135: #{fno_forward.11} parent=133 // loop_pre_header
                _
              $region136: #{fno_forward.11} parent=133 // loop_header
                %s4505 = sphi 0, %s4509
                %p4506 = scmp.ge.s32.totalorder %s4505, 1
                %s4510 = sphi %s4485, %s4485
                %s4511 = sphi %s4496, %s4496
              $region137: #{fno_forward.11} parent=133 // loop_header_branch
                %4508 = sbr.rel (%p4506) target = $region141
              $region138: #{fno_forward.11} parent=133 // loop_body
                %v4512 = vld [vmem:[%s4510] sm:$0xff]
                %4513 = vst [vmem:[%s4511] sm:$0xff] %v4512
                %v4514 = vld [vmem:[%s4510 + $0x8] sm:$0xff]
                %4515 = vst [vmem:[%s4511 + $0x8] sm:$0xff] %v4514
                %v4516 = vld [vmem:[%s4510 + $0x10] sm:$0xff]
                %4517 = vst [vmem:[%s4511 + $0x20] sm:$0xff] %v4516
                %v4518 = vld [vmem:[%s4510 + $0x18] sm:$0xff]
                %4519 = vst [vmem:[%s4511 + $0x28] sm:$0xff] %v4518
              $region139: #{fno_forward.11} parent=133 // loop_footer
                %s4509 = sadd.s32 1, %s4505
              $region140: #{fno_forward.11} parent=133 // loop_footer_branch
                %4504 = sbr.rel target = $region136
              $region141: #{fno_forward.11} parent=133 // loop_exit
                _
            $region134: #{fno_forward.11} parent=125 // pred_fallthru
              _
          $region126: #{fno_forward.11} parent=121 // pred_fallthru
            _
          %4540 = vnop
        $region122: #{fno_forward.11} parent=109 // pred_fallthru
          _
        // Predicated region
        $region157: #{fno_forward.11} parent=109 // pred_check
          %p4541 = pneg %p185
        $region158: #{fno_forward.11} parent=109 // pred_check_branch
          %4543 = sbr.rel (%p4541) target = $region160
        $region159: #{fno_forward.11} parent=109 // pred_region
          %s4544 = smul.u32 2, %s21
          %s4545 = sadd.s32 %s22, %s4544
          %s4546 = smul.addr %s4545, 8
          %s4547 = scalar_lea.vmem %s5, %s4546
          // Predicated region
          $region161: #{fno_forward.11} parent=159 // pred_check
            _
          $region162: #{fno_forward.11} parent=159 // pred_check_branch
            %4549 = sbr.rel (0) target = $region164
          $region163: #{fno_forward.11} parent=159 // pred_region
            // Predicated region
            $region165: #{fno_forward.11} parent=163 // pred_check
              _
            $region166: #{fno_forward.11} parent=163 // pred_check_branch
              %4551 = sbr.rel (0) target = $region168
            $region167: #{fno_forward.11} parent=163 // pred_region
              // Predicated region
              $region180: #{fno_forward.11} parent=167 // pred_check
                _
              $region181: #{fno_forward.11} parent=167 // pred_check_branch
                %4572 = sbr.rel (0) target = $region183
              $region182: #{fno_forward.11} parent=167 // pred_region
                loop: start=0, step=1, limit=1
                $region184: #{fno_forward.11} parent=182 // loop_pre_header
                  _
                $region185: #{fno_forward.11} parent=182 // loop_header
                  %s4574 = sphi 0, %s4578
                  %p4575 = scmp.ge.s32.totalorder %s4574, 1
                  %s4579 = sphi %s4489, %s4489
                  %s4580 = sphi %s4547, %s4547
                $region186: #{fno_forward.11} parent=182 // loop_header_branch
                  %4577 = sbr.rel (%p4575) target = $region190
                $region187: #{fno_forward.11} parent=182 // loop_body
                  %v4581 = vld [vmem:[%s4579] sm:$0xff]
                  %4582 = vst [vmem:[%s4580] sm:$0xff] %v4581
                  %v4583 = vld [vmem:[%s4579 + $0x8] sm:$0xff]
                  %4584 = vst [vmem:[%s4580 + $0x8] sm:$0xff] %v4583
                  %v4585 = vld [vmem:[%s4579 + $0x10] sm:$0xff]
                  %4586 = vst [vmem:[%s4580 + $0x20] sm:$0xff] %v4585
                  %v4587 = vld [vmem:[%s4579 + $0x18] sm:$0xff]
                  %4588 = vst [vmem:[%s4580 + $0x28] sm:$0xff] %v4587
                $region188: #{fno_forward.11} parent=182 // loop_footer
                  %s4578 = sadd.s32 1, %s4574
                $region189: #{fno_forward.11} parent=182 // loop_footer_branch
                  %4573 = sbr.rel target = $region185
                $region190: #{fno_forward.11} parent=182 // loop_exit
                  _
              $region183: #{fno_forward.11} parent=167 // pred_fallthru
                _
              // Predicated region
              $region191: #{fno_forward.11} parent=167 // pred_check
                _
              $region192: #{fno_forward.11} parent=167 // pred_check_branch
                %4590 = sbr.rel target = $region194
              $region193: #{fno_forward.11} parent=167 // pred_region
                _
              $region194: #{fno_forward.11} parent=167 // pred_fallthru
                _
            $region168: #{fno_forward.11} parent=163 // pred_fallthru
              _
            // Predicated region
            $region169: #{fno_forward.11} parent=163 // pred_check
              _
            $region170: #{fno_forward.11} parent=163 // pred_check_branch
              %4553 = sbr.rel target = $region172
            $region171: #{fno_forward.11} parent=163 // pred_region
              loop: start=0, step=1, limit=1
              $region173: #{fno_forward.11} parent=171 // loop_pre_header
                _
              $region174: #{fno_forward.11} parent=171 // loop_header
                %s4556 = sphi 0, %s4560
                %p4557 = scmp.ge.s32.totalorder %s4556, 1
                %s4561 = sphi %s4489, %s4489
                %s4562 = sphi %s4547, %s4547
              $region175: #{fno_forward.11} parent=171 // loop_header_branch
                %4559 = sbr.rel (%p4557) target = $region179
              $region176: #{fno_forward.11} parent=171 // loop_body
                %v4563 = vld [vmem:[%s4561] sm:$0xff]
                %4564 = vst [vmem:[%s4562] sm:$0xff] %v4563
                %v4565 = vld [vmem:[%s4561 + $0x8] sm:$0xff]
                %4566 = vst [vmem:[%s4562 + $0x8] sm:$0xff] %v4565
                %v4567 = vld [vmem:[%s4561 + $0x10] sm:$0xff]
                %4568 = vst [vmem:[%s4562 + $0x20] sm:$0xff] %v4567
                %v4569 = vld [vmem:[%s4561 + $0x18] sm:$0xff]
                %4570 = vst [vmem:[%s4562 + $0x28] sm:$0xff] %v4569
              $region177: #{fno_forward.11} parent=171 // loop_footer
                %s4560 = sadd.s32 1, %s4556
              $region178: #{fno_forward.11} parent=171 // loop_footer_branch
                %4555 = sbr.rel target = $region174
              $region179: #{fno_forward.11} parent=171 // loop_exit
                _
            $region172: #{fno_forward.11} parent=163 // pred_fallthru
              _
          $region164: #{fno_forward.11} parent=159 // pred_fallthru
            _
          %4591 = vnop
        $region160: #{fno_forward.11} parent=109 // pred_fallthru
          _
      $region110: #{fno_forward.11} parent=5 // pred_fallthru
        _
      %p4592 = scmp.le.s32.totalorder 2, %s12
      // Predicated region
      $region195: #{fno_forward.11} parent=5 // pred_check
        %p4593 = pneg %p4592
      $region196: #{fno_forward.11} parent=5 // pred_check_branch
        %4595 = sbr.rel (%p4593) target = $region198
      $region197: #{fno_forward.11} parent=5 // pred_region
        %s4596 = ssub.s32 %s12, 2
        // Predicated region
        $region199: #{fno_forward.11} parent=197 // pred_check
          %p4597 = pneg %p163
        $region200: #{fno_forward.11} parent=197 // pred_check_branch
          %4599 = sbr.rel (%p4597) target = $region202
        $region201: #{fno_forward.11} parent=197 // pred_region
          %s4600 = sand.u32 %s148, 1
          %s4601 = sand.u32 %s148, 1
          %s4602 = smul.addr %s4601, 32
          %s4603 = scalar_lea.vmem [#allocation4], %s4602
        $region202: #{fno_forward.11} parent=197 // pred_fallthru
          _
        // Predicated region
        $region203: #{fno_forward.11} parent=197 // pred_check
          %p4604 = pneg %p191
        $region204: #{fno_forward.11} parent=197 // pred_check_branch
          %4606 = sbr.rel (%p4604) target = $region206
        $region205: #{fno_forward.11} parent=197 // pred_region
          %s4607 = sand.u32 %s176, 1
          %s4608 = sand.u32 %s176, 1
          %s4609 = smul.addr %s4608, 32
          %s4610 = scalar_lea.vmem [#allocation5], %s4609
        $region206: #{fno_forward.11} parent=197 // pred_fallthru
          _
      $region198: #{fno_forward.11} parent=5 // pred_fallthru
        _
    $region6: #{fno_forward.11} parent=1 // loop_footer
      %s16 = sadd.s32 1, %s12
    $region7: #{fno_forward.11} parent=1 // loop_footer_branch
      %11 = sbr.rel target = $region3
    $region8: #{fno_forward.11} parent=1 // loop_exit
      _

// kernel: reverse.8
$region0: #{reverse.8}
  #allocation0 [shape = 's32[1]{0}', space=sflag, size = 0x4, scoped, tag = 'scoped memory for reverse.8']
  %s0 = inlined_call_operand.vmem [shape: f32[32,2,16,7], index: 0, kind: input, shape index: {}]
  %s1 = inlined_call_operand.vmem [shape: f32[32,2,16,7], index: 1, kind: output, shape index: {}]
  %s2 = scalar_lea.vmem %s0, 96
  %v3 = vld [vmem:[%s2] sm:$0xff]
  %4 = vst [vmem:[%s1] sm:$0xff] %v3
  %s5 = scalar_lea.vmem %s0, 208
  %v6 = vld [vmem:[%s5] sm:$0xff]
  %s7 = scalar_lea.vmem %s1, 112
  %8 = vst [vmem:[%s7] sm:$0xff] %v6
  %s9 = scalar_lea.vmem %s0, 80
  %v10 = vld [vmem:[%s9] sm:$0xff]
  %s11 = scalar_lea.vmem %s1, 16
  %12 = vst [vmem:[%s11] sm:$0xff] %v10
  %s13 = scalar_lea.vmem %s0, 192
  %v14 = vld [vmem:[%s13] sm:$0xff]
  %s15 = scalar_lea.vmem %s1, 128
  %16 = vst [vmem:[%s15] sm:$0xff] %v14
  %s17 = scalar_lea.vmem %s0, 64
  %v18 = vld [vmem:[%s17] sm:$0xff]
  %s19 = scalar_lea.vmem %s1, 32
  %20 = vst [vmem:[%s19] sm:$0xff] %v18
  %s21 = scalar_lea.vmem %s0, 176
  %v22 = vld [vmem:[%s21] sm:$0xff]
  %s23 = scalar_lea.vmem %s1, 144
  %24 = vst [vmem:[%s23] sm:$0xff] %v22
  %s25 = scalar_lea.vmem %s0, 48
  %v26 = vld [vmem:[%s25] sm:$0xff]
  %s27 = scalar_lea.vmem %s1, 48
  %28 = vst [vmem:[%s27] sm:$0xff] %v26
  %s29 = scalar_lea.vmem %s0, 160
  %v30 = vld [vmem:[%s29] sm:$0xff]
  %s31 = scalar_lea.vmem %s1, 160
  %32 = vst [vmem:[%s31] sm:$0xff] %v30
  %s33 = scalar_lea.vmem %s0, 32
  %v34 = vld [vmem:[%s33] sm:$0xff]
  %s35 = scalar_lea.vmem %s1, 64
  %36 = vst [vmem:[%s35] sm:$0xff] %v34
  %s37 = scalar_lea.vmem %s0, 144
  %v38 = vld [vmem:[%s37] sm:$0xff]
  %s39 = scalar_lea.vmem %s1, 176
  %40 = vst [vmem:[%s39] sm:$0xff] %v38
  %s41 = scalar_lea.vmem %s0, 16
  %v42 = vld [vmem:[%s41] sm:$0xff]
  %s43 = scalar_lea.vmem %s1, 80
  %44 = vst [vmem:[%s43] sm:$0xff] %v42
  %s45 = scalar_lea.vmem %s0, 128
  %v46 = vld [vmem:[%s45] sm:$0xff]
  %s47 = scalar_lea.vmem %s1, 192
  %48 = vst [vmem:[%s47] sm:$0xff] %v46
  %v49 = vld [vmem:[%s0] sm:$0xff]
  %s50 = scalar_lea.vmem %s1, 96
  %51 = vst [vmem:[%s50] sm:$0xff] %v49
  %s52 = scalar_lea.vmem %s0, 112
  %v53 = vld [vmem:[%s52] sm:$0xff]
  %s54 = scalar_lea.vmem %s1, 208
  %55 = vst [vmem:[%s54] sm:$0xff] %v53
  %s56 = scalar_lea.vmem %s0, 104
  %v57 = vld [vmem:[%s56] sm:$0xff]
  %s58 = scalar_lea.vmem %s1, 8
  %59 = vst [vmem:[%s58] sm:$0xff] %v57
  %s60 = scalar_lea.vmem %s0, 216
  %v61 = vld [vmem:[%s60] sm:$0xff]
  %s62 = scalar_lea.vmem %s1, 120
  %63 = vst [vmem:[%s62] sm:$0xff] %v61
  %s64 = scalar_lea.vmem %s0, 88
  %v65 = vld [vmem:[%s64] sm:$0xff]
  %s66 = scalar_lea.vmem %s1, 24
  %67 = vst [vmem:[%s66] sm:$0xff] %v65
  %s68 = scalar_lea.vmem %s0, 200
  %v69 = vld [vmem:[%s68] sm:$0xff]
  %s70 = scalar_lea.vmem %s1, 136
  %71 = vst [vmem:[%s70] sm:$0xff] %v69
  %s72 = scalar_lea.vmem %s0, 72
  %v73 = vld [vmem:[%s72] sm:$0xff]
  %s74 = scalar_lea.vmem %s1, 40
  %75 = vst [vmem:[%s74] sm:$0xff] %v73
  %s76 = scalar_lea.vmem %s0, 184
  %v77 = vld [vmem:[%s76] sm:$0xff]
  %s78 = scalar_lea.vmem %s1, 152
  %79 = vst [vmem:[%s78] sm:$0xff] %v77
  %s80 = scalar_lea.vmem %s0, 56
  %v81 = vld [vmem:[%s80] sm:$0xff]
  %s82 = scalar_lea.vmem %s1, 56
  %83 = vst [vmem:[%s82] sm:$0xff] %v81
  %s84 = scalar_lea.vmem %s0, 168
  %v85 = vld [vmem:[%s84] sm:$0xff]
  %s86 = scalar_lea.vmem %s1, 168
  %87 = vst [vmem:[%s86] sm:$0xff] %v85
  %s88 = scalar_lea.vmem %s0, 40
  %v89 = vld [vmem:[%s88] sm:$0xff]
  %s90 = scalar_lea.vmem %s1, 72
  %91 = vst [vmem:[%s90] sm:$0xff] %v89
  %s92 = scalar_lea.vmem %s0, 152
  %v93 = vld [vmem:[%s92] sm:$0xff]
  %s94 = scalar_lea.vmem %s1, 184
  %95 = vst [vmem:[%s94] sm:$0xff] %v93
  %s96 = scalar_lea.vmem %s0, 24
  %v97 = vld [vmem:[%s96] sm:$0xff]
  %s98 = scalar_lea.vmem %s1, 88
  %99 = vst [vmem:[%s98] sm:$0xff] %v97
  %s100 = scalar_lea.vmem %s0, 136
  %v101 = vld [vmem:[%s100] sm:$0xff]
  %s102 = scalar_lea.vmem %s1, 200
  %103 = vst [vmem:[%s102] sm:$0xff] %v101
  %s104 = scalar_lea.vmem %s0, 8
  %v105 = vld [vmem:[%s104] sm:$0xff]
  %s106 = scalar_lea.vmem %s1, 104
  %107 = vst [vmem:[%s106] sm:$0xff] %v105
  %s108 = scalar_lea.vmem %s0, 120
  %v109 = vld [vmem:[%s108] sm:$0xff]
  %s110 = scalar_lea.vmem %s1, 216
  %111 = vst [vmem:[%s110] sm:$0xff] %v109

// kernel: fno_forward.12
$region0: #{fno_forward.12}
  #allocation0 [shape = 'u32[]', space=smem, size = 0x4, offset = 0x4, fixed_abs, tag = 'smem constant byte address 0x4 - core index']
  #allocation1 [shape = 'u32[144,128]{1,0:T(1,128)}', space=vmem, size = 0x12000, scoped, tag = 'internal scratch']
  %s0 = inlined_call_operand.vmem [shape: bf16[32,512], index: 0, kind: input, shape index: {}]
  %s1 = inlined_call_operand.vmem [shape: f32[32,512], index: 1, kind: input, shape index: {}]
  %s2 = inlined_call_operand.vmem [shape: bf16[32,32], index: 2, kind: input, shape index: {}]
  %s3 = inlined_call_operand.vmem [shape: f32[32,1], index: 3, kind: input, shape index: {}]
  %s4 = inlined_call_operand.vmem [shape: bf16[32,512], index: 4, kind: output, shape index: {}]
  %s5 = sld [smem:[#allocation0]]
  $region26: #{fno_forward.12} parent=0
    _
  %s7 = ssub.s32 1, %s5
  %s8 = scalar_select 0, %s7, %s5
  // Predicated region
  $region2: #{fno_forward.12} parent=0 // pred_check
    _
  $region3: #{fno_forward.12} parent=0 // pred_check_branch
    %10 = sbr.rel (0) target = $region5
  $region4: #{fno_forward.12} parent=0 // pred_region
    _
  $region5: #{fno_forward.12} parent=0 // pred_fallthru
    _
  // Predicated region
  $region6: #{fno_forward.12} parent=0 // pred_check
    _
  $region7: #{fno_forward.12} parent=0 // pred_check_branch
    %12 = sbr.rel (0) target = $region9
  $region8: #{fno_forward.12} parent=0 // pred_region
    _
  $region9: #{fno_forward.12} parent=0 // pred_fallthru
    _
  // Predicated region
  $region10: #{fno_forward.12} parent=0 // pred_check
    _
  $region11: #{fno_forward.12} parent=0 // pred_check_branch
    %14 = sbr.rel (0) target = $region13
  $region12: #{fno_forward.12} parent=0 // pred_region
    _
  $region13: #{fno_forward.12} parent=0 // pred_fallthru
    _
  // Predicated region
  $region14: #{fno_forward.12} parent=0 // pred_check
    _
  $region15: #{fno_forward.12} parent=0 // pred_check_branch
    %16 = sbr.rel (0) target = $region17
  $region16: #{fno_forward.12} parent=0 // pred_region
    _
  $region17: #{fno_forward.12} parent=0 // pred_fallthru
    _
  %v18 = vld [vmem:[%s2] sm:$0xf]
  %v19 = vld [vmem:[%s2 + $0x4] sm:$0xf]
  %v20 = vld [vmem:[%s2 + $0x8] sm:$0xf]
  %v21 = vld [vmem:[%s2 + $0xc] sm:$0xf]
  %v22 = vld [vmem:[%s0] sm:$0xff]
  %v23 = vld [vmem:[%s0 + $0x8] sm:$0xff]
  %v24 = vld [vmem:[%s0 + $0x10] sm:$0xff]
  %v25 = vld [vmem:[%s0 + $0x18] sm:$0xff]
  %v26 = vld [vmem:[%s0 + $0x20] sm:$0xff]
  %v27 = vld [vmem:[%s0 + $0x28] sm:$0xff]
  %v28 = vld [vmem:[%s0 + $0x30] sm:$0xff]
  %v29 = vld [vmem:[%s0 + $0x38] sm:$0xff]
  %v34 = vunpack.c.l.b16 %v18
  %v35 = vunpack.c.l.b16 %v19
  %v36 = vunpack.c.l.b16 %v20
  %v37 = vunpack.c.l.b16 %v21
  %v38 = vpack.c.b16 %v35, %v34
  %v39 = vpack.c.b16 %v37, %v36
  %v48 = vunpack.c.l.b16 %v22
  %v49 = vunpack.c.h.b16 %v22
  %v50 = vunpack.c.l.b16 %v23
  %v51 = vunpack.c.h.b16 %v23
  %v52 = vunpack.c.l.b16 %v24
  %v53 = vunpack.c.h.b16 %v24
  %v54 = vunpack.c.l.b16 %v25
  %v55 = vunpack.c.h.b16 %v25
  %v56 = vunpack.c.l.b16 %v26
  %v57 = vunpack.c.h.b16 %v26
  %v58 = vunpack.c.l.b16 %v27
  %v59 = vunpack.c.h.b16 %v27
  %v60 = vunpack.c.l.b16 %v28
  %v61 = vunpack.c.h.b16 %v28
  %v62 = vunpack.c.l.b16 %v29
  %v63 = vunpack.c.h.b16 %v29
  %v64 = vpack.c.b16 %v52, %v48
  %v65 = vpack.c.b16 %v53, %v49
  %v66 = vpack.c.b16 %v54, %v50
  %v67 = vpack.c.b16 %v55, %v51
  %v68 = vpack.c.b16 %v60, %v56
  %v69 = vpack.c.b16 %v61, %v57
  %v70 = vpack.c.b16 %v62, %v58
  %v71 = vpack.c.b16 %v63, %v59
  %vm80 = vcmask 261120
  %v82 = vsel %vm80, %v38, 0
  %v85 = vsel %vm80, %v39, 0
  %87 = vmatprep.subr.bf16.mxu0 %v65
  %88 = vmatpush1.bf16.msra.mxu0 %v64
  %89 = vmatprep.subr.bf16.mxu0 %v69
  %90 = vmatpush1.bf16.msra.mxu0 %v68
  %91 = vmatprep.subr.bf16.mxu0 0
  %92 = vmatpush1.bf16.msra.mxu0 0
  %93 = vmatprep.subr.bf16.mxu0 0
  %94 = vmatpush1.bf16.msra.mxu0 0
  %95 = vmatprep.subr.bf16.mxu0 0
  %96 = vmatpush1.bf16.msra.mxu0 0
  %97 = vmatprep.subr.bf16.mxu0 0
  %98 = vmatpush1.bf16.msra.mxu0 0
  %99 = vmatprep.subr.bf16.mxu0 0
  %100 = vmatpush1.bf16.msra.mxu0 0
  %101 = vmatprep.subr.bf16.mxu0 0
  %102 = vmatpush1.bf16.msra.mxu0 0
  %103 = vmatprep.subr.bf16.mxu0 0
  %104 = vmatpush1.bf16.msra.mxu0 0
  %105 = vmatprep.subr.bf16.mxu0 0
  %106 = vmatpush1.bf16.msra.mxu0 0
  %107 = vmatprep.subr.bf16.mxu0 0
  %108 = vmatpush1.bf16.msra.mxu0 0
  %109 = vmatprep.subr.bf16.mxu0 0
  %110 = vmatpush1.bf16.msra.mxu0 0
  %111 = vmatprep.subr.bf16.mxu0 0
  %112 = vmatpush1.bf16.msra.mxu0 0
  %113 = vmatprep.subr.bf16.mxu0 0
  %114 = vmatpush1.bf16.msra.mxu0 0
  %115 = vmatprep.subr.bf16.mxu0 0
  %116 = vmatpush1.bf16.msra.mxu0 0
  %117 = vmatprep.subr.bf16.mxu0 0
  %118 = vmatpush1.bf16.msra.mxu0 0
  %119 = vmatprep.mubr.bf16.mxu0 0
  %120 = vmatmul.mubr.bf16.gmra.mrb[0].mxu0 %v82
  %v121 = vpop.f32.mrb[0].mxu0
  %v122 = vadd.f32 0.0, %v121
  %v123 = vpop.f32.mrb[0].mxu0
  %v124 = vadd.f32 0.0, %v123
  %v125 = vpop.f32.mrb[0].mxu0
  %v126 = vadd.f32 0.0, %v125
  %v127 = vpop.f32.mrb[0].mxu0
  %v128 = vadd.f32 0.0, %v127
  %129 = vmatprep.mubr.bf16.mxu0 0
  %130 = vmatmul.mubr.bf16.gmra.mrb[0].mxu0 %v85
  %v131 = vpop.f32.mrb[0].mxu0
  %v132 = vadd.f32 0.0, %v131
  %v133 = vpop.f32.mrb[0].mxu0
  %v134 = vadd.f32 0.0, %v133
  %v135 = vpop.f32.mrb[0].mxu0
  %v136 = vadd.f32 0.0, %v135
  %v137 = vpop.f32.mrb[0].mxu0
  %v138 = vadd.f32 0.0, %v137
  %139 = vdwg.mxu0
  %140 = vmatprep.subr.bf16.mxu0 %v67
  %141 = vmatpush1.bf16.msra.mxu0 %v66
  %142 = vmatprep.subr.bf16.mxu0 %v71
  %143 = vmatpush1.bf16.msra.mxu0 %v70
  %144 = vmatprep.subr.bf16.mxu0 0
  %145 = vmatpush1.bf16.msra.mxu0 0
  %146 = vmatprep.subr.bf16.mxu0 0
  %147 = vmatpush1.bf16.msra.mxu0 0
  %148 = vmatprep.subr.bf16.mxu0 0
  %149 = vmatpush1.bf16.msra.mxu0 0
  %150 = vmatprep.subr.bf16.mxu0 0
  %151 = vmatpush1.bf16.msra.mxu0 0
  %152 = vmatprep.subr.bf16.mxu0 0
  %153 = vmatpush1.bf16.msra.mxu0 0
  %154 = vmatprep.subr.bf16.mxu0 0
  %155 = vmatpush1.bf16.msra.mxu0 0
  %156 = vmatprep.subr.bf16.mxu0 0
  %157 = vmatpush1.bf16.msra.mxu0 0
  %158 = vmatprep.subr.bf16.mxu0 0
  %159 = vmatpush1.bf16.msra.mxu0 0
  %160 = vmatprep.subr.bf16.mxu0 0
  %161 = vmatpush1.bf16.msra.mxu0 0
  %162 = vmatprep.subr.bf16.mxu0 0
  %163 = vmatpush1.bf16.msra.mxu0 0
  %164 = vmatprep.subr.bf16.mxu0 0
  %165 = vmatpush1.bf16.msra.mxu0 0
  %166 = vmatprep.subr.bf16.mxu0 0
  %167 = vmatpush1.bf16.msra.mxu0 0
  %168 = vmatprep.subr.bf16.mxu0 0
  %169 = vmatpush1.bf16.msra.mxu0 0
  %170 = vmatprep.subr.bf16.mxu0 0
  %171 = vmatpush1.bf16.msra.mxu0 0
  %172 = vmatprep.mubr.bf16.mxu0 0
  %173 = vmatmul.mubr.bf16.gmra.mrb[0].mxu0 %v82
  %v174 = vpop.f32.mrb[0].mxu0
  %v175 = vadd.f32 0.0, %v174
  %v176 = vpop.f32.mrb[0].mxu0
  %v177 = vadd.f32 0.0, %v176
  %v178 = vpop.f32.mrb[0].mxu0
  %v179 = vadd.f32 0.0, %v178
  %v180 = vpop.f32.mrb[0].mxu0
  %v181 = vadd.f32 0.0, %v180
  %182 = vmatprep.mubr.bf16.mxu0 0
  %183 = vmatmul.mubr.bf16.gmra.mrb[0].mxu0 %v85
  %v184 = vpop.f32.mrb[0].mxu0
  %v185 = vadd.f32 0.0, %v184
  %v186 = vpop.f32.mrb[0].mxu0
  %v187 = vadd.f32 0.0, %v186
  %v188 = vpop.f32.mrb[0].mxu0
  %v189 = vadd.f32 0.0, %v188
  %v190 = vpop.f32.mrb[0].mxu0
  %v191 = vadd.f32 0.0, %v190
  %192 = vdwg.mxu0
  %v193 = vld [vmem:[%s1] sm:$0xff]
  %v194 = vld [vmem:[%s1 + $0x8] sm:$0xff]
  %v195 = vld [vmem:[%s1 + $0x10] sm:$0xff]
  %v196 = vld [vmem:[%s1 + $0x18] sm:$0xff]
  %v197 = vld [vmem:[%s1 + $0x20] sm:$0xff]
  %v198 = vld [vmem:[%s1 + $0x28] sm:$0xff]
  %v199 = vld [vmem:[%s1 + $0x30] sm:$0xff]
  %v200 = vld [vmem:[%s1 + $0x38] sm:$0xff]
  %v201 = vld [vmem:[%s1 + $0x40] sm:$0xff]
  %v202 = vld [vmem:[%s1 + $0x48] sm:$0xff]
  %v203 = vld [vmem:[%s1 + $0x50] sm:$0xff]
  %v204 = vld [vmem:[%s1 + $0x58] sm:$0xff]
  %v205 = vld [vmem:[%s1 + $0x60] sm:$0xff]
  %v206 = vld [vmem:[%s1 + $0x68] sm:$0xff]
  %v207 = vld [vmem:[%s1 + $0x70] sm:$0xff]
  %v208 = vld [vmem:[%s1 + $0x78] sm:$0xff]
  %v209 = vld [vmem:[%s3] sm:$0xff]
  %v210 = vld [vmem:[%s3 + $0x8] sm:$0xff]
  %v211 = vld [vmem:[%s3 + $0x10] sm:$0xff]
  %v212 = vld [vmem:[%s3 + $0x18] sm:$0xff]
  %214 = vset.pattern.permute.xlu0 0
  %215 = vperm.xlu0 %214, %v209
  %v216 = vpop.permute.xlu0 %215
  %219 = vset.pattern.permute.xlu0 0
  %220 = vperm.xlu0 %219, %v210
  %v221 = vpop.permute.xlu0 %220
  %224 = vset.pattern.permute.xlu0 0
  %225 = vperm.xlu0 %224, %v211
  %v226 = vpop.permute.xlu0 %225
  %229 = vset.pattern.permute.xlu0 0
  %230 = vperm.xlu0 %229, %v212
  %v231 = vpop.permute.xlu0 %230
  %v233 = vadd.f32 %v193, %v216
  %v234 = vadd.f32 %v194, %v216
  %v235 = vadd.f32 %v195, %v216
  %v236 = vadd.f32 %v196, %v216
  %v237 = vadd.f32 %v197, %v221
  %v238 = vadd.f32 %v198, %v221
  %v239 = vadd.f32 %v199, %v221
  %v240 = vadd.f32 %v200, %v221
  %v241 = vadd.f32 %v201, %v226
  %v242 = vadd.f32 %v202, %v226
  %v243 = vadd.f32 %v203, %v226
  %v244 = vadd.f32 %v204, %v226
  %v245 = vadd.f32 %v205, %v231
  %v246 = vadd.f32 %v206, %v231
  %v247 = vadd.f32 %v207, %v231
  %v248 = vadd.f32 %v208, %v231
  %v249 = vadd.f32 %v233, %v122
  %v250 = vadd.f32 %v234, %v124
  %v251 = vadd.f32 %v235, %v175
  %v252 = vadd.f32 %v236, %v177
  %v253 = vadd.f32 %v237, %v126
  %v254 = vadd.f32 %v238, %v128
  %v255 = vadd.f32 %v239, %v179
  %v256 = vadd.f32 %v240, %v181
  %v257 = vadd.f32 %v241, %v132
  %v258 = vadd.f32 %v242, %v134
  %v259 = vadd.f32 %v243, %v185
  %v260 = vadd.f32 %v244, %v187
  %v261 = vadd.f32 %v245, %v136
  %v262 = vadd.f32 %v246, %v138
  %v263 = vadd.f32 %v247, %v189
  %v264 = vadd.f32 %v248, %v191
  %v265 = vmul.f32 %v249, 0.5
  %v266 = vmul.f32 %v250, 0.5
  %v267 = vmul.f32 %v251, 0.5
  %v268 = vmul.f32 %v252, 0.5
  %v269 = vmul.f32 %v253, 0.5
  %v270 = vmul.f32 %v254, 0.5
  %v271 = vmul.f32 %v255, 0.5
  %v272 = vmul.f32 %v256, 0.5
  %v273 = vmul.f32 %v257, 0.5
  %v274 = vmul.f32 %v258, 0.5
  %v275 = vmul.f32 %v259, 0.5
  %v276 = vmul.f32 %v260, 0.5
  %v277 = vmul.f32 %v261, 0.5
  %v278 = vmul.f32 %v262, 0.5
  %v279 = vmul.f32 %v263, 0.5
  %v280 = vmul.f32 %v264, 0.5
  %v281 = vmul.f32 %v249, 0.044715
  %v282 = vmul.f32 %v250, 0.044715
  %v283 = vmul.f32 %v251, 0.044715
  %v284 = vmul.f32 %v252, 0.044715
  %v285 = vmul.f32 %v253, 0.044715
  %v286 = vmul.f32 %v254, 0.044715
  %v287 = vmul.f32 %v255, 0.044715
  %v288 = vmul.f32 %v256, 0.044715
  %v289 = vmul.f32 %v257, 0.044715
  %v290 = vmul.f32 %v258, 0.044715
  %v291 = vmul.f32 %v259, 0.044715
  %v292 = vmul.f32 %v260, 0.044715
  %v293 = vmul.f32 %v261, 0.044715
  %v294 = vmul.f32 %v262, 0.044715
  %v295 = vmul.f32 %v263, 0.044715
  %v296 = vmul.f32 %v264, 0.044715
  %v297 = vmul.f32 %v281, %v249
  %v298 = vmul.f32 %v282, %v250
  %v299 = vmul.f32 %v283, %v251
  %v300 = vmul.f32 %v284, %v252
  %v301 = vmul.f32 %v285, %v253
  %v302 = vmul.f32 %v286, %v254
  %v303 = vmul.f32 %v287, %v255
  %v304 = vmul.f32 %v288, %v256
  %v305 = vmul.f32 %v289, %v257
  %v306 = vmul.f32 %v290, %v258
  %v307 = vmul.f32 %v291, %v259
  %v308 = vmul.f32 %v292, %v260
  %v309 = vmul.f32 %v293, %v261
  %v310 = vmul.f32 %v294, %v262
  %v311 = vmul.f32 %v295, %v263
  %v312 = vmul.f32 %v296, %v264
  %v313 = vmul.f32 %v297, %v249
  %v314 = vmul.f32 %v298, %v250
  %v315 = vmul.f32 %v299, %v251
  %v316 = vmul.f32 %v300, %v252
  %v317 = vmul.f32 %v301, %v253
  %v318 = vmul.f32 %v302, %v254
  %v319 = vmul.f32 %v303, %v255
  %v320 = vmul.f32 %v304, %v256
  %v321 = vmul.f32 %v305, %v257
  %v322 = vmul.f32 %v306, %v258
  %v323 = vmul.f32 %v307, %v259
  %v324 = vmul.f32 %v308, %v260
  %v325 = vmul.f32 %v309, %v261
  %v326 = vmul.f32 %v310, %v262
  %v327 = vmul.f32 %v311, %v263
  %v328 = vmul.f32 %v312, %v264
  %v329 = vadd.f32 %v249, %v313
  %v330 = vadd.f32 %v250, %v314
  %v331 = vadd.f32 %v251, %v315
  %v332 = vadd.f32 %v252, %v316
  %v333 = vadd.f32 %v253, %v317
  %v334 = vadd.f32 %v254, %v318
  %v335 = vadd.f32 %v255, %v319
  %v336 = vadd.f32 %v256, %v320
  %v337 = vadd.f32 %v257, %v321
  %v338 = vadd.f32 %v258, %v322
  %v339 = vadd.f32 %v259, %v323
  %v340 = vadd.f32 %v260, %v324
  %v341 = vadd.f32 %v261, %v325
  %v342 = vadd.f32 %v262, %v326
  %v343 = vadd.f32 %v263, %v327
  %v344 = vadd.f32 %v264, %v328
  %v345 = vmul.f32 %v329, 0.7978846
  %v346 = vmul.f32 %v330, 0.7978846
  %v347 = vmul.f32 %v331, 0.7978846
  %v348 = vmul.f32 %v332, 0.7978846
  %v349 = vmul.f32 %v333, 0.7978846
  %v350 = vmul.f32 %v334, 0.7978846
  %v351 = vmul.f32 %v335, 0.7978846
  %v352 = vmul.f32 %v336, 0.7978846
  %v353 = vmul.f32 %v337, 0.7978846
  %v354 = vmul.f32 %v338, 0.7978846
  %v355 = vmul.f32 %v339, 0.7978846
  %v356 = vmul.f32 %v340, 0.7978846
  %v357 = vmul.f32 %v341, 0.7978846
  %v358 = vmul.f32 %v342, 0.7978846
  %v359 = vmul.f32 %v343, 0.7978846
  %v360 = vmul.f32 %v344, 0.7978846
  %v361 = vtanh.pop %v345
  %v362 = vtanh.pop %v346
  %v363 = vtanh.pop %v347
  %v364 = vtanh.pop %v348
  %v365 = vtanh.pop %v349
  %v366 = vtanh.pop %v350
  %v367 = vtanh.pop %v351
  %v368 = vtanh.pop %v352
  %v369 = vtanh.pop %v353
  %v370 = vtanh.pop %v354
  %v371 = vtanh.pop %v355
  %v372 = vtanh.pop %v356
  %v373 = vtanh.pop %v357
  %v374 = vtanh.pop %v358
  %v375 = vtanh.pop %v359
  %v376 = vtanh.pop %v360
  %v377 = vadd.f32 %v361, 1.0
  %v378 = vadd.f32 %v362, 1.0
  %v379 = vadd.f32 %v363, 1.0
  %v380 = vadd.f32 %v364, 1.0
  %v381 = vadd.f32 %v365, 1.0
  %v382 = vadd.f32 %v366, 1.0
  %v383 = vadd.f32 %v367, 1.0
  %v384 = vadd.f32 %v368, 1.0
  %v385 = vadd.f32 %v369, 1.0
  %v386 = vadd.f32 %v370, 1.0
  %v387 = vadd.f32 %v371, 1.0
  %v388 = vadd.f32 %v372, 1.0
  %v389 = vadd.f32 %v373, 1.0
  %v390 = vadd.f32 %v374, 1.0
  %v391 = vadd.f32 %v375, 1.0
  %v392 = vadd.f32 %v376, 1.0
  %v393 = vmul.f32 %v265, %v377
  %v394 = vmul.f32 %v266, %v378
  %v395 = vmul.f32 %v267, %v379
  %v396 = vmul.f32 %v268, %v380
  %v397 = vmul.f32 %v269, %v381
  %v398 = vmul.f32 %v270, %v382
  %v399 = vmul.f32 %v271, %v383
  %v400 = vmul.f32 %v272, %v384
  %v401 = vmul.f32 %v273, %v385
  %v402 = vmul.f32 %v274, %v386
  %v403 = vmul.f32 %v275, %v387
  %v404 = vmul.f32 %v276, %v388
  %v405 = vmul.f32 %v277, %v389
  %v406 = vmul.f32 %v278, %v390
  %v407 = vmul.f32 %v279, %v391
  %v408 = vmul.f32 %v280, %v392
  %v409 = vpack.c.bf16 %v397, %v393
  %v410 = vpack.c.bf16 %v398, %v394
  %v411 = vpack.c.bf16 %v399, %v395
  %v412 = vpack.c.bf16 %v400, %v396
  %v413 = vpack.c.bf16 %v405, %v401
  %v414 = vpack.c.bf16 %v406, %v402
  %v415 = vpack.c.bf16 %v407, %v403
  %v416 = vpack.c.bf16 %v408, %v404
  %v425 = vunpack.c.l.b16 %v409
  %v426 = vunpack.c.l.b16 %v410
  %v427 = vunpack.c.l.b16 %v411
  %v428 = vunpack.c.l.b16 %v412
  %v429 = vunpack.c.h.b16 %v409
  %v430 = vunpack.c.h.b16 %v410
  %v431 = vunpack.c.h.b16 %v411
  %v432 = vunpack.c.h.b16 %v412
  %v433 = vunpack.c.l.b16 %v413
  %v434 = vunpack.c.l.b16 %v414
  %v435 = vunpack.c.l.b16 %v415
  %v436 = vunpack.c.l.b16 %v416
  %v437 = vunpack.c.h.b16 %v413
  %v438 = vunpack.c.h.b16 %v414
  %v439 = vunpack.c.h.b16 %v415
  %v440 = vunpack.c.h.b16 %v416
  %v441 = vpack.c.b16 %v426, %v425
  %v442 = vpack.c.b16 %v428, %v427
  %v443 = vpack.c.b16 %v430, %v429
  %v444 = vpack.c.b16 %v432, %v431
  %v445 = vpack.c.b16 %v434, %v433
  %v446 = vpack.c.b16 %v436, %v435
  %v447 = vpack.c.b16 %v438, %v437
  %v448 = vpack.c.b16 %v440, %v439
  %457 = vst [vmem:[%s4] sm:$0xff] %v441
  %458 = vst [vmem:[%s4 + $0x8] sm:$0xff] %v442
  %459 = vst [vmem:[%s4 + $0x10] sm:$0xff] %v443
  %460 = vst [vmem:[%s4 + $0x18] sm:$0xff] %v444
  %461 = vst [vmem:[%s4 + $0x20] sm:$0xff] %v445
  %462 = vst [vmem:[%s4 + $0x28] sm:$0xff] %v446
  %463 = vst [vmem:[%s4 + $0x30] sm:$0xff] %v447
  %464 = vst [vmem:[%s4 + $0x38] sm:$0xff] %v448
  // Predicated region
  $region18: #{fno_forward.12} parent=0 // pred_check
    _
  $region19: #{fno_forward.12} parent=0 // pred_check_branch
    %466 = sbr.rel (0) target = $region21
  $region20: #{fno_forward.12} parent=0 // pred_region
    _
  $region21: #{fno_forward.12} parent=0 // pred_fallthru
    _
  // Predicated region
  $region22: #{fno_forward.12} parent=0 // pred_check
    _
  $region23: #{fno_forward.12} parent=0 // pred_check_branch
    %468 = sbr.rel (0) target = $region25
  $region24: #{fno_forward.12} parent=0 // pred_region
    _
  $region25: #{fno_forward.12} parent=0 // pred_fallthru
    _

// kernel: fno_forward.18
$region0: #{fno_forward.18}
  #allocation0 [shape = 'u32[]', space=smem, size = 0x4, offset = 0x4, fixed_abs, tag = 'smem constant byte address 0x4 - core index']
  #allocation1 [shape = 'u32[144,128]{1,0:T(1,128)}', space=vmem, size = 0x12000, scoped, tag = 'internal scratch']
  %s0 = inlined_call_operand.vmem [shape: bf16[32,512], index: 0, kind: input, shape index: {}]
  %s1 = inlined_call_operand.vmem [shape: f32[32,512], index: 1, kind: input, shape index: {}]
  %s2 = inlined_call_operand.vmem [shape: bf16[32,32], index: 2, kind: input, shape index: {}]
  %s3 = inlined_call_operand.vmem [shape: f32[32,1], index: 3, kind: input, shape index: {}]
  %s4 = inlined_call_operand.vmem [shape: bf16[32,512], index: 4, kind: output, shape index: {}]
  %s5 = sld [smem:[#allocation0]]
  $region26: #{fno_forward.18} parent=0
    _
  %s7 = ssub.s32 1, %s5
  %s8 = scalar_select 0, %s7, %s5
  // Predicated region
  $region2: #{fno_forward.18} parent=0 // pred_check
    _
  $region3: #{fno_forward.18} parent=0 // pred_check_branch
    %10 = sbr.rel (0) target = $region5
  $region4: #{fno_forward.18} parent=0 // pred_region
    _
  $region5: #{fno_forward.18} parent=0 // pred_fallthru
    _
  // Predicated region
  $region6: #{fno_forward.18} parent=0 // pred_check
    _
  $region7: #{fno_forward.18} parent=0 // pred_check_branch
    %12 = sbr.rel (0) target = $region9
  $region8: #{fno_forward.18} parent=0 // pred_region
    _
  $region9: #{fno_forward.18} parent=0 // pred_fallthru
    _
  // Predicated region
  $region10: #{fno_forward.18} parent=0 // pred_check
    _
  $region11: #{fno_forward.18} parent=0 // pred_check_branch
    %14 = sbr.rel (0) target = $region13
  $region12: #{fno_forward.18} parent=0 // pred_region
    _
  $region13: #{fno_forward.18} parent=0 // pred_fallthru
    _
  // Predicated region
  $region14: #{fno_forward.18} parent=0 // pred_check
    _
  $region15: #{fno_forward.18} parent=0 // pred_check_branch
    %16 = sbr.rel (0) target = $region17
  $region16: #{fno_forward.18} parent=0 // pred_region
    _
  $region17: #{fno_forward.18} parent=0 // pred_fallthru
    _
  %v18 = vld [vmem:[%s2] sm:$0xf]
  %v19 = vld [vmem:[%s2 + $0x4] sm:$0xf]
  %v20 = vld [vmem:[%s2 + $0x8] sm:$0xf]
  %v21 = vld [vmem:[%s2 + $0xc] sm:$0xf]
  %v22 = vld [vmem:[%s0] sm:$0xff]
  %v23 = vld [vmem:[%s0 + $0x8] sm:$0xff]
  %v24 = vld [vmem:[%s0 + $0x10] sm:$0xff]
  %v25 = vld [vmem:[%s0 + $0x18] sm:$0xff]
  %v26 = vld [vmem:[%s0 + $0x20] sm:$0xff]
  %v27 = vld [vmem:[%s0 + $0x28] sm:$0xff]
  %v28 = vld [vmem:[%s0 + $0x30] sm:$0xff]
  %v29 = vld [vmem:[%s0 + $0x38] sm:$0xff]
  %v34 = vunpack.c.l.b16 %v18
  %v35 = vunpack.c.l.b16 %v19
  %v36 = vunpack.c.l.b16 %v20
  %v37 = vunpack.c.l.b16 %v21
  %v38 = vpack.c.b16 %v35, %v34
  %v39 = vpack.c.b16 %v37, %v36
  %v48 = vunpack.c.l.b16 %v22
  %v49 = vunpack.c.h.b16 %v22
  %v50 = vunpack.c.l.b16 %v23
  %v51 = vunpack.c.h.b16 %v23
  %v52 = vunpack.c.l.b16 %v24
  %v53 = vunpack.c.h.b16 %v24
  %v54 = vunpack.c.l.b16 %v25
  %v55 = vunpack.c.h.b16 %v25
  %v56 = vunpack.c.l.b16 %v26
  %v57 = vunpack.c.h.b16 %v26
  %v58 = vunpack.c.l.b16 %v27
  %v59 = vunpack.c.h.b16 %v27
  %v60 = vunpack.c.l.b16 %v28
  %v61 = vunpack.c.h.b16 %v28
  %v62 = vunpack.c.l.b16 %v29
  %v63 = vunpack.c.h.b16 %v29
  %v64 = vpack.c.b16 %v52, %v48
  %v65 = vpack.c.b16 %v53, %v49
  %v66 = vpack.c.b16 %v54, %v50
  %v67 = vpack.c.b16 %v55, %v51
  %v68 = vpack.c.b16 %v60, %v56
  %v69 = vpack.c.b16 %v61, %v57
  %v70 = vpack.c.b16 %v62, %v58
  %v71 = vpack.c.b16 %v63, %v59
  %vm80 = vcmask 261120
  %v82 = vsel %vm80, %v38, 0
  %v85 = vsel %vm80, %v39, 0
  %87 = vmatprep.subr.bf16.mxu0 %v65
  %88 = vmatpush1.bf16.msra.mxu0 %v64
  %89 = vmatprep.subr.bf16.mxu0 %v69
  %90 = vmatpush1.bf16.msra.mxu0 %v68
  %91 = vmatprep.subr.bf16.mxu0 0
  %92 = vmatpush1.bf16.msra.mxu0 0
  %93 = vmatprep.subr.bf16.mxu0 0
  %94 = vmatpush1.bf16.msra.mxu0 0
  %95 = vmatprep.subr.bf16.mxu0 0
  %96 = vmatpush1.bf16.msra.mxu0 0
  %97 = vmatprep.subr.bf16.mxu0 0
  %98 = vmatpush1.bf16.msra.mxu0 0
  %99 = vmatprep.subr.bf16.mxu0 0
  %100 = vmatpush1.bf16.msra.mxu0 0
  %101 = vmatprep.subr.bf16.mxu0 0
  %102 = vmatpush1.bf16.msra.mxu0 0
  %103 = vmatprep.subr.bf16.mxu0 0
  %104 = vmatpush1.bf16.msra.mxu0 0
  %105 = vmatprep.subr.bf16.mxu0 0
  %106 = vmatpush1.bf16.msra.mxu0 0
  %107 = vmatprep.subr.bf16.mxu0 0
  %108 = vmatpush1.bf16.msra.mxu0 0
  %109 = vmatprep.subr.bf16.mxu0 0
  %110 = vmatpush1.bf16.msra.mxu0 0
  %111 = vmatprep.subr.bf16.mxu0 0
  %112 = vmatpush1.bf16.msra.mxu0 0
  %113 = vmatprep.subr.bf16.mxu0 0
  %114 = vmatpush1.bf16.msra.mxu0 0
  %115 = vmatprep.subr.bf16.mxu0 0
  %116 = vmatpush1.bf16.msra.mxu0 0
  %117 = vmatprep.subr.bf16.mxu0 0
  %118 = vmatpush1.bf16.msra.mxu0 0
  %119 = vmatprep.mubr.bf16.mxu0 0
  %120 = vmatmul.mubr.bf16.gmra.mrb[0].mxu0 %v82
  %v121 = vpop.f32.mrb[0].mxu0
  %v122 = vadd.f32 0.0, %v121
  %v123 = vpop.f32.mrb[0].mxu0
  %v124 = vadd.f32 0.0, %v123
  %v125 = vpop.f32.mrb[0].mxu0
  %v126 = vadd.f32 0.0, %v125
  %v127 = vpop.f32.mrb[0].mxu0
  %v128 = vadd.f32 0.0, %v127
  %129 = vmatprep.mubr.bf16.mxu0 0
  %130 = vmatmul.mubr.bf16.gmra.mrb[0].mxu0 %v85
  %v131 = vpop.f32.mrb[0].mxu0
  %v132 = vadd.f32 0.0, %v131
  %v133 = vpop.f32.mrb[0].mxu0
  %v134 = vadd.f32 0.0, %v133
  %v135 = vpop.f32.mrb[0].mxu0
  %v136 = vadd.f32 0.0, %v135
  %v137 = vpop.f32.mrb[0].mxu0
  %v138 = vadd.f32 0.0, %v137
  %139 = vdwg.mxu0
  %140 = vmatprep.subr.bf16.mxu0 %v67
  %141 = vmatpush1.bf16.msra.mxu0 %v66
  %142 = vmatprep.subr.bf16.mxu0 %v71
  %143 = vmatpush1.bf16.msra.mxu0 %v70
  %144 = vmatprep.subr.bf16.mxu0 0
  %145 = vmatpush1.bf16.msra.mxu0 0
  %146 = vmatprep.subr.bf16.mxu0 0
  %147 = vmatpush1.bf16.msra.mxu0 0
  %148 = vmatprep.subr.bf16.mxu0 0
  %149 = vmatpush1.bf16.msra.mxu0 0
  %150 = vmatprep.subr.bf16.mxu0 0
  %151 = vmatpush1.bf16.msra.mxu0 0
  %152 = vmatprep.subr.bf16.mxu0 0
  %153 = vmatpush1.bf16.msra.mxu0 0
  %154 = vmatprep.subr.bf16.mxu0 0
  %155 = vmatpush1.bf16.msra.mxu0 0
  %156 = vmatprep.subr.bf16.mxu0 0
  %157 = vmatpush1.bf16.msra.mxu0 0
  %158 = vmatprep.subr.bf16.mxu0 0
  %159 = vmatpush1.bf16.msra.mxu0 0
  %160 = vmatprep.subr.bf16.mxu0 0
  %161 = vmatpush1.bf16.msra.mxu0 0
  %162 = vmatprep.subr.bf16.mxu0 0
  %163 = vmatpush1.bf16.msra.mxu0 0
  %164 = vmatprep.subr.bf16.mxu0 0
  %165 = vmatpush1.bf16.msra.mxu0 0
  %166 = vmatprep.subr.bf16.mxu0 0
  %167 = vmatpush1.bf16.msra.mxu0 0
  %168 = vmatprep.subr.bf16.mxu0 0
  %169 = vmatpush1.bf16.msra.mxu0 0
  %170 = vmatprep.subr.bf16.mxu0 0
  %171 = vmatpush1.bf16.msra.mxu0 0
  %172 = vmatprep.mubr.bf16.mxu0 0
  %173 = vmatmul.mubr.bf16.gmra.mrb[0].mxu0 %v82
  %v174 = vpop.f32.mrb[0].mxu0
  %v175 = vadd.f32 0.0, %v174
  %v176 = vpop.f32.mrb[0].mxu0
  %v177 = vadd.f32 0.0, %v176
  %v178 = vpop.f32.mrb[0].mxu0
  %v179 = vadd.f32 0.0, %v178
  %v180 = vpop.f32.mrb[0].mxu0
  %v181 = vadd.f32 0.0, %v180
  %182 = vmatprep.mubr.bf16.mxu0 0
  %183 = vmatmul.mubr.bf16.gmra.mrb[0].mxu0 %v85
  %v184 = vpop.f32.mrb[0].mxu0
  %v185 = vadd.f32 0.0, %v184
  %v186 = vpop.f32.mrb[0].mxu0
  %v187 = vadd.f32 0.0, %v186
  %v188 = vpop.f32.mrb[0].mxu0
  %v189 = vadd.f32 0.0, %v188
  %v190 = vpop.f32.mrb[0].mxu0
  %v191 = vadd.f32 0.0, %v190
  %192 = vdwg.mxu0
  %v193 = vld [vmem:[%s1] sm:$0xff]
  %v194 = vld [vmem:[%s1 + $0x8] sm:$0xff]
  %v195 = vld [vmem:[%s1 + $0x10] sm:$0xff]
  %v196 = vld [vmem:[%s1 + $0x18] sm:$0xff]
  %v197 = vld [vmem:[%s1 + $0x20] sm:$0xff]
  %v198 = vld [vmem:[%s1 + $0x28] sm:$0xff]
  %v199 = vld [vmem:[%s1 + $0x30] sm:$0xff]
  %v200 = vld [vmem:[%s1 + $0x38] sm:$0xff]
  %v201 = vld [vmem:[%s1 + $0x40] sm:$0xff]
  %v202 = vld [vmem:[%s1 + $0x48] sm:$0xff]
  %v203 = vld [vmem:[%s1 + $0x50] sm:$0xff]
  %v204 = vld [vmem:[%s1 + $0x58] sm:$0xff]
  %v205 = vld [vmem:[%s1 + $0x60] sm:$0xff]
  %v206 = vld [vmem:[%s1 + $0x68] sm:$0xff]
  %v207 = vld [vmem:[%s1 + $0x70] sm:$0xff]
  %v208 = vld [vmem:[%s1 + $0x78] sm:$0xff]
  %v209 = vld [vmem:[%s3] sm:$0xff]
  %v210 = vld [vmem:[%s3 + $0x8] sm:$0xff]
  %v211 = vld [vmem:[%s3 + $0x10] sm:$0xff]
  %v212 = vld [vmem:[%s3 + $0x18] sm:$0xff]
  %214 = vset.pattern.permute.xlu0 0
  %215 = vperm.xlu0 %214, %v209
  %v216 = vpop.permute.xlu0 %215
  %219 = vset.pattern.permute.xlu0 0
  %220 = vperm.xlu0 %219, %v210
  %v221 = vpop.permute.xlu0 %220
  %224 = vset.pattern.permute.xlu0 0
  %225 = vperm.xlu0 %224, %v211
  %v226 = vpop.permute.xlu0 %225
  %229 = vset.pattern.permute.xlu0 0
  %230 = vperm.xlu0 %229, %v212
  %v231 = vpop.permute.xlu0 %230
  %v233 = vadd.f32 %v193, %v216
  %v234 = vadd.f32 %v194, %v216
  %v235 = vadd.f32 %v195, %v216
  %v236 = vadd.f32 %v196, %v216
  %v237 = vadd.f32 %v197, %v221
  %v238 = vadd.f32 %v198, %v221
  %v239 = vadd.f32 %v199, %v221
  %v240 = vadd.f32 %v200, %v221
  %v241 = vadd.f32 %v201, %v226
  %v242 = vadd.f32 %v202, %v226
  %v243 = vadd.f32 %v203, %v226
  %v244 = vadd.f32 %v204, %v226
  %v245 = vadd.f32 %v205, %v231
  %v246 = vadd.f32 %v206, %v231
  %v247 = vadd.f32 %v207, %v231
  %v248 = vadd.f32 %v208, %v231
  %v249 = vadd.f32 %v233, %v122
  %v250 = vadd.f32 %v234, %v124
  %v251 = vadd.f32 %v235, %v175
  %v252 = vadd.f32 %v236, %v177
  %v253 = vadd.f32 %v237, %v126
  %v254 = vadd.f32 %v238, %v128
  %v255 = vadd.f32 %v239, %v179
  %v256 = vadd.f32 %v240, %v181
  %v257 = vadd.f32 %v241, %v132
  %v258 = vadd.f32 %v242, %v134
  %v259 = vadd.f32 %v243, %v185
  %v260 = vadd.f32 %v244, %v187
  %v261 = vadd.f32 %v245, %v136
  %v262 = vadd.f32 %v246, %v138
  %v263 = vadd.f32 %v247, %v189
  %v264 = vadd.f32 %v248, %v191
  %v265 = vpack.c.bf16 %v253, %v249
  %v266 = vpack.c.bf16 %v254, %v250
  %v267 = vpack.c.bf16 %v255, %v251
  %v268 = vpack.c.bf16 %v256, %v252
  %v269 = vpack.c.bf16 %v261, %v257
  %v270 = vpack.c.bf16 %v262, %v258
  %v271 = vpack.c.bf16 %v263, %v259
  %v272 = vpack.c.bf16 %v264, %v260
  %v281 = vunpack.c.l.b16 %v265
  %v282 = vunpack.c.l.b16 %v266
  %v283 = vunpack.c.l.b16 %v267
  %v284 = vunpack.c.l.b16 %v268
  %v285 = vunpack.c.h.b16 %v265
  %v286 = vunpack.c.h.b16 %v266
  %v287 = vunpack.c.h.b16 %v267
  %v288 = vunpack.c.h.b16 %v268
  %v289 = vunpack.c.l.b16 %v269
  %v290 = vunpack.c.l.b16 %v270
  %v291 = vunpack.c.l.b16 %v271
  %v292 = vunpack.c.l.b16 %v272
  %v293 = vunpack.c.h.b16 %v269
  %v294 = vunpack.c.h.b16 %v270
  %v295 = vunpack.c.h.b16 %v271
  %v296 = vunpack.c.h.b16 %v272
  %v297 = vpack.c.b16 %v282, %v281
  %v298 = vpack.c.b16 %v284, %v283
  %v299 = vpack.c.b16 %v286, %v285
  %v300 = vpack.c.b16 %v288, %v287
  %v301 = vpack.c.b16 %v290, %v289
  %v302 = vpack.c.b16 %v292, %v291
  %v303 = vpack.c.b16 %v294, %v293
  %v304 = vpack.c.b16 %v296, %v295
  %313 = vst [vmem:[%s4] sm:$0xff] %v297
  %314 = vst [vmem:[%s4 + $0x8] sm:$0xff] %v298
  %315 = vst [vmem:[%s4 + $0x10] sm:$0xff] %v299
  %316 = vst [vmem:[%s4 + $0x18] sm:$0xff] %v300
  %317 = vst [vmem:[%s4 + $0x20] sm:$0xff] %v301
  %318 = vst [vmem:[%s4 + $0x28] sm:$0xff] %v302
  %319 = vst [vmem:[%s4 + $0x30] sm:$0xff] %v303
  %320 = vst [vmem:[%s4 + $0x38] sm:$0xff] %v304
  // Predicated region
  $region18: #{fno_forward.18} parent=0 // pred_check
    _
  $region19: #{fno_forward.18} parent=0 // pred_check_branch
    %322 = sbr.rel (0) target = $region21
  $region20: #{fno_forward.18} parent=0 // pred_region
    _
  $region21: #{fno_forward.18} parent=0 // pred_fallthru
    _
  // Predicated region
  $region22: #{fno_forward.18} parent=0 // pred_check
    _
  $region23: #{fno_forward.18} parent=0 // pred_check_branch
    %324 = sbr.rel (0) target = $region25
  $region24: #{fno_forward.18} parent=0 // pred_region
    _
  $region25: #{fno_forward.18} parent=0 // pred_fallthru
    _

// kernel: fno_forward.19
$region0: #{fno_forward.19}
  #allocation0 [shape = 'u32[]', space=smem, size = 0x4, offset = 0x4, fixed_abs, tag = 'smem constant byte address 0x4 - core index']
  #allocation1 [shape = 'u32[144,128]{1,0:T(1,128)}', space=vmem, size = 0x12000, scoped, tag = 'internal scratch']
  #allocation2 [shape = 'bf16[64,512]{1,0:T(16,128)(2,1)}', space=vmem, size = 0x10000, scoped, tag = 'scratch operand']
  #allocation3 [shape = 'f32[1,1]{1,0:T(1,128)S(1)}', space=vmem, size = 0x200, scoped, tag = 'scoped memory for fno_forward.19']
  %s0 = inlined_call_operand.vmem [shape: bf16[32,512], index: 0, kind: input, shape index: {}]
  %s1 = inlined_call_operand.vmem [shape: bf16[64,32], index: 1, kind: input, shape index: {}]
  %s2 = inlined_call_operand.vmem [shape: f32[64,1], index: 2, kind: input, shape index: {}]
  %s3 = inlined_call_operand.vmem [shape: bf16[1,64], index: 3, kind: input, shape index: {}]
  %s4 = inlined_call_operand.<no memory space> [shape: f32[1,1], index: 4, kind: input, shape index: {}]
  %s5 = inlined_call_operand.vmem [shape: f32[1,512], index: 5, kind: output, shape index: {}]
  %s6 = sld [smem:[#allocation0]]
  $region30: #{fno_forward.19} parent=0
    _
  %s8 = ssub.s32 1, %s6
  %s9 = scalar_select 0, %s8, %s6
  %v10 = vstv %s4
  %11 = vst [vmem:[#allocation3] sm:$0x1] %v10
  // Predicated region
  $region2: #{fno_forward.19} parent=0 // pred_check
    _
  $region3: #{fno_forward.19} parent=0 // pred_check_branch
    %13 = sbr.rel (0) target = $region5
  $region4: #{fno_forward.19} parent=0 // pred_region
    _
  $region5: #{fno_forward.19} parent=0 // pred_fallthru
    _
  // Predicated region
  $region6: #{fno_forward.19} parent=0 // pred_check
    _
  $region7: #{fno_forward.19} parent=0 // pred_check_branch
    %15 = sbr.rel (0) target = $region9
  $region8: #{fno_forward.19} parent=0 // pred_region
    _
  $region9: #{fno_forward.19} parent=0 // pred_fallthru
    _
  // Predicated region
  $region10: #{fno_forward.19} parent=0 // pred_check
    _
  $region11: #{fno_forward.19} parent=0 // pred_check_branch
    %17 = sbr.rel (0) target = $region13
  $region12: #{fno_forward.19} parent=0 // pred_region
    _
  $region13: #{fno_forward.19} parent=0 // pred_fallthru
    _
  // Predicated region
  $region14: #{fno_forward.19} parent=0 // pred_check
    _
  $region15: #{fno_forward.19} parent=0 // pred_check_branch
    %19 = sbr.rel (0) target = $region17
  $region16: #{fno_forward.19} parent=0 // pred_region
    _
  $region17: #{fno_forward.19} parent=0 // pred_fallthru
    _
  // Predicated region
  $region18: #{fno_forward.19} parent=0 // pred_check
    _
  $region19: #{fno_forward.19} parent=0 // pred_check_branch
    %21 = sbr.rel (0) target = $region21
  $region20: #{fno_forward.19} parent=0 // pred_region
    _
  $region21: #{fno_forward.19} parent=0 // pred_fallthru
    _
  %v23 = vld [vmem:[%s1] sm:$0xf]
  %v24 = vld [vmem:[%s1 + $0x4] sm:$0xf]
  %v25 = vld [vmem:[%s1 + $0x8] sm:$0xf]
  %v26 = vld [vmem:[%s1 + $0xc] sm:$0xf]
  %v27 = vld [vmem:[%s1 + $0x10] sm:$0xf]
  %v28 = vld [vmem:[%s1 + $0x14] sm:$0xf]
  %v29 = vld [vmem:[%s1 + $0x18] sm:$0xf]
  %v30 = vld [vmem:[%s1 + $0x1c] sm:$0xf]
  %v31 = vld [vmem:[%s0] sm:$0xff]
  %v32 = vld [vmem:[%s0 + $0x8] sm:$0xff]
  %v33 = vld [vmem:[%s0 + $0x10] sm:$0xff]
  %v34 = vld [vmem:[%s0 + $0x18] sm:$0xff]
  %v35 = vld [vmem:[%s0 + $0x20] sm:$0xff]
  %v36 = vld [vmem:[%s0 + $0x28] sm:$0xff]
  %v37 = vld [vmem:[%s0 + $0x30] sm:$0xff]
  %v38 = vld [vmem:[%s0 + $0x38] sm:$0xff]
  %v39 = vld [vmem:[%s2] sm:$0xff]
  %v40 = vld [vmem:[%s2 + $0x8] sm:$0xff]
  %v41 = vld [vmem:[%s2 + $0x10] sm:$0xff]
  %v42 = vld [vmem:[%s2 + $0x18] sm:$0xff]
  %v43 = vld [vmem:[%s2 + $0x20] sm:$0xff]
  %v44 = vld [vmem:[%s2 + $0x28] sm:$0xff]
  %v45 = vld [vmem:[%s2 + $0x30] sm:$0xff]
  %v46 = vld [vmem:[%s2 + $0x38] sm:$0xff]
  %48 = vset.pattern.permute.xlu0 0
  %49 = vperm.xlu0 %48, %v39
  %v50 = vpop.permute.xlu0 %49
  %53 = vset.pattern.permute.xlu0 0
  %54 = vperm.xlu0 %53, %v40
  %v55 = vpop.permute.xlu0 %54
  %58 = vset.pattern.permute.xlu0 0
  %59 = vperm.xlu0 %58, %v41
  %v60 = vpop.permute.xlu0 %59
  %63 = vset.pattern.permute.xlu0 0
  %64 = vperm.xlu0 %63, %v42
  %v65 = vpop.permute.xlu0 %64
  %68 = vset.pattern.permute.xlu0 0
  %69 = vperm.xlu0 %68, %v43
  %v70 = vpop.permute.xlu0 %69
  %73 = vset.pattern.permute.xlu0 0
  %74 = vperm.xlu0 %73, %v44
  %v75 = vpop.permute.xlu0 %74
  %78 = vset.pattern.permute.xlu0 0
  %79 = vperm.xlu0 %78, %v45
  %v80 = vpop.permute.xlu0 %79
  %83 = vset.pattern.permute.xlu0 0
  %84 = vperm.xlu0 %83, %v46
  %v85 = vpop.permute.xlu0 %84
  %v95 = vunpack.c.l.b16 %v23
  %v96 = vunpack.c.l.b16 %v24
  %v97 = vunpack.c.l.b16 %v25
  %v98 = vunpack.c.l.b16 %v26
  %v99 = vunpack.c.l.b16 %v27
  %v100 = vunpack.c.l.b16 %v28
  %v101 = vunpack.c.l.b16 %v29
  %v102 = vunpack.c.l.b16 %v30
  %v103 = vpack.c.b16 %v96, %v95
  %v104 = vpack.c.b16 %v98, %v97
  %v105 = vpack.c.b16 %v100, %v99
  %v106 = vpack.c.b16 %v102, %v101
  %v115 = vunpack.c.l.b16 %v31
  %v116 = vunpack.c.h.b16 %v31
  %v117 = vunpack.c.l.b16 %v32
  %v118 = vunpack.c.h.b16 %v32
  %v119 = vunpack.c.l.b16 %v33
  %v120 = vunpack.c.h.b16 %v33
  %v121 = vunpack.c.l.b16 %v34
  %v122 = vunpack.c.h.b16 %v34
  %v123 = vunpack.c.l.b16 %v35
  %v124 = vunpack.c.h.b16 %v35
  %v125 = vunpack.c.l.b16 %v36
  %v126 = vunpack.c.h.b16 %v36
  %v127 = vunpack.c.l.b16 %v37
  %v128 = vunpack.c.h.b16 %v37
  %v129 = vunpack.c.l.b16 %v38
  %v130 = vunpack.c.h.b16 %v38
  %v131 = vpack.c.b16 %v119, %v115
  %v132 = vpack.c.b16 %v120, %v116
  %v133 = vpack.c.b16 %v121, %v117
  %v134 = vpack.c.b16 %v122, %v118
  %v135 = vpack.c.b16 %v127, %v123
  %v136 = vpack.c.b16 %v128, %v124
  %v137 = vpack.c.b16 %v129, %v125
  %v138 = vpack.c.b16 %v130, %v126
  %vm147 = vcmask 261120
  %v149 = vsel %vm147, %v103, 0
  %v152 = vsel %vm147, %v104, 0
  %v155 = vsel %vm147, %v105, 0
  %v158 = vsel %vm147, %v106, 0
  %160 = vmatprep.subr.bf16.mxu0 %v132
  %161 = vmatpush1.bf16.msra.mxu0 %v131
  %162 = vmatprep.subr.bf16.mxu0 %v136
  %163 = vmatpush1.bf16.msra.mxu0 %v135
  %164 = vmatprep.subr.bf16.mxu0 0
  %165 = vmatpush1.bf16.msra.mxu0 0
  %166 = vmatprep.subr.bf16.mxu0 0
  %167 = vmatpush1.bf16.msra.mxu0 0
  %168 = vmatprep.subr.bf16.mxu0 0
  %169 = vmatpush1.bf16.msra.mxu0 0
  %170 = vmatprep.subr.bf16.mxu0 0
  %171 = vmatpush1.bf16.msra.mxu0 0
  %172 = vmatprep.subr.bf16.mxu0 0
  %173 = vmatpush1.bf16.msra.mxu0 0
  %174 = vmatprep.subr.bf16.mxu0 0
  %175 = vmatpush1.bf16.msra.mxu0 0
  %176 = vmatprep.subr.bf16.mxu0 0
  %177 = vmatpush1.bf16.msra.mxu0 0
  %178 = vmatprep.subr.bf16.mxu0 0
  %179 = vmatpush1.bf16.msra.mxu0 0
  %180 = vmatprep.subr.bf16.mxu0 0
  %181 = vmatpush1.bf16.msra.mxu0 0
  %182 = vmatprep.subr.bf16.mxu0 0
  %183 = vmatpush1.bf16.msra.mxu0 0
  %184 = vmatprep.subr.bf16.mxu0 0
  %185 = vmatpush1.bf16.msra.mxu0 0
  %186 = vmatprep.subr.bf16.mxu0 0
  %187 = vmatpush1.bf16.msra.mxu0 0
  %188 = vmatprep.subr.bf16.mxu0 0
  %189 = vmatpush1.bf16.msra.mxu0 0
  %190 = vmatprep.subr.bf16.mxu0 0
  %191 = vmatpush1.bf16.msra.mxu0 0
  %192 = vmatprep.mubr.bf16.mxu0 0
  %193 = vmatmul.mubr.bf16.gmra.mrb[0].mxu0 %v149
  %v194 = vpop.f32.mrb[0].mxu0
  %v195 = vadd.f32 %v50, %v194
  %v196 = vpop.f32.mrb[0].mxu0
  %v197 = vadd.f32 %v50, %v196
  %v198 = vpop.f32.mrb[0].mxu0
  %v199 = vadd.f32 %v55, %v198
  %v200 = vpop.f32.mrb[0].mxu0
  %v201 = vadd.f32 %v55, %v200
  %202 = vmatprep.mubr.bf16.mxu0 0
  %203 = vmatmul.mubr.bf16.gmra.mrb[0].mxu0 %v152
  %v204 = vpop.f32.mrb[0].mxu0
  %v205 = vadd.f32 %v60, %v204
  %v206 = vpop.f32.mrb[0].mxu0
  %v207 = vadd.f32 %v60, %v206
  %v208 = vpop.f32.mrb[0].mxu0
  %v209 = vadd.f32 %v65, %v208
  %v210 = vpop.f32.mrb[0].mxu0
  %v211 = vadd.f32 %v65, %v210
  %212 = vmatprep.mubr.bf16.mxu0 0
  %213 = vmatmul.mubr.bf16.gmra.mrb[0].mxu0 %v155
  %v214 = vpop.f32.mrb[0].mxu0
  %v215 = vadd.f32 %v70, %v214
  %v216 = vpop.f32.mrb[0].mxu0
  %v217 = vadd.f32 %v70, %v216
  %v218 = vpop.f32.mrb[0].mxu0
  %v219 = vadd.f32 %v75, %v218
  %v220 = vpop.f32.mrb[0].mxu0
  %v221 = vadd.f32 %v75, %v220
  %222 = vmatprep.mubr.bf16.mxu0 0
  %223 = vmatmul.mubr.bf16.gmra.mrb[0].mxu0 %v158
  %v224 = vpop.f32.mrb[0].mxu0
  %v225 = vadd.f32 %v80, %v224
  %v226 = vpop.f32.mrb[0].mxu0
  %v227 = vadd.f32 %v80, %v226
  %v228 = vpop.f32.mrb[0].mxu0
  %v229 = vadd.f32 %v85, %v228
  %v230 = vpop.f32.mrb[0].mxu0
  %v231 = vadd.f32 %v85, %v230
  %232 = vdwg.mxu0
  %233 = vmatprep.subr.bf16.mxu0 %v134
  %234 = vmatpush1.bf16.msra.mxu0 %v133
  %235 = vmatprep.subr.bf16.mxu0 %v138
  %236 = vmatpush1.bf16.msra.mxu0 %v137
  %237 = vmatprep.subr.bf16.mxu0 0
  %238 = vmatpush1.bf16.msra.mxu0 0
  %239 = vmatprep.subr.bf16.mxu0 0
  %240 = vmatpush1.bf16.msra.mxu0 0
  %241 = vmatprep.subr.bf16.mxu0 0
  %242 = vmatpush1.bf16.msra.mxu0 0
  %243 = vmatprep.subr.bf16.mxu0 0
  %244 = vmatpush1.bf16.msra.mxu0 0
  %245 = vmatprep.subr.bf16.mxu0 0
  %246 = vmatpush1.bf16.msra.mxu0 0
  %247 = vmatprep.subr.bf16.mxu0 0
  %248 = vmatpush1.bf16.msra.mxu0 0
  %249 = vmatprep.subr.bf16.mxu0 0
  %250 = vmatpush1.bf16.msra.mxu0 0
  %251 = vmatprep.subr.bf16.mxu0 0
  %252 = vmatpush1.bf16.msra.mxu0 0
  %253 = vmatprep.subr.bf16.mxu0 0
  %254 = vmatpush1.bf16.msra.mxu0 0
  %255 = vmatprep.subr.bf16.mxu0 0
  %256 = vmatpush1.bf16.msra.mxu0 0
  %257 = vmatprep.subr.bf16.mxu0 0
  %258 = vmatpush1.bf16.msra.mxu0 0
  %259 = vmatprep.subr.bf16.mxu0 0
  %260 = vmatpush1.bf16.msra.mxu0 0
  %261 = vmatprep.subr.bf16.mxu0 0
  %262 = vmatpush1.bf16.msra.mxu0 0
  %263 = vmatprep.subr.bf16.mxu0 0
  %264 = vmatpush1.bf16.msra.mxu0 0
  %265 = vmatprep.mubr.bf16.mxu0 0
  %266 = vmatmul.mubr.bf16.gmra.mrb[0].mxu0 %v149
  %v267 = vpop.f32.mrb[0].mxu0
  %v268 = vadd.f32 %v50, %v267
  %v269 = vpop.f32.mrb[0].mxu0
  %v270 = vadd.f32 %v50, %v269
  %v271 = vpop.f32.mrb[0].mxu0
  %v272 = vadd.f32 %v55, %v271
  %v273 = vpop.f32.mrb[0].mxu0
  %v274 = vadd.f32 %v55, %v273
  %275 = vmatprep.mubr.bf16.mxu0 0
  %276 = vmatmul.mubr.bf16.gmra.mrb[0].mxu0 %v152
  %v277 = vpop.f32.mrb[0].mxu0
  %v278 = vadd.f32 %v60, %v277
  %v279 = vpop.f32.mrb[0].mxu0
  %v280 = vadd.f32 %v60, %v279
  %v281 = vpop.f32.mrb[0].mxu0
  %v282 = vadd.f32 %v65, %v281
  %v283 = vpop.f32.mrb[0].mxu0
  %v284 = vadd.f32 %v65, %v283
  %285 = vmatprep.mubr.bf16.mxu0 0
  %286 = vmatmul.mubr.bf16.gmra.mrb[0].mxu0 %v155
  %v287 = vpop.f32.mrb[0].mxu0
  %v288 = vadd.f32 %v70, %v287
  %v289 = vpop.f32.mrb[0].mxu0
  %v290 = vadd.f32 %v70, %v289
  %v291 = vpop.f32.mrb[0].mxu0
  %v292 = vadd.f32 %v75, %v291
  %v293 = vpop.f32.mrb[0].mxu0
  %v294 = vadd.f32 %v75, %v293
  %295 = vmatprep.mubr.bf16.mxu0 0
  %296 = vmatmul.mubr.bf16.gmra.mrb[0].mxu0 %v158
  %v297 = vpop.f32.mrb[0].mxu0
  %v298 = vadd.f32 %v80, %v297
  %v299 = vpop.f32.mrb[0].mxu0
  %v300 = vadd.f32 %v80, %v299
  %v301 = vpop.f32.mrb[0].mxu0
  %v302 = vadd.f32 %v85, %v301
  %v303 = vpop.f32.mrb[0].mxu0
  %v304 = vadd.f32 %v85, %v303
  %305 = vdwg.mxu0
  %v306 = vmul.f32 %v195, 0.5
  %v307 = vmul.f32 %v197, 0.5
  %v308 = vmul.f32 %v268, 0.5
  %v309 = vmul.f32 %v270, 0.5
  %v310 = vmul.f32 %v199, 0.5
  %v311 = vmul.f32 %v201, 0.5
  %v312 = vmul.f32 %v272, 0.5
  %v313 = vmul.f32 %v274, 0.5
  %v314 = vmul.f32 %v205, 0.5
  %v315 = vmul.f32 %v207, 0.5
  %v316 = vmul.f32 %v278, 0.5
  %v317 = vmul.f32 %v280, 0.5
  %v318 = vmul.f32 %v209, 0.5
  %v319 = vmul.f32 %v211, 0.5
  %v320 = vmul.f32 %v282, 0.5
  %v321 = vmul.f32 %v284, 0.5
  %v322 = vmul.f32 %v215, 0.5
  %v323 = vmul.f32 %v217, 0.5
  %v324 = vmul.f32 %v288, 0.5
  %v325 = vmul.f32 %v290, 0.5
  %v326 = vmul.f32 %v219, 0.5
  %v327 = vmul.f32 %v221, 0.5
  %v328 = vmul.f32 %v292, 0.5
  %v329 = vmul.f32 %v294, 0.5
  %v330 = vmul.f32 %v225, 0.5
  %v331 = vmul.f32 %v227, 0.5
  %v332 = vmul.f32 %v298, 0.5
  %v333 = vmul.f32 %v300, 0.5
  %v334 = vmul.f32 %v229, 0.5
  %v335 = vmul.f32 %v231, 0.5
  %v336 = vmul.f32 %v302, 0.5
  %v337 = vmul.f32 %v304, 0.5
  %v338 = vmul.f32 %v195, 0.044715
  %v339 = vmul.f32 %v197, 0.044715
  %v340 = vmul.f32 %v268, 0.044715
  %v341 = vmul.f32 %v270, 0.044715
  %v342 = vmul.f32 %v199, 0.044715
  %v343 = vmul.f32 %v201, 0.044715
  %v344 = vmul.f32 %v272, 0.044715
  %v345 = vmul.f32 %v274, 0.044715
  %v346 = vmul.f32 %v205, 0.044715
  %v347 = vmul.f32 %v207, 0.044715
  %v348 = vmul.f32 %v278, 0.044715
  %v349 = vmul.f32 %v280, 0.044715
  %v350 = vmul.f32 %v209, 0.044715
  %v351 = vmul.f32 %v211, 0.044715
  %v352 = vmul.f32 %v282, 0.044715
  %v353 = vmul.f32 %v284, 0.044715
  %v354 = vmul.f32 %v215, 0.044715
  %v355 = vmul.f32 %v217, 0.044715
  %v356 = vmul.f32 %v288, 0.044715
  %v357 = vmul.f32 %v290, 0.044715
  %v358 = vmul.f32 %v219, 0.044715
  %v359 = vmul.f32 %v221, 0.044715
  %v360 = vmul.f32 %v292, 0.044715
  %v361 = vmul.f32 %v294, 0.044715
  %v362 = vmul.f32 %v225, 0.044715
  %v363 = vmul.f32 %v227, 0.044715
  %v364 = vmul.f32 %v298, 0.044715
  %v365 = vmul.f32 %v300, 0.044715
  %v366 = vmul.f32 %v229, 0.044715
  %v367 = vmul.f32 %v231, 0.044715
  %v368 = vmul.f32 %v302, 0.044715
  %v369 = vmul.f32 %v304, 0.044715
  %v370 = vmul.f32 %v338, %v195
  %v371 = vmul.f32 %v339, %v197
  %v372 = vmul.f32 %v340, %v268
  %v373 = vmul.f32 %v341, %v270
  %v374 = vmul.f32 %v342, %v199
  %v375 = vmul.f32 %v343, %v201
  %v376 = vmul.f32 %v344, %v272
  %v377 = vmul.f32 %v345, %v274
  %v378 = vmul.f32 %v346, %v205
  %v379 = vmul.f32 %v347, %v207
  %v380 = vmul.f32 %v348, %v278
  %v381 = vmul.f32 %v349, %v280
  %v382 = vmul.f32 %v350, %v209
  %v383 = vmul.f32 %v351, %v211
  %v384 = vmul.f32 %v352, %v282
  %v385 = vmul.f32 %v353, %v284
  %v386 = vmul.f32 %v354, %v215
  %v387 = vmul.f32 %v355, %v217
  %v388 = vmul.f32 %v356, %v288
  %v389 = vmul.f32 %v357, %v290
  %v390 = vmul.f32 %v358, %v219
  %v391 = vmul.f32 %v359, %v221
  %v392 = vmul.f32 %v360, %v292
  %v393 = vmul.f32 %v361, %v294
  %v394 = vmul.f32 %v362, %v225
  %v395 = vmul.f32 %v363, %v227
  %v396 = vmul.f32 %v364, %v298
  %v397 = vmul.f32 %v365, %v300
  %v398 = vmul.f32 %v366, %v229
  %v399 = vmul.f32 %v367, %v231
  %v400 = vmul.f32 %v368, %v302
  %v401 = vmul.f32 %v369, %v304
  %v402 = vmul.f32 %v370, %v195
  %v403 = vmul.f32 %v371, %v197
  %v404 = vmul.f32 %v372, %v268
  %v405 = vmul.f32 %v373, %v270
  %v406 = vmul.f32 %v374, %v199
  %v407 = vmul.f32 %v375, %v201
  %v408 = vmul.f32 %v376, %v272
  %v409 = vmul.f32 %v377, %v274
  %v410 = vmul.f32 %v378, %v205
  %v411 = vmul.f32 %v379, %v207
  %v412 = vmul.f32 %v380, %v278
  %v413 = vmul.f32 %v381, %v280
  %v414 = vmul.f32 %v382, %v209
  %v415 = vmul.f32 %v383, %v211
  %v416 = vmul.f32 %v384, %v282
  %v417 = vmul.f32 %v385, %v284
  %v418 = vmul.f32 %v386, %v215
  %v419 = vmul.f32 %v387, %v217
  %v420 = vmul.f32 %v388, %v288
  %v421 = vmul.f32 %v389, %v290
  %v422 = vmul.f32 %v390, %v219
  %v423 = vmul.f32 %v391, %v221
  %v424 = vmul.f32 %v392, %v292
  %v425 = vmul.f32 %v393, %v294
  %v426 = vmul.f32 %v394, %v225
  %v427 = vmul.f32 %v395, %v227
  %v428 = vmul.f32 %v396, %v298
  %v429 = vmul.f32 %v397, %v300
  %v430 = vmul.f32 %v398, %v229
  %v431 = vmul.f32 %v399, %v231
  %v432 = vmul.f32 %v400, %v302
  %v433 = vmul.f32 %v401, %v304
  %v434 = vadd.f32 %v195, %v402
  %v435 = vadd.f32 %v197, %v403
  %v436 = vadd.f32 %v268, %v404
  %v437 = vadd.f32 %v270, %v405
  %v438 = vadd.f32 %v199, %v406
  %v439 = vadd.f32 %v201, %v407
  %v440 = vadd.f32 %v272, %v408
  %v441 = vadd.f32 %v274, %v409
  %v442 = vadd.f32 %v205, %v410
  %v443 = vadd.f32 %v207, %v411
  %v444 = vadd.f32 %v278, %v412
  %v445 = vadd.f32 %v280, %v413
  %v446 = vadd.f32 %v209, %v414
  %v447 = vadd.f32 %v211, %v415
  %v448 = vadd.f32 %v282, %v416
  %v449 = vadd.f32 %v284, %v417
  %v450 = vadd.f32 %v215, %v418
  %v451 = vadd.f32 %v217, %v419
  %v452 = vadd.f32 %v288, %v420
  %v453 = vadd.f32 %v290, %v421
  %v454 = vadd.f32 %v219, %v422
  %v455 = vadd.f32 %v221, %v423
  %v456 = vadd.f32 %v292, %v424
  %v457 = vadd.f32 %v294, %v425
  %v458 = vadd.f32 %v225, %v426
  %v459 = vadd.f32 %v227, %v427
  %v460 = vadd.f32 %v298, %v428
  %v461 = vadd.f32 %v300, %v429
  %v462 = vadd.f32 %v229, %v430
  %v463 = vadd.f32 %v231, %v431
  %v464 = vadd.f32 %v302, %v432
  %v465 = vadd.f32 %v304, %v433
  %v466 = vmul.f32 %v434, 0.7978846
  %v467 = vmul.f32 %v435, 0.7978846
  %v468 = vmul.f32 %v436, 0.7978846
  %v469 = vmul.f32 %v437, 0.7978846
  %v470 = vmul.f32 %v438, 0.7978846
  %v471 = vmul.f32 %v439, 0.7978846
  %v472 = vmul.f32 %v440, 0.7978846
  %v473 = vmul.f32 %v441, 0.7978846
  %v474 = vmul.f32 %v442, 0.7978846
  %v475 = vmul.f32 %v443, 0.7978846
  %v476 = vmul.f32 %v444, 0.7978846
  %v477 = vmul.f32 %v445, 0.7978846
  %v478 = vmul.f32 %v446, 0.7978846
  %v479 = vmul.f32 %v447, 0.7978846
  %v480 = vmul.f32 %v448, 0.7978846
  %v481 = vmul.f32 %v449, 0.7978846
  %v482 = vmul.f32 %v450, 0.7978846
  %v483 = vmul.f32 %v451, 0.7978846
  %v484 = vmul.f32 %v452, 0.7978846
  %v485 = vmul.f32 %v453, 0.7978846
  %v486 = vmul.f32 %v454, 0.7978846
  %v487 = vmul.f32 %v455, 0.7978846
  %v488 = vmul.f32 %v456, 0.7978846
  %v489 = vmul.f32 %v457, 0.7978846
  %v490 = vmul.f32 %v458, 0.7978846
  %v491 = vmul.f32 %v459, 0.7978846
  %v492 = vmul.f32 %v460, 0.7978846
  %v493 = vmul.f32 %v461, 0.7978846
  %v494 = vmul.f32 %v462, 0.7978846
  %v495 = vmul.f32 %v463, 0.7978846
  %v496 = vmul.f32 %v464, 0.7978846
  %v497 = vmul.f32 %v465, 0.7978846
  %v498 = vtanh.pop %v466
  %v499 = vtanh.pop %v467
  %v500 = vtanh.pop %v468
  %v501 = vtanh.pop %v469
  %v502 = vtanh.pop %v470
  %v503 = vtanh.pop %v471
  %v504 = vtanh.pop %v472
  %v505 = vtanh.pop %v473
  %v506 = vtanh.pop %v474
  %v507 = vtanh.pop %v475
  %v508 = vtanh.pop %v476
  %v509 = vtanh.pop %v477
  %v510 = vtanh.pop %v478
  %v511 = vtanh.pop %v479
  %v512 = vtanh.pop %v480
  %v513 = vtanh.pop %v481
  %v514 = vtanh.pop %v482
  %v515 = vtanh.pop %v483
  %v516 = vtanh.pop %v484
  %v517 = vtanh.pop %v485
  %v518 = vtanh.pop %v486
  %v519 = vtanh.pop %v487
  %v520 = vtanh.pop %v488
  %v521 = vtanh.pop %v489
  %v522 = vtanh.pop %v490
  %v523 = vtanh.pop %v491
  %v524 = vtanh.pop %v492
  %v525 = vtanh.pop %v493
  %v526 = vtanh.pop %v494
  %v527 = vtanh.pop %v495
  %v528 = vtanh.pop %v496
  %v529 = vtanh.pop %v497
  %v530 = vadd.f32 %v498, 1.0
  %v531 = vadd.f32 %v499, 1.0
  %v532 = vadd.f32 %v500, 1.0
  %v533 = vadd.f32 %v501, 1.0
  %v534 = vadd.f32 %v502, 1.0
  %v535 = vadd.f32 %v503, 1.0
  %v536 = vadd.f32 %v504, 1.0
  %v537 = vadd.f32 %v505, 1.0
  %v538 = vadd.f32 %v506, 1.0
  %v539 = vadd.f32 %v507, 1.0
  %v540 = vadd.f32 %v508, 1.0
  %v541 = vadd.f32 %v509, 1.0
  %v542 = vadd.f32 %v510, 1.0
  %v543 = vadd.f32 %v511, 1.0
  %v544 = vadd.f32 %v512, 1.0
  %v545 = vadd.f32 %v513, 1.0
  %v546 = vadd.f32 %v514, 1.0
  %v547 = vadd.f32 %v515, 1.0
  %v548 = vadd.f32 %v516, 1.0
  %v549 = vadd.f32 %v517, 1.0
  %v550 = vadd.f32 %v518, 1.0
  %v551 = vadd.f32 %v519, 1.0
  %v552 = vadd.f32 %v520, 1.0
  %v553 = vadd.f32 %v521, 1.0
  %v554 = vadd.f32 %v522, 1.0
  %v555 = vadd.f32 %v523, 1.0
  %v556 = vadd.f32 %v524, 1.0
  %v557 = vadd.f32 %v525, 1.0
  %v558 = vadd.f32 %v526, 1.0
  %v559 = vadd.f32 %v527, 1.0
  %v560 = vadd.f32 %v528, 1.0
  %v561 = vadd.f32 %v529, 1.0
  %v562 = vmul.f32 %v306, %v530
  %v563 = vmul.f32 %v307, %v531
  %v564 = vmul.f32 %v308, %v532
  %v565 = vmul.f32 %v309, %v533
  %v566 = vmul.f32 %v310, %v534
  %v567 = vmul.f32 %v311, %v535
  %v568 = vmul.f32 %v312, %v536
  %v569 = vmul.f32 %v313, %v537
  %v570 = vmul.f32 %v314, %v538
  %v571 = vmul.f32 %v315, %v539
  %v572 = vmul.f32 %v316, %v540
  %v573 = vmul.f32 %v317, %v541
  %v574 = vmul.f32 %v318, %v542
  %v575 = vmul.f32 %v319, %v543
  %v576 = vmul.f32 %v320, %v544
  %v577 = vmul.f32 %v321, %v545
  %v578 = vmul.f32 %v322, %v546
  %v579 = vmul.f32 %v323, %v547
  %v580 = vmul.f32 %v324, %v548
  %v581 = vmul.f32 %v325, %v549
  %v582 = vmul.f32 %v326, %v550
  %v583 = vmul.f32 %v327, %v551
  %v584 = vmul.f32 %v328, %v552
  %v585 = vmul.f32 %v329, %v553
  %v586 = vmul.f32 %v330, %v554
  %v587 = vmul.f32 %v331, %v555
  %v588 = vmul.f32 %v332, %v556
  %v589 = vmul.f32 %v333, %v557
  %v590 = vmul.f32 %v334, %v558
  %v591 = vmul.f32 %v335, %v559
  %v592 = vmul.f32 %v336, %v560
  %v593 = vmul.f32 %v337, %v561
  %v594 = vpack.c.bf16 %v566, %v562
  %v595 = vpack.c.bf16 %v567, %v563
  %v596 = vpack.c.bf16 %v568, %v564
  %v597 = vpack.c.bf16 %v569, %v565
  %v598 = vpack.c.bf16 %v574, %v570
  %v599 = vpack.c.bf16 %v575, %v571
  %v600 = vpack.c.bf16 %v576, %v572
  %v601 = vpack.c.bf16 %v577, %v573
  %v602 = vpack.c.bf16 %v582, %v578
  %v603 = vpack.c.bf16 %v583, %v579
  %v604 = vpack.c.bf16 %v584, %v580
  %v605 = vpack.c.bf16 %v585, %v581
  %v606 = vpack.c.bf16 %v590, %v586
  %v607 = vpack.c.bf16 %v591, %v587
  %v608 = vpack.c.bf16 %v592, %v588
  %v609 = vpack.c.bf16 %v593, %v589
  %610 = vst [vmem:[#allocation2] sm:$0xff] %v594
  %611 = vst [vmem:[#allocation2 + $0x8] sm:$0xff] %v595
  %612 = vst [vmem:[#allocation2 + $0x10] sm:$0xff] %v596
  %613 = vst [vmem:[#allocation2 + $0x18] sm:$0xff] %v597
  %614 = vst [vmem:[#allocation2 + $0x20] sm:$0xff] %v598
  %615 = vst [vmem:[#allocation2 + $0x28] sm:$0xff] %v599
  %616 = vst [vmem:[#allocation2 + $0x30] sm:$0xff] %v600
  %617 = vst [vmem:[#allocation2 + $0x38] sm:$0xff] %v601
  %618 = vst [vmem:[#allocation2 + $0x40] sm:$0xff] %v602
  %619 = vst [vmem:[#allocation2 + $0x48] sm:$0xff] %v603
  %620 = vst [vmem:[#allocation2 + $0x50] sm:$0xff] %v604
  %621 = vst [vmem:[#allocation2 + $0x58] sm:$0xff] %v605
  %622 = vst [vmem:[#allocation2 + $0x60] sm:$0xff] %v606
  %623 = vst [vmem:[#allocation2 + $0x68] sm:$0xff] %v607
  %624 = vst [vmem:[#allocation2 + $0x70] sm:$0xff] %v608
  %625 = vst [vmem:[#allocation2 + $0x78] sm:$0xff] %v609
  %v626 = vld [vmem:[%s3] sm:$0x1]
  %v627 = vld [vmem:[#allocation2] sm:$0xff]
  %v628 = vld [vmem:[#allocation2 + $0x8] sm:$0xff]
  %v629 = vld [vmem:[#allocation2 + $0x10] sm:$0xff]
  %v630 = vld [vmem:[#allocation2 + $0x18] sm:$0xff]
  %v631 = vld [vmem:[#allocation2 + $0x20] sm:$0xff]
  %v632 = vld [vmem:[#allocation2 + $0x28] sm:$0xff]
  %v633 = vld [vmem:[#allocation2 + $0x30] sm:$0xff]
  %v634 = vld [vmem:[#allocation2 + $0x38] sm:$0xff]
  %v635 = vld [vmem:[#allocation2 + $0x40] sm:$0xff]
  %v636 = vld [vmem:[#allocation2 + $0x48] sm:$0xff]
  %v637 = vld [vmem:[#allocation2 + $0x50] sm:$0xff]
  %v638 = vld [vmem:[#allocation2 + $0x58] sm:$0xff]
  %v639 = vld [vmem:[#allocation2 + $0x60] sm:$0xff]
  %v640 = vld [vmem:[#allocation2 + $0x68] sm:$0xff]
  %v641 = vld [vmem:[#allocation2 + $0x70] sm:$0xff]
  %v642 = vld [vmem:[#allocation2 + $0x78] sm:$0xff]
  %v643 = vld [vmem:[#allocation3] sm:$0x1]
  %645 = vset.pattern.permute.xlu0 0
  %646 = vperm.xlu0 %645, %v643
  %v647 = vpop.permute.xlu0 %646
  %v649 = vlaneseq
  %v650 = vshrl.u32 %v649, 7
  %v651 = vsub.s32 0, %v650
  %v652 = vrot.slane %v647, %v651
  %vm653 = vcmask 523264
  %v655 = vsel %vm653, %v626, 0
  %657 = vmatprep.subr.bf16.mxu0 %v628
  %658 = vmatpush1.bf16.msra.mxu0 %v627
  %659 = vmatprep.subr.bf16.mxu0 %v632
  %660 = vmatpush1.bf16.msra.mxu0 %v631
  %661 = vmatprep.subr.bf16.mxu0 %v636
  %662 = vmatpush1.bf16.msra.mxu0 %v635
  %663 = vmatprep.subr.bf16.mxu0 %v640
  %664 = vmatpush1.bf16.msra.mxu0 %v639
  %665 = vmatprep.subr.bf16.mxu0 0
  %666 = vmatpush1.bf16.msra.mxu0 0
  %667 = vmatprep.subr.bf16.mxu0 0
  %668 = vmatpush1.bf16.msra.mxu0 0
  %669 = vmatprep.subr.bf16.mxu0 0
  %670 = vmatpush1.bf16.msra.mxu0 0
  %671 = vmatprep.subr.bf16.mxu0 0
  %672 = vmatpush1.bf16.msra.mxu0 0
  %673 = vmatprep.subr.bf16.mxu0 0
  %674 = vmatpush1.bf16.msra.mxu0 0
  %675 = vmatprep.subr.bf16.mxu0 0
  %676 = vmatpush1.bf16.msra.mxu0 0
  %677 = vmatprep.subr.bf16.mxu0 0
  %678 = vmatpush1.bf16.msra.mxu0 0
  %679 = vmatprep.subr.bf16.mxu0 0
  %680 = vmatpush1.bf16.msra.mxu0 0
  %681 = vmatprep.subr.bf16.mxu0 0
  %682 = vmatpush1.bf16.msra.mxu0 0
  %683 = vmatprep.subr.bf16.mxu0 0
  %684 = vmatpush1.bf16.msra.mxu0 0
  %685 = vmatprep.subr.bf16.mxu0 0
  %686 = vmatpush1.bf16.msra.mxu0 0
  %687 = vmatprep.subr.bf16.mxu0 0
  %688 = vmatpush1.bf16.msra.mxu0 0
  %689 = vmatprep.mubr.bf16.mxu0 0
  %690 = vmatmul.mubr.bf16.gmra.mrb[0].mxu0 %v655
  %v691 = vpop.f32.mrb[0].mxu0
  %v692 = vadd.f32 %v652, %v691
  %v693 = vpop.f32.mrb[0].mxu0
  %v694 = vadd.f32 %v652, %v693
  %v695 = vpop.f32.mrb[0].mxu0
  %v696 = vpop.f32.mrb[0].mxu0
  %697 = vdwg.mxu0
  %698 = vmatprep.subr.bf16.mxu0 %v630
  %699 = vmatpush1.bf16.msra.mxu0 %v629
  %700 = vmatprep.subr.bf16.mxu0 %v634
  %701 = vmatpush1.bf16.msra.mxu0 %v633
  %702 = vmatprep.subr.bf16.mxu0 %v638
  %703 = vmatpush1.bf16.msra.mxu0 %v637
  %704 = vmatprep.subr.bf16.mxu0 %v642
  %705 = vmatpush1.bf16.msra.mxu0 %v641
  %706 = vmatprep.subr.bf16.mxu0 0
  %707 = vmatpush1.bf16.msra.mxu0 0
  %708 = vmatprep.subr.bf16.mxu0 0
  %709 = vmatpush1.bf16.msra.mxu0 0
  %710 = vmatprep.subr.bf16.mxu0 0
  %711 = vmatpush1.bf16.msra.mxu0 0
  %712 = vmatprep.subr.bf16.mxu0 0
  %713 = vmatpush1.bf16.msra.mxu0 0
  %714 = vmatprep.subr.bf16.mxu0 0
  %715 = vmatpush1.bf16.msra.mxu0 0
  %716 = vmatprep.subr.bf16.mxu0 0
  %717 = vmatpush1.bf16.msra.mxu0 0
  %718 = vmatprep.subr.bf16.mxu0 0
  %719 = vmatpush1.bf16.msra.mxu0 0
  %720 = vmatprep.subr.bf16.mxu0 0
  %721 = vmatpush1.bf16.msra.mxu0 0
  %722 = vmatprep.subr.bf16.mxu0 0
  %723 = vmatpush1.bf16.msra.mxu0 0
  %724 = vmatprep.subr.bf16.mxu0 0
  %725 = vmatpush1.bf16.msra.mxu0 0
  %726 = vmatprep.subr.bf16.mxu0 0
  %727 = vmatpush1.bf16.msra.mxu0 0
  %728 = vmatprep.subr.bf16.mxu0 0
  %729 = vmatpush1.bf16.msra.mxu0 0
  %730 = vmatprep.mubr.bf16.mxu0 0
  %731 = vmatmul.mubr.bf16.gmra.mrb[0].mxu0 %v655
  %v732 = vpop.f32.mrb[0].mxu0
  %v733 = vadd.f32 %v652, %v732
  %v734 = vpop.f32.mrb[0].mxu0
  %v735 = vadd.f32 %v652, %v734
  %v736 = vpop.f32.mrb[0].mxu0
  %v737 = vpop.f32.mrb[0].mxu0
  %738 = vdwg.mxu0
  %v743 = vcombine.low %v692, %v694
  %v744 = vcombine.low %v733, %v735
  %v746 = vunpack.c.l.s4 1966171168
  %v747 = vunpack.c.0.s8 %v746
  %v748 = vlaneseq
  %v749 = vshrl.u32 %v748, 7
  %v750 = vsub.s32 %v747, %v749
  %v751 = vrot.slane %v743, %v750
  %v753 = vunpack.c.l.s4 1966171168
  %v754 = vunpack.c.0.s8 %v753
  %v755 = vlaneseq
  %v756 = vshrl.u32 %v755, 7
  %v757 = vsub.s32 %v754, %v756
  %v758 = vrot.slane %v744, %v757
  %v759 = vcombine.low %v751, %v758
  %v761 = vunpack.c.l.s4 1966171168
  %v762 = vunpack.c.0.s8 %v761
  %v763 = vlaneseq
  %v764 = vshrl.u32 %v763, 7
  %v765 = vsub.s32 %v762, %v764
  %v766 = vrot.slane %v759, %v765
  %v768 = vlaneseq
  %vm769 = vcmp.ge.s32.totalorder %v768, 0
  %vm770 = vcmp.lt.s32.totalorder %v768, 512
  %vm771 = vmand %vm769, %vm770
  %772 = vst.msk [vmem:[%s5] sm:$0xf] %vm771, %v766
  // Predicated region
  $region22: #{fno_forward.19} parent=0 // pred_check
    _
  $region23: #{fno_forward.19} parent=0 // pred_check_branch
    %774 = sbr.rel (0) target = $region25
  $region24: #{fno_forward.19} parent=0 // pred_region
    _
  $region25: #{fno_forward.19} parent=0 // pred_fallthru
    _
  // Predicated region
  $region26: #{fno_forward.19} parent=0 // pred_check
    _
  $region27: #{fno_forward.19} parent=0 // pred_check_branch
    %776 = sbr.rel (0) target = $region29
  $region28: #{fno_forward.19} parent=0 // pred_region
    _
  $region29: #{fno_forward.19} parent=0 // pred_fallthru
    _

</llo_original>
